<compile_context>
chip_gen: v7x
topology: tpu7x:2x2x1
jax: 0.10.0
libtpu: 0.0.40
codegen_flags: <defaults>
</compile_context>

<pallas_src>
import numpy as np
import jax
import jax.numpy as jnp
from jax.experimental import pallas as pl
from jax.experimental.pallas import tpu as pltpu

NUM_CLASSES = 10       # num_classes
LATENT_DIMS = 32       # dims (latent noise dim)
IMG_SHAPE = (1, 8, 8)  # shape -> prod = 64
IMG_PROD = int(np.prod(IMG_SHAPE))
OUT_PAD = 128          # lane-dense padded output width (>= IMG_PROD, mult of 128)
BN_EPS = 0.8           # nn.BatchNorm1d(out_features, 0.8) -> eps=0.8
LRELU_SLOPE = 0.2

# Packed row-parameter layout: (name, width).  Every width is a multiple of
# 128, so every offset is 128-aligned -> unmasked lane-aligned slices.
ROW_LAYOUT = (
    ("b1", 128),
    ("b2", 256), ("g2", 256), ("be2", 256),
    ("b3", 512), ("g3", 512), ("be3", 512),
    ("b4", 1024), ("g4", 1024), ("be4", 1024),
    ("b5", OUT_PAD),
)
ROW_SLOTS = {}
_off = 0
for _name, _w in ROW_LAYOUT:
    ROW_SLOTS[_name] = (_off, _w)
    _off += _w
ROW_TOTAL = _off  # 5632


def _leaky(x):
    return jnp.where(x > 0, x, LRELU_SLOPE * x)


def _bn_train(x, gamma, beta):
    # PyTorch BatchNorm1d forward in training mode: batch mean, biased variance.
    mean = jnp.mean(x, axis=0, keepdims=True)
    var = jnp.mean((x - mean) ** 2, axis=0, keepdims=True)
    return (x - mean) * jax.lax.rsqrt(var + BN_EPS) * gamma + beta


def generator_kernel(labels_ref, noise_ref,
                     embw1_ref, w1b_ref, w2_ref, w3_ref, w4_ref, w5_ref,
                     rowp_ref, out_ref):
    f32 = jnp.float32
    bf16 = jnp.bfloat16
    B = noise_ref.shape[0]

    def rp(name):
        off, width = ROW_SLOTS[name]
        return rowp_ref[:, pl.ds(off, width)]          # (1, width) f32

    # One-hot built in-kernel from int32 labels (no wrapper one_hot, no f32 DMA).
    labels = labels_ref[...]                                         # (B, 1) int32
    cls_iota = jax.lax.broadcasted_iota(jnp.int32, (B, NUM_CLASSES), 1)
    onehot = (cls_iota == labels).astype(bf16)                       # (B, 10)

    # Layer 1: Linear(dims + num_classes, 128) on concat(emb(labels), noise).
    # Embedding folded into the label half of W1: onehot @ (Emb @ W1_label).
    h = (jnp.dot(onehot, embw1_ref[...], preferred_element_type=f32)
         + jnp.dot(noise_ref[...].astype(bf16), w1b_ref[...],
                   preferred_element_type=f32)
         + rp("b1"))
    h = _leaky(h)

    def block(h, w_ref, bname, gname, bename):
        # Linear + BatchNorm1d(training stats, biased var, eps=0.8) + LeakyReLU.
        x = (jnp.dot(h.astype(bf16), w_ref[...], preferred_element_type=f32)
             + rp(bname))
        mean = jnp.mean(x, axis=0, keepdims=True)
        var = jnp.mean(x * x, axis=0, keepdims=True) - mean * mean
        scale = rp(gname) * jax.lax.rsqrt(var + BN_EPS)   # EUP rsqrt
        shift = rp(bename) - mean * scale
        y = x * scale + shift                             # single elementwise pass
        return jnp.where(y > 0, y, LRELU_SLOPE * y)

    h = block(h, w2_ref, "b2", "g2", "be2")   # Linear(128, 256)  + BN + LReLU
    h = block(h, w3_ref, "b3", "g3", "be3")   # Linear(256, 512)  + BN + LReLU
    h = block(h, w4_ref, "b4", "g4", "be4")   # Linear(512, 1024) + BN + LReLU

    # Output: Linear(1024, 64 -> padded 128) + Tanh; full-lane (unmasked) store.
    h = jnp.dot(h.astype(bf16), w5_ref[...], preferred_element_type=f32) + rp("b5")
    out_ref[...] = jnp.tanh(h)


def prepare_kernel_params(params):
    """Fold embedding into layer 1, pad w5/b5 to 128 lanes, cast matmul weights
    to bf16, and pack all (1, N) row parameters into one buffer."""
    bf16 = jnp.bfloat16
    kp = {}
    # emb(10,10) @ w1a(10,128) -> folded label-path weight (f32 compute, bf16 store).
    kp["embw1"] = jnp.dot(params["emb"], params["w1a"]).astype(bf16)
    kp["w1b"] = params["w1b"].astype(bf16)
    for l in ("2", "3", "4"):
        kp["w" + l] = params["w" + l].astype(bf16)
    # Lane-pad output projection 64 -> 128 with zeros (tanh(0)=0 in padded lanes).
    w5 = jnp.zeros((params["w5"].shape[0], OUT_PAD), jnp.float32)
    w5 = w5.at[:, :IMG_PROD].set(params["w5"])
    kp["w5"] = w5.astype(bf16)

    b5 = jnp.zeros((1, OUT_PAD), jnp.float32).at[:, :IMG_PROD].set(params["b5"])
    rows = {"b1": params["b1"], "b5": b5}
    for l in ("2", "3", "4"):
        rows["b" + l] = params["b" + l]
        rows["g" + l] = params["g" + l]
        rows["be" + l] = params["be" + l]
    rowp = jnp.zeros((1, ROW_TOTAL), jnp.float32)
    for name, width in ROW_LAYOUT:
        off = ROW_SLOTS[name][0]
        rowp = rowp.at[:, off:off + width].set(rows[name])
    kp["rowp"] = rowp
    return kp


def generator_forward(noise, labels, kparams):
    """noise: (C, B, LATENT_DIMS) f32, labels: (C, B) int32
    -> (C, B, *IMG_SHAPE) f32.  Each chunk c is one independent generator
    forward batch (BatchNorm stats are per chunk, matching one module call)."""
    C, B, _ = noise.shape
    labels3d = labels.reshape(C, B, 1).astype(jnp.int32)

    def w_spec(shape):
        # Constant block index across the chunk grid -> DMA'd once, stays resident.
        return pl.BlockSpec(shape, lambda i: (0, 0))

    in_specs = [
        pl.BlockSpec((None, B, 1), lambda i: (i, 0, 0)),             # labels
        pl.BlockSpec((None, B, LATENT_DIMS), lambda i: (i, 0, 0)),   # noise
        w_spec((NUM_CLASSES, 128)),                                  # embw1
        w_spec((LATENT_DIMS, 128)),                                  # w1b
        w_spec((128, 256)),                                          # w2
        w_spec((256, 512)),                                          # w3
        w_spec((512, 1024)),                                         # w4
        w_spec((1024, OUT_PAD)),                                     # w5 (padded)
        w_spec((1, ROW_TOTAL)),                                      # packed rows
    ]
    out_spec = pl.BlockSpec((None, B, OUT_PAD), lambda i: (i, 0, 0))

    out_padded = pl.pallas_call(
        generator_kernel,
        out_shape=jax.ShapeDtypeStruct((C, B, OUT_PAD), jnp.float32),
        grid=(C,),
        in_specs=in_specs,
        out_specs=out_spec,
        compiler_params=pltpu.CompilerParams(
            dimension_semantics=("parallel",)),   # v7x: shard chunks over 2 TCs
    )(labels3d, noise,
      kparams["embw1"], kparams["w1b"], kparams["w2"], kparams["w3"],
      kparams["w4"], kparams["w5"], kparams["rowp"])

    return out_padded[:, :, :IMG_PROD].reshape(C, B, *IMG_SHAPE)


def init_params(key):
    """Deterministic parameter init mirroring the PyTorch module's shapes (f32)."""
    ks = jax.random.split(key, 16)

    def linear(kw, kb, fan_in, fan_out):
        # PyTorch Linear default: U(-1/sqrt(fan_in), 1/sqrt(fan_in))
        bound = 1.0 / np.sqrt(fan_in)
        w = jax.random.uniform(kw, (fan_in, fan_out), jnp.float32, -bound, bound)
        b = jax.random.uniform(kb, (1, fan_out), jnp.float32, -bound, bound)
        return w, b

    params = {}
    # nn.Embedding(num_classes, num_classes): N(0, 1)
    params["emb"] = jax.random.normal(ks[0], (NUM_CLASSES, NUM_CLASSES), jnp.float32)

    in1 = LATENT_DIMS + NUM_CLASSES
    w1, b1 = linear(ks[1], ks[2], in1, 128)
    # Split along input so concat(emb, noise) @ W1 = emb @ w1a + noise @ w1b
    params["w1a"] = w1[:NUM_CLASSES]
    params["w1b"] = w1[NUM_CLASSES:]
    params["b1"] = b1

    params["w2"], params["b2"] = linear(ks[3], ks[4], 128, 256)
    params["g2"] = jnp.ones((1, 256), jnp.float32)
    params["be2"] = jnp.zeros((1, 256), jnp.float32)

    params["w3"], params["b3"] = linear(ks[5], ks[6], 256, 512)
    params["g3"] = jnp.ones((1, 512), jnp.float32)
    params["be3"] = jnp.zeros((1, 512), jnp.float32)

    params["w4"], params["b4"] = linear(ks[7], ks[8], 512, 1024)
    params["g4"] = jnp.ones((1, 1024), jnp.float32)
    params["be4"] = jnp.zeros((1, 1024), jnp.float32)

    params["w5"], params["b5"] = linear(ks[9], ks[10], 1024, IMG_PROD)
    return params


def generator_forward_ref(noise, labels, params):
    """Pure-JAX f32 reference with exact PyTorch-module semantics, applied
    independently per chunk (vmap over the chunk axis)."""
    w1 = jnp.concatenate([params["w1a"], params["w1b"]], axis=0)

    def one_batch(noise_b, labels_b):
        emb = params["emb"][labels_b]
        x = jnp.concatenate([emb, noise_b], axis=-1)
        h = _leaky(x @ w1 + params["b1"])
        h = _leaky(_bn_train(h @ params["w2"] + params["b2"], params["g2"], params["be2"]))
        h = _leaky(_bn_train(h @ params["w3"] + params["b3"], params["g3"], params["be3"]))
        h = _leaky(_bn_train(h @ params["w4"] + params["b4"], params["g4"], params["be4"]))
        return jnp.tanh(h @ params["w5"] + params["b5"])

    out = jax.vmap(one_batch)(noise, labels)
    return out.reshape(noise.shape[0], noise.shape[1], *IMG_SHAPE)


if __name__ == "__main__":
    key = jax.random.PRNGKey(0)
    k_params, k_noise, k_labels = jax.random.split(key, 3)

    NUM_CHUNKS = 4    # independent generator batches processed in one pallas_call
    CHUNK_B = 128     # batch per chunk -> MXU M dimension actually utilized

    params = init_params(k_params)
    kparams = prepare_kernel_params(params)

    noise = jax.random.normal(k_noise, (NUM_CHUNKS, CHUNK_B, LATENT_DIMS), jnp.float32)
    labels = jax.random.randint(k_labels, (NUM_CHUNKS, CHUNK_B), 0, NUM_CLASSES, jnp.int32)

    img = jax.block_until_ready(generator_forward(noise, labels, kparams))
    ref = jax.block_until_ready(generator_forward_ref(noise, labels, params))

    assert img.shape == (NUM_CHUNKS, CHUNK_B, *IMG_SHAPE), img.shape
    # bf16 MXU operands vs f32 reference -> loosened tolerance.
    np.testing.assert_allclose(np.asarray(img), np.asarray(ref), rtol=5e-2, atol=5e-2)

    print("KERNEL_OK")
</pallas_src>

<mosaic_0001>
module attributes {stable_mosaic.version = 11 : i64} {
  func.func @generator_kernel(%arg0: i32, %arg1: memref<1x128x1xi32, #tpu.memory_space<vmem>>, %arg2: memref<1x128x32xf32, #tpu.memory_space<vmem>>, %arg3: memref<10x128xbf16, #tpu.memory_space<vmem>>, %arg4: memref<32x128xbf16, #tpu.memory_space<vmem>>, %arg5: memref<128x256xbf16, #tpu.memory_space<vmem>>, %arg6: memref<256x512xbf16, #tpu.memory_space<vmem>>, %arg7: memref<512x1024xbf16, #tpu.memory_space<vmem>>, %arg8: memref<1024x128xbf16, #tpu.memory_space<vmem>>, %arg9: memref<1x5632xf32, #tpu.memory_space<vmem>>, %arg10: memref<1x128x128xf32, #tpu.memory_space<vmem>>) attributes {dimension_semantics = [#tpu.dimension_semantics<parallel>], iteration_bounds = array<i64: 4>, scalar_prefetch = 0 : i64, scratch_operands = 0 : i64, tpu.core_type = #tpu.core_type<tc>, window_params = [{transform_indices = @transform_0, window_bounds = array<i64: 1, 128, 1>}, {transform_indices = @transform_1, window_bounds = array<i64: 1, 128, 32>}, {pipeline_mode = #tpu.pipeline_mode<synchronous>, transform_indices = @transform_2, window_bounds = array<i64: 10, 128>}, {pipeline_mode = #tpu.pipeline_mode<synchronous>, transform_indices = @transform_3, window_bounds = array<i64: 32, 128>}, {pipeline_mode = #tpu.pipeline_mode<synchronous>, transform_indices = @transform_4, window_bounds = array<i64: 128, 256>}, {pipeline_mode = #tpu.pipeline_mode<synchronous>, transform_indices = @transform_5, window_bounds = array<i64: 256, 512>}, {pipeline_mode = #tpu.pipeline_mode<synchronous>, transform_indices = @transform_6, window_bounds = array<i64: 512, 1024>}, {pipeline_mode = #tpu.pipeline_mode<synchronous>, transform_indices = @transform_7, window_bounds = array<i64: 1024, 128>}, {pipeline_mode = #tpu.pipeline_mode<synchronous>, transform_indices = @transform_8, window_bounds = array<i64: 1, 5632>}, {transform_indices = @transform_9, window_bounds = array<i64: 1, 128, 128>}]} {
    %c0 = arith.constant 0 : index
    %c0_0 = arith.constant 0 : index
    %c0_1 = arith.constant 0 : index
    %0 = vector.load %arg1[%c0, %c0_0, %c0_1] : memref<1x128x1xi32, #tpu.memory_space<vmem>>, vector<1x128x1xi32>
    %1 = vector.shape_cast %0 : vector<1x128x1xi32> to vector<128x1xi32>
    %2 = tpu.iota {dimensions = array<i32: 1>} : vector<128x10xi32>
    %3 = vector.broadcast %1 : vector<128x1xi32> to vector<128x10xi32>
    %4 = arith.cmpi eq, %2, %3 : vector<128x10xi32>
    %5 = arith.extui %4 : vector<128x10xi1> to vector<128x10xi32>
    %6 = arith.sitofp %5 : vector<128x10xi32> to vector<128x10xf32>
    %7 = arith.truncf %6 : vector<128x10xf32> to vector<128x10xbf16>
    %c0_2 = arith.constant 0 : index
    %c0_3 = arith.constant 0 : index
    %8 = vector.load %arg3[%c0_2, %c0_3] : memref<10x128xbf16, #tpu.memory_space<vmem>>, vector<10x128xbf16>
    %cst = arith.constant dense<0.000000e+00> : vector<128x128xf32>
    %9 = tpu.matmul %7, %8, %cst {dimension_numbers = #tpu.dot_dimension_numbers<[1], [0], [0], [1], [0, 0, 1, 1], [], []>} : vector<128x10xbf16>, vector<10x128xbf16>, vector<128x128xf32> -> vector<128x128xf32>
    %c0_4 = arith.constant 0 : index
    %c0_5 = arith.constant 0 : index
    %c0_6 = arith.constant 0 : index
    %10 = vector.load %arg2[%c0_4, %c0_5, %c0_6] : memref<1x128x32xf32, #tpu.memory_space<vmem>>, vector<1x128x32xf32>
    %11 = vector.shape_cast %10 : vector<1x128x32xf32> to vector<128x32xf32>
    %12 = arith.truncf %11 : vector<128x32xf32> to vector<128x32xbf16>
    %c0_7 = arith.constant 0 : index
    %c0_8 = arith.constant 0 : index
    %13 = vector.load %arg4[%c0_7, %c0_8] : memref<32x128xbf16, #tpu.memory_space<vmem>>, vector<32x128xbf16>
    %cst_9 = arith.constant dense<0.000000e+00> : vector<128x128xf32>
    %14 = tpu.matmul %12, %13, %cst_9 {dimension_numbers = #tpu.dot_dimension_numbers<[1], [0], [0], [1], [0, 0, 1, 1], [], []>} : vector<128x32xbf16>, vector<32x128xbf16>, vector<128x128xf32> -> vector<128x128xf32>
    %15 = arith.addf %9, %14 : vector<128x128xf32>
    %c0_10 = arith.constant 0 : index
    %c0_11 = arith.constant 0 : index
    %16 = vector.load %arg9[%c0_10, %c0_11] : memref<1x5632xf32, #tpu.memory_space<vmem>>, vector<1x128xf32>
    %17 = vector.broadcast %16 : vector<1x128xf32> to vector<128x128xf32>
    %18 = arith.addf %15, %17 : vector<128x128xf32>
    %cst_12 = arith.constant 0.000000e+00 : f32
    %19 = vector.broadcast %cst_12 : f32 to vector<128x128xf32>
    %20 = arith.cmpf ogt, %18, %19 : vector<128x128xf32>
    %cst_13 = arith.constant 2.000000e-01 : f32
    %21 = vector.broadcast %cst_13 : f32 to vector<128x128xf32>
    %22 = arith.mulf %21, %18 : vector<128x128xf32>
    %23 = arith.select %20, %18, %22 : vector<128x128xi1>, vector<128x128xf32>
    %24 = arith.truncf %23 : vector<128x128xf32> to vector<128x128xbf16>
    %c0_14 = arith.constant 0 : index
    %c0_15 = arith.constant 0 : index
    %25 = vector.load %arg5[%c0_14, %c0_15] : memref<128x256xbf16, #tpu.memory_space<vmem>>, vector<128x256xbf16>
    %cst_16 = arith.constant dense<0.000000e+00> : vector<128x256xf32>
    %26 = tpu.matmul %24, %25, %cst_16 {dimension_numbers = #tpu.dot_dimension_numbers<[1], [0], [0], [1], [0, 0, 1, 1], [], []>} : vector<128x128xbf16>, vector<128x256xbf16>, vector<128x256xf32> -> vector<128x256xf32>
    %c0_17 = arith.constant 0 : index
    %c128 = arith.constant 128 : index
    %27 = vector.load %arg9[%c0_17, %c128] : memref<1x5632xf32, #tpu.memory_space<vmem>>, vector<1x256xf32>
    %28 = vector.broadcast %27 : vector<1x256xf32> to vector<128x256xf32>
    %29 = arith.addf %26, %28 : vector<128x256xf32>
    %cst_18 = arith.constant dense<0.000000e+00> : vector<256xf32>
    %30 = vector.multi_reduction <add>, %29, %cst_18 [0] : vector<128x256xf32> to vector<256xf32>
    %31 = vector.shape_cast %30 : vector<256xf32> to vector<1x256xf32>
    %cst_19 = arith.constant 1.280000e+02 : f32
    %32 = vector.broadcast %cst_19 : f32 to vector<1x256xf32>
    %33 = arith.divf %31, %32 : vector<1x256xf32>
    %34 = arith.mulf %29, %29 : vector<128x256xf32>
    %cst_20 = arith.constant dense<0.000000e+00> : vector<256xf32>
    %35 = vector.multi_reduction <add>, %34, %cst_20 [0] : vector<128x256xf32> to vector<256xf32>
    %36 = vector.shape_cast %35 : vector<256xf32> to vector<1x256xf32>
    %cst_21 = arith.constant 1.280000e+02 : f32
    %37 = vector.broadcast %cst_21 : f32 to vector<1x256xf32>
    %38 = arith.divf %36, %37 : vector<1x256xf32>
    %39 = arith.mulf %33, %33 : vector<1x256xf32>
    %40 = arith.subf %38, %39 : vector<1x256xf32>
    %c0_22 = arith.constant 0 : index
    %c384 = arith.constant 384 : index
    %41 = vector.load %arg9[%c0_22, %c384] : memref<1x5632xf32, #tpu.memory_space<vmem>>, vector<1x256xf32>
    %cst_23 = arith.constant 8.000000e-01 : f32
    %42 = vector.broadcast %cst_23 : f32 to vector<1x256xf32>
    %43 = arith.addf %40, %42 : vector<1x256xf32>
    %44 = math.rsqrt %43 : vector<1x256xf32>
    %45 = arith.mulf %41, %44 : vector<1x256xf32>
    %c0_24 = arith.constant 0 : index
    %c640 = arith.constant 640 : index
    %46 = vector.load %arg9[%c0_24, %c640] : memref<1x5632xf32, #tpu.memory_space<vmem>>, vector<1x256xf32>
    %47 = arith.mulf %33, %45 : vector<1x256xf32>
    %48 = arith.subf %46, %47 : vector<1x256xf32>
    %49 = vector.broadcast %45 : vector<1x256xf32> to vector<128x256xf32>
    %50 = arith.mulf %29, %49 : vector<128x256xf32>
    %51 = vector.broadcast %48 : vector<1x256xf32> to vector<128x256xf32>
    %52 = arith.addf %50, %51 : vector<128x256xf32>
    %cst_25 = arith.constant 0.000000e+00 : f32
    %53 = vector.broadcast %cst_25 : f32 to vector<128x256xf32>
    %54 = arith.cmpf ogt, %52, %53 : vector<128x256xf32>
    %cst_26 = arith.constant 2.000000e-01 : f32
    %55 = vector.broadcast %cst_26 : f32 to vector<128x256xf32>
    %56 = arith.mulf %55, %52 : vector<128x256xf32>
    %57 = arith.select %54, %52, %56 : vector<128x256xi1>, vector<128x256xf32>
    %58 = arith.truncf %57 : vector<128x256xf32> to vector<128x256xbf16>
    %c0_27 = arith.constant 0 : index
    %c0_28 = arith.constant 0 : index
    %59 = vector.load %arg6[%c0_27, %c0_28] : memref<256x512xbf16, #tpu.memory_space<vmem>>, vector<256x512xbf16>
    %cst_29 = arith.constant dense<0.000000e+00> : vector<128x512xf32>
    %60 = tpu.matmul %58, %59, %cst_29 {dimension_numbers = #tpu.dot_dimension_numbers<[1], [0], [0], [1], [0, 0, 1, 1], [], []>} : vector<128x256xbf16>, vector<256x512xbf16>, vector<128x512xf32> -> vector<128x512xf32>
    %c0_30 = arith.constant 0 : index
    %c896 = arith.constant 896 : index
    %61 = vector.load %arg9[%c0_30, %c896] : memref<1x5632xf32, #tpu.memory_space<vmem>>, vector<1x512xf32>
    %62 = vector.broadcast %61 : vector<1x512xf32> to vector<128x512xf32>
    %63 = arith.addf %60, %62 : vector<128x512xf32>
    %cst_31 = arith.constant dense<0.000000e+00> : vector<512xf32>
    %64 = vector.multi_reduction <add>, %63, %cst_31 [0] : vector<128x512xf32> to vector<512xf32>
    %65 = vector.shape_cast %64 : vector<512xf32> to vector<1x512xf32>
    %cst_32 = arith.constant 1.280000e+02 : f32
    %66 = vector.broadcast %cst_32 : f32 to vector<1x512xf32>
    %67 = arith.divf %65, %66 : vector<1x512xf32>
    %68 = arith.mulf %63, %63 : vector<128x512xf32>
    %cst_33 = arith.constant dense<0.000000e+00> : vector<512xf32>
    %69 = vector.multi_reduction <add>, %68, %cst_33 [0] : vector<128x512xf32> to vector<512xf32>
    %70 = vector.shape_cast %69 : vector<512xf32> to vector<1x512xf32>
    %cst_34 = arith.constant 1.280000e+02 : f32
    %71 = vector.broadcast %cst_34 : f32 to vector<1x512xf32>
    %72 = arith.divf %70, %71 : vector<1x512xf32>
    %73 = arith.mulf %67, %67 : vector<1x512xf32>
    %74 = arith.subf %72, %73 : vector<1x512xf32>
    %c0_35 = arith.constant 0 : index
    %c1408 = arith.constant 1408 : index
    %75 = vector.load %arg9[%c0_35, %c1408] : memref<1x5632xf32, #tpu.memory_space<vmem>>, vector<1x512xf32>
    %cst_36 = arith.constant 8.000000e-01 : f32
    %76 = vector.broadcast %cst_36 : f32 to vector<1x512xf32>
    %77 = arith.addf %74, %76 : vector<1x512xf32>
    %78 = math.rsqrt %77 : vector<1x512xf32>
    %79 = arith.mulf %75, %78 : vector<1x512xf32>
    %c0_37 = arith.constant 0 : index
    %c1920 = arith.constant 1920 : index
    %80 = vector.load %arg9[%c0_37, %c1920] : memref<1x5632xf32, #tpu.memory_space<vmem>>, vector<1x512xf32>
    %81 = arith.mulf %67, %79 : vector<1x512xf32>
    %82 = arith.subf %80, %81 : vector<1x512xf32>
    %83 = vector.broadcast %79 : vector<1x512xf32> to vector<128x512xf32>
    %84 = arith.mulf %63, %83 : vector<128x512xf32>
    %85 = vector.broadcast %82 : vector<1x512xf32> to vector<128x512xf32>
    %86 = arith.addf %84, %85 : vector<128x512xf32>
    %cst_38 = arith.constant 0.000000e+00 : f32
    %87 = vector.broadcast %cst_38 : f32 to vector<128x512xf32>
    %88 = arith.cmpf ogt, %86, %87 : vector<128x512xf32>
    %cst_39 = arith.constant 2.000000e-01 : f32
    %89 = vector.broadcast %cst_39 : f32 to vector<128x512xf32>
    %90 = arith.mulf %89, %86 : vector<128x512xf32>
    %91 = arith.select %88, %86, %90 : vector<128x512xi1>, vector<128x512xf32>
    %92 = arith.truncf %91 : vector<128x512xf32> to vector<128x512xbf16>
    %c0_40 = arith.constant 0 : index
    %c0_41 = arith.constant 0 : index
    %93 = vector.load %arg7[%c0_40, %c0_41] : memref<512x1024xbf16, #tpu.memory_space<vmem>>, vector<512x1024xbf16>
    %cst_42 = arith.constant dense<0.000000e+00> : vector<128x1024xf32>
    %94 = tpu.matmul %92, %93, %cst_42 {dimension_numbers = #tpu.dot_dimension_numbers<[1], [0], [0], [1], [0, 0, 1, 1], [], []>} : vector<128x512xbf16>, vector<512x1024xbf16>, vector<128x1024xf32> -> vector<128x1024xf32>
    %c0_43 = arith.constant 0 : index
    %c2432 = arith.constant 2432 : index
    %95 = vector.load %arg9[%c0_43, %c2432] : memref<1x5632xf32, #tpu.memory_space<vmem>>, vector<1x1024xf32>
    %96 = vector.broadcast %95 : vector<1x1024xf32> to vector<128x1024xf32>
    %97 = arith.addf %94, %96 : vector<128x1024xf32>
    %cst_44 = arith.constant dense<0.000000e+00> : vector<1024xf32>
    %98 = vector.multi_reduction <add>, %97, %cst_44 [0] : vector<128x1024xf32> to vector<1024xf32>
    %99 = vector.shape_cast %98 : vector<1024xf32> to vector<1x1024xf32>
    %cst_45 = arith.constant 1.280000e+02 : f32
    %100 = vector.broadcast %cst_45 : f32 to vector<1x1024xf32>
    %101 = arith.divf %99, %100 : vector<1x1024xf32>
    %102 = arith.mulf %97, %97 : vector<128x1024xf32>
    %cst_46 = arith.constant dense<0.000000e+00> : vector<1024xf32>
    %103 = vector.multi_reduction <add>, %102, %cst_46 [0] : vector<128x1024xf32> to vector<1024xf32>
    %104 = vector.shape_cast %103 : vector<1024xf32> to vector<1x1024xf32>
    %cst_47 = arith.constant 1.280000e+02 : f32
    %105 = vector.broadcast %cst_47 : f32 to vector<1x1024xf32>
    %106 = arith.divf %104, %105 : vector<1x1024xf32>
    %107 = arith.mulf %101, %101 : vector<1x1024xf32>
    %108 = arith.subf %106, %107 : vector<1x1024xf32>
    %c0_48 = arith.constant 0 : index
    %c3456 = arith.constant 3456 : index
    %109 = vector.load %arg9[%c0_48, %c3456] : memref<1x5632xf32, #tpu.memory_space<vmem>>, vector<1x1024xf32>
    %cst_49 = arith.constant 8.000000e-01 : f32
    %110 = vector.broadcast %cst_49 : f32 to vector<1x1024xf32>
    %111 = arith.addf %108, %110 : vector<1x1024xf32>
    %112 = math.rsqrt %111 : vector<1x1024xf32>
    %113 = arith.mulf %109, %112 : vector<1x1024xf32>
    %c0_50 = arith.constant 0 : index
    %c4480 = arith.constant 4480 : index
    %114 = vector.load %arg9[%c0_50, %c4480] : memref<1x5632xf32, #tpu.memory_space<vmem>>, vector<1x1024xf32>
    %115 = arith.mulf %101, %113 : vector<1x1024xf32>
    %116 = arith.subf %114, %115 : vector<1x1024xf32>
    %117 = vector.broadcast %113 : vector<1x1024xf32> to vector<128x1024xf32>
    %118 = arith.mulf %97, %117 : vector<128x1024xf32>
    %119 = vector.broadcast %116 : vector<1x1024xf32> to vector<128x1024xf32>
    %120 = arith.addf %118, %119 : vector<128x1024xf32>
    %cst_51 = arith.constant 0.000000e+00 : f32
    %121 = vector.broadcast %cst_51 : f32 to vector<128x1024xf32>
    %122 = arith.cmpf ogt, %120, %121 : vector<128x1024xf32>
    %cst_52 = arith.constant 2.000000e-01 : f32
    %123 = vector.broadcast %cst_52 : f32 to vector<128x1024xf32>
    %124 = arith.mulf %123, %120 : vector<128x1024xf32>
    %125 = arith.select %122, %120, %124 : vector<128x1024xi1>, vector<128x1024xf32>
    %126 = arith.truncf %125 : vector<128x1024xf32> to vector<128x1024xbf16>
    %c0_53 = arith.constant 0 : index
    %c0_54 = arith.constant 0 : index
    %127 = vector.load %arg8[%c0_53, %c0_54] : memref<1024x128xbf16, #tpu.memory_space<vmem>>, vector<1024x128xbf16>
    %cst_55 = arith.constant dense<0.000000e+00> : vector<128x128xf32>
    %128 = tpu.matmul %126, %127, %cst_55 {dimension_numbers = #tpu.dot_dimension_numbers<[1], [0], [0], [1], [0, 0, 1, 1], [], []>} : vector<128x1024xbf16>, vector<1024x128xbf16>, vector<128x128xf32> -> vector<128x128xf32>
    %c0_56 = arith.constant 0 : index
    %c5504 = arith.constant 5504 : index
    %129 = vector.load %arg9[%c0_56, %c5504] : memref<1x5632xf32, #tpu.memory_space<vmem>>, vector<1x128xf32>
    %130 = vector.broadcast %129 : vector<1x128xf32> to vector<128x128xf32>
    %131 = arith.addf %128, %130 : vector<128x128xf32>
    %132 = math.tanh %131 : vector<128x128xf32>
    %c0_57 = arith.constant 0 : index
    %c0_58 = arith.constant 0 : index
    %c0_59 = arith.constant 0 : index
    %133 = vector.load %arg10[%c0_57, %c0_58, %c0_59] : memref<1x128x128xf32, #tpu.memory_space<vmem>>, vector<1x128x128xf32>
    %134 = vector.shape_cast %133 : vector<1x128x128xf32> to vector<128x128xf32>
    %135 = vector.shape_cast %132 : vector<128x128xf32> to vector<1x128x128xf32>
    tpu.vector_store %arg10[%c0_57, %c0_58, %c0_59], %135 {strides = array<i32>} : memref<1x128x128xf32, #tpu.memory_space<vmem>>, vector<1x128x128xf32>,
    return
  }
  func.func @transform_0(%arg0: i32) -> (i32, i32, i32) {
    %c0_i32 = arith.constant 0 : i32
    %c0_i32_0 = arith.constant 0 : i32
    %c0_i32_1 = arith.constant 0 : i32
    return %arg0, %c0_i32, %c0_i32_0 : i32, i32, i32
  }
  func.func @transform_1(%arg0: i32) -> (i32, i32, i32) {
    %c0_i32 = arith.constant 0 : i32
    %c0_i32_0 = arith.constant 0 : i32
    %c0_i32_1 = arith.constant 0 : i32
    return %arg0, %c0_i32, %c0_i32_0 : i32, i32, i32
  }
  func.func @transform_2(%arg0: i32) -> (i32, i32) {
    %c0_i32 = arith.constant 0 : i32
    %c0_i32_0 = arith.constant 0 : i32
    %c0_i32_1 = arith.constant 0 : i32
    return %c0_i32, %c0_i32_0 : i32, i32
  }
  func.func @transform_3(%arg0: i32) -> (i32, i32) {
    %c0_i32 = arith.constant 0 : i32
    %c0_i32_0 = arith.constant 0 : i32
    %c0_i32_1 = arith.constant 0 : i32
    return %c0_i32, %c0_i32_0 : i32, i32
  }
  func.func @transform_4(%arg0: i32) -> (i32, i32) {
    %c0_i32 = arith.constant 0 : i32
    %c0_i32_0 = arith.constant 0 : i32
    %c0_i32_1 = arith.constant 0 : i32
    return %c0_i32, %c0_i32_0 : i32, i32
  }
  func.func @transform_5(%arg0: i32) -> (i32, i32) {
    %c0_i32 = arith.constant 0 : i32
    %c0_i32_0 = arith.constant 0 : i32
    %c0_i32_1 = arith.constant 0 : i32
    return %c0_i32, %c0_i32_0 : i32, i32
  }
  func.func @transform_6(%arg0: i32) -> (i32, i32) {
    %c0_i32 = arith.constant 0 : i32
    %c0_i32_0 = arith.constant 0 : i32
    %c0_i32_1 = arith.constant 0 : i32
    return %c0_i32, %c0_i32_0 : i32, i32
  }
  func.func @transform_7(%arg0: i32) -> (i32, i32) {
    %c0_i32 = arith.constant 0 : i32
    %c0_i32_0 = arith.constant 0 : i32
    %c0_i32_1 = arith.constant 0 : i32
    return %c0_i32, %c0_i32_0 : i32, i32
  }
  func.func @transform_8(%arg0: i32) -> (i32, i32) {
    %c0_i32 = arith.constant 0 : i32
    %c0_i32_0 = arith.constant 0 : i32
    %c0_i32_1 = arith.constant 0 : i32
    return %c0_i32, %c0_i32_0 : i32, i32
  }
  func.func @transform_9(%arg0: i32) -> (i32, i32, i32) {
    %c0_i32 = arith.constant 0 : i32
    %c0_i32_0 = arith.constant 0 : i32
    %c0_i32_1 = arith.constant 0 : i32
    return %arg0, %c0_i32, %c0_i32_0 : i32, i32, i32
  }
}

</mosaic_0001>

<llo_original>
// kernel: tpu_custom_call.1
$region0: #{tpu_custom_call.1}
  #allocation0 [shape = 'u32[]', space=smem, size = 0x4, offset = 0x4, fixed_abs, tag = 'smem constant byte address 0x4 - core index']
  #allocation1 [shape = 'u32[144,128]{1,0:T(1,128)}', space=vmem, size = 0x12000, scoped, tag = 'internal scratch']
  %s0 = inlined_call_operand.vmem [shape: s32[4,128,1], index: 0, kind: input, shape index: {}]
  %s1 = inlined_call_operand.vmem [shape: f32[4,128,32], index: 1, kind: input, shape index: {}]
  %s2 = inlined_call_operand.hbm [shape: bf16[10,128], index: 2, kind: input, shape index: {}]
  %s3 = inlined_call_operand.hbm [shape: bf16[32,128], index: 3, kind: input, shape index: {}]
  %s4 = inlined_call_operand.vmem [shape: bf16[128,256], index: 4, kind: input, shape index: {}]
  %s5 = inlined_call_operand.vmem [shape: bf16[256,512], index: 5, kind: input, shape index: {}]
  %s6 = inlined_call_operand.hbm [shape: bf16[512,1024], index: 6, kind: input, shape index: {}]
  %s7 = inlined_call_operand.vmem [shape: bf16[1024,128], index: 7, kind: input, shape index: {}]
  %s8 = inlined_call_operand.hbm [shape: f32[1,5632], index: 8, kind: input, shape index: {}]
  %s9 = inlined_call_operand.hbm [shape: f32[4,128,128], index: 9, kind: output, shape index: {}]
  %s10 = sld [smem:[#allocation0]]
  $region85: #{tpu_custom_call.1} parent=0
    _
  %s12 = ssub.s32 1, %s10
  %s13 = scalar_select 0, %s12, %s10
  $region1: #{tpu_custom_call.1} parent=0
    #allocation2 [shape = 'u8[4096]{0}', space=vmem, size = 0x1000, scoped, tag = 'input window, operand 2, single buffered']
    #allocation3 [shape = 's32[2]{0}', space=sflag, size = 0x8, scoped, tag = 'scoped memory for tpu_custom_call.1']
    #allocation4 [shape = 's32[2]{0}', space=sflag, size = 0x8, scoped, tag = 'scoped memory for tpu_custom_call.1']
    #allocation5 [shape = 'u8[8192]{0}', space=vmem, size = 0x2000, scoped, tag = 'input window, operand 3, single buffered']
    #allocation6 [shape = 's32[1]{0}', space=sflag, size = 0x4, scoped, tag = 'scoped memory for tpu_custom_call.1']
    #allocation7 [shape = 'u8[1048576]{0}', space=vmem, size = 0x100000, scoped, tag = 'input window, operand 6, single buffered']
    #allocation8 [shape = 'u8[22528]{0}', space=vmem, size = 0x5800, scoped, tag = 'input window, operand 8, single buffered']
    #allocation9 [shape = 's32[1]{0}', space=sflag, size = 0x4, scoped, tag = 'scoped memory for tpu_custom_call.1']
    #allocation10 [shape = 'u8[131072]{0}', space=vmem, size = 0x20000, scoped, tag = 'output window, operand 0']
    %14 = vsyncpa [#allocation3], 0
    %15 = vsyncpa [#allocation6], 0
    %16 = vsyncpa [#allocation9], 0
    %17 = vsyncpa [#allocation4], 0
    %s18 = scalar_lea.sflag [#allocation4], 1
    %19 = vsyncpa %s18, 0
    loop: start=0, step=1, limit=6
    $region2: #{tpu_custom_call.1} parent=1 // loop_pre_header
      _
    $region3: #{tpu_custom_call.1} parent=1 // loop_header
      %s21 = sphi 0, %s25
      %p22 = scmp.ge.s32.totalorder %s21, 6
      %s31 = sphi 0, %s33
      %s34 = sphi 0, %s31
      %s35 = sphi 0, %s34
      %s51 = sphi 0, %s35
      %s57 = sphi 0, %s59
      %s60 = sphi 0, %s57
      %s61 = sphi 0, %s60
      %s77 = sphi 0, %s61
      %s81 = sphi 0, %s81
      %s83 = sphi 0, %s81
      %s84 = sphi 0, %s83
      %s98 = sphi 0, %s84
      %s102 = sphi 0, %s102
      %s104 = sphi 0, %s102
      %s105 = sphi 0, %s104
      %s119 = sphi 0, %s105
      %s123 = sphi 0, %s123
      %s125 = sphi 0, %s123
      %s126 = sphi 0, %s125
      %s140 = sphi 0, %s126
      %s144 = sphi 0, %s144
      %s146 = sphi 0, %s144
      %s147 = sphi 0, %s146
      %s161 = sphi 0, %s147
      %s165 = sphi 0, %s165
      %s167 = sphi 0, %s165
      %s168 = sphi 0, %s167
      %s182 = sphi 0, %s168
      %s186 = sphi 0, %s186
      %s188 = sphi 0, %s186
      %s189 = sphi 0, %s188
      %s203 = sphi 0, %s189
      %s207 = sphi 0, %s207
      %s209 = sphi 0, %s207
      %s210 = sphi 0, %s209
      %s224 = sphi 0, %s210
      %s230 = sphi 0, %s232
      %s233 = sphi 0, %s230
      %s234 = sphi 0, %s233
      %s250 = sphi 0, %s234
    $region4: #{tpu_custom_call.1} parent=1 // loop_header_branch
      %24 = sbr.rel (%p22) target = $region8
    $region5: #{tpu_custom_call.1} parent=1 // loop_body
      %s26 = ssub.s32 %s21, 1
      %s27 = ssub.s32 %s21, 2
      %s28 = sadd.s32 %s21, 1
      %s29 = ssub.s32 %s21, %s28
      %p30 = scmp.eq.s32.totalorder %s29, 0
      %s32 = sadd.s32 %s31, 1
      %s33 = scalar_select %p30, %s31, %s32
      %p36 = pneg %p30
      %p37 = scmp.eq.s32.totalorder %s21, 3
      %p38 = por %p36, %p37
      %p39 = scmp.ne.s32.totalorder %s31, %s34
      %p40 = scmp.eq.s32.totalorder %s21, 0
      %p41 = por %p39, %p40
      %p42 = scmp.ne.s32.totalorder %s31, %s34
      %p43 = scmp.eq.s32.totalorder %s26, 3
      %p44 = por %p42, %p43
      %p45 = scmp.ne.s32.totalorder %s34, %s35
      %p46 = scmp.eq.s32.totalorder %s26, 0
      %p47 = por %p45, %p46
      %p48 = scmp.ne.s32.totalorder %s34, %s35
      %p49 = scmp.eq.s32.totalorder %s27, 3
      %p50 = por %p48, %p49
      %p52 = scmp.ne.s32.totalorder %s35, %s51
      %p53 = scmp.eq.s32.totalorder %s27, 0
      %p54 = por %p52, %p53
      %s55 = ssub.s32 %s21, %s28
      %p56 = scmp.eq.s32.totalorder %s55, 0
      %s58 = sadd.s32 %s57, 1
      %s59 = scalar_select %p56, %s57, %s58
      %p62 = pneg %p56
      %p63 = scmp.eq.s32.totalorder %s21, 3
      %p64 = por %p62, %p63
      %p65 = scmp.ne.s32.totalorder %s57, %s60
      %p66 = scmp.eq.s32.totalorder %s21, 0
      %p67 = por %p65, %p66
      %p68 = scmp.ne.s32.totalorder %s57, %s60
      %p69 = scmp.eq.s32.totalorder %s26, 3
      %p70 = por %p68, %p69
      %p71 = scmp.ne.s32.totalorder %s60, %s61
      %p72 = scmp.eq.s32.totalorder %s26, 0
      %p73 = por %p71, %p72
      %p74 = scmp.ne.s32.totalorder %s60, %s61
      %p75 = scmp.eq.s32.totalorder %s27, 3
      %p76 = por %p74, %p75
      %p78 = scmp.ne.s32.totalorder %s61, %s77
      %p79 = scmp.eq.s32.totalorder %s27, 0
      %p80 = por %p78, %p79
      %s82 = sadd.s32 %s81, 1
      %p85 = scmp.eq.s32.totalorder %s21, 3
      %p86 = scmp.ne.s32.totalorder %s81, %s83
      %p87 = scmp.eq.s32.totalorder %s21, 0
      %p88 = por %p86, %p87
      %p89 = scmp.ne.s32.totalorder %s81, %s83
      %p90 = scmp.eq.s32.totalorder %s26, 3
      %p91 = por %p89, %p90
      %p92 = scmp.ne.s32.totalorder %s83, %s84
      %p93 = scmp.eq.s32.totalorder %s26, 0
      %p94 = por %p92, %p93
      %p95 = scmp.ne.s32.totalorder %s83, %s84
      %p96 = scmp.eq.s32.totalorder %s27, 3
      %p97 = por %p95, %p96
      %p99 = scmp.ne.s32.totalorder %s84, %s98
      %p100 = scmp.eq.s32.totalorder %s27, 0
      %p101 = por %p99, %p100
      %s103 = sadd.s32 %s102, 1
      %p106 = scmp.eq.s32.totalorder %s21, 3
      %p107 = scmp.ne.s32.totalorder %s102, %s104
      %p108 = scmp.eq.s32.totalorder %s21, 0
      %p109 = por %p107, %p108
      %p110 = scmp.ne.s32.totalorder %s102, %s104
      %p111 = scmp.eq.s32.totalorder %s26, 3
      %p112 = por %p110, %p111
      %p113 = scmp.ne.s32.totalorder %s104, %s105
      %p114 = scmp.eq.s32.totalorder %s26, 0
      %p115 = por %p113, %p114
      %p116 = scmp.ne.s32.totalorder %s104, %s105
      %p117 = scmp.eq.s32.totalorder %s27, 3
      %p118 = por %p116, %p117
      %p120 = scmp.ne.s32.totalorder %s105, %s119
      %p121 = scmp.eq.s32.totalorder %s27, 0
      %p122 = por %p120, %p121
      %s124 = sadd.s32 %s123, 1
      %p127 = scmp.eq.s32.totalorder %s21, 3
      %p128 = scmp.ne.s32.totalorder %s123, %s125
      %p129 = scmp.eq.s32.totalorder %s21, 0
      %p130 = por %p128, %p129
      %p131 = scmp.ne.s32.totalorder %s123, %s125
      %p132 = scmp.eq.s32.totalorder %s26, 3
      %p133 = por %p131, %p132
      %p134 = scmp.ne.s32.totalorder %s125, %s126
      %p135 = scmp.eq.s32.totalorder %s26, 0
      %p136 = por %p134, %p135
      %p137 = scmp.ne.s32.totalorder %s125, %s126
      %p138 = scmp.eq.s32.totalorder %s27, 3
      %p139 = por %p137, %p138
      %p141 = scmp.ne.s32.totalorder %s126, %s140
      %p142 = scmp.eq.s32.totalorder %s27, 0
      %p143 = por %p141, %p142
      %s145 = sadd.s32 %s144, 1
      %p148 = scmp.eq.s32.totalorder %s21, 3
      %p149 = scmp.ne.s32.totalorder %s144, %s146
      %p150 = scmp.eq.s32.totalorder %s21, 0
      %p151 = por %p149, %p150
      %p152 = scmp.ne.s32.totalorder %s144, %s146
      %p153 = scmp.eq.s32.totalorder %s26, 3
      %p154 = por %p152, %p153
      %p155 = scmp.ne.s32.totalorder %s146, %s147
      %p156 = scmp.eq.s32.totalorder %s26, 0
      %p157 = por %p155, %p156
      %p158 = scmp.ne.s32.totalorder %s146, %s147
      %p159 = scmp.eq.s32.totalorder %s27, 3
      %p160 = por %p158, %p159
      %p162 = scmp.ne.s32.totalorder %s147, %s161
      %p163 = scmp.eq.s32.totalorder %s27, 0
      %p164 = por %p162, %p163
      %s166 = sadd.s32 %s165, 1
      %p169 = scmp.eq.s32.totalorder %s21, 3
      %p170 = scmp.ne.s32.totalorder %s165, %s167
      %p171 = scmp.eq.s32.totalorder %s21, 0
      %p172 = por %p170, %p171
      %p173 = scmp.ne.s32.totalorder %s165, %s167
      %p174 = scmp.eq.s32.totalorder %s26, 3
      %p175 = por %p173, %p174
      %p176 = scmp.ne.s32.totalorder %s167, %s168
      %p177 = scmp.eq.s32.totalorder %s26, 0
      %p178 = por %p176, %p177
      %p179 = scmp.ne.s32.totalorder %s167, %s168
      %p180 = scmp.eq.s32.totalorder %s27, 3
      %p181 = por %p179, %p180
      %p183 = scmp.ne.s32.totalorder %s168, %s182
      %p184 = scmp.eq.s32.totalorder %s27, 0
      %p185 = por %p183, %p184
      %s187 = sadd.s32 %s186, 1
      %p190 = scmp.eq.s32.totalorder %s21, 3
      %p191 = scmp.ne.s32.totalorder %s186, %s188
      %p192 = scmp.eq.s32.totalorder %s21, 0
      %p193 = por %p191, %p192
      %p194 = scmp.ne.s32.totalorder %s186, %s188
      %p195 = scmp.eq.s32.totalorder %s26, 3
      %p196 = por %p194, %p195
      %p197 = scmp.ne.s32.totalorder %s188, %s189
      %p198 = scmp.eq.s32.totalorder %s26, 0
      %p199 = por %p197, %p198
      %p200 = scmp.ne.s32.totalorder %s188, %s189
      %p201 = scmp.eq.s32.totalorder %s27, 3
      %p202 = por %p200, %p201
      %p204 = scmp.ne.s32.totalorder %s189, %s203
      %p205 = scmp.eq.s32.totalorder %s27, 0
      %p206 = por %p204, %p205
      %s208 = sadd.s32 %s207, 1
      %p211 = scmp.eq.s32.totalorder %s21, 3
      %p212 = scmp.ne.s32.totalorder %s207, %s209
      %p213 = scmp.eq.s32.totalorder %s21, 0
      %p214 = por %p212, %p213
      %p215 = scmp.ne.s32.totalorder %s207, %s209
      %p216 = scmp.eq.s32.totalorder %s26, 3
      %p217 = por %p215, %p216
      %p218 = scmp.ne.s32.totalorder %s209, %s210
      %p219 = scmp.eq.s32.totalorder %s26, 0
      %p220 = por %p218, %p219
      %p221 = scmp.ne.s32.totalorder %s209, %s210
      %p222 = scmp.eq.s32.totalorder %s27, 3
      %p223 = por %p221, %p222
      %p225 = scmp.ne.s32.totalorder %s210, %s224
      %p226 = scmp.eq.s32.totalorder %s27, 0
      %p227 = por %p225, %p226
      %s228 = ssub.s32 %s21, %s28
      %p229 = scmp.eq.s32.totalorder %s228, 0
      %s231 = sadd.s32 %s230, 1
      %s232 = scalar_select %p229, %s230, %s231
      %p235 = pneg %p229
      %p236 = scmp.eq.s32.totalorder %s21, 3
      %p237 = por %p235, %p236
      %p238 = scmp.ne.s32.totalorder %s230, %s233
      %p239 = scmp.eq.s32.totalorder %s21, 0
      %p240 = por %p238, %p239
      %p241 = scmp.ne.s32.totalorder %s230, %s233
      %p242 = scmp.eq.s32.totalorder %s26, 3
      %p243 = por %p241, %p242
      %p244 = scmp.ne.s32.totalorder %s233, %s234
      %p245 = scmp.eq.s32.totalorder %s26, 0
      %p246 = por %p244, %p245
      %p247 = scmp.ne.s32.totalorder %s233, %s234
      %p248 = scmp.eq.s32.totalorder %s27, 3
      %p249 = por %p247, %p248
      %p251 = scmp.ne.s32.totalorder %s234, %s250
      %p252 = scmp.eq.s32.totalorder %s27, 0
      %p253 = por %p251, %p252
      %p254 = scmp.le.s32.totalorder 1, %s21
      %p255 = scmp.lt.s32.totalorder %s21, 5
      %p256 = pnand %p254, %p255
      %p257 = pneg %p256
      // Predicated region
      $region9: #{tpu_custom_call.1} parent=5 // pred_check
        _
      $region10: #{tpu_custom_call.1} parent=5 // pred_check_branch
        %259 = sbr.rel (%p256) target = $region12
      $region11: #{tpu_custom_call.1} parent=5 // pred_region
        %s260 = ssub.s32 %s21, 1
        // Predicated region
        $region13: #{tpu_custom_call.1} parent=11 // pred_check
          %p261 = pneg %p94
        $region14: #{tpu_custom_call.1} parent=11 // pred_check_branch
          %263 = sbr.rel (%p261) target = $region16
        $region15: #{tpu_custom_call.1} parent=11 // pred_region
          %s265 = ssub.s32 128, 128
          %266 = vsyncadd [#allocation3], %s265
          %s267 = sshll.u32 [#allocation2], 4
          %s268 = int_to_ptr.vmem [resolvable:$true] %s267
          %273 = dma.hbm_to_vmem [thread:$0]  %s2, 128, %s268, [#allocation3], 64, 64, 4
        $region16: #{tpu_custom_call.1} parent=11 // pred_fallthru
          _
        // Predicated region
        $region17: #{tpu_custom_call.1} parent=11 // pred_check
          %p274 = pneg %p115
        $region18: #{tpu_custom_call.1} parent=11 // pred_check_branch
          %276 = sbr.rel (%p274) target = $region20
        $region19: #{tpu_custom_call.1} parent=11 // pred_region
          %s278 = ssub.s32 256, 256
          %279 = vsyncadd [#allocation6], %s278
          %s280 = sshll.u32 [#allocation5], 4
          %s281 = int_to_ptr.vmem [resolvable:$true] %s280
          %286 = dma.hbm_to_vmem [thread:$0]  %s3, 256, %s281, [#allocation6], 64, 64, 4
        $region20: #{tpu_custom_call.1} parent=11 // pred_fallthru
          _
        // Predicated region
        $region21: #{tpu_custom_call.1} parent=11 // pred_check
          %p287 = pneg %p136
        $region22: #{tpu_custom_call.1} parent=11 // pred_check_branch
          %289 = sbr.rel (%p287) target = $region24
        $region23: #{tpu_custom_call.1} parent=11 // pred_region
          _
        $region24: #{tpu_custom_call.1} parent=11 // pred_fallthru
          _
        // Predicated region
        $region25: #{tpu_custom_call.1} parent=11 // pred_check
          %p290 = pneg %p157
        $region26: #{tpu_custom_call.1} parent=11 // pred_check_branch
          %292 = sbr.rel (%p290) target = $region28
        $region27: #{tpu_custom_call.1} parent=11 // pred_region
          _
        $region28: #{tpu_custom_call.1} parent=11 // pred_fallthru
          _
        // Predicated region
        $region29: #{tpu_custom_call.1} parent=11 // pred_check
          %p293 = pneg %p178
        $region30: #{tpu_custom_call.1} parent=11 // pred_check_branch
          %295 = sbr.rel (%p293) target = $region32
        $region31: #{tpu_custom_call.1} parent=11 // pred_region
          %s297 = ssub.s32 32768, 32768
          %298 = vsyncadd [#allocation6], %s297
          %s299 = sshll.u32 [#allocation7], 4
          %s300 = int_to_ptr.vmem [resolvable:$true] %s299
          %305 = dma.hbm_to_vmem [thread:$0]  %s6, 32768, %s300, [#allocation6], 512, 512, 32
        $region32: #{tpu_custom_call.1} parent=11 // pred_fallthru
          _
        // Predicated region
        $region33: #{tpu_custom_call.1} parent=11 // pred_check
          %p306 = pneg %p199
        $region34: #{tpu_custom_call.1} parent=11 // pred_check_branch
          %308 = sbr.rel (%p306) target = $region36
        $region35: #{tpu_custom_call.1} parent=11 // pred_region
          _
        $region36: #{tpu_custom_call.1} parent=11 // pred_fallthru
          _
        // Predicated region
        $region37: #{tpu_custom_call.1} parent=11 // pred_check
          %p309 = pneg %p220
        $region38: #{tpu_custom_call.1} parent=11 // pred_check_branch
          %311 = sbr.rel (%p309) target = $region40
        $region39: #{tpu_custom_call.1} parent=11 // pred_region
          %s313 = ssub.s32 704, 704
          %314 = vsyncadd [#allocation9], %s313
          %s316 = sshll.u32 [#allocation8], 4
          %s317 = int_to_ptr.vmem [resolvable:$true] %s316
          %319 = dma.hbm_to_vmem [thread:$0]  %s8, 704, %s317, [#allocation9]
        $region40: #{tpu_custom_call.1} parent=11 // pred_fallthru
          _
      $region12: #{tpu_custom_call.1} parent=5 // pred_fallthru
        _
      %p320 = scmp.lt.s32.totalorder %s21, 4
      // Predicated region
      $region41: #{tpu_custom_call.1} parent=5 // pred_check
        %p321 = pneg %p320
      $region42: #{tpu_custom_call.1} parent=5 // pred_check_branch
        %323 = sbr.rel (%p321) target = $region44
      $region43: #{tpu_custom_call.1} parent=5 // pred_region
        // Predicated region
        $region45: #{tpu_custom_call.1} parent=43 // pred_check
          %p324 = pneg %p41
        $region46: #{tpu_custom_call.1} parent=43 // pred_check_branch
          %326 = sbr.rel (%p324) target = $region48
        $region47: #{tpu_custom_call.1} parent=43 // pred_region
          %p327 = scmp.lt.s32.totalorder %s21, 3
          %s328 = scalar_select %p327, %s21, 3
          %s329 = smul.addr %s328, 16
          %s330 = smul.addr %s329, 8
          %s331 = scalar_lea.vmem %s0, %s330
        $region48: #{tpu_custom_call.1} parent=43 // pred_fallthru
          _
        // Predicated region
        $region49: #{tpu_custom_call.1} parent=43 // pred_check
          %p332 = pneg %p67
        $region50: #{tpu_custom_call.1} parent=43 // pred_check_branch
          %334 = sbr.rel (%p332) target = $region52
        $region51: #{tpu_custom_call.1} parent=43 // pred_region
          %p335 = scmp.lt.s32.totalorder %s21, 3
          %s336 = scalar_select %p335, %s21, 3
          %s337 = smul.addr %s336, 16
          %s338 = smul.addr %s337, 8
          %s339 = scalar_lea.vmem %s1, %s338
        $region52: #{tpu_custom_call.1} parent=43 // pred_fallthru
          _
      $region44: #{tpu_custom_call.1} parent=5 // pred_fallthru
        _
      %p340 = scmp.le.s32.totalorder 1, %s21
      %p341 = scmp.lt.s32.totalorder %s21, 5
      %p342 = pnand %p340, %p341
      %p343 = pneg %p342
      // Predicated region
      $region53: #{tpu_custom_call.1} parent=5 // pred_check
        _
      $region54: #{tpu_custom_call.1} parent=5 // pred_check_branch
        %345 = sbr.rel (%p342) target = $region56
      $region55: #{tpu_custom_call.1} parent=5 // pred_region
        %s346 = ssub.s32 %s21, 1
        // Predicated region
        $region57: #{tpu_custom_call.1} parent=55 // pred_check
          %p347 = pneg %p94
        $region58: #{tpu_custom_call.1} parent=55 // pred_check_branch
          %349 = sbr.rel (%p347) target = $region60
        $region59: #{tpu_custom_call.1} parent=55 // pred_region
          %350 = dma.done [#allocation3], 128
        $region60: #{tpu_custom_call.1} parent=55 // pred_fallthru
          _
        // Predicated region
        $region61: #{tpu_custom_call.1} parent=55 // pred_check
          %p351 = pneg %p115
        $region62: #{tpu_custom_call.1} parent=55 // pred_check_branch
          %353 = sbr.rel (%p351) target = $region64
        $region63: #{tpu_custom_call.1} parent=55 // pred_region
          %354 = dma.done [#allocation6], 256
        $region64: #{tpu_custom_call.1} parent=55 // pred_fallthru
          _
        // Predicated region
        $region65: #{tpu_custom_call.1} parent=55 // pred_check
          %p355 = pneg %p178
        $region66: #{tpu_custom_call.1} parent=55 // pred_check_branch
          %357 = sbr.rel (%p355) target = $region68
        $region67: #{tpu_custom_call.1} parent=55 // pred_region
          %358 = dma.done [#allocation6], 32768
        $region68: #{tpu_custom_call.1} parent=55 // pred_fallthru
          _
        // Predicated region
        $region69: #{tpu_custom_call.1} parent=55 // pred_check
          %p359 = pneg %p220
        $region70: #{tpu_custom_call.1} parent=55 // pred_check_branch
          %361 = sbr.rel (%p359) target = $region72
        $region71: #{tpu_custom_call.1} parent=55 // pred_region
          %362 = dma.done [#allocation9], 704
        $region72: #{tpu_custom_call.1} parent=55 // pred_fallthru
          _
        %p363 = scmp.lt.s32.totalorder %s26, 3
        %s364 = scalar_select %p363, %s26, 3
        %s365 = smul.addr %s364, 16
        %s366 = smul.addr %s365, 8
        %s367 = scalar_lea.vmem %s0, %s366
        %p368 = pneg %p47
        %p369 = pneg %p44
        %p370 = scmp.lt.s32.totalorder %s26, 3
        %s371 = scalar_select %p370, %s26, 3
        %s372 = smul.addr %s371, 16
        %s373 = smul.addr %s372, 8
        %s374 = scalar_lea.vmem %s1, %s373
        %p375 = pneg %p73
        %p376 = pneg %p70
        %p377 = pneg %p94
        %p378 = pneg %p91
        %p379 = pneg %p115
        %p380 = pneg %p112
        %p381 = pneg %p136
        %p382 = pneg %p133
        %p383 = pneg %p157
        %p384 = pneg %p154
        %p385 = pneg %p178
        %p386 = pneg %p175
        %p387 = pneg %p199
        %p388 = pneg %p196
        %p389 = pneg %p220
        %p390 = pneg %p217
        %p391 = pneg %p246
        %p392 = pneg %p243
        %s393 = sand.u32 %s233, 1
        %s394 = scalar_lea.sflag [#allocation4], %s393
        %s395 = sand.u32 %s233, 1
        %s396 = smul.addr %s395, 128
        %s397 = scalar_lea.vmem [#allocation10], %s396
        %p398 = scmp.lt.s32.totalorder %s26, 3
        %s399 = scalar_select %p398, %s26, 3
        %s400 = smul.addr %s399, 16
        %s401 = smul.addr %s400, 8
        %s402 = scalar_lea.vmem %s0, %s401
        %p403 = scmp.lt.s32.totalorder %s26, 3
        %s404 = scalar_select %p403, %s26, 3
        %s405 = smul.addr %s404, 16
        %s406 = smul.addr %s405, 8
        %s407 = scalar_lea.vmem %s1, %s406
        %v409 = vld [vmem:[%s402] sm:$0xff]
        %v410 = vld [vmem:[%s402 + $0x8] sm:$0xff]
        %v411 = vld [vmem:[%s402 + $0x10] sm:$0xff]
        %v412 = vld [vmem:[%s402 + $0x18] sm:$0xff]
        %v413 = vld [vmem:[%s402 + $0x20] sm:$0xff]
        %v414 = vld [vmem:[%s402 + $0x28] sm:$0xff]
        %v415 = vld [vmem:[%s402 + $0x30] sm:$0xff]
        %v416 = vld [vmem:[%s402 + $0x38] sm:$0xff]
        %v417 = vld [vmem:[%s402 + $0x40] sm:$0xff]
        %v418 = vld [vmem:[%s402 + $0x48] sm:$0xff]
        %v419 = vld [vmem:[%s402 + $0x50] sm:$0xff]
        %v420 = vld [vmem:[%s402 + $0x58] sm:$0xff]
        %v421 = vld [vmem:[%s402 + $0x60] sm:$0xff]
        %v422 = vld [vmem:[%s402 + $0x68] sm:$0xff]
        %v423 = vld [vmem:[%s402 + $0x70] sm:$0xff]
        %v424 = vld [vmem:[%s402 + $0x78] sm:$0xff]
        %v425 = vlaneseq
        %v426 = vand.u32 %v425, 127
        %427 = vset.pattern.permute.xlu0 0
        %428 = vperm.xlu0 %427, %v409
        %v429 = vpop.permute.xlu0 %428
        %430 = vset.pattern.permute.xlu0 0
        %431 = vperm.xlu0 %430, %v410
        %v432 = vpop.permute.xlu0 %431
        %433 = vset.pattern.permute.xlu0 0
        %434 = vperm.xlu0 %433, %v411
        %v435 = vpop.permute.xlu0 %434
        %436 = vset.pattern.permute.xlu0 0
        %437 = vperm.xlu0 %436, %v412
        %v438 = vpop.permute.xlu0 %437
        %439 = vset.pattern.permute.xlu0 0
        %440 = vperm.xlu0 %439, %v413
        %v441 = vpop.permute.xlu0 %440
        %442 = vset.pattern.permute.xlu0 0
        %443 = vperm.xlu0 %442, %v414
        %v444 = vpop.permute.xlu0 %443
        %445 = vset.pattern.permute.xlu0 0
        %446 = vperm.xlu0 %445, %v415
        %v447 = vpop.permute.xlu0 %446
        %448 = vset.pattern.permute.xlu0 0
        %449 = vperm.xlu0 %448, %v416
        %v450 = vpop.permute.xlu0 %449
        %451 = vset.pattern.permute.xlu0 0
        %452 = vperm.xlu0 %451, %v417
        %v453 = vpop.permute.xlu0 %452
        %454 = vset.pattern.permute.xlu0 0
        %455 = vperm.xlu0 %454, %v418
        %v456 = vpop.permute.xlu0 %455
        %457 = vset.pattern.permute.xlu0 0
        %458 = vperm.xlu0 %457, %v419
        %v459 = vpop.permute.xlu0 %458
        %460 = vset.pattern.permute.xlu0 0
        %461 = vperm.xlu0 %460, %v420
        %v462 = vpop.permute.xlu0 %461
        %463 = vset.pattern.permute.xlu0 0
        %464 = vperm.xlu0 %463, %v421
        %v465 = vpop.permute.xlu0 %464
        %466 = vset.pattern.permute.xlu0 0
        %467 = vperm.xlu0 %466, %v422
        %v468 = vpop.permute.xlu0 %467
        %469 = vset.pattern.permute.xlu0 0
        %470 = vperm.xlu0 %469, %v423
        %v471 = vpop.permute.xlu0 %470
        %472 = vset.pattern.permute.xlu0 0
        %473 = vperm.xlu0 %472, %v424
        %v474 = vpop.permute.xlu0 %473
        %vm475 = vcmp.eq.s32.totalorder %v426, %v429
        %vm476 = vcmp.eq.s32.totalorder %v426, %v432
        %vm477 = vcmp.eq.s32.totalorder %v426, %v435
        %vm478 = vcmp.eq.s32.totalorder %v426, %v438
        %vm479 = vcmp.eq.s32.totalorder %v426, %v441
        %vm480 = vcmp.eq.s32.totalorder %v426, %v444
        %vm481 = vcmp.eq.s32.totalorder %v426, %v447
        %vm482 = vcmp.eq.s32.totalorder %v426, %v450
        %vm483 = vcmp.eq.s32.totalorder %v426, %v453
        %vm484 = vcmp.eq.s32.totalorder %v426, %v456
        %vm485 = vcmp.eq.s32.totalorder %v426, %v459
        %vm486 = vcmp.eq.s32.totalorder %v426, %v462
        %vm487 = vcmp.eq.s32.totalorder %v426, %v465
        %vm488 = vcmp.eq.s32.totalorder %v426, %v468
        %vm489 = vcmp.eq.s32.totalorder %v426, %v471
        %vm490 = vcmp.eq.s32.totalorder %v426, %v474
        %v491 = vsel %vm475, 1, 0
        %v492 = vsel %vm476, 1, 0
        %v493 = vsel %vm477, 1, 0
        %v494 = vsel %vm478, 1, 0
        %v495 = vsel %vm479, 1, 0
        %v496 = vsel %vm480, 1, 0
        %v497 = vsel %vm481, 1, 0
        %v498 = vsel %vm482, 1, 0
        %v499 = vsel %vm483, 1, 0
        %v500 = vsel %vm484, 1, 0
        %v501 = vsel %vm485, 1, 0
        %v502 = vsel %vm486, 1, 0
        %v503 = vsel %vm487, 1, 0
        %v504 = vsel %vm488, 1, 0
        %v505 = vsel %vm489, 1, 0
        %v506 = vsel %vm490, 1, 0
        %v507 = vcvt.s32.f32 %v491
        %v508 = vcvt.s32.f32 %v492
        %v509 = vcvt.s32.f32 %v493
        %v510 = vcvt.s32.f32 %v494
        %v511 = vcvt.s32.f32 %v495
        %v512 = vcvt.s32.f32 %v496
        %v513 = vcvt.s32.f32 %v497
        %v514 = vcvt.s32.f32 %v498
        %v515 = vcvt.s32.f32 %v499
        %v516 = vcvt.s32.f32 %v500
        %v517 = vcvt.s32.f32 %v501
        %v518 = vcvt.s32.f32 %v502
        %v519 = vcvt.s32.f32 %v503
        %v520 = vcvt.s32.f32 %v504
        %v521 = vcvt.s32.f32 %v505
        %v522 = vcvt.s32.f32 %v506
        %v523 = vpack.c.bf16 %v508, %v507
        %v524 = vpack.c.bf16 %v510, %v509
        %v525 = vpack.c.bf16 %v512, %v511
        %v526 = vpack.c.bf16 %v514, %v513
        %v527 = vpack.c.bf16 %v516, %v515
        %v528 = vpack.c.bf16 %v518, %v517
        %v529 = vpack.c.bf16 %v520, %v519
        %v530 = vpack.c.bf16 %v522, %v521
        %v531 = vld [vmem:[#allocation2] sm:$0xf]
        %v532 = vld [vmem:[#allocation2 + $0x4] sm:$0x1]
        %v533 = vld [vmem:[%s407] sm:$0xff]
        %v534 = vld [vmem:[%s407 + $0x8] sm:$0xff]
        %v535 = vld [vmem:[%s407 + $0x10] sm:$0xff]
        %v536 = vld [vmem:[%s407 + $0x18] sm:$0xff]
        %v537 = vld [vmem:[%s407 + $0x20] sm:$0xff]
        %v538 = vld [vmem:[%s407 + $0x28] sm:$0xff]
        %v539 = vld [vmem:[%s407 + $0x30] sm:$0xff]
        %v540 = vld [vmem:[%s407 + $0x38] sm:$0xff]
        %v541 = vld [vmem:[%s407 + $0x40] sm:$0xff]
        %v542 = vld [vmem:[%s407 + $0x48] sm:$0xff]
        %v543 = vld [vmem:[%s407 + $0x50] sm:$0xff]
        %v544 = vld [vmem:[%s407 + $0x58] sm:$0xff]
        %v545 = vld [vmem:[%s407 + $0x60] sm:$0xff]
        %v546 = vld [vmem:[%s407 + $0x68] sm:$0xff]
        %v547 = vld [vmem:[%s407 + $0x70] sm:$0xff]
        %v548 = vld [vmem:[%s407 + $0x78] sm:$0xff]
        %v549 = vpack.c.bf16 %v534, %v533
        %v550 = vpack.c.bf16 %v536, %v535
        %v551 = vpack.c.bf16 %v538, %v537
        %v552 = vpack.c.bf16 %v540, %v539
        %v553 = vpack.c.bf16 %v542, %v541
        %v554 = vpack.c.bf16 %v544, %v543
        %v555 = vpack.c.bf16 %v546, %v545
        %v556 = vpack.c.bf16 %v548, %v547
        %v557 = vld [vmem:[#allocation5] sm:$0xf]
        %v558 = vld [vmem:[#allocation5 + $0x4] sm:$0xf]
        %v559 = vld [vmem:[#allocation5 + $0x8] sm:$0xf]
        %v560 = vld [vmem:[#allocation5 + $0xc] sm:$0xf]
        %v565 = vunpack.c.l.b16 %v557
        %v566 = vunpack.c.l.b16 %v558
        %v567 = vunpack.c.l.b16 %v559
        %v568 = vunpack.c.l.b16 %v560
        %v569 = vpack.c.b16 %v566, %v565
        %v570 = vpack.c.b16 %v568, %v567
        %vm573 = vcmask 261120
        %v575 = vsel %vm573, %v549, 0
        %v578 = vsel %vm573, %v550, 0
        %v581 = vsel %vm573, %v551, 0
        %v584 = vsel %vm573, %v552, 0
        %v587 = vsel %vm573, %v553, 0
        %v590 = vsel %vm573, %v554, 0
        %v593 = vsel %vm573, %v555, 0
        %v596 = vsel %vm573, %v556, 0
        %598 = vmatprep.subr.bf16.mxu0 0
        %599 = vmatpush1.bf16.msra.mxu0 %v569
        %600 = vmatprep.subr.bf16.mxu0 0
        %601 = vmatpush1.bf16.msra.mxu0 %v570
        %602 = vmatprep.subr.bf16.mxu0 0
        %603 = vmatpush1.bf16.msra.mxu0 0
        %604 = vmatprep.subr.bf16.mxu0 0
        %605 = vmatpush1.bf16.msra.mxu0 0
        %606 = vmatprep.subr.bf16.mxu0 0
        %607 = vmatpush1.bf16.msra.mxu0 0
        %608 = vmatprep.subr.bf16.mxu0 0
        %609 = vmatpush1.bf16.msra.mxu0 0
        %610 = vmatprep.subr.bf16.mxu0 0
        %611 = vmatpush1.bf16.msra.mxu0 0
        %612 = vmatprep.subr.bf16.mxu0 0
        %613 = vmatpush1.bf16.msra.mxu0 0
        %614 = vmatprep.subr.bf16.mxu0 0
        %615 = vmatpush1.bf16.msra.mxu0 0
        %616 = vmatprep.subr.bf16.mxu0 0
        %617 = vmatpush1.bf16.msra.mxu0 0
        %618 = vmatprep.subr.bf16.mxu0 0
        %619 = vmatpush1.bf16.msra.mxu0 0
        %620 = vmatprep.subr.bf16.mxu0 0
        %621 = vmatpush1.bf16.msra.mxu0 0
        %622 = vmatprep.subr.bf16.mxu0 0
        %623 = vmatpush1.bf16.msra.mxu0 0
        %624 = vmatprep.subr.bf16.mxu0 0
        %625 = vmatpush1.bf16.msra.mxu0 0
        %626 = vmatprep.subr.bf16.mxu0 0
        %627 = vmatpush1.bf16.msra.mxu0 0
        %628 = vmatprep.subr.bf16.mxu0 0
        %629 = vmatpush1.bf16.msra.mxu0 0
        %630 = vmatprep.mubr.bf16.mxu0 0
        %631 = vmatmul.mubr.bf16.gmra.mrb[0].mxu0 %v575
        %v632 = vpop.f32.mrb[0].mxu0
        %v633 = vadd.f32 0.0, %v632
        %v634 = vpop.f32.mrb[0].mxu0
        %v635 = vpop.f32.mrb[0].mxu0
        %v636 = vadd.f32 0.0, %v635
        %v637 = vpop.f32.mrb[0].mxu0
        %638 = vmatprep.mubr.bf16.mxu0 0
        %639 = vmatmul.mubr.bf16.gmra.mrb[0].mxu0 %v578
        %v640 = vpop.f32.mrb[0].mxu0
        %v641 = vadd.f32 0.0, %v640
        %v642 = vpop.f32.mrb[0].mxu0
        %v643 = vpop.f32.mrb[0].mxu0
        %v644 = vadd.f32 0.0, %v643
        %v645 = vpop.f32.mrb[0].mxu0
        %646 = vmatprep.mubr.bf16.mxu0 0
        %647 = vmatmul.mubr.bf16.gmra.mrb[0].mxu0 %v581
        %v648 = vpop.f32.mrb[0].mxu0
        %v649 = vadd.f32 0.0, %v648
        %v650 = vpop.f32.mrb[0].mxu0
        %v651 = vpop.f32.mrb[0].mxu0
        %v652 = vadd.f32 0.0, %v651
        %v653 = vpop.f32.mrb[0].mxu0
        %654 = vmatprep.mubr.bf16.mxu0 0
        %655 = vmatmul.mubr.bf16.gmra.mrb[0].mxu0 %v584
        %v656 = vpop.f32.mrb[0].mxu0
        %v657 = vadd.f32 0.0, %v656
        %v658 = vpop.f32.mrb[0].mxu0
        %v659 = vpop.f32.mrb[0].mxu0
        %v660 = vadd.f32 0.0, %v659
        %v661 = vpop.f32.mrb[0].mxu0
        %662 = vmatprep.mubr.bf16.mxu0 0
        %663 = vmatmul.mubr.bf16.gmra.mrb[0].mxu0 %v587
        %v664 = vpop.f32.mrb[0].mxu0
        %v665 = vadd.f32 0.0, %v664
        %v666 = vpop.f32.mrb[0].mxu0
        %v667 = vpop.f32.mrb[0].mxu0
        %v668 = vadd.f32 0.0, %v667
        %v669 = vpop.f32.mrb[0].mxu0
        %670 = vmatprep.mubr.bf16.mxu0 0
        %671 = vmatmul.mubr.bf16.gmra.mrb[0].mxu0 %v590
        %v672 = vpop.f32.mrb[0].mxu0
        %v673 = vadd.f32 0.0, %v672
        %v674 = vpop.f32.mrb[0].mxu0
        %v675 = vpop.f32.mrb[0].mxu0
        %v676 = vadd.f32 0.0, %v675
        %v677 = vpop.f32.mrb[0].mxu0
        %678 = vmatprep.mubr.bf16.mxu0 0
        %679 = vmatmul.mubr.bf16.gmra.mrb[0].mxu0 %v593
        %v680 = vpop.f32.mrb[0].mxu0
        %v681 = vadd.f32 0.0, %v680
        %v682 = vpop.f32.mrb[0].mxu0
        %v683 = vpop.f32.mrb[0].mxu0
        %v684 = vadd.f32 0.0, %v683
        %v685 = vpop.f32.mrb[0].mxu0
        %686 = vmatprep.mubr.bf16.mxu0 0
        %687 = vmatmul.mubr.bf16.gmra.mrb[0].mxu0 %v596
        %v688 = vpop.f32.mrb[0].mxu0
        %v689 = vadd.f32 0.0, %v688
        %v690 = vpop.f32.mrb[0].mxu0
        %v691 = vpop.f32.mrb[0].mxu0
        %v692 = vadd.f32 0.0, %v691
        %v693 = vpop.f32.mrb[0].mxu0
        %694 = vdwg.mxu0
        %v697 = vunpack.c.l.b16 %v531
        %v698 = vunpack.c.l.b16 %v532
        %v699 = vpack.c.b16 %v698, %v697
        %vm700 = vcmask 80896
        %v702 = vsel %vm700, %v523, 0
        %v705 = vsel %vm700, %v524, 0
        %v708 = vsel %vm700, %v525, 0
        %v711 = vsel %vm700, %v526, 0
        %v714 = vsel %vm700, %v527, 0
        %v717 = vsel %vm700, %v528, 0
        %v720 = vsel %vm700, %v529, 0
        %v723 = vsel %vm700, %v530, 0
        %vm725 = vcmask 1044480
        %v727 = vsel %vm725, %v699, 0
        %729 = vmatprep.subr.bf16.mxu0 0
        %730 = vmatpush1.bf16.msra.mxu0 %v727
        %731 = vmatprep.subr.bf16.mxu0 0
        %732 = vmatpush1.bf16.msra.mxu0 0
        %733 = vmatprep.subr.bf16.mxu0 0
        %734 = vmatpush1.bf16.msra.mxu0 0
        %735 = vmatprep.subr.bf16.mxu0 0
        %736 = vmatpush1.bf16.msra.mxu0 0
        %737 = vmatprep.subr.bf16.mxu0 0
        %738 = vmatpush1.bf16.msra.mxu0 0
        %739 = vmatprep.subr.bf16.mxu0 0
        %740 = vmatpush1.bf16.msra.mxu0 0
        %741 = vmatprep.subr.bf16.mxu0 0
        %742 = vmatpush1.bf16.msra.mxu0 0
        %743 = vmatprep.subr.bf16.mxu0 0
        %744 = vmatpush1.bf16.msra.mxu0 0
        %745 = vmatprep.subr.bf16.mxu0 0
        %746 = vmatpush1.bf16.msra.mxu0 0
        %747 = vmatprep.subr.bf16.mxu0 0
        %748 = vmatpush1.bf16.msra.mxu0 0
        %749 = vmatprep.subr.bf16.mxu0 0
        %750 = vmatpush1.bf16.msra.mxu0 0
        %751 = vmatprep.subr.bf16.mxu0 0
        %752 = vmatpush1.bf16.msra.mxu0 0
        %753 = vmatprep.subr.bf16.mxu0 0
        %754 = vmatpush1.bf16.msra.mxu0 0
        %755 = vmatprep.subr.bf16.mxu0 0
        %756 = vmatpush1.bf16.msra.mxu0 0
        %757 = vmatprep.subr.bf16.mxu0 0
        %758 = vmatpush1.bf16.msra.mxu0 0
        %759 = vmatprep.subr.bf16.mxu0 0
        %760 = vmatpush1.bf16.msra.mxu0 0
        %761 = vmatprep.mubr.bf16.mxu0 0
        %762 = vmatmul.mubr.bf16.gmra.mrb[0].mxu0 %v702
        %v763 = vpop.f32.mrb[0].mxu0
        %v764 = vadd.f32 %v633, %v763
        %v765 = vpop.f32.mrb[0].mxu0
        %v766 = vpop.f32.mrb[0].mxu0
        %v767 = vadd.f32 %v636, %v766
        %v768 = vpop.f32.mrb[0].mxu0
        %769 = vmatprep.mubr.bf16.mxu0 0
        %770 = vmatmul.mubr.bf16.gmra.mrb[0].mxu0 %v705
        %v771 = vpop.f32.mrb[0].mxu0
        %v772 = vadd.f32 %v641, %v771
        %v773 = vpop.f32.mrb[0].mxu0
        %v774 = vpop.f32.mrb[0].mxu0
        %v775 = vadd.f32 %v644, %v774
        %v776 = vpop.f32.mrb[0].mxu0
        %777 = vmatprep.mubr.bf16.mxu0 0
        %778 = vmatmul.mubr.bf16.gmra.mrb[0].mxu0 %v708
        %v779 = vpop.f32.mrb[0].mxu0
        %v780 = vadd.f32 %v649, %v779
        %v781 = vpop.f32.mrb[0].mxu0
        %v782 = vpop.f32.mrb[0].mxu0
        %v783 = vadd.f32 %v652, %v782
        %v784 = vpop.f32.mrb[0].mxu0
        %785 = vmatprep.mubr.bf16.mxu0 0
        %786 = vmatmul.mubr.bf16.gmra.mrb[0].mxu0 %v711
        %v787 = vpop.f32.mrb[0].mxu0
        %v788 = vadd.f32 %v657, %v787
        %v789 = vpop.f32.mrb[0].mxu0
        %v790 = vpop.f32.mrb[0].mxu0
        %v791 = vadd.f32 %v660, %v790
        %v792 = vpop.f32.mrb[0].mxu0
        %793 = vmatprep.mubr.bf16.mxu0 0
        %794 = vmatmul.mubr.bf16.gmra.mrb[0].mxu0 %v714
        %v795 = vpop.f32.mrb[0].mxu0
        %v796 = vadd.f32 %v665, %v795
        %v797 = vpop.f32.mrb[0].mxu0
        %v798 = vpop.f32.mrb[0].mxu0
        %v799 = vadd.f32 %v668, %v798
        %v800 = vpop.f32.mrb[0].mxu0
        %801 = vmatprep.mubr.bf16.mxu0 0
        %802 = vmatmul.mubr.bf16.gmra.mrb[0].mxu0 %v717
        %v803 = vpop.f32.mrb[0].mxu0
        %v804 = vadd.f32 %v673, %v803
        %v805 = vpop.f32.mrb[0].mxu0
        %v806 = vpop.f32.mrb[0].mxu0
        %v807 = vadd.f32 %v676, %v806
        %v808 = vpop.f32.mrb[0].mxu0
        %809 = vmatprep.mubr.bf16.mxu0 0
        %810 = vmatmul.mubr.bf16.gmra.mrb[0].mxu0 %v720
        %v811 = vpop.f32.mrb[0].mxu0
        %v812 = vadd.f32 %v681, %v811
        %v813 = vpop.f32.mrb[0].mxu0
        %v814 = vpop.f32.mrb[0].mxu0
        %v815 = vadd.f32 %v684, %v814
        %v816 = vpop.f32.mrb[0].mxu0
        %817 = vmatprep.mubr.bf16.mxu0 0
        %818 = vmatmul.mubr.bf16.gmra.mrb[0].mxu0 %v723
        %v819 = vpop.f32.mrb[0].mxu0
        %v820 = vadd.f32 %v689, %v819
        %v821 = vpop.f32.mrb[0].mxu0
        %v822 = vpop.f32.mrb[0].mxu0
        %v823 = vadd.f32 %v692, %v822
        %v824 = vpop.f32.mrb[0].mxu0
        %825 = vdwg.mxu0
        %v826 = vld [vmem:[#allocation8] sm:$0x1]
        %v828 = vlaneseq
        %v829 = vshrl.u32 %v828, 7
        %v830 = vsub.s32 0, %v829
        %v831 = vrot.slane %v826, %v830
        %v833 = vadd.f32 %v764, %v831
        %v834 = vadd.f32 %v767, %v831
        %v835 = vadd.f32 %v772, %v831
        %v836 = vadd.f32 %v775, %v831
        %v837 = vadd.f32 %v780, %v831
        %v838 = vadd.f32 %v783, %v831
        %v839 = vadd.f32 %v788, %v831
        %v840 = vadd.f32 %v791, %v831
        %v841 = vadd.f32 %v796, %v831
        %v842 = vadd.f32 %v799, %v831
        %v843 = vadd.f32 %v804, %v831
        %v844 = vadd.f32 %v807, %v831
        %v845 = vadd.f32 %v812, %v831
        %v846 = vadd.f32 %v815, %v831
        %v847 = vadd.f32 %v820, %v831
        %v848 = vadd.f32 %v823, %v831
        %vm849 = vcmp.gt.f32.partialorder %v833, 0.0
        %vm850 = vcmp.gt.f32.partialorder %v834, 0.0
        %vm851 = vcmp.gt.f32.partialorder %v835, 0.0
        %vm852 = vcmp.gt.f32.partialorder %v836, 0.0
        %vm853 = vcmp.gt.f32.partialorder %v837, 0.0
        %vm854 = vcmp.gt.f32.partialorder %v838, 0.0
        %vm855 = vcmp.gt.f32.partialorder %v839, 0.0
        %vm856 = vcmp.gt.f32.partialorder %v840, 0.0
        %vm857 = vcmp.gt.f32.partialorder %v841, 0.0
        %vm858 = vcmp.gt.f32.partialorder %v842, 0.0
        %vm859 = vcmp.gt.f32.partialorder %v843, 0.0
        %vm860 = vcmp.gt.f32.partialorder %v844, 0.0
        %vm861 = vcmp.gt.f32.partialorder %v845, 0.0
        %vm862 = vcmp.gt.f32.partialorder %v846, 0.0
        %vm863 = vcmp.gt.f32.partialorder %v847, 0.0
        %vm864 = vcmp.gt.f32.partialorder %v848, 0.0
        %v865 = vmul.f32 %v833, 0.2
        %v866 = vmul.f32 %v834, 0.2
        %v867 = vmul.f32 %v835, 0.2
        %v868 = vmul.f32 %v836, 0.2
        %v869 = vmul.f32 %v837, 0.2
        %v870 = vmul.f32 %v838, 0.2
        %v871 = vmul.f32 %v839, 0.2
        %v872 = vmul.f32 %v840, 0.2
        %v873 = vmul.f32 %v841, 0.2
        %v874 = vmul.f32 %v842, 0.2
        %v875 = vmul.f32 %v843, 0.2
        %v876 = vmul.f32 %v844, 0.2
        %v877 = vmul.f32 %v845, 0.2
        %v878 = vmul.f32 %v846, 0.2
        %v879 = vmul.f32 %v847, 0.2
        %v880 = vmul.f32 %v848, 0.2
        %v881 = vsel %vm849, %v833, %v865
        %v882 = vsel %vm850, %v834, %v866
        %v883 = vsel %vm851, %v835, %v867
        %v884 = vsel %vm852, %v836, %v868
        %v885 = vsel %vm853, %v837, %v869
        %v886 = vsel %vm854, %v838, %v870
        %v887 = vsel %vm855, %v839, %v871
        %v888 = vsel %vm856, %v840, %v872
        %v889 = vsel %vm857, %v841, %v873
        %v890 = vsel %vm858, %v842, %v874
        %v891 = vsel %vm859, %v843, %v875
        %v892 = vsel %vm860, %v844, %v876
        %v893 = vsel %vm861, %v845, %v877
        %v894 = vsel %vm862, %v846, %v878
        %v895 = vsel %vm863, %v847, %v879
        %v896 = vsel %vm864, %v848, %v880
        %v897 = vpack.c.bf16 %v882, %v881
        %v898 = vpack.c.bf16 %v884, %v883
        %v899 = vpack.c.bf16 %v886, %v885
        %v900 = vpack.c.bf16 %v888, %v887
        %v901 = vpack.c.bf16 %v890, %v889
        %v902 = vpack.c.bf16 %v892, %v891
        %v903 = vpack.c.bf16 %v894, %v893
        %v904 = vpack.c.bf16 %v896, %v895
        %v905 = vld [vmem:[%s4] sm:$0xff]
        %v906 = vld [vmem:[%s4 + $0x8] sm:$0xff]
        %v907 = vld [vmem:[%s4 + $0x10] sm:$0xff]
        %v908 = vld [vmem:[%s4 + $0x18] sm:$0xff]
        %v909 = vld [vmem:[%s4 + $0x20] sm:$0xff]
        %v910 = vld [vmem:[%s4 + $0x28] sm:$0xff]
        %v911 = vld [vmem:[%s4 + $0x30] sm:$0xff]
        %v912 = vld [vmem:[%s4 + $0x38] sm:$0xff]
        %v913 = vld [vmem:[%s4 + $0x40] sm:$0xff]
        %v914 = vld [vmem:[%s4 + $0x48] sm:$0xff]
        %v915 = vld [vmem:[%s4 + $0x50] sm:$0xff]
        %v916 = vld [vmem:[%s4 + $0x58] sm:$0xff]
        %v917 = vld [vmem:[%s4 + $0x60] sm:$0xff]
        %v918 = vld [vmem:[%s4 + $0x68] sm:$0xff]
        %v919 = vld [vmem:[%s4 + $0x70] sm:$0xff]
        %v920 = vld [vmem:[%s4 + $0x78] sm:$0xff]
        %v921 = vld [vmem:[#allocation8 + $0x1] sm:$0x3]
        %v923 = vlaneseq
        %v924 = vshrl.u32 %v923, 7
        %v925 = vsub.s32 0, %v924
        %v926 = vrot.slane %v921, %v925
        %v927 = vlaneseq
        %v928 = vshrl.u32 %v927, 7
        %v929 = vsub.s32 1, %v928
        %v930 = vrot.slane %v921, %v929
        %v949 = vunpack.c.l.b16 %v905
        %v950 = vunpack.c.h.b16 %v905
        %v951 = vunpack.c.l.b16 %v906
        %v952 = vunpack.c.h.b16 %v906
        %v953 = vunpack.c.l.b16 %v907
        %v954 = vunpack.c.h.b16 %v907
        %v955 = vunpack.c.l.b16 %v908
        %v956 = vunpack.c.h.b16 %v908
        %v957 = vunpack.c.l.b16 %v909
        %v958 = vunpack.c.h.b16 %v909
        %v959 = vunpack.c.l.b16 %v910
        %v960 = vunpack.c.h.b16 %v910
        %v961 = vunpack.c.l.b16 %v911
        %v962 = vunpack.c.h.b16 %v911
        %v963 = vunpack.c.l.b16 %v912
        %v964 = vunpack.c.h.b16 %v912
        %v965 = vunpack.c.l.b16 %v913
        %v966 = vunpack.c.h.b16 %v913
        %v967 = vunpack.c.l.b16 %v914
        %v968 = vunpack.c.h.b16 %v914
        %v969 = vunpack.c.l.b16 %v915
        %v970 = vunpack.c.h.b16 %v915
        %v971 = vunpack.c.l.b16 %v916
        %v972 = vunpack.c.h.b16 %v916
        %v973 = vunpack.c.l.b16 %v917
        %v974 = vunpack.c.h.b16 %v917
        %v975 = vunpack.c.l.b16 %v918
        %v976 = vunpack.c.h.b16 %v918
        %v977 = vunpack.c.l.b16 %v919
        %v978 = vunpack.c.h.b16 %v919
        %v979 = vunpack.c.l.b16 %v920
        %v980 = vunpack.c.h.b16 %v920
        %v981 = vpack.c.b16 %v951, %v949
        %v982 = vpack.c.b16 %v952, %v950
        %v983 = vpack.c.b16 %v955, %v953
        %v984 = vpack.c.b16 %v956, %v954
        %v985 = vpack.c.b16 %v959, %v957
        %v986 = vpack.c.b16 %v960, %v958
        %v987 = vpack.c.b16 %v963, %v961
        %v988 = vpack.c.b16 %v964, %v962
        %v989 = vpack.c.b16 %v967, %v965
        %v990 = vpack.c.b16 %v968, %v966
        %v991 = vpack.c.b16 %v971, %v969
        %v992 = vpack.c.b16 %v972, %v970
        %v993 = vpack.c.b16 %v975, %v973
        %v994 = vpack.c.b16 %v976, %v974
        %v995 = vpack.c.b16 %v979, %v977
        %v996 = vpack.c.b16 %v980, %v978
        %1013 = vmatprep.subr.bf16.mxu0 %v982
        %1014 = vmatpush1.bf16.msra.mxu0 %v981
        %1015 = vmatprep.subr.bf16.mxu0 %v984
        %1016 = vmatpush1.bf16.msra.mxu0 %v983
        %1017 = vmatprep.subr.bf16.mxu0 %v986
        %1018 = vmatpush1.bf16.msra.mxu0 %v985
        %1019 = vmatprep.subr.bf16.mxu0 %v988
        %1020 = vmatpush1.bf16.msra.mxu0 %v987
        %1021 = vmatprep.subr.bf16.mxu0 %v990
        %1022 = vmatpush1.bf16.msra.mxu0 %v989
        %1023 = vmatprep.subr.bf16.mxu0 %v992
        %1024 = vmatpush1.bf16.msra.mxu0 %v991
        %1025 = vmatprep.subr.bf16.mxu0 %v994
        %1026 = vmatpush1.bf16.msra.mxu0 %v993
        %1027 = vmatprep.subr.bf16.mxu0 %v996
        %1028 = vmatpush1.bf16.msra.mxu0 %v995
        %1029 = vmatprep.subr.bf16.mxu0 0
        %1030 = vmatpush1.bf16.msra.mxu0 0
        %1031 = vmatprep.subr.bf16.mxu0 0
        %1032 = vmatpush1.bf16.msra.mxu0 0
        %1033 = vmatprep.subr.bf16.mxu0 0
        %1034 = vmatpush1.bf16.msra.mxu0 0
        %1035 = vmatprep.subr.bf16.mxu0 0
        %1036 = vmatpush1.bf16.msra.mxu0 0
        %1037 = vmatprep.subr.bf16.mxu0 0
        %1038 = vmatpush1.bf16.msra.mxu0 0
        %1039 = vmatprep.subr.bf16.mxu0 0
        %1040 = vmatpush1.bf16.msra.mxu0 0
        %1041 = vmatprep.subr.bf16.mxu0 0
        %1042 = vmatpush1.bf16.msra.mxu0 0
        %1043 = vmatprep.subr.bf16.mxu0 0
        %1044 = vmatpush1.bf16.msra.mxu0 0
        %1045 = vmatprep.mubr.bf16.mxu0 0
        %1046 = vmatmul.mubr.bf16.gmra.mrb[0].mxu0 %v897
        %v1047 = vpop.f32.mrb[0].mxu0
        %v1048 = vadd.f32 %v926, %v1047
        %v1049 = vpop.f32.mrb[0].mxu0
        %v1050 = vadd.f32 %v930, %v1049
        %v1051 = vpop.f32.mrb[0].mxu0
        %v1052 = vadd.f32 %v926, %v1051
        %v1053 = vpop.f32.mrb[0].mxu0
        %v1054 = vadd.f32 %v930, %v1053
        %1055 = vmatprep.mubr.bf16.mxu0 0
        %1056 = vmatmul.mubr.bf16.gmra.mrb[0].mxu0 %v898
        %v1057 = vpop.f32.mrb[0].mxu0
        %v1058 = vadd.f32 %v926, %v1057
        %v1059 = vpop.f32.mrb[0].mxu0
        %v1060 = vadd.f32 %v930, %v1059
        %v1061 = vpop.f32.mrb[0].mxu0
        %v1062 = vadd.f32 %v926, %v1061
        %v1063 = vpop.f32.mrb[0].mxu0
        %v1064 = vadd.f32 %v930, %v1063
        %1065 = vmatprep.mubr.bf16.mxu0 0
        %1066 = vmatmul.mubr.bf16.gmra.mrb[0].mxu0 %v899
        %v1067 = vpop.f32.mrb[0].mxu0
        %v1068 = vadd.f32 %v926, %v1067
        %v1069 = vpop.f32.mrb[0].mxu0
        %v1070 = vadd.f32 %v930, %v1069
        %v1071 = vpop.f32.mrb[0].mxu0
        %v1072 = vadd.f32 %v926, %v1071
        %v1073 = vpop.f32.mrb[0].mxu0
        %v1074 = vadd.f32 %v930, %v1073
        %1075 = vmatprep.mubr.bf16.mxu0 0
        %1076 = vmatmul.mubr.bf16.gmra.mrb[0].mxu0 %v900
        %v1077 = vpop.f32.mrb[0].mxu0
        %v1078 = vadd.f32 %v926, %v1077
        %v1079 = vpop.f32.mrb[0].mxu0
        %v1080 = vadd.f32 %v930, %v1079
        %v1081 = vpop.f32.mrb[0].mxu0
        %v1082 = vadd.f32 %v926, %v1081
        %v1083 = vpop.f32.mrb[0].mxu0
        %v1084 = vadd.f32 %v930, %v1083
        %1085 = vmatprep.mubr.bf16.mxu0 0
        %1086 = vmatmul.mubr.bf16.gmra.mrb[0].mxu0 %v901
        %v1087 = vpop.f32.mrb[0].mxu0
        %v1088 = vadd.f32 %v926, %v1087
        %v1089 = vpop.f32.mrb[0].mxu0
        %v1090 = vadd.f32 %v930, %v1089
        %v1091 = vpop.f32.mrb[0].mxu0
        %v1092 = vadd.f32 %v926, %v1091
        %v1093 = vpop.f32.mrb[0].mxu0
        %v1094 = vadd.f32 %v930, %v1093
        %1095 = vmatprep.mubr.bf16.mxu0 0
        %1096 = vmatmul.mubr.bf16.gmra.mrb[0].mxu0 %v902
        %v1097 = vpop.f32.mrb[0].mxu0
        %v1098 = vadd.f32 %v926, %v1097
        %v1099 = vpop.f32.mrb[0].mxu0
        %v1100 = vadd.f32 %v930, %v1099
        %v1101 = vpop.f32.mrb[0].mxu0
        %v1102 = vadd.f32 %v926, %v1101
        %v1103 = vpop.f32.mrb[0].mxu0
        %v1104 = vadd.f32 %v930, %v1103
        %1105 = vmatprep.mubr.bf16.mxu0 0
        %1106 = vmatmul.mubr.bf16.gmra.mrb[0].mxu0 %v903
        %v1107 = vpop.f32.mrb[0].mxu0
        %v1108 = vadd.f32 %v926, %v1107
        %v1109 = vpop.f32.mrb[0].mxu0
        %v1110 = vadd.f32 %v930, %v1109
        %v1111 = vpop.f32.mrb[0].mxu0
        %v1112 = vadd.f32 %v926, %v1111
        %v1113 = vpop.f32.mrb[0].mxu0
        %v1114 = vadd.f32 %v930, %v1113
        %1115 = vmatprep.mubr.bf16.mxu0 0
        %1116 = vmatmul.mubr.bf16.gmra.mrb[0].mxu0 %v904
        %v1117 = vpop.f32.mrb[0].mxu0
        %v1118 = vadd.f32 %v926, %v1117
        %v1119 = vpop.f32.mrb[0].mxu0
        %v1120 = vadd.f32 %v930, %v1119
        %v1121 = vpop.f32.mrb[0].mxu0
        %v1122 = vadd.f32 %v926, %v1121
        %v1123 = vpop.f32.mrb[0].mxu0
        %v1124 = vadd.f32 %v930, %v1123
        %1125 = vdwg.mxu0
        %v1126 = vadd.f32 %v1048, %v1052
        %v1127 = vadd.f32 %v1126, %v1058
        %v1128 = vadd.f32 %v1127, %v1062
        %v1129 = vadd.f32 %v1128, %v1068
        %v1130 = vadd.f32 %v1129, %v1072
        %v1131 = vadd.f32 %v1130, %v1078
        %v1132 = vadd.f32 %v1131, %v1082
        %v1133 = vadd.f32 %v1132, %v1088
        %v1134 = vadd.f32 %v1133, %v1092
        %v1135 = vadd.f32 %v1134, %v1098
        %v1136 = vadd.f32 %v1135, %v1102
        %v1137 = vadd.f32 %v1136, %v1108
        %v1138 = vadd.f32 %v1137, %v1112
        %v1139 = vadd.f32 %v1138, %v1118
        %v1140 = vadd.f32 %v1139, %v1122
        %v1141 = vrot.slane %v1140, 4
        %v1142 = vadd.f32 %v1140, %v1141
        %v1143 = vrot.slane %v1142, 2
        %v1144 = vadd.f32 %v1142, %v1143
        %v1145 = vrot.slane %v1144, 1
        %v1146 = vadd.f32 %v1144, %v1145
        %v1147 = vadd.f32 %v1050, %v1054
        %v1148 = vadd.f32 %v1147, %v1060
        %v1149 = vadd.f32 %v1148, %v1064
        %v1150 = vadd.f32 %v1149, %v1070
        %v1151 = vadd.f32 %v1150, %v1074
        %v1152 = vadd.f32 %v1151, %v1080
        %v1153 = vadd.f32 %v1152, %v1084
        %v1154 = vadd.f32 %v1153, %v1090
        %v1155 = vadd.f32 %v1154, %v1094
        %v1156 = vadd.f32 %v1155, %v1100
        %v1157 = vadd.f32 %v1156, %v1104
        %v1158 = vadd.f32 %v1157, %v1110
        %v1159 = vadd.f32 %v1158, %v1114
        %v1160 = vadd.f32 %v1159, %v1120
        %v1161 = vadd.f32 %v1160, %v1124
        %v1162 = vrot.slane %v1161, 4
        %v1163 = vadd.f32 %v1161, %v1162
        %v1164 = vrot.slane %v1163, 2
        %v1165 = vadd.f32 %v1163, %v1164
        %v1166 = vrot.slane %v1165, 1
        %v1167 = vadd.f32 %v1165, %v1166
        %v1168 = vrcp.pop 128.0
        %v1169 = vmul.f32 %v1146, %v1168
        %v1170 = vmul.f32 %v1167, %v1168
        %v1171 = vmul.f32 %v1048, %v1048
        %v1172 = vmul.f32 %v1050, %v1050
        %v1173 = vmul.f32 %v1052, %v1052
        %v1174 = vmul.f32 %v1054, %v1054
        %v1175 = vmul.f32 %v1058, %v1058
        %v1176 = vmul.f32 %v1060, %v1060
        %v1177 = vmul.f32 %v1062, %v1062
        %v1178 = vmul.f32 %v1064, %v1064
        %v1179 = vmul.f32 %v1068, %v1068
        %v1180 = vmul.f32 %v1070, %v1070
        %v1181 = vmul.f32 %v1072, %v1072
        %v1182 = vmul.f32 %v1074, %v1074
        %v1183 = vmul.f32 %v1078, %v1078
        %v1184 = vmul.f32 %v1080, %v1080
        %v1185 = vmul.f32 %v1082, %v1082
        %v1186 = vmul.f32 %v1084, %v1084
        %v1187 = vmul.f32 %v1088, %v1088
        %v1188 = vmul.f32 %v1090, %v1090
        %v1189 = vmul.f32 %v1092, %v1092
        %v1190 = vmul.f32 %v1094, %v1094
        %v1191 = vmul.f32 %v1098, %v1098
        %v1192 = vmul.f32 %v1100, %v1100
        %v1193 = vmul.f32 %v1102, %v1102
        %v1194 = vmul.f32 %v1104, %v1104
        %v1195 = vmul.f32 %v1108, %v1108
        %v1196 = vmul.f32 %v1110, %v1110
        %v1197 = vmul.f32 %v1112, %v1112
        %v1198 = vmul.f32 %v1114, %v1114
        %v1199 = vmul.f32 %v1118, %v1118
        %v1200 = vmul.f32 %v1120, %v1120
        %v1201 = vmul.f32 %v1122, %v1122
        %v1202 = vmul.f32 %v1124, %v1124
        %v1203 = vadd.f32 %v1171, %v1173
        %v1204 = vadd.f32 %v1203, %v1175
        %v1205 = vadd.f32 %v1204, %v1177
        %v1206 = vadd.f32 %v1205, %v1179
        %v1207 = vadd.f32 %v1206, %v1181
        %v1208 = vadd.f32 %v1207, %v1183
        %v1209 = vadd.f32 %v1208, %v1185
        %v1210 = vadd.f32 %v1209, %v1187
        %v1211 = vadd.f32 %v1210, %v1189
        %v1212 = vadd.f32 %v1211, %v1191
        %v1213 = vadd.f32 %v1212, %v1193
        %v1214 = vadd.f32 %v1213, %v1195
        %v1215 = vadd.f32 %v1214, %v1197
        %v1216 = vadd.f32 %v1215, %v1199
        %v1217 = vadd.f32 %v1216, %v1201
        %v1218 = vrot.slane %v1217, 4
        %v1219 = vadd.f32 %v1217, %v1218
        %v1220 = vrot.slane %v1219, 2
        %v1221 = vadd.f32 %v1219, %v1220
        %v1222 = vrot.slane %v1221, 1
        %v1223 = vadd.f32 %v1221, %v1222
        %v1224 = vadd.f32 %v1172, %v1174
        %v1225 = vadd.f32 %v1224, %v1176
        %v1226 = vadd.f32 %v1225, %v1178
        %v1227 = vadd.f32 %v1226, %v1180
        %v1228 = vadd.f32 %v1227, %v1182
        %v1229 = vadd.f32 %v1228, %v1184
        %v1230 = vadd.f32 %v1229, %v1186
        %v1231 = vadd.f32 %v1230, %v1188
        %v1232 = vadd.f32 %v1231, %v1190
        %v1233 = vadd.f32 %v1232, %v1192
        %v1234 = vadd.f32 %v1233, %v1194
        %v1235 = vadd.f32 %v1234, %v1196
        %v1236 = vadd.f32 %v1235, %v1198
        %v1237 = vadd.f32 %v1236, %v1200
        %v1238 = vadd.f32 %v1237, %v1202
        %v1239 = vrot.slane %v1238, 4
        %v1240 = vadd.f32 %v1238, %v1239
        %v1241 = vrot.slane %v1240, 2
        %v1242 = vadd.f32 %v1240, %v1241
        %v1243 = vrot.slane %v1242, 1
        %v1244 = vadd.f32 %v1242, %v1243
        %v1245 = vmul.f32 %v1223, %v1168
        %v1246 = vmul.f32 %v1244, %v1168
        %v1247 = vmul.f32 %v1169, %v1169
        %v1248 = vmul.f32 %v1170, %v1170
        %v1249 = vsub.f32 %v1245, %v1247
        %v1250 = vsub.f32 %v1246, %v1248
        %v1251 = vld [vmem:[#allocation8 + $0x3] sm:$0x3]
        %v1252 = vadd.f32 %v1249, 0.8
        %v1253 = vadd.f32 %v1250, 0.8
        %v1254 = vrsqrt.pop %v1252
        %v1255 = vrsqrt.pop %v1253
        %v1258 = vcombine.low %v1254, %v1255
        %v1260 = vunpack.c.l.s4 1966171168
        %v1261 = vunpack.c.0.s8 %v1260
        %v1262 = vlaneseq
        %v1263 = vshrl.u32 %v1262, 7
        %v1264 = vsub.s32 %v1261, %v1263
        %v1265 = vrot.slane %v1258, %v1264
        %v1267 = vunpack.c.l.s4 1966171168
        %v1268 = vunpack.c.0.s8 %v1267
        %v1269 = vlaneseq
        %v1270 = vshrl.u32 %v1269, 7
        %v1271 = vsub.s32 %v1268, %v1270
        %v1272 = vrot.slane %v1265, %v1271
        %v1274 = vmul.f32 %v1251, %v1272
        %v1275 = vld [vmem:[#allocation8 + $0x5] sm:$0x3]
        %v1277 = vlaneseq
        %v1278 = vshrl.u32 %v1277, 7
        %v1279 = vsub.s32 0, %v1278
        %v1280 = vrot.slane %v1274, %v1279
        %v1281 = vlaneseq
        %v1282 = vshrl.u32 %v1281, 7
        %v1283 = vsub.s32 1, %v1282
        %v1284 = vrot.slane %v1274, %v1283
        %v1287 = vmul.f32 %v1169, %v1280
        %v1288 = vmul.f32 %v1170, %v1284
        %v1291 = vcombine.low %v1287, %v1288
        %v1293 = vunpack.c.l.s4 1966171168
        %v1294 = vunpack.c.0.s8 %v1293
        %v1295 = vlaneseq
        %v1296 = vshrl.u32 %v1295, 7
        %v1297 = vsub.s32 %v1294, %v1296
        %v1298 = vrot.slane %v1291, %v1297
        %v1300 = vunpack.c.l.s4 1966171168
        %v1301 = vunpack.c.0.s8 %v1300
        %v1302 = vlaneseq
        %v1303 = vshrl.u32 %v1302, 7
        %v1304 = vsub.s32 %v1301, %v1303
        %v1305 = vrot.slane %v1298, %v1304
        %v1307 = vsub.f32 %v1275, %v1305
        %v1308 = vmul.f32 %v1048, %v1280
        %v1309 = vmul.f32 %v1050, %v1284
        %v1310 = vmul.f32 %v1052, %v1280
        %v1311 = vmul.f32 %v1054, %v1284
        %v1312 = vmul.f32 %v1058, %v1280
        %v1313 = vmul.f32 %v1060, %v1284
        %v1314 = vmul.f32 %v1062, %v1280
        %v1315 = vmul.f32 %v1064, %v1284
        %v1316 = vmul.f32 %v1068, %v1280
        %v1317 = vmul.f32 %v1070, %v1284
        %v1318 = vmul.f32 %v1072, %v1280
        %v1319 = vmul.f32 %v1074, %v1284
        %v1320 = vmul.f32 %v1078, %v1280
        %v1321 = vmul.f32 %v1080, %v1284
        %v1322 = vmul.f32 %v1082, %v1280
        %v1323 = vmul.f32 %v1084, %v1284
        %v1324 = vmul.f32 %v1088, %v1280
        %v1325 = vmul.f32 %v1090, %v1284
        %v1326 = vmul.f32 %v1092, %v1280
        %v1327 = vmul.f32 %v1094, %v1284
        %v1328 = vmul.f32 %v1098, %v1280
        %v1329 = vmul.f32 %v1100, %v1284
        %v1330 = vmul.f32 %v1102, %v1280
        %v1331 = vmul.f32 %v1104, %v1284
        %v1332 = vmul.f32 %v1108, %v1280
        %v1333 = vmul.f32 %v1110, %v1284
        %v1334 = vmul.f32 %v1112, %v1280
        %v1335 = vmul.f32 %v1114, %v1284
        %v1336 = vmul.f32 %v1118, %v1280
        %v1337 = vmul.f32 %v1120, %v1284
        %v1338 = vmul.f32 %v1122, %v1280
        %v1339 = vmul.f32 %v1124, %v1284
        %v1341 = vlaneseq
        %v1342 = vshrl.u32 %v1341, 7
        %v1343 = vsub.s32 0, %v1342
        %v1344 = vrot.slane %v1307, %v1343
        %v1345 = vlaneseq
        %v1346 = vshrl.u32 %v1345, 7
        %v1347 = vsub.s32 1, %v1346
        %v1348 = vrot.slane %v1307, %v1347
        %v1351 = vadd.f32 %v1308, %v1344
        %v1352 = vadd.f32 %v1309, %v1348
        %v1353 = vadd.f32 %v1310, %v1344
        %v1354 = vadd.f32 %v1311, %v1348
        %v1355 = vadd.f32 %v1312, %v1344
        %v1356 = vadd.f32 %v1313, %v1348
        %v1357 = vadd.f32 %v1314, %v1344
        %v1358 = vadd.f32 %v1315, %v1348
        %v1359 = vadd.f32 %v1316, %v1344
        %v1360 = vadd.f32 %v1317, %v1348
        %v1361 = vadd.f32 %v1318, %v1344
        %v1362 = vadd.f32 %v1319, %v1348
        %v1363 = vadd.f32 %v1320, %v1344
        %v1364 = vadd.f32 %v1321, %v1348
        %v1365 = vadd.f32 %v1322, %v1344
        %v1366 = vadd.f32 %v1323, %v1348
        %v1367 = vadd.f32 %v1324, %v1344
        %v1368 = vadd.f32 %v1325, %v1348
        %v1369 = vadd.f32 %v1326, %v1344
        %v1370 = vadd.f32 %v1327, %v1348
        %v1371 = vadd.f32 %v1328, %v1344
        %v1372 = vadd.f32 %v1329, %v1348
        %v1373 = vadd.f32 %v1330, %v1344
        %v1374 = vadd.f32 %v1331, %v1348
        %v1375 = vadd.f32 %v1332, %v1344
        %v1376 = vadd.f32 %v1333, %v1348
        %v1377 = vadd.f32 %v1334, %v1344
        %v1378 = vadd.f32 %v1335, %v1348
        %v1379 = vadd.f32 %v1336, %v1344
        %v1380 = vadd.f32 %v1337, %v1348
        %v1381 = vadd.f32 %v1338, %v1344
        %v1382 = vadd.f32 %v1339, %v1348
        %vm1383 = vcmp.gt.f32.partialorder %v1351, 0.0
        %vm1384 = vcmp.gt.f32.partialorder %v1352, 0.0
        %vm1385 = vcmp.gt.f32.partialorder %v1353, 0.0
        %vm1386 = vcmp.gt.f32.partialorder %v1354, 0.0
        %vm1387 = vcmp.gt.f32.partialorder %v1355, 0.0
        %vm1388 = vcmp.gt.f32.partialorder %v1356, 0.0
        %vm1389 = vcmp.gt.f32.partialorder %v1357, 0.0
        %vm1390 = vcmp.gt.f32.partialorder %v1358, 0.0
        %vm1391 = vcmp.gt.f32.partialorder %v1359, 0.0
        %vm1392 = vcmp.gt.f32.partialorder %v1360, 0.0
        %vm1393 = vcmp.gt.f32.partialorder %v1361, 0.0
        %vm1394 = vcmp.gt.f32.partialorder %v1362, 0.0
        %vm1395 = vcmp.gt.f32.partialorder %v1363, 0.0
        %vm1396 = vcmp.gt.f32.partialorder %v1364, 0.0
        %vm1397 = vcmp.gt.f32.partialorder %v1365, 0.0
        %vm1398 = vcmp.gt.f32.partialorder %v1366, 0.0
        %vm1399 = vcmp.gt.f32.partialorder %v1367, 0.0
        %vm1400 = vcmp.gt.f32.partialorder %v1368, 0.0
        %vm1401 = vcmp.gt.f32.partialorder %v1369, 0.0
        %vm1402 = vcmp.gt.f32.partialorder %v1370, 0.0
        %vm1403 = vcmp.gt.f32.partialorder %v1371, 0.0
        %vm1404 = vcmp.gt.f32.partialorder %v1372, 0.0
        %vm1405 = vcmp.gt.f32.partialorder %v1373, 0.0
        %vm1406 = vcmp.gt.f32.partialorder %v1374, 0.0
        %vm1407 = vcmp.gt.f32.partialorder %v1375, 0.0
        %vm1408 = vcmp.gt.f32.partialorder %v1376, 0.0
        %vm1409 = vcmp.gt.f32.partialorder %v1377, 0.0
        %vm1410 = vcmp.gt.f32.partialorder %v1378, 0.0
        %vm1411 = vcmp.gt.f32.partialorder %v1379, 0.0
        %vm1412 = vcmp.gt.f32.partialorder %v1380, 0.0
        %vm1413 = vcmp.gt.f32.partialorder %v1381, 0.0
        %vm1414 = vcmp.gt.f32.partialorder %v1382, 0.0
        %v1415 = vmul.f32 %v1351, 0.2
        %v1416 = vmul.f32 %v1352, 0.2
        %v1417 = vmul.f32 %v1353, 0.2
        %v1418 = vmul.f32 %v1354, 0.2
        %v1419 = vmul.f32 %v1355, 0.2
        %v1420 = vmul.f32 %v1356, 0.2
        %v1421 = vmul.f32 %v1357, 0.2
        %v1422 = vmul.f32 %v1358, 0.2
        %v1423 = vmul.f32 %v1359, 0.2
        %v1424 = vmul.f32 %v1360, 0.2
        %v1425 = vmul.f32 %v1361, 0.2
        %v1426 = vmul.f32 %v1362, 0.2
        %v1427 = vmul.f32 %v1363, 0.2
        %v1428 = vmul.f32 %v1364, 0.2
        %v1429 = vmul.f32 %v1365, 0.2
        %v1430 = vmul.f32 %v1366, 0.2
        %v1431 = vmul.f32 %v1367, 0.2
        %v1432 = vmul.f32 %v1368, 0.2
        %v1433 = vmul.f32 %v1369, 0.2
        %v1434 = vmul.f32 %v1370, 0.2
        %v1435 = vmul.f32 %v1371, 0.2
        %v1436 = vmul.f32 %v1372, 0.2
        %v1437 = vmul.f32 %v1373, 0.2
        %v1438 = vmul.f32 %v1374, 0.2
        %v1439 = vmul.f32 %v1375, 0.2
        %v1440 = vmul.f32 %v1376, 0.2
        %v1441 = vmul.f32 %v1377, 0.2
        %v1442 = vmul.f32 %v1378, 0.2
        %v1443 = vmul.f32 %v1379, 0.2
        %v1444 = vmul.f32 %v1380, 0.2
        %v1445 = vmul.f32 %v1381, 0.2
        %v1446 = vmul.f32 %v1382, 0.2
        %v1447 = vsel %vm1383, %v1351, %v1415
        %v1448 = vsel %vm1384, %v1352, %v1416
        %v1449 = vsel %vm1385, %v1353, %v1417
        %v1450 = vsel %vm1386, %v1354, %v1418
        %v1451 = vsel %vm1387, %v1355, %v1419
        %v1452 = vsel %vm1388, %v1356, %v1420
        %v1453 = vsel %vm1389, %v1357, %v1421
        %v1454 = vsel %vm1390, %v1358, %v1422
        %v1455 = vsel %vm1391, %v1359, %v1423
        %v1456 = vsel %vm1392, %v1360, %v1424
        %v1457 = vsel %vm1393, %v1361, %v1425
        %v1458 = vsel %vm1394, %v1362, %v1426
        %v1459 = vsel %vm1395, %v1363, %v1427
        %v1460 = vsel %vm1396, %v1364, %v1428
        %v1461 = vsel %vm1397, %v1365, %v1429
        %v1462 = vsel %vm1398, %v1366, %v1430
        %v1463 = vsel %vm1399, %v1367, %v1431
        %v1464 = vsel %vm1400, %v1368, %v1432
        %v1465 = vsel %vm1401, %v1369, %v1433
        %v1466 = vsel %vm1402, %v1370, %v1434
        %v1467 = vsel %vm1403, %v1371, %v1435
        %v1468 = vsel %vm1404, %v1372, %v1436
        %v1469 = vsel %vm1405, %v1373, %v1437
        %v1470 = vsel %vm1406, %v1374, %v1438
        %v1471 = vsel %vm1407, %v1375, %v1439
        %v1472 = vsel %vm1408, %v1376, %v1440
        %v1473 = vsel %vm1409, %v1377, %v1441
        %v1474 = vsel %vm1410, %v1378, %v1442
        %v1475 = vsel %vm1411, %v1379, %v1443
        %v1476 = vsel %vm1412, %v1380, %v1444
        %v1477 = vsel %vm1413, %v1381, %v1445
        %v1478 = vsel %vm1414, %v1382, %v1446
        %v1479 = vpack.c.bf16 %v1449, %v1447
        %v1480 = vpack.c.bf16 %v1450, %v1448
        %v1481 = vpack.c.bf16 %v1453, %v1451
        %v1482 = vpack.c.bf16 %v1454, %v1452
        %v1483 = vpack.c.bf16 %v1457, %v1455
        %v1484 = vpack.c.bf16 %v1458, %v1456
        %v1485 = vpack.c.bf16 %v1461, %v1459
        %v1486 = vpack.c.bf16 %v1462, %v1460
        %v1487 = vpack.c.bf16 %v1465, %v1463
        %v1488 = vpack.c.bf16 %v1466, %v1464
        %v1489 = vpack.c.bf16 %v1469, %v1467
        %v1490 = vpack.c.bf16 %v1470, %v1468
        %v1491 = vpack.c.bf16 %v1473, %v1471
        %v1492 = vpack.c.bf16 %v1474, %v1472
        %v1493 = vpack.c.bf16 %v1477, %v1475
        %v1494 = vpack.c.bf16 %v1478, %v1476
        %v1495 = vld [vmem:[%s5] sm:$0xff]
        %v1496 = vld [vmem:[%s5 + $0x8] sm:$0xff]
        %v1497 = vld [vmem:[%s5 + $0x10] sm:$0xff]
        %v1498 = vld [vmem:[%s5 + $0x18] sm:$0xff]
        %v1499 = vld [vmem:[%s5 + $0x20] sm:$0xff]
        %v1500 = vld [vmem:[%s5 + $0x28] sm:$0xff]
        %v1501 = vld [vmem:[%s5 + $0x30] sm:$0xff]
        %v1502 = vld [vmem:[%s5 + $0x38] sm:$0xff]
        %v1503 = vld [vmem:[%s5 + $0x40] sm:$0xff]
        %v1504 = vld [vmem:[%s5 + $0x48] sm:$0xff]
        %v1505 = vld [vmem:[%s5 + $0x50] sm:$0xff]
        %v1506 = vld [vmem:[%s5 + $0x58] sm:$0xff]
        %v1507 = vld [vmem:[%s5 + $0x60] sm:$0xff]
        %v1508 = vld [vmem:[%s5 + $0x68] sm:$0xff]
        %v1509 = vld [vmem:[%s5 + $0x70] sm:$0xff]
        %v1510 = vld [vmem:[%s5 + $0x78] sm:$0xff]
        %v1511 = vld [vmem:[%s5 + $0x80] sm:$0xff]
        %v1512 = vld [vmem:[%s5 + $0x88] sm:$0xff]
        %v1513 = vld [vmem:[%s5 + $0x90] sm:$0xff]
        %v1514 = vld [vmem:[%s5 + $0x98] sm:$0xff]
        %v1515 = vld [vmem:[%s5 + $0xa0] sm:$0xff]
        %v1516 = vld [vmem:[%s5 + $0xa8] sm:$0xff]
        %v1517 = vld [vmem:[%s5 + $0xb0] sm:$0xff]
        %v1518 = vld [vmem:[%s5 + $0xb8] sm:$0xff]
        %v1519 = vld [vmem:[%s5 + $0xc0] sm:$0xff]
        %v1520 = vld [vmem:[%s5 + $0xc8] sm:$0xff]
        %v1521 = vld [vmem:[%s5 + $0xd0] sm:$0xff]
        %v1522 = vld [vmem:[%s5 + $0xd8] sm:$0xff]
        %v1523 = vld [vmem:[%s5 + $0xe0] sm:$0xff]
        %v1524 = vld [vmem:[%s5 + $0xe8] sm:$0xff]
        %v1525 = vld [vmem:[%s5 + $0xf0] sm:$0xff]
        %v1526 = vld [vmem:[%s5 + $0xf8] sm:$0xff]
        %v1527 = vld [vmem:[%s5 + $0x100] sm:$0xff]
        %v1528 = vld [vmem:[%s5 + $0x108] sm:$0xff]
        %v1529 = vld [vmem:[%s5 + $0x110] sm:$0xff]
        %v1530 = vld [vmem:[%s5 + $0x118] sm:$0xff]
        %v1531 = vld [vmem:[%s5 + $0x120] sm:$0xff]
        %v1532 = vld [vmem:[%s5 + $0x128] sm:$0xff]
        %v1533 = vld [vmem:[%s5 + $0x130] sm:$0xff]
        %v1534 = vld [vmem:[%s5 + $0x138] sm:$0xff]
        %v1535 = vld [vmem:[%s5 + $0x140] sm:$0xff]
        %v1536 = vld [vmem:[%s5 + $0x148] sm:$0xff]
        %v1537 = vld [vmem:[%s5 + $0x150] sm:$0xff]
        %v1538 = vld [vmem:[%s5 + $0x158] sm:$0xff]
        %v1539 = vld [vmem:[%s5 + $0x160] sm:$0xff]
        %v1540 = vld [vmem:[%s5 + $0x168] sm:$0xff]
        %v1541 = vld [vmem:[%s5 + $0x170] sm:$0xff]
        %v1542 = vld [vmem:[%s5 + $0x178] sm:$0xff]
        %v1543 = vld [vmem:[%s5 + $0x180] sm:$0xff]
        %v1544 = vld [vmem:[%s5 + $0x188] sm:$0xff]
        %v1545 = vld [vmem:[%s5 + $0x190] sm:$0xff]
        %v1546 = vld [vmem:[%s5 + $0x198] sm:$0xff]
        %v1547 = vld [vmem:[%s5 + $0x1a0] sm:$0xff]
        %v1548 = vld [vmem:[%s5 + $0x1a8] sm:$0xff]
        %v1549 = vld [vmem:[%s5 + $0x1b0] sm:$0xff]
        %v1550 = vld [vmem:[%s5 + $0x1b8] sm:$0xff]
        %v1551 = vld [vmem:[%s5 + $0x1c0] sm:$0xff]
        %v1552 = vld [vmem:[%s5 + $0x1c8] sm:$0xff]
        %v1553 = vld [vmem:[%s5 + $0x1d0] sm:$0xff]
        %v1554 = vld [vmem:[%s5 + $0x1d8] sm:$0xff]
        %v1555 = vld [vmem:[%s5 + $0x1e0] sm:$0xff]
        %v1556 = vld [vmem:[%s5 + $0x1e8] sm:$0xff]
        %v1557 = vld [vmem:[%s5 + $0x1f0] sm:$0xff]
        %v1558 = vld [vmem:[%s5 + $0x1f8] sm:$0xff]
        %v1559 = vld [vmem:[#allocation8 + $0x7] sm:$0xf]
        %v1561 = vlaneseq
        %v1562 = vshrl.u32 %v1561, 7
        %v1563 = vsub.s32 0, %v1562
        %v1564 = vrot.slane %v1559, %v1563
        %v1565 = vlaneseq
        %v1566 = vshrl.u32 %v1565, 7
        %v1567 = vsub.s32 1, %v1566
        %v1568 = vrot.slane %v1559, %v1567
        %v1569 = vlaneseq
        %v1570 = vshrl.u32 %v1569, 7
        %v1571 = vsub.s32 2, %v1570
        %v1572 = vrot.slane %v1559, %v1571
        %v1573 = vlaneseq
        %v1574 = vshrl.u32 %v1573, 7
        %v1575 = vsub.s32 3, %v1574
        %v1576 = vrot.slane %v1559, %v1575
        %v1645 = vunpack.c.l.b16 %v1495
        %v1646 = vunpack.c.h.b16 %v1495
        %v1647 = vunpack.c.l.b16 %v1496
        %v1648 = vunpack.c.h.b16 %v1496
        %v1649 = vunpack.c.l.b16 %v1497
        %v1650 = vunpack.c.h.b16 %v1497
        %v1651 = vunpack.c.l.b16 %v1498
        %v1652 = vunpack.c.h.b16 %v1498
        %v1653 = vunpack.c.l.b16 %v1499
        %v1654 = vunpack.c.h.b16 %v1499
        %v1655 = vunpack.c.l.b16 %v1500
        %v1656 = vunpack.c.h.b16 %v1500
        %v1657 = vunpack.c.l.b16 %v1501
        %v1658 = vunpack.c.h.b16 %v1501
        %v1659 = vunpack.c.l.b16 %v1502
        %v1660 = vunpack.c.h.b16 %v1502
        %v1661 = vunpack.c.l.b16 %v1503
        %v1662 = vunpack.c.h.b16 %v1503
        %v1663 = vunpack.c.l.b16 %v1504
        %v1664 = vunpack.c.h.b16 %v1504
        %v1665 = vunpack.c.l.b16 %v1505
        %v1666 = vunpack.c.h.b16 %v1505
        %v1667 = vunpack.c.l.b16 %v1506
        %v1668 = vunpack.c.h.b16 %v1506
        %v1669 = vunpack.c.l.b16 %v1507
        %v1670 = vunpack.c.h.b16 %v1507
        %v1671 = vunpack.c.l.b16 %v1508
        %v1672 = vunpack.c.h.b16 %v1508
        %v1673 = vunpack.c.l.b16 %v1509
        %v1674 = vunpack.c.h.b16 %v1509
        %v1675 = vunpack.c.l.b16 %v1510
        %v1676 = vunpack.c.h.b16 %v1510
        %v1677 = vunpack.c.l.b16 %v1511
        %v1678 = vunpack.c.h.b16 %v1511
        %v1679 = vunpack.c.l.b16 %v1512
        %v1680 = vunpack.c.h.b16 %v1512
        %v1681 = vunpack.c.l.b16 %v1513
        %v1682 = vunpack.c.h.b16 %v1513
        %v1683 = vunpack.c.l.b16 %v1514
        %v1684 = vunpack.c.h.b16 %v1514
        %v1685 = vunpack.c.l.b16 %v1515
        %v1686 = vunpack.c.h.b16 %v1515
        %v1687 = vunpack.c.l.b16 %v1516
        %v1688 = vunpack.c.h.b16 %v1516
        %v1689 = vunpack.c.l.b16 %v1517
        %v1690 = vunpack.c.h.b16 %v1517
        %v1691 = vunpack.c.l.b16 %v1518
        %v1692 = vunpack.c.h.b16 %v1518
        %v1693 = vunpack.c.l.b16 %v1519
        %v1694 = vunpack.c.h.b16 %v1519
        %v1695 = vunpack.c.l.b16 %v1520
        %v1696 = vunpack.c.h.b16 %v1520
        %v1697 = vunpack.c.l.b16 %v1521
        %v1698 = vunpack.c.h.b16 %v1521
        %v1699 = vunpack.c.l.b16 %v1522
        %v1700 = vunpack.c.h.b16 %v1522
        %v1701 = vunpack.c.l.b16 %v1523
        %v1702 = vunpack.c.h.b16 %v1523
        %v1703 = vunpack.c.l.b16 %v1524
        %v1704 = vunpack.c.h.b16 %v1524
        %v1705 = vunpack.c.l.b16 %v1525
        %v1706 = vunpack.c.h.b16 %v1525
        %v1707 = vunpack.c.l.b16 %v1526
        %v1708 = vunpack.c.h.b16 %v1526
        %v1709 = vunpack.c.l.b16 %v1527
        %v1710 = vunpack.c.h.b16 %v1527
        %v1711 = vunpack.c.l.b16 %v1528
        %v1712 = vunpack.c.h.b16 %v1528
        %v1713 = vunpack.c.l.b16 %v1529
        %v1714 = vunpack.c.h.b16 %v1529
        %v1715 = vunpack.c.l.b16 %v1530
        %v1716 = vunpack.c.h.b16 %v1530
        %v1717 = vunpack.c.l.b16 %v1531
        %v1718 = vunpack.c.h.b16 %v1531
        %v1719 = vunpack.c.l.b16 %v1532
        %v1720 = vunpack.c.h.b16 %v1532
        %v1721 = vunpack.c.l.b16 %v1533
        %v1722 = vunpack.c.h.b16 %v1533
        %v1723 = vunpack.c.l.b16 %v1534
        %v1724 = vunpack.c.h.b16 %v1534
        %v1725 = vunpack.c.l.b16 %v1535
        %v1726 = vunpack.c.h.b16 %v1535
        %v1727 = vunpack.c.l.b16 %v1536
        %v1728 = vunpack.c.h.b16 %v1536
        %v1729 = vunpack.c.l.b16 %v1537
        %v1730 = vunpack.c.h.b16 %v1537
        %v1731 = vunpack.c.l.b16 %v1538
        %v1732 = vunpack.c.h.b16 %v1538
        %v1733 = vunpack.c.l.b16 %v1539
        %v1734 = vunpack.c.h.b16 %v1539
        %v1735 = vunpack.c.l.b16 %v1540
        %v1736 = vunpack.c.h.b16 %v1540
        %v1737 = vunpack.c.l.b16 %v1541
        %v1738 = vunpack.c.h.b16 %v1541
        %v1739 = vunpack.c.l.b16 %v1542
        %v1740 = vunpack.c.h.b16 %v1542
        %v1741 = vunpack.c.l.b16 %v1543
        %v1742 = vunpack.c.h.b16 %v1543
        %v1743 = vunpack.c.l.b16 %v1544
        %v1744 = vunpack.c.h.b16 %v1544
        %v1745 = vunpack.c.l.b16 %v1545
        %v1746 = vunpack.c.h.b16 %v1545
        %v1747 = vunpack.c.l.b16 %v1546
        %v1748 = vunpack.c.h.b16 %v1546
        %v1749 = vunpack.c.l.b16 %v1547
        %v1750 = vunpack.c.h.b16 %v1547
        %v1751 = vunpack.c.l.b16 %v1548
        %v1752 = vunpack.c.h.b16 %v1548
        %v1753 = vunpack.c.l.b16 %v1549
        %v1754 = vunpack.c.h.b16 %v1549
        %v1755 = vunpack.c.l.b16 %v1550
        %v1756 = vunpack.c.h.b16 %v1550
        %v1757 = vunpack.c.l.b16 %v1551
        %v1758 = vunpack.c.h.b16 %v1551
        %v1759 = vunpack.c.l.b16 %v1552
        %v1760 = vunpack.c.h.b16 %v1552
        %v1761 = vunpack.c.l.b16 %v1553
        %v1762 = vunpack.c.h.b16 %v1553
        %v1763 = vunpack.c.l.b16 %v1554
        %v1764 = vunpack.c.h.b16 %v1554
        %v1765 = vunpack.c.l.b16 %v1555
        %v1766 = vunpack.c.h.b16 %v1555
        %v1767 = vunpack.c.l.b16 %v1556
        %v1768 = vunpack.c.h.b16 %v1556
        %v1769 = vunpack.c.l.b16 %v1557
        %v1770 = vunpack.c.h.b16 %v1557
        %v1771 = vunpack.c.l.b16 %v1558
        %v1772 = vunpack.c.h.b16 %v1558
        %v1773 = vpack.c.b16 %v1649, %v1645
        %v1774 = vpack.c.b16 %v1650, %v1646
        %v1775 = vpack.c.b16 %v1651, %v1647
        %v1776 = vpack.c.b16 %v1652, %v1648
        %v1777 = vpack.c.b16 %v1657, %v1653
        %v1778 = vpack.c.b16 %v1658, %v1654
        %v1779 = vpack.c.b16 %v1659, %v1655
        %v1780 = vpack.c.b16 %v1660, %v1656
        %v1781 = vpack.c.b16 %v1665, %v1661
        %v1782 = vpack.c.b16 %v1666, %v1662
        %v1783 = vpack.c.b16 %v1667, %v1663
        %v1784 = vpack.c.b16 %v1668, %v1664
        %v1785 = vpack.c.b16 %v1673, %v1669
        %v1786 = vpack.c.b16 %v1674, %v1670
        %v1787 = vpack.c.b16 %v1675, %v1671
        %v1788 = vpack.c.b16 %v1676, %v1672
        %v1789 = vpack.c.b16 %v1681, %v1677
        %v1790 = vpack.c.b16 %v1682, %v1678
        %v1791 = vpack.c.b16 %v1683, %v1679
        %v1792 = vpack.c.b16 %v1684, %v1680
        %v1793 = vpack.c.b16 %v1689, %v1685
        %v1794 = vpack.c.b16 %v1690, %v1686
        %v1795 = vpack.c.b16 %v1691, %v1687
        %v1796 = vpack.c.b16 %v1692, %v1688
        %v1797 = vpack.c.b16 %v1697, %v1693
        %v1798 = vpack.c.b16 %v1698, %v1694
        %v1799 = vpack.c.b16 %v1699, %v1695
        %v1800 = vpack.c.b16 %v1700, %v1696
        %v1801 = vpack.c.b16 %v1705, %v1701
        %v1802 = vpack.c.b16 %v1706, %v1702
        %v1803 = vpack.c.b16 %v1707, %v1703
        %v1804 = vpack.c.b16 %v1708, %v1704
        %v1805 = vpack.c.b16 %v1713, %v1709
        %v1806 = vpack.c.b16 %v1714, %v1710
        %v1807 = vpack.c.b16 %v1715, %v1711
        %v1808 = vpack.c.b16 %v1716, %v1712
        %v1809 = vpack.c.b16 %v1721, %v1717
        %v1810 = vpack.c.b16 %v1722, %v1718
        %v1811 = vpack.c.b16 %v1723, %v1719
        %v1812 = vpack.c.b16 %v1724, %v1720
        %v1813 = vpack.c.b16 %v1729, %v1725
        %v1814 = vpack.c.b16 %v1730, %v1726
        %v1815 = vpack.c.b16 %v1731, %v1727
        %v1816 = vpack.c.b16 %v1732, %v1728
        %v1817 = vpack.c.b16 %v1737, %v1733
        %v1818 = vpack.c.b16 %v1738, %v1734
        %v1819 = vpack.c.b16 %v1739, %v1735
        %v1820 = vpack.c.b16 %v1740, %v1736
        %v1821 = vpack.c.b16 %v1745, %v1741
        %v1822 = vpack.c.b16 %v1746, %v1742
        %v1823 = vpack.c.b16 %v1747, %v1743
        %v1824 = vpack.c.b16 %v1748, %v1744
        %v1825 = vpack.c.b16 %v1753, %v1749
        %v1826 = vpack.c.b16 %v1754, %v1750
        %v1827 = vpack.c.b16 %v1755, %v1751
        %v1828 = vpack.c.b16 %v1756, %v1752
        %v1829 = vpack.c.b16 %v1761, %v1757
        %v1830 = vpack.c.b16 %v1762, %v1758
        %v1831 = vpack.c.b16 %v1763, %v1759
        %v1832 = vpack.c.b16 %v1764, %v1760
        %v1833 = vpack.c.b16 %v1769, %v1765
        %v1834 = vpack.c.b16 %v1770, %v1766
        %v1835 = vpack.c.b16 %v1771, %v1767
        %v1836 = vpack.c.b16 %v1772, %v1768
        %1901 = vmatprep.subr.bf16.mxu0 %v1774
        %1902 = vmatpush1.bf16.msra.mxu0 %v1773
        %1903 = vmatprep.subr.bf16.mxu0 %v1778
        %1904 = vmatpush1.bf16.msra.mxu0 %v1777
        %1905 = vmatprep.subr.bf16.mxu0 %v1782
        %1906 = vmatpush1.bf16.msra.mxu0 %v1781
        %1907 = vmatprep.subr.bf16.mxu0 %v1786
        %1908 = vmatpush1.bf16.msra.mxu0 %v1785
        %1909 = vmatprep.subr.bf16.mxu0 %v1790
        %1910 = vmatpush1.bf16.msra.mxu0 %v1789
        %1911 = vmatprep.subr.bf16.mxu0 %v1794
        %1912 = vmatpush1.bf16.msra.mxu0 %v1793
        %1913 = vmatprep.subr.bf16.mxu0 %v1798
        %1914 = vmatpush1.bf16.msra.mxu0 %v1797
        %1915 = vmatprep.subr.bf16.mxu0 %v1802
        %1916 = vmatpush1.bf16.msra.mxu0 %v1801
        %1917 = vmatprep.subr.bf16.mxu0 %v1806
        %1918 = vmatpush1.bf16.msra.mxu0 %v1805
        %1919 = vmatprep.subr.bf16.mxu0 %v1810
        %1920 = vmatpush1.bf16.msra.mxu0 %v1809
        %1921 = vmatprep.subr.bf16.mxu0 %v1814
        %1922 = vmatpush1.bf16.msra.mxu0 %v1813
        %1923 = vmatprep.subr.bf16.mxu0 %v1818
        %1924 = vmatpush1.bf16.msra.mxu0 %v1817
        %1925 = vmatprep.subr.bf16.mxu0 %v1822
        %1926 = vmatpush1.bf16.msra.mxu0 %v1821
        %1927 = vmatprep.subr.bf16.mxu0 %v1826
        %1928 = vmatpush1.bf16.msra.mxu0 %v1825
        %1929 = vmatprep.subr.bf16.mxu0 %v1830
        %1930 = vmatpush1.bf16.msra.mxu0 %v1829
        %1931 = vmatprep.subr.bf16.mxu0 %v1834
        %1932 = vmatpush1.bf16.msra.mxu0 %v1833
        %1933 = vmatprep.mubr.bf16.mxu0 %v1480
        %1934 = vmatmul.mubr.bf16.gmra.mrb[0].mxu0 %v1479
        %v1935 = vpop.f32.mrb[0].mxu0
        %v1936 = vadd.f32 %v1564, %v1935
        %v1937 = vpop.f32.mrb[0].mxu0
        %v1938 = vadd.f32 %v1568, %v1937
        %v1939 = vpop.f32.mrb[0].mxu0
        %v1940 = vadd.f32 %v1564, %v1939
        %v1941 = vpop.f32.mrb[0].mxu0
        %v1942 = vadd.f32 %v1568, %v1941
        %1943 = vmatprep.mubr.bf16.mxu0 %v1482
        %1944 = vmatmul.mubr.bf16.gmra.mrb[0].mxu0 %v1481
        %v1945 = vpop.f32.mrb[0].mxu0
        %v1946 = vadd.f32 %v1564, %v1945
        %v1947 = vpop.f32.mrb[0].mxu0
        %v1948 = vadd.f32 %v1568, %v1947
        %v1949 = vpop.f32.mrb[0].mxu0
        %v1950 = vadd.f32 %v1564, %v1949
        %v1951 = vpop.f32.mrb[0].mxu0
        %v1952 = vadd.f32 %v1568, %v1951
        %1953 = vmatprep.mubr.bf16.mxu0 %v1484
        %1954 = vmatmul.mubr.bf16.gmra.mrb[0].mxu0 %v1483
        %v1955 = vpop.f32.mrb[0].mxu0
        %v1956 = vadd.f32 %v1564, %v1955
        %v1957 = vpop.f32.mrb[0].mxu0
        %v1958 = vadd.f32 %v1568, %v1957
        %v1959 = vpop.f32.mrb[0].mxu0
        %v1960 = vadd.f32 %v1564, %v1959
        %v1961 = vpop.f32.mrb[0].mxu0
        %v1962 = vadd.f32 %v1568, %v1961
        %1963 = vmatprep.mubr.bf16.mxu0 %v1486
        %1964 = vmatmul.mubr.bf16.gmra.mrb[0].mxu0 %v1485
        %v1965 = vpop.f32.mrb[0].mxu0
        %v1966 = vadd.f32 %v1564, %v1965
        %v1967 = vpop.f32.mrb[0].mxu0
        %v1968 = vadd.f32 %v1568, %v1967
        %v1969 = vpop.f32.mrb[0].mxu0
        %v1970 = vadd.f32 %v1564, %v1969
        %v1971 = vpop.f32.mrb[0].mxu0
        %v1972 = vadd.f32 %v1568, %v1971
        %1973 = vmatprep.mubr.bf16.mxu0 %v1488
        %1974 = vmatmul.mubr.bf16.gmra.mrb[0].mxu0 %v1487
        %v1975 = vpop.f32.mrb[0].mxu0
        %v1976 = vadd.f32 %v1564, %v1975
        %v1977 = vpop.f32.mrb[0].mxu0
        %v1978 = vadd.f32 %v1568, %v1977
        %v1979 = vpop.f32.mrb[0].mxu0
        %v1980 = vadd.f32 %v1564, %v1979
        %v1981 = vpop.f32.mrb[0].mxu0
        %v1982 = vadd.f32 %v1568, %v1981
        %1983 = vmatprep.mubr.bf16.mxu0 %v1490
        %1984 = vmatmul.mubr.bf16.gmra.mrb[0].mxu0 %v1489
        %v1985 = vpop.f32.mrb[0].mxu0
        %v1986 = vadd.f32 %v1564, %v1985
        %v1987 = vpop.f32.mrb[0].mxu0
        %v1988 = vadd.f32 %v1568, %v1987
        %v1989 = vpop.f32.mrb[0].mxu0
        %v1990 = vadd.f32 %v1564, %v1989
        %v1991 = vpop.f32.mrb[0].mxu0
        %v1992 = vadd.f32 %v1568, %v1991
        %1993 = vmatprep.mubr.bf16.mxu0 %v1492
        %1994 = vmatmul.mubr.bf16.gmra.mrb[0].mxu0 %v1491
        %v1995 = vpop.f32.mrb[0].mxu0
        %v1996 = vadd.f32 %v1564, %v1995
        %v1997 = vpop.f32.mrb[0].mxu0
        %v1998 = vadd.f32 %v1568, %v1997
        %v1999 = vpop.f32.mrb[0].mxu0
        %v2000 = vadd.f32 %v1564, %v1999
        %v2001 = vpop.f32.mrb[0].mxu0
        %v2002 = vadd.f32 %v1568, %v2001
        %2003 = vmatprep.mubr.bf16.mxu0 %v1494
        %2004 = vmatmul.mubr.bf16.gmra.mrb[0].mxu0 %v1493
        %v2005 = vpop.f32.mrb[0].mxu0
        %v2006 = vadd.f32 %v1564, %v2005
        %v2007 = vpop.f32.mrb[0].mxu0
        %v2008 = vadd.f32 %v1568, %v2007
        %v2009 = vpop.f32.mrb[0].mxu0
        %v2010 = vadd.f32 %v1564, %v2009
        %v2011 = vpop.f32.mrb[0].mxu0
        %v2012 = vadd.f32 %v1568, %v2011
        %2013 = vdwg.mxu0
        %2014 = vmatprep.subr.bf16.mxu0 %v1776
        %2015 = vmatpush1.bf16.msra.mxu0 %v1775
        %2016 = vmatprep.subr.bf16.mxu0 %v1780
        %2017 = vmatpush1.bf16.msra.mxu0 %v1779
        %2018 = vmatprep.subr.bf16.mxu0 %v1784
        %2019 = vmatpush1.bf16.msra.mxu0 %v1783
        %2020 = vmatprep.subr.bf16.mxu0 %v1788
        %2021 = vmatpush1.bf16.msra.mxu0 %v1787
        %2022 = vmatprep.subr.bf16.mxu0 %v1792
        %2023 = vmatpush1.bf16.msra.mxu0 %v1791
        %2024 = vmatprep.subr.bf16.mxu0 %v1796
        %2025 = vmatpush1.bf16.msra.mxu0 %v1795
        %2026 = vmatprep.subr.bf16.mxu0 %v1800
        %2027 = vmatpush1.bf16.msra.mxu0 %v1799
        %2028 = vmatprep.subr.bf16.mxu0 %v1804
        %2029 = vmatpush1.bf16.msra.mxu0 %v1803
        %2030 = vmatprep.subr.bf16.mxu0 %v1808
        %2031 = vmatpush1.bf16.msra.mxu0 %v1807
        %2032 = vmatprep.subr.bf16.mxu0 %v1812
        %2033 = vmatpush1.bf16.msra.mxu0 %v1811
        %2034 = vmatprep.subr.bf16.mxu0 %v1816
        %2035 = vmatpush1.bf16.msra.mxu0 %v1815
        %2036 = vmatprep.subr.bf16.mxu0 %v1820
        %2037 = vmatpush1.bf16.msra.mxu0 %v1819
        %2038 = vmatprep.subr.bf16.mxu0 %v1824
        %2039 = vmatpush1.bf16.msra.mxu0 %v1823
        %2040 = vmatprep.subr.bf16.mxu0 %v1828
        %2041 = vmatpush1.bf16.msra.mxu0 %v1827
        %2042 = vmatprep.subr.bf16.mxu0 %v1832
        %2043 = vmatpush1.bf16.msra.mxu0 %v1831
        %2044 = vmatprep.subr.bf16.mxu0 %v1836
        %2045 = vmatpush1.bf16.msra.mxu0 %v1835
        %2046 = vmatprep.mubr.bf16.mxu0 %v1480
        %2047 = vmatmul.mubr.bf16.gmra.mrb[0].mxu0 %v1479
        %v2048 = vpop.f32.mrb[0].mxu0
        %v2049 = vadd.f32 %v1572, %v2048
        %v2050 = vpop.f32.mrb[0].mxu0
        %v2051 = vadd.f32 %v1576, %v2050
        %v2052 = vpop.f32.mrb[0].mxu0
        %v2053 = vadd.f32 %v1572, %v2052
        %v2054 = vpop.f32.mrb[0].mxu0
        %v2055 = vadd.f32 %v1576, %v2054
        %2056 = vmatprep.mubr.bf16.mxu0 %v1482
        %2057 = vmatmul.mubr.bf16.gmra.mrb[0].mxu0 %v1481
        %v2058 = vpop.f32.mrb[0].mxu0
        %v2059 = vadd.f32 %v1572, %v2058
        %v2060 = vpop.f32.mrb[0].mxu0
        %v2061 = vadd.f32 %v1576, %v2060
        %v2062 = vpop.f32.mrb[0].mxu0
        %v2063 = vadd.f32 %v1572, %v2062
        %v2064 = vpop.f32.mrb[0].mxu0
        %v2065 = vadd.f32 %v1576, %v2064
        %2066 = vmatprep.mubr.bf16.mxu0 %v1484
        %2067 = vmatmul.mubr.bf16.gmra.mrb[0].mxu0 %v1483
        %v2068 = vpop.f32.mrb[0].mxu0
        %v2069 = vadd.f32 %v1572, %v2068
        %v2070 = vpop.f32.mrb[0].mxu0
        %v2071 = vadd.f32 %v1576, %v2070
        %v2072 = vpop.f32.mrb[0].mxu0
        %v2073 = vadd.f32 %v1572, %v2072
        %v2074 = vpop.f32.mrb[0].mxu0
        %v2075 = vadd.f32 %v1576, %v2074
        %2076 = vmatprep.mubr.bf16.mxu0 %v1486
        %2077 = vmatmul.mubr.bf16.gmra.mrb[0].mxu0 %v1485
        %v2078 = vpop.f32.mrb[0].mxu0
        %v2079 = vadd.f32 %v1572, %v2078
        %v2080 = vpop.f32.mrb[0].mxu0
        %v2081 = vadd.f32 %v1576, %v2080
        %v2082 = vpop.f32.mrb[0].mxu0
        %v2083 = vadd.f32 %v1572, %v2082
        %v2084 = vpop.f32.mrb[0].mxu0
        %v2085 = vadd.f32 %v1576, %v2084
        %2086 = vmatprep.mubr.bf16.mxu0 %v1488
        %2087 = vmatmul.mubr.bf16.gmra.mrb[0].mxu0 %v1487
        %v2088 = vpop.f32.mrb[0].mxu0
        %v2089 = vadd.f32 %v1572, %v2088
        %v2090 = vpop.f32.mrb[0].mxu0
        %v2091 = vadd.f32 %v1576, %v2090
        %v2092 = vpop.f32.mrb[0].mxu0
        %v2093 = vadd.f32 %v1572, %v2092
        %v2094 = vpop.f32.mrb[0].mxu0
        %v2095 = vadd.f32 %v1576, %v2094
        %2096 = vmatprep.mubr.bf16.mxu0 %v1490
        %2097 = vmatmul.mubr.bf16.gmra.mrb[0].mxu0 %v1489
        %v2098 = vpop.f32.mrb[0].mxu0
        %v2099 = vadd.f32 %v1572, %v2098
        %v2100 = vpop.f32.mrb[0].mxu0
        %v2101 = vadd.f32 %v1576, %v2100
        %v2102 = vpop.f32.mrb[0].mxu0
        %v2103 = vadd.f32 %v1572, %v2102
        %v2104 = vpop.f32.mrb[0].mxu0
        %v2105 = vadd.f32 %v1576, %v2104
        %2106 = vmatprep.mubr.bf16.mxu0 %v1492
        %2107 = vmatmul.mubr.bf16.gmra.mrb[0].mxu0 %v1491
        %v2108 = vpop.f32.mrb[0].mxu0
        %v2109 = vadd.f32 %v1572, %v2108
        %v2110 = vpop.f32.mrb[0].mxu0
        %v2111 = vadd.f32 %v1576, %v2110
        %v2112 = vpop.f32.mrb[0].mxu0
        %v2113 = vadd.f32 %v1572, %v2112
        %v2114 = vpop.f32.mrb[0].mxu0
        %v2115 = vadd.f32 %v1576, %v2114
        %2116 = vmatprep.mubr.bf16.mxu0 %v1494
        %2117 = vmatmul.mubr.bf16.gmra.mrb[0].mxu0 %v1493
        %v2118 = vpop.f32.mrb[0].mxu0
        %v2119 = vadd.f32 %v1572, %v2118
        %v2120 = vpop.f32.mrb[0].mxu0
        %v2121 = vadd.f32 %v1576, %v2120
        %v2122 = vpop.f32.mrb[0].mxu0
        %v2123 = vadd.f32 %v1572, %v2122
        %v2124 = vpop.f32.mrb[0].mxu0
        %v2125 = vadd.f32 %v1576, %v2124
        %2126 = vdwg.mxu0
        %v2127 = vadd.f32 %v1936, %v1940
        %v2128 = vadd.f32 %v2127, %v1946
        %v2129 = vadd.f32 %v2128, %v1950
        %v2130 = vadd.f32 %v2129, %v1956
        %v2131 = vadd.f32 %v2130, %v1960
        %v2132 = vadd.f32 %v2131, %v1966
        %v2133 = vadd.f32 %v2132, %v1970
        %v2134 = vadd.f32 %v2133, %v1976
        %v2135 = vadd.f32 %v2134, %v1980
        %v2136 = vadd.f32 %v2135, %v1986
        %v2137 = vadd.f32 %v2136, %v1990
        %v2138 = vadd.f32 %v2137, %v1996
        %v2139 = vadd.f32 %v2138, %v2000
        %v2140 = vadd.f32 %v2139, %v2006
        %v2141 = vadd.f32 %v2140, %v2010
        %v2142 = vrot.slane %v2141, 4
        %v2143 = vadd.f32 %v2141, %v2142
        %v2144 = vrot.slane %v2143, 2
        %v2145 = vadd.f32 %v2143, %v2144
        %v2146 = vrot.slane %v2145, 1
        %v2147 = vadd.f32 %v2145, %v2146
        %v2148 = vadd.f32 %v1938, %v1942
        %v2149 = vadd.f32 %v2148, %v1948
        %v2150 = vadd.f32 %v2149, %v1952
        %v2151 = vadd.f32 %v2150, %v1958
        %v2152 = vadd.f32 %v2151, %v1962
        %v2153 = vadd.f32 %v2152, %v1968
        %v2154 = vadd.f32 %v2153, %v1972
        %v2155 = vadd.f32 %v2154, %v1978
        %v2156 = vadd.f32 %v2155, %v1982
        %v2157 = vadd.f32 %v2156, %v1988
        %v2158 = vadd.f32 %v2157, %v1992
        %v2159 = vadd.f32 %v2158, %v1998
        %v2160 = vadd.f32 %v2159, %v2002
        %v2161 = vadd.f32 %v2160, %v2008
        %v2162 = vadd.f32 %v2161, %v2012
        %v2163 = vrot.slane %v2162, 4
        %v2164 = vadd.f32 %v2162, %v2163
        %v2165 = vrot.slane %v2164, 2
        %v2166 = vadd.f32 %v2164, %v2165
        %v2167 = vrot.slane %v2166, 1
        %v2168 = vadd.f32 %v2166, %v2167
        %v2169 = vadd.f32 %v2049, %v2053
        %v2170 = vadd.f32 %v2169, %v2059
        %v2171 = vadd.f32 %v2170, %v2063
        %v2172 = vadd.f32 %v2171, %v2069
        %v2173 = vadd.f32 %v2172, %v2073
        %v2174 = vadd.f32 %v2173, %v2079
        %v2175 = vadd.f32 %v2174, %v2083
        %v2176 = vadd.f32 %v2175, %v2089
        %v2177 = vadd.f32 %v2176, %v2093
        %v2178 = vadd.f32 %v2177, %v2099
        %v2179 = vadd.f32 %v2178, %v2103
        %v2180 = vadd.f32 %v2179, %v2109
        %v2181 = vadd.f32 %v2180, %v2113
        %v2182 = vadd.f32 %v2181, %v2119
        %v2183 = vadd.f32 %v2182, %v2123
        %v2184 = vrot.slane %v2183, 4
        %v2185 = vadd.f32 %v2183, %v2184
        %v2186 = vrot.slane %v2185, 2
        %v2187 = vadd.f32 %v2185, %v2186
        %v2188 = vrot.slane %v2187, 1
        %v2189 = vadd.f32 %v2187, %v2188
        %v2190 = vadd.f32 %v2051, %v2055
        %v2191 = vadd.f32 %v2190, %v2061
        %v2192 = vadd.f32 %v2191, %v2065
        %v2193 = vadd.f32 %v2192, %v2071
        %v2194 = vadd.f32 %v2193, %v2075
        %v2195 = vadd.f32 %v2194, %v2081
        %v2196 = vadd.f32 %v2195, %v2085
        %v2197 = vadd.f32 %v2196, %v2091
        %v2198 = vadd.f32 %v2197, %v2095
        %v2199 = vadd.f32 %v2198, %v2101
        %v2200 = vadd.f32 %v2199, %v2105
        %v2201 = vadd.f32 %v2200, %v2111
        %v2202 = vadd.f32 %v2201, %v2115
        %v2203 = vadd.f32 %v2202, %v2121
        %v2204 = vadd.f32 %v2203, %v2125
        %v2205 = vrot.slane %v2204, 4
        %v2206 = vadd.f32 %v2204, %v2205
        %v2207 = vrot.slane %v2206, 2
        %v2208 = vadd.f32 %v2206, %v2207
        %v2209 = vrot.slane %v2208, 1
        %v2210 = vadd.f32 %v2208, %v2209
        %v2211 = vmul.f32 %v2147, %v1168
        %v2212 = vmul.f32 %v2168, %v1168
        %v2213 = vmul.f32 %v2189, %v1168
        %v2214 = vmul.f32 %v2210, %v1168
        %v2215 = vmul.f32 %v1936, %v1936
        %v2216 = vmul.f32 %v1938, %v1938
        %v2217 = vmul.f32 %v2049, %v2049
        %v2218 = vmul.f32 %v2051, %v2051
        %v2219 = vmul.f32 %v1940, %v1940
        %v2220 = vmul.f32 %v1942, %v1942
        %v2221 = vmul.f32 %v2053, %v2053
        %v2222 = vmul.f32 %v2055, %v2055
        %v2223 = vmul.f32 %v1946, %v1946
        %v2224 = vmul.f32 %v1948, %v1948
        %v2225 = vmul.f32 %v2059, %v2059
        %v2226 = vmul.f32 %v2061, %v2061
        %v2227 = vmul.f32 %v1950, %v1950
        %v2228 = vmul.f32 %v1952, %v1952
        %v2229 = vmul.f32 %v2063, %v2063
        %v2230 = vmul.f32 %v2065, %v2065
        %v2231 = vmul.f32 %v1956, %v1956
        %v2232 = vmul.f32 %v1958, %v1958
        %v2233 = vmul.f32 %v2069, %v2069
        %v2234 = vmul.f32 %v2071, %v2071
        %v2235 = vmul.f32 %v1960, %v1960
        %v2236 = vmul.f32 %v1962, %v1962
        %v2237 = vmul.f32 %v2073, %v2073
        %v2238 = vmul.f32 %v2075, %v2075
        %v2239 = vmul.f32 %v1966, %v1966
        %v2240 = vmul.f32 %v1968, %v1968
        %v2241 = vmul.f32 %v2079, %v2079
        %v2242 = vmul.f32 %v2081, %v2081
        %v2243 = vmul.f32 %v1970, %v1970
        %v2244 = vmul.f32 %v1972, %v1972
        %v2245 = vmul.f32 %v2083, %v2083
        %v2246 = vmul.f32 %v2085, %v2085
        %v2247 = vmul.f32 %v1976, %v1976
        %v2248 = vmul.f32 %v1978, %v1978
        %v2249 = vmul.f32 %v2089, %v2089
        %v2250 = vmul.f32 %v2091, %v2091
        %v2251 = vmul.f32 %v1980, %v1980
        %v2252 = vmul.f32 %v1982, %v1982
        %v2253 = vmul.f32 %v2093, %v2093
        %v2254 = vmul.f32 %v2095, %v2095
        %v2255 = vmul.f32 %v1986, %v1986
        %v2256 = vmul.f32 %v1988, %v1988
        %v2257 = vmul.f32 %v2099, %v2099
        %v2258 = vmul.f32 %v2101, %v2101
        %v2259 = vmul.f32 %v1990, %v1990
        %v2260 = vmul.f32 %v1992, %v1992
        %v2261 = vmul.f32 %v2103, %v2103
        %v2262 = vmul.f32 %v2105, %v2105
        %v2263 = vmul.f32 %v1996, %v1996
        %v2264 = vmul.f32 %v1998, %v1998
        %v2265 = vmul.f32 %v2109, %v2109
        %v2266 = vmul.f32 %v2111, %v2111
        %v2267 = vmul.f32 %v2000, %v2000
        %v2268 = vmul.f32 %v2002, %v2002
        %v2269 = vmul.f32 %v2113, %v2113
        %v2270 = vmul.f32 %v2115, %v2115
        %v2271 = vmul.f32 %v2006, %v2006
        %v2272 = vmul.f32 %v2008, %v2008
        %v2273 = vmul.f32 %v2119, %v2119
        %v2274 = vmul.f32 %v2121, %v2121
        %v2275 = vmul.f32 %v2010, %v2010
        %v2276 = vmul.f32 %v2012, %v2012
        %v2277 = vmul.f32 %v2123, %v2123
        %v2278 = vmul.f32 %v2125, %v2125
        %v2279 = vadd.f32 %v2215, %v2219
        %v2280 = vadd.f32 %v2279, %v2223
        %v2281 = vadd.f32 %v2280, %v2227
        %v2282 = vadd.f32 %v2281, %v2231
        %v2283 = vadd.f32 %v2282, %v2235
        %v2284 = vadd.f32 %v2283, %v2239
        %v2285 = vadd.f32 %v2284, %v2243
        %v2286 = vadd.f32 %v2285, %v2247
        %v2287 = vadd.f32 %v2286, %v2251
        %v2288 = vadd.f32 %v2287, %v2255
        %v2289 = vadd.f32 %v2288, %v2259
        %v2290 = vadd.f32 %v2289, %v2263
        %v2291 = vadd.f32 %v2290, %v2267
        %v2292 = vadd.f32 %v2291, %v2271
        %v2293 = vadd.f32 %v2292, %v2275
        %v2294 = vrot.slane %v2293, 4
        %v2295 = vadd.f32 %v2293, %v2294
        %v2296 = vrot.slane %v2295, 2
        %v2297 = vadd.f32 %v2295, %v2296
        %v2298 = vrot.slane %v2297, 1
        %v2299 = vadd.f32 %v2297, %v2298
        %v2300 = vadd.f32 %v2216, %v2220
        %v2301 = vadd.f32 %v2300, %v2224
        %v2302 = vadd.f32 %v2301, %v2228
        %v2303 = vadd.f32 %v2302, %v2232
        %v2304 = vadd.f32 %v2303, %v2236
        %v2305 = vadd.f32 %v2304, %v2240
        %v2306 = vadd.f32 %v2305, %v2244
        %v2307 = vadd.f32 %v2306, %v2248
        %v2308 = vadd.f32 %v2307, %v2252
        %v2309 = vadd.f32 %v2308, %v2256
        %v2310 = vadd.f32 %v2309, %v2260
        %v2311 = vadd.f32 %v2310, %v2264
        %v2312 = vadd.f32 %v2311, %v2268
        %v2313 = vadd.f32 %v2312, %v2272
        %v2314 = vadd.f32 %v2313, %v2276
        %v2315 = vrot.slane %v2314, 4
        %v2316 = vadd.f32 %v2314, %v2315
        %v2317 = vrot.slane %v2316, 2
        %v2318 = vadd.f32 %v2316, %v2317
        %v2319 = vrot.slane %v2318, 1
        %v2320 = vadd.f32 %v2318, %v2319
        %v2321 = vadd.f32 %v2217, %v2221
        %v2322 = vadd.f32 %v2321, %v2225
        %v2323 = vadd.f32 %v2322, %v2229
        %v2324 = vadd.f32 %v2323, %v2233
        %v2325 = vadd.f32 %v2324, %v2237
        %v2326 = vadd.f32 %v2325, %v2241
        %v2327 = vadd.f32 %v2326, %v2245
        %v2328 = vadd.f32 %v2327, %v2249
        %v2329 = vadd.f32 %v2328, %v2253
        %v2330 = vadd.f32 %v2329, %v2257
        %v2331 = vadd.f32 %v2330, %v2261
        %v2332 = vadd.f32 %v2331, %v2265
        %v2333 = vadd.f32 %v2332, %v2269
        %v2334 = vadd.f32 %v2333, %v2273
        %v2335 = vadd.f32 %v2334, %v2277
        %v2336 = vrot.slane %v2335, 4
        %v2337 = vadd.f32 %v2335, %v2336
        %v2338 = vrot.slane %v2337, 2
        %v2339 = vadd.f32 %v2337, %v2338
        %v2340 = vrot.slane %v2339, 1
        %v2341 = vadd.f32 %v2339, %v2340
        %v2342 = vadd.f32 %v2218, %v2222
        %v2343 = vadd.f32 %v2342, %v2226
        %v2344 = vadd.f32 %v2343, %v2230
        %v2345 = vadd.f32 %v2344, %v2234
        %v2346 = vadd.f32 %v2345, %v2238
        %v2347 = vadd.f32 %v2346, %v2242
        %v2348 = vadd.f32 %v2347, %v2246
        %v2349 = vadd.f32 %v2348, %v2250
        %v2350 = vadd.f32 %v2349, %v2254
        %v2351 = vadd.f32 %v2350, %v2258
        %v2352 = vadd.f32 %v2351, %v2262
        %v2353 = vadd.f32 %v2352, %v2266
        %v2354 = vadd.f32 %v2353, %v2270
        %v2355 = vadd.f32 %v2354, %v2274
        %v2356 = vadd.f32 %v2355, %v2278
        %v2357 = vrot.slane %v2356, 4
        %v2358 = vadd.f32 %v2356, %v2357
        %v2359 = vrot.slane %v2358, 2
        %v2360 = vadd.f32 %v2358, %v2359
        %v2361 = vrot.slane %v2360, 1
        %v2362 = vadd.f32 %v2360, %v2361
        %v2363 = vmul.f32 %v2299, %v1168
        %v2364 = vmul.f32 %v2320, %v1168
        %v2365 = vmul.f32 %v2341, %v1168
        %v2366 = vmul.f32 %v2362, %v1168
        %v2367 = vmul.f32 %v2211, %v2211
        %v2368 = vmul.f32 %v2212, %v2212
        %v2369 = vmul.f32 %v2213, %v2213
        %v2370 = vmul.f32 %v2214, %v2214
        %v2371 = vsub.f32 %v2363, %v2367
        %v2372 = vsub.f32 %v2364, %v2368
        %v2373 = vsub.f32 %v2365, %v2369
        %v2374 = vsub.f32 %v2366, %v2370
        %v2375 = vld [vmem:[#allocation8 + $0xb] sm:$0xf]
        %v2376 = vadd.f32 %v2371, 0.8
        %v2377 = vadd.f32 %v2372, 0.8
        %v2378 = vadd.f32 %v2373, 0.8
        %v2379 = vadd.f32 %v2374, 0.8
        %v2380 = vrsqrt.pop %v2376
        %v2381 = vrsqrt.pop %v2377
        %v2382 = vrsqrt.pop %v2378
        %v2383 = vrsqrt.pop %v2379
        %v2388 = vcombine.low %v2380, %v2381
        %v2389 = vcombine.low %v2382, %v2383
        %v2391 = vunpack.c.l.s4 1966171168
        %v2392 = vunpack.c.0.s8 %v2391
        %v2393 = vlaneseq
        %v2394 = vshrl.u32 %v2393, 7
        %v2395 = vsub.s32 %v2392, %v2394
        %v2396 = vrot.slane %v2388, %v2395
        %v2398 = vunpack.c.l.s4 1966171168
        %v2399 = vunpack.c.0.s8 %v2398
        %v2400 = vlaneseq
        %v2401 = vshrl.u32 %v2400, 7
        %v2402 = vsub.s32 %v2399, %v2401
        %v2403 = vrot.slane %v2389, %v2402
        %v2404 = vcombine.low %v2396, %v2403
        %v2406 = vunpack.c.l.s4 1966171168
        %v2407 = vunpack.c.0.s8 %v2406
        %v2408 = vlaneseq
        %v2409 = vshrl.u32 %v2408, 7
        %v2410 = vsub.s32 %v2407, %v2409
        %v2411 = vrot.slane %v2404, %v2410
        %v2413 = vmul.f32 %v2375, %v2411
        %v2414 = vld [vmem:[#allocation8 + $0xf] sm:$0xf]
        %v2416 = vlaneseq
        %v2417 = vshrl.u32 %v2416, 7
        %v2418 = vsub.s32 0, %v2417
        %v2419 = vrot.slane %v2413, %v2418
        %v2420 = vlaneseq
        %v2421 = vshrl.u32 %v2420, 7
        %v2422 = vsub.s32 1, %v2421
        %v2423 = vrot.slane %v2413, %v2422
        %v2424 = vlaneseq
        %v2425 = vshrl.u32 %v2424, 7
        %v2426 = vsub.s32 2, %v2425
        %v2427 = vrot.slane %v2413, %v2426
        %v2428 = vlaneseq
        %v2429 = vshrl.u32 %v2428, 7
        %v2430 = vsub.s32 3, %v2429
        %v2431 = vrot.slane %v2413, %v2430
        %v2436 = vmul.f32 %v2211, %v2419
        %v2437 = vmul.f32 %v2212, %v2423
        %v2438 = vmul.f32 %v2213, %v2427
        %v2439 = vmul.f32 %v2214, %v2431
        %v2444 = vcombine.low %v2436, %v2437
        %v2445 = vcombine.low %v2438, %v2439
        %v2447 = vunpack.c.l.s4 1966171168
        %v2448 = vunpack.c.0.s8 %v2447
        %v2449 = vlaneseq
        %v2450 = vshrl.u32 %v2449, 7
        %v2451 = vsub.s32 %v2448, %v2450
        %v2452 = vrot.slane %v2444, %v2451
        %v2454 = vunpack.c.l.s4 1966171168
        %v2455 = vunpack.c.0.s8 %v2454
        %v2456 = vlaneseq
        %v2457 = vshrl.u32 %v2456, 7
        %v2458 = vsub.s32 %v2455, %v2457
        %v2459 = vrot.slane %v2445, %v2458
        %v2460 = vcombine.low %v2452, %v2459
        %v2462 = vunpack.c.l.s4 1966171168
        %v2463 = vunpack.c.0.s8 %v2462
        %v2464 = vlaneseq
        %v2465 = vshrl.u32 %v2464, 7
        %v2466 = vsub.s32 %v2463, %v2465
        %v2467 = vrot.slane %v2460, %v2466
        %v2469 = vsub.f32 %v2414, %v2467
        %v2470 = vmul.f32 %v1936, %v2419
        %v2471 = vmul.f32 %v1938, %v2423
        %v2472 = vmul.f32 %v2049, %v2427
        %v2473 = vmul.f32 %v2051, %v2431
        %v2474 = vmul.f32 %v1940, %v2419
        %v2475 = vmul.f32 %v1942, %v2423
        %v2476 = vmul.f32 %v2053, %v2427
        %v2477 = vmul.f32 %v2055, %v2431
        %v2478 = vmul.f32 %v1946, %v2419
        %v2479 = vmul.f32 %v1948, %v2423
        %v2480 = vmul.f32 %v2059, %v2427
        %v2481 = vmul.f32 %v2061, %v2431
        %v2482 = vmul.f32 %v1950, %v2419
        %v2483 = vmul.f32 %v1952, %v2423
        %v2484 = vmul.f32 %v2063, %v2427
        %v2485 = vmul.f32 %v2065, %v2431
        %v2486 = vmul.f32 %v1956, %v2419
        %v2487 = vmul.f32 %v1958, %v2423
        %v2488 = vmul.f32 %v2069, %v2427
        %v2489 = vmul.f32 %v2071, %v2431
        %v2490 = vmul.f32 %v1960, %v2419
        %v2491 = vmul.f32 %v1962, %v2423
        %v2492 = vmul.f32 %v2073, %v2427
        %v2493 = vmul.f32 %v2075, %v2431
        %v2494 = vmul.f32 %v1966, %v2419
        %v2495 = vmul.f32 %v1968, %v2423
        %v2496 = vmul.f32 %v2079, %v2427
        %v2497 = vmul.f32 %v2081, %v2431
        %v2498 = vmul.f32 %v1970, %v2419
        %v2499 = vmul.f32 %v1972, %v2423
        %v2500 = vmul.f32 %v2083, %v2427
        %v2501 = vmul.f32 %v2085, %v2431
        %v2502 = vmul.f32 %v1976, %v2419
        %v2503 = vmul.f32 %v1978, %v2423
        %v2504 = vmul.f32 %v2089, %v2427
        %v2505 = vmul.f32 %v2091, %v2431
        %v2506 = vmul.f32 %v1980, %v2419
        %v2507 = vmul.f32 %v1982, %v2423
        %v2508 = vmul.f32 %v2093, %v2427
        %v2509 = vmul.f32 %v2095, %v2431
        %v2510 = vmul.f32 %v1986, %v2419
        %v2511 = vmul.f32 %v1988, %v2423
        %v2512 = vmul.f32 %v2099, %v2427
        %v2513 = vmul.f32 %v2101, %v2431
        %v2514 = vmul.f32 %v1990, %v2419
        %v2515 = vmul.f32 %v1992, %v2423
        %v2516 = vmul.f32 %v2103, %v2427
        %v2517 = vmul.f32 %v2105, %v2431
        %v2518 = vmul.f32 %v1996, %v2419
        %v2519 = vmul.f32 %v1998, %v2423
        %v2520 = vmul.f32 %v2109, %v2427
        %v2521 = vmul.f32 %v2111, %v2431
        %v2522 = vmul.f32 %v2000, %v2419
        %v2523 = vmul.f32 %v2002, %v2423
        %v2524 = vmul.f32 %v2113, %v2427
        %v2525 = vmul.f32 %v2115, %v2431
        %v2526 = vmul.f32 %v2006, %v2419
        %v2527 = vmul.f32 %v2008, %v2423
        %v2528 = vmul.f32 %v2119, %v2427
        %v2529 = vmul.f32 %v2121, %v2431
        %v2530 = vmul.f32 %v2010, %v2419
        %v2531 = vmul.f32 %v2012, %v2423
        %v2532 = vmul.f32 %v2123, %v2427
        %v2533 = vmul.f32 %v2125, %v2431
        %v2535 = vlaneseq
        %v2536 = vshrl.u32 %v2535, 7
        %v2537 = vsub.s32 0, %v2536
        %v2538 = vrot.slane %v2469, %v2537
        %v2539 = vlaneseq
        %v2540 = vshrl.u32 %v2539, 7
        %v2541 = vsub.s32 1, %v2540
        %v2542 = vrot.slane %v2469, %v2541
        %v2543 = vlaneseq
        %v2544 = vshrl.u32 %v2543, 7
        %v2545 = vsub.s32 2, %v2544
        %v2546 = vrot.slane %v2469, %v2545
        %v2547 = vlaneseq
        %v2548 = vshrl.u32 %v2547, 7
        %v2549 = vsub.s32 3, %v2548
        %v2550 = vrot.slane %v2469, %v2549
        %v2555 = vadd.f32 %v2470, %v2538
        %v2556 = vadd.f32 %v2471, %v2542
        %v2557 = vadd.f32 %v2472, %v2546
        %v2558 = vadd.f32 %v2473, %v2550
        %v2559 = vadd.f32 %v2474, %v2538
        %v2560 = vadd.f32 %v2475, %v2542
        %v2561 = vadd.f32 %v2476, %v2546
        %v2562 = vadd.f32 %v2477, %v2550
        %v2563 = vadd.f32 %v2478, %v2538
        %v2564 = vadd.f32 %v2479, %v2542
        %v2565 = vadd.f32 %v2480, %v2546
        %v2566 = vadd.f32 %v2481, %v2550
        %v2567 = vadd.f32 %v2482, %v2538
        %v2568 = vadd.f32 %v2483, %v2542
        %v2569 = vadd.f32 %v2484, %v2546
        %v2570 = vadd.f32 %v2485, %v2550
        %v2571 = vadd.f32 %v2486, %v2538
        %v2572 = vadd.f32 %v2487, %v2542
        %v2573 = vadd.f32 %v2488, %v2546
        %v2574 = vadd.f32 %v2489, %v2550
        %v2575 = vadd.f32 %v2490, %v2538
        %v2576 = vadd.f32 %v2491, %v2542
        %v2577 = vadd.f32 %v2492, %v2546
        %v2578 = vadd.f32 %v2493, %v2550
        %v2579 = vadd.f32 %v2494, %v2538
        %v2580 = vadd.f32 %v2495, %v2542
        %v2581 = vadd.f32 %v2496, %v2546
        %v2582 = vadd.f32 %v2497, %v2550
        %v2583 = vadd.f32 %v2498, %v2538
        %v2584 = vadd.f32 %v2499, %v2542
        %v2585 = vadd.f32 %v2500, %v2546
        %v2586 = vadd.f32 %v2501, %v2550
        %v2587 = vadd.f32 %v2502, %v2538
        %v2588 = vadd.f32 %v2503, %v2542
        %v2589 = vadd.f32 %v2504, %v2546
        %v2590 = vadd.f32 %v2505, %v2550
        %v2591 = vadd.f32 %v2506, %v2538
        %v2592 = vadd.f32 %v2507, %v2542
        %v2593 = vadd.f32 %v2508, %v2546
        %v2594 = vadd.f32 %v2509, %v2550
        %v2595 = vadd.f32 %v2510, %v2538
        %v2596 = vadd.f32 %v2511, %v2542
        %v2597 = vadd.f32 %v2512, %v2546
        %v2598 = vadd.f32 %v2513, %v2550
        %v2599 = vadd.f32 %v2514, %v2538
        %v2600 = vadd.f32 %v2515, %v2542
        %v2601 = vadd.f32 %v2516, %v2546
        %v2602 = vadd.f32 %v2517, %v2550
        %v2603 = vadd.f32 %v2518, %v2538
        %v2604 = vadd.f32 %v2519, %v2542
        %v2605 = vadd.f32 %v2520, %v2546
        %v2606 = vadd.f32 %v2521, %v2550
        %v2607 = vadd.f32 %v2522, %v2538
        %v2608 = vadd.f32 %v2523, %v2542
        %v2609 = vadd.f32 %v2524, %v2546
        %v2610 = vadd.f32 %v2525, %v2550
        %v2611 = vadd.f32 %v2526, %v2538
        %v2612 = vadd.f32 %v2527, %v2542
        %v2613 = vadd.f32 %v2528, %v2546
        %v2614 = vadd.f32 %v2529, %v2550
        %v2615 = vadd.f32 %v2530, %v2538
        %v2616 = vadd.f32 %v2531, %v2542
        %v2617 = vadd.f32 %v2532, %v2546
        %v2618 = vadd.f32 %v2533, %v2550
        %vm2619 = vcmp.gt.f32.partialorder %v2555, 0.0
        %vm2620 = vcmp.gt.f32.partialorder %v2556, 0.0
        %vm2621 = vcmp.gt.f32.partialorder %v2557, 0.0
        %vm2622 = vcmp.gt.f32.partialorder %v2558, 0.0
        %vm2623 = vcmp.gt.f32.partialorder %v2559, 0.0
        %vm2624 = vcmp.gt.f32.partialorder %v2560, 0.0
        %vm2625 = vcmp.gt.f32.partialorder %v2561, 0.0
        %vm2626 = vcmp.gt.f32.partialorder %v2562, 0.0
        %vm2627 = vcmp.gt.f32.partialorder %v2563, 0.0
        %vm2628 = vcmp.gt.f32.partialorder %v2564, 0.0
        %vm2629 = vcmp.gt.f32.partialorder %v2565, 0.0
        %vm2630 = vcmp.gt.f32.partialorder %v2566, 0.0
        %vm2631 = vcmp.gt.f32.partialorder %v2567, 0.0
        %vm2632 = vcmp.gt.f32.partialorder %v2568, 0.0
        %vm2633 = vcmp.gt.f32.partialorder %v2569, 0.0
        %vm2634 = vcmp.gt.f32.partialorder %v2570, 0.0
        %vm2635 = vcmp.gt.f32.partialorder %v2571, 0.0
        %vm2636 = vcmp.gt.f32.partialorder %v2572, 0.0
        %vm2637 = vcmp.gt.f32.partialorder %v2573, 0.0
        %vm2638 = vcmp.gt.f32.partialorder %v2574, 0.0
        %vm2639 = vcmp.gt.f32.partialorder %v2575, 0.0
        %vm2640 = vcmp.gt.f32.partialorder %v2576, 0.0
        %vm2641 = vcmp.gt.f32.partialorder %v2577, 0.0
        %vm2642 = vcmp.gt.f32.partialorder %v2578, 0.0
        %vm2643 = vcmp.gt.f32.partialorder %v2579, 0.0
        %vm2644 = vcmp.gt.f32.partialorder %v2580, 0.0
        %vm2645 = vcmp.gt.f32.partialorder %v2581, 0.0
        %vm2646 = vcmp.gt.f32.partialorder %v2582, 0.0
        %vm2647 = vcmp.gt.f32.partialorder %v2583, 0.0
        %vm2648 = vcmp.gt.f32.partialorder %v2584, 0.0
        %vm2649 = vcmp.gt.f32.partialorder %v2585, 0.0
        %vm2650 = vcmp.gt.f32.partialorder %v2586, 0.0
        %vm2651 = vcmp.gt.f32.partialorder %v2587, 0.0
        %vm2652 = vcmp.gt.f32.partialorder %v2588, 0.0
        %vm2653 = vcmp.gt.f32.partialorder %v2589, 0.0
        %vm2654 = vcmp.gt.f32.partialorder %v2590, 0.0
        %vm2655 = vcmp.gt.f32.partialorder %v2591, 0.0
        %vm2656 = vcmp.gt.f32.partialorder %v2592, 0.0
        %vm2657 = vcmp.gt.f32.partialorder %v2593, 0.0
        %vm2658 = vcmp.gt.f32.partialorder %v2594, 0.0
        %vm2659 = vcmp.gt.f32.partialorder %v2595, 0.0
        %vm2660 = vcmp.gt.f32.partialorder %v2596, 0.0
        %vm2661 = vcmp.gt.f32.partialorder %v2597, 0.0
        %vm2662 = vcmp.gt.f32.partialorder %v2598, 0.0
        %vm2663 = vcmp.gt.f32.partialorder %v2599, 0.0
        %vm2664 = vcmp.gt.f32.partialorder %v2600, 0.0
        %vm2665 = vcmp.gt.f32.partialorder %v2601, 0.0
        %vm2666 = vcmp.gt.f32.partialorder %v2602, 0.0
        %vm2667 = vcmp.gt.f32.partialorder %v2603, 0.0
        %vm2668 = vcmp.gt.f32.partialorder %v2604, 0.0
        %vm2669 = vcmp.gt.f32.partialorder %v2605, 0.0
        %vm2670 = vcmp.gt.f32.partialorder %v2606, 0.0
        %vm2671 = vcmp.gt.f32.partialorder %v2607, 0.0
        %vm2672 = vcmp.gt.f32.partialorder %v2608, 0.0
        %vm2673 = vcmp.gt.f32.partialorder %v2609, 0.0
        %vm2674 = vcmp.gt.f32.partialorder %v2610, 0.0
        %vm2675 = vcmp.gt.f32.partialorder %v2611, 0.0
        %vm2676 = vcmp.gt.f32.partialorder %v2612, 0.0
        %vm2677 = vcmp.gt.f32.partialorder %v2613, 0.0
        %vm2678 = vcmp.gt.f32.partialorder %v2614, 0.0
        %vm2679 = vcmp.gt.f32.partialorder %v2615, 0.0
        %vm2680 = vcmp.gt.f32.partialorder %v2616, 0.0
        %vm2681 = vcmp.gt.f32.partialorder %v2617, 0.0
        %vm2682 = vcmp.gt.f32.partialorder %v2618, 0.0
        %v2683 = vmul.f32 %v2555, 0.2
        %v2684 = vmul.f32 %v2556, 0.2
        %v2685 = vmul.f32 %v2557, 0.2
        %v2686 = vmul.f32 %v2558, 0.2
        %v2687 = vmul.f32 %v2559, 0.2
        %v2688 = vmul.f32 %v2560, 0.2
        %v2689 = vmul.f32 %v2561, 0.2
        %v2690 = vmul.f32 %v2562, 0.2
        %v2691 = vmul.f32 %v2563, 0.2
        %v2692 = vmul.f32 %v2564, 0.2
        %v2693 = vmul.f32 %v2565, 0.2
        %v2694 = vmul.f32 %v2566, 0.2
        %v2695 = vmul.f32 %v2567, 0.2
        %v2696 = vmul.f32 %v2568, 0.2
        %v2697 = vmul.f32 %v2569, 0.2
        %v2698 = vmul.f32 %v2570, 0.2
        %v2699 = vmul.f32 %v2571, 0.2
        %v2700 = vmul.f32 %v2572, 0.2
        %v2701 = vmul.f32 %v2573, 0.2
        %v2702 = vmul.f32 %v2574, 0.2
        %v2703 = vmul.f32 %v2575, 0.2
        %v2704 = vmul.f32 %v2576, 0.2
        %v2705 = vmul.f32 %v2577, 0.2
        %v2706 = vmul.f32 %v2578, 0.2
        %v2707 = vmul.f32 %v2579, 0.2
        %v2708 = vmul.f32 %v2580, 0.2
        %v2709 = vmul.f32 %v2581, 0.2
        %v2710 = vmul.f32 %v2582, 0.2
        %v2711 = vmul.f32 %v2583, 0.2
        %v2712 = vmul.f32 %v2584, 0.2
        %v2713 = vmul.f32 %v2585, 0.2
        %v2714 = vmul.f32 %v2586, 0.2
        %v2715 = vmul.f32 %v2587, 0.2
        %v2716 = vmul.f32 %v2588, 0.2
        %v2717 = vmul.f32 %v2589, 0.2
        %v2718 = vmul.f32 %v2590, 0.2
        %v2719 = vmul.f32 %v2591, 0.2
        %v2720 = vmul.f32 %v2592, 0.2
        %v2721 = vmul.f32 %v2593, 0.2
        %v2722 = vmul.f32 %v2594, 0.2
        %v2723 = vmul.f32 %v2595, 0.2
        %v2724 = vmul.f32 %v2596, 0.2
        %v2725 = vmul.f32 %v2597, 0.2
        %v2726 = vmul.f32 %v2598, 0.2
        %v2727 = vmul.f32 %v2599, 0.2
        %v2728 = vmul.f32 %v2600, 0.2
        %v2729 = vmul.f32 %v2601, 0.2
        %v2730 = vmul.f32 %v2602, 0.2
        %v2731 = vmul.f32 %v2603, 0.2
        %v2732 = vmul.f32 %v2604, 0.2
        %v2733 = vmul.f32 %v2605, 0.2
        %v2734 = vmul.f32 %v2606, 0.2
        %v2735 = vmul.f32 %v2607, 0.2
        %v2736 = vmul.f32 %v2608, 0.2
        %v2737 = vmul.f32 %v2609, 0.2
        %v2738 = vmul.f32 %v2610, 0.2
        %v2739 = vmul.f32 %v2611, 0.2
        %v2740 = vmul.f32 %v2612, 0.2
        %v2741 = vmul.f32 %v2613, 0.2
        %v2742 = vmul.f32 %v2614, 0.2
        %v2743 = vmul.f32 %v2615, 0.2
        %v2744 = vmul.f32 %v2616, 0.2
        %v2745 = vmul.f32 %v2617, 0.2
        %v2746 = vmul.f32 %v2618, 0.2
        %v2747 = vsel %vm2619, %v2555, %v2683
        %v2748 = vsel %vm2620, %v2556, %v2684
        %v2749 = vsel %vm2621, %v2557, %v2685
        %v2750 = vsel %vm2622, %v2558, %v2686
        %v2751 = vsel %vm2623, %v2559, %v2687
        %v2752 = vsel %vm2624, %v2560, %v2688
        %v2753 = vsel %vm2625, %v2561, %v2689
        %v2754 = vsel %vm2626, %v2562, %v2690
        %v2755 = vsel %vm2627, %v2563, %v2691
        %v2756 = vsel %vm2628, %v2564, %v2692
        %v2757 = vsel %vm2629, %v2565, %v2693
        %v2758 = vsel %vm2630, %v2566, %v2694
        %v2759 = vsel %vm2631, %v2567, %v2695
        %v2760 = vsel %vm2632, %v2568, %v2696
        %v2761 = vsel %vm2633, %v2569, %v2697
        %v2762 = vsel %vm2634, %v2570, %v2698
        %v2763 = vsel %vm2635, %v2571, %v2699
        %v2764 = vsel %vm2636, %v2572, %v2700
        %v2765 = vsel %vm2637, %v2573, %v2701
        %v2766 = vsel %vm2638, %v2574, %v2702
        %v2767 = vsel %vm2639, %v2575, %v2703
        %v2768 = vsel %vm2640, %v2576, %v2704
        %v2769 = vsel %vm2641, %v2577, %v2705
        %v2770 = vsel %vm2642, %v2578, %v2706
        %v2771 = vsel %vm2643, %v2579, %v2707
        %v2772 = vsel %vm2644, %v2580, %v2708
        %v2773 = vsel %vm2645, %v2581, %v2709
        %v2774 = vsel %vm2646, %v2582, %v2710
        %v2775 = vsel %vm2647, %v2583, %v2711
        %v2776 = vsel %vm2648, %v2584, %v2712
        %v2777 = vsel %vm2649, %v2585, %v2713
        %v2778 = vsel %vm2650, %v2586, %v2714
        %v2779 = vsel %vm2651, %v2587, %v2715
        %v2780 = vsel %vm2652, %v2588, %v2716
        %v2781 = vsel %vm2653, %v2589, %v2717
        %v2782 = vsel %vm2654, %v2590, %v2718
        %v2783 = vsel %vm2655, %v2591, %v2719
        %v2784 = vsel %vm2656, %v2592, %v2720
        %v2785 = vsel %vm2657, %v2593, %v2721
        %v2786 = vsel %vm2658, %v2594, %v2722
        %v2787 = vsel %vm2659, %v2595, %v2723
        %v2788 = vsel %vm2660, %v2596, %v2724
        %v2789 = vsel %vm2661, %v2597, %v2725
        %v2790 = vsel %vm2662, %v2598, %v2726
        %v2791 = vsel %vm2663, %v2599, %v2727
        %v2792 = vsel %vm2664, %v2600, %v2728
        %v2793 = vsel %vm2665, %v2601, %v2729
        %v2794 = vsel %vm2666, %v2602, %v2730
        %v2795 = vsel %vm2667, %v2603, %v2731
        %v2796 = vsel %vm2668, %v2604, %v2732
        %v2797 = vsel %vm2669, %v2605, %v2733
        %v2798 = vsel %vm2670, %v2606, %v2734
        %v2799 = vsel %vm2671, %v2607, %v2735
        %v2800 = vsel %vm2672, %v2608, %v2736
        %v2801 = vsel %vm2673, %v2609, %v2737
        %v2802 = vsel %vm2674, %v2610, %v2738
        %v2803 = vsel %vm2675, %v2611, %v2739
        %v2804 = vsel %vm2676, %v2612, %v2740
        %v2805 = vsel %vm2677, %v2613, %v2741
        %v2806 = vsel %vm2678, %v2614, %v2742
        %v2807 = vsel %vm2679, %v2615, %v2743
        %v2808 = vsel %vm2680, %v2616, %v2744
        %v2809 = vsel %vm2681, %v2617, %v2745
        %v2810 = vsel %vm2682, %v2618, %v2746
        %v2811 = vpack.c.bf16 %v2751, %v2747
        %v2812 = vpack.c.bf16 %v2752, %v2748
        %v2813 = vpack.c.bf16 %v2753, %v2749
        %v2814 = vpack.c.bf16 %v2754, %v2750
        %v2815 = vpack.c.bf16 %v2759, %v2755
        %v2816 = vpack.c.bf16 %v2760, %v2756
        %v2817 = vpack.c.bf16 %v2761, %v2757
        %v2818 = vpack.c.bf16 %v2762, %v2758
        %v2819 = vpack.c.bf16 %v2767, %v2763
        %v2820 = vpack.c.bf16 %v2768, %v2764
        %v2821 = vpack.c.bf16 %v2769, %v2765
        %v2822 = vpack.c.bf16 %v2770, %v2766
        %v2823 = vpack.c.bf16 %v2775, %v2771
        %v2824 = vpack.c.bf16 %v2776, %v2772
        %v2825 = vpack.c.bf16 %v2777, %v2773
        %v2826 = vpack.c.bf16 %v2778, %v2774
        %v2827 = vpack.c.bf16 %v2783, %v2779
        %v2828 = vpack.c.bf16 %v2784, %v2780
        %v2829 = vpack.c.bf16 %v2785, %v2781
        %v2830 = vpack.c.bf16 %v2786, %v2782
        %v2831 = vpack.c.bf16 %v2791, %v2787
        %v2832 = vpack.c.bf16 %v2792, %v2788
        %v2833 = vpack.c.bf16 %v2793, %v2789
        %v2834 = vpack.c.bf16 %v2794, %v2790
        %v2835 = vpack.c.bf16 %v2799, %v2795
        %v2836 = vpack.c.bf16 %v2800, %v2796
        %v2837 = vpack.c.bf16 %v2801, %v2797
        %v2838 = vpack.c.bf16 %v2802, %v2798
        %v2839 = vpack.c.bf16 %v2807, %v2803
        %v2840 = vpack.c.bf16 %v2808, %v2804
        %v2841 = vpack.c.bf16 %v2809, %v2805
        %v2842 = vpack.c.bf16 %v2810, %v2806
        %v2843 = vld [vmem:[#allocation7] sm:$0xff]
        %v2844 = vld [vmem:[#allocation7 + $0x8] sm:$0xff]
        %v2845 = vld [vmem:[#allocation7 + $0x10] sm:$0xff]
        %v2846 = vld [vmem:[#allocation7 + $0x18] sm:$0xff]
        %v2847 = vld [vmem:[#allocation7 + $0x20] sm:$0xff]
        %v2848 = vld [vmem:[#allocation7 + $0x28] sm:$0xff]
        %v2849 = vld [vmem:[#allocation7 + $0x30] sm:$0xff]
        %v2850 = vld [vmem:[#allocation7 + $0x38] sm:$0xff]
        %v2851 = vld [vmem:[#allocation7 + $0x40] sm:$0xff]
        %v2852 = vld [vmem:[#allocation7 + $0x48] sm:$0xff]
        %v2853 = vld [vmem:[#allocation7 + $0x50] sm:$0xff]
        %v2854 = vld [vmem:[#allocation7 + $0x58] sm:$0xff]
        %v2855 = vld [vmem:[#allocation7 + $0x60] sm:$0xff]
        %v2856 = vld [vmem:[#allocation7 + $0x68] sm:$0xff]
        %v2857 = vld [vmem:[#allocation7 + $0x70] sm:$0xff]
        %v2858 = vld [vmem:[#allocation7 + $0x78] sm:$0xff]
        %v2859 = vld [vmem:[#allocation7 + $0x80] sm:$0xff]
        %v2860 = vld [vmem:[#allocation7 + $0x88] sm:$0xff]
        %v2861 = vld [vmem:[#allocation7 + $0x90] sm:$0xff]
        %v2862 = vld [vmem:[#allocation7 + $0x98] sm:$0xff]
        %v2863 = vld [vmem:[#allocation7 + $0xa0] sm:$0xff]
        %v2864 = vld [vmem:[#allocation7 + $0xa8] sm:$0xff]
        %v2865 = vld [vmem:[#allocation7 + $0xb0] sm:$0xff]
        %v2866 = vld [vmem:[#allocation7 + $0xb8] sm:$0xff]
        %v2867 = vld [vmem:[#allocation7 + $0xc0] sm:$0xff]
        %v2868 = vld [vmem:[#allocation7 + $0xc8] sm:$0xff]
        %v2869 = vld [vmem:[#allocation7 + $0xd0] sm:$0xff]
        %v2870 = vld [vmem:[#allocation7 + $0xd8] sm:$0xff]
        %v2871 = vld [vmem:[#allocation7 + $0xe0] sm:$0xff]
        %v2872 = vld [vmem:[#allocation7 + $0xe8] sm:$0xff]
        %v2873 = vld [vmem:[#allocation7 + $0xf0] sm:$0xff]
        %v2874 = vld [vmem:[#allocation7 + $0xf8] sm:$0xff]
        %v2875 = vld [vmem:[#allocation7 + $0x100] sm:$0xff]
        %v2876 = vld [vmem:[#allocation7 + $0x108] sm:$0xff]
        %v2877 = vld [vmem:[#allocation7 + $0x110] sm:$0xff]
        %v2878 = vld [vmem:[#allocation7 + $0x118] sm:$0xff]
        %v2879 = vld [vmem:[#allocation7 + $0x120] sm:$0xff]
        %v2880 = vld [vmem:[#allocation7 + $0x128] sm:$0xff]
        %v2881 = vld [vmem:[#allocation7 + $0x130] sm:$0xff]
        %v2882 = vld [vmem:[#allocation7 + $0x138] sm:$0xff]
        %v2883 = vld [vmem:[#allocation7 + $0x140] sm:$0xff]
        %v2884 = vld [vmem:[#allocation7 + $0x148] sm:$0xff]
        %v2885 = vld [vmem:[#allocation7 + $0x150] sm:$0xff]
        %v2886 = vld [vmem:[#allocation7 + $0x158] sm:$0xff]
        %v2887 = vld [vmem:[#allocation7 + $0x160] sm:$0xff]
        %v2888 = vld [vmem:[#allocation7 + $0x168] sm:$0xff]
        %v2889 = vld [vmem:[#allocation7 + $0x170] sm:$0xff]
        %v2890 = vld [vmem:[#allocation7 + $0x178] sm:$0xff]
        %v2891 = vld [vmem:[#allocation7 + $0x180] sm:$0xff]
        %v2892 = vld [vmem:[#allocation7 + $0x188] sm:$0xff]
        %v2893 = vld [vmem:[#allocation7 + $0x190] sm:$0xff]
        %v2894 = vld [vmem:[#allocation7 + $0x198] sm:$0xff]
        %v2895 = vld [vmem:[#allocation7 + $0x1a0] sm:$0xff]
        %v2896 = vld [vmem:[#allocation7 + $0x1a8] sm:$0xff]
        %v2897 = vld [vmem:[#allocation7 + $0x1b0] sm:$0xff]
        %v2898 = vld [vmem:[#allocation7 + $0x1b8] sm:$0xff]
        %v2899 = vld [vmem:[#allocation7 + $0x1c0] sm:$0xff]
        %v2900 = vld [vmem:[#allocation7 + $0x1c8] sm:$0xff]
        %v2901 = vld [vmem:[#allocation7 + $0x1d0] sm:$0xff]
        %v2902 = vld [vmem:[#allocation7 + $0x1d8] sm:$0xff]
        %v2903 = vld [vmem:[#allocation7 + $0x1e0] sm:$0xff]
        %v2904 = vld [vmem:[#allocation7 + $0x1e8] sm:$0xff]
        %v2905 = vld [vmem:[#allocation7 + $0x1f0] sm:$0xff]
        %v2906 = vld [vmem:[#allocation7 + $0x1f8] sm:$0xff]
        %v2907 = vld [vmem:[#allocation7 + $0x200] sm:$0xff]
        %v2908 = vld [vmem:[#allocation7 + $0x208] sm:$0xff]
        %v2909 = vld [vmem:[#allocation7 + $0x210] sm:$0xff]
        %v2910 = vld [vmem:[#allocation7 + $0x218] sm:$0xff]
        %v2911 = vld [vmem:[#allocation7 + $0x220] sm:$0xff]
        %v2912 = vld [vmem:[#allocation7 + $0x228] sm:$0xff]
        %v2913 = vld [vmem:[#allocation7 + $0x230] sm:$0xff]
        %v2914 = vld [vmem:[#allocation7 + $0x238] sm:$0xff]
        %v2915 = vld [vmem:[#allocation7 + $0x240] sm:$0xff]
        %v2916 = vld [vmem:[#allocation7 + $0x248] sm:$0xff]
        %v2917 = vld [vmem:[#allocation7 + $0x250] sm:$0xff]
        %v2918 = vld [vmem:[#allocation7 + $0x258] sm:$0xff]
        %v2919 = vld [vmem:[#allocation7 + $0x260] sm:$0xff]
        %v2920 = vld [vmem:[#allocation7 + $0x268] sm:$0xff]
        %v2921 = vld [vmem:[#allocation7 + $0x270] sm:$0xff]
        %v2922 = vld [vmem:[#allocation7 + $0x278] sm:$0xff]
        %v2923 = vld [vmem:[#allocation7 + $0x280] sm:$0xff]
        %v2924 = vld [vmem:[#allocation7 + $0x288] sm:$0xff]
        %v2925 = vld [vmem:[#allocation7 + $0x290] sm:$0xff]
        %v2926 = vld [vmem:[#allocation7 + $0x298] sm:$0xff]
        %v2927 = vld [vmem:[#allocation7 + $0x2a0] sm:$0xff]
        %v2928 = vld [vmem:[#allocation7 + $0x2a8] sm:$0xff]
        %v2929 = vld [vmem:[#allocation7 + $0x2b0] sm:$0xff]
        %v2930 = vld [vmem:[#allocation7 + $0x2b8] sm:$0xff]
        %v2931 = vld [vmem:[#allocation7 + $0x2c0] sm:$0xff]
        %v2932 = vld [vmem:[#allocation7 + $0x2c8] sm:$0xff]
        %v2933 = vld [vmem:[#allocation7 + $0x2d0] sm:$0xff]
        %v2934 = vld [vmem:[#allocation7 + $0x2d8] sm:$0xff]
        %v2935 = vld [vmem:[#allocation7 + $0x2e0] sm:$0xff]
        %v2936 = vld [vmem:[#allocation7 + $0x2e8] sm:$0xff]
        %v2937 = vld [vmem:[#allocation7 + $0x2f0] sm:$0xff]
        %v2938 = vld [vmem:[#allocation7 + $0x2f8] sm:$0xff]
        %v2939 = vld [vmem:[#allocation7 + $0x300] sm:$0xff]
        %v2940 = vld [vmem:[#allocation7 + $0x308] sm:$0xff]
        %v2941 = vld [vmem:[#allocation7 + $0x310] sm:$0xff]
        %v2942 = vld [vmem:[#allocation7 + $0x318] sm:$0xff]
        %v2943 = vld [vmem:[#allocation7 + $0x320] sm:$0xff]
        %v2944 = vld [vmem:[#allocation7 + $0x328] sm:$0xff]
        %v2945 = vld [vmem:[#allocation7 + $0x330] sm:$0xff]
        %v2946 = vld [vmem:[#allocation7 + $0x338] sm:$0xff]
        %v2947 = vld [vmem:[#allocation7 + $0x340] sm:$0xff]
        %v2948 = vld [vmem:[#allocation7 + $0x348] sm:$0xff]
        %v2949 = vld [vmem:[#allocation7 + $0x350] sm:$0xff]
        %v2950 = vld [vmem:[#allocation7 + $0x358] sm:$0xff]
        %v2951 = vld [vmem:[#allocation7 + $0x360] sm:$0xff]
        %v2952 = vld [vmem:[#allocation7 + $0x368] sm:$0xff]
        %v2953 = vld [vmem:[#allocation7 + $0x370] sm:$0xff]
        %v2954 = vld [vmem:[#allocation7 + $0x378] sm:$0xff]
        %v2955 = vld [vmem:[#allocation7 + $0x380] sm:$0xff]
        %v2956 = vld [vmem:[#allocation7 + $0x388] sm:$0xff]
        %v2957 = vld [vmem:[#allocation7 + $0x390] sm:$0xff]
        %v2958 = vld [vmem:[#allocation7 + $0x398] sm:$0xff]
        %v2959 = vld [vmem:[#allocation7 + $0x3a0] sm:$0xff]
        %v2960 = vld [vmem:[#allocation7 + $0x3a8] sm:$0xff]
        %v2961 = vld [vmem:[#allocation7 + $0x3b0] sm:$0xff]
        %v2962 = vld [vmem:[#allocation7 + $0x3b8] sm:$0xff]
        %v2963 = vld [vmem:[#allocation7 + $0x3c0] sm:$0xff]
        %v2964 = vld [vmem:[#allocation7 + $0x3c8] sm:$0xff]
        %v2965 = vld [vmem:[#allocation7 + $0x3d0] sm:$0xff]
        %v2966 = vld [vmem:[#allocation7 + $0x3d8] sm:$0xff]
        %v2967 = vld [vmem:[#allocation7 + $0x3e0] sm:$0xff]
        %v2968 = vld [vmem:[#allocation7 + $0x3e8] sm:$0xff]
        %v2969 = vld [vmem:[#allocation7 + $0x3f0] sm:$0xff]
        %v2970 = vld [vmem:[#allocation7 + $0x3f8] sm:$0xff]
        %v2971 = vld [vmem:[#allocation7 + $0x400] sm:$0xff]
        %v2972 = vld [vmem:[#allocation7 + $0x408] sm:$0xff]
        %v2973 = vld [vmem:[#allocation7 + $0x410] sm:$0xff]
        %v2974 = vld [vmem:[#allocation7 + $0x418] sm:$0xff]
        %v2975 = vld [vmem:[#allocation7 + $0x420] sm:$0xff]
        %v2976 = vld [vmem:[#allocation7 + $0x428] sm:$0xff]
        %v2977 = vld [vmem:[#allocation7 + $0x430] sm:$0xff]
        %v2978 = vld [vmem:[#allocation7 + $0x438] sm:$0xff]
        %v2979 = vld [vmem:[#allocation7 + $0x440] sm:$0xff]
        %v2980 = vld [vmem:[#allocation7 + $0x448] sm:$0xff]
        %v2981 = vld [vmem:[#allocation7 + $0x450] sm:$0xff]
        %v2982 = vld [vmem:[#allocation7 + $0x458] sm:$0xff]
        %v2983 = vld [vmem:[#allocation7 + $0x460] sm:$0xff]
        %v2984 = vld [vmem:[#allocation7 + $0x468] sm:$0xff]
        %v2985 = vld [vmem:[#allocation7 + $0x470] sm:$0xff]
        %v2986 = vld [vmem:[#allocation7 + $0x478] sm:$0xff]
        %v2987 = vld [vmem:[#allocation7 + $0x480] sm:$0xff]
        %v2988 = vld [vmem:[#allocation7 + $0x488] sm:$0xff]
        %v2989 = vld [vmem:[#allocation7 + $0x490] sm:$0xff]
        %v2990 = vld [vmem:[#allocation7 + $0x498] sm:$0xff]
        %v2991 = vld [vmem:[#allocation7 + $0x4a0] sm:$0xff]
        %v2992 = vld [vmem:[#allocation7 + $0x4a8] sm:$0xff]
        %v2993 = vld [vmem:[#allocation7 + $0x4b0] sm:$0xff]
        %v2994 = vld [vmem:[#allocation7 + $0x4b8] sm:$0xff]
        %v2995 = vld [vmem:[#allocation7 + $0x4c0] sm:$0xff]
        %v2996 = vld [vmem:[#allocation7 + $0x4c8] sm:$0xff]
        %v2997 = vld [vmem:[#allocation7 + $0x4d0] sm:$0xff]
        %v2998 = vld [vmem:[#allocation7 + $0x4d8] sm:$0xff]
        %v2999 = vld [vmem:[#allocation7 + $0x4e0] sm:$0xff]
        %v3000 = vld [vmem:[#allocation7 + $0x4e8] sm:$0xff]
        %v3001 = vld [vmem:[#allocation7 + $0x4f0] sm:$0xff]
        %v3002 = vld [vmem:[#allocation7 + $0x4f8] sm:$0xff]
        %v3003 = vld [vmem:[#allocation7 + $0x500] sm:$0xff]
        %v3004 = vld [vmem:[#allocation7 + $0x508] sm:$0xff]
        %v3005 = vld [vmem:[#allocation7 + $0x510] sm:$0xff]
        %v3006 = vld [vmem:[#allocation7 + $0x518] sm:$0xff]
        %v3007 = vld [vmem:[#allocation7 + $0x520] sm:$0xff]
        %v3008 = vld [vmem:[#allocation7 + $0x528] sm:$0xff]
        %v3009 = vld [vmem:[#allocation7 + $0x530] sm:$0xff]
        %v3010 = vld [vmem:[#allocation7 + $0x538] sm:$0xff]
        %v3011 = vld [vmem:[#allocation7 + $0x540] sm:$0xff]
        %v3012 = vld [vmem:[#allocation7 + $0x548] sm:$0xff]
        %v3013 = vld [vmem:[#allocation7 + $0x550] sm:$0xff]
        %v3014 = vld [vmem:[#allocation7 + $0x558] sm:$0xff]
        %v3015 = vld [vmem:[#allocation7 + $0x560] sm:$0xff]
        %v3016 = vld [vmem:[#allocation7 + $0x568] sm:$0xff]
        %v3017 = vld [vmem:[#allocation7 + $0x570] sm:$0xff]
        %v3018 = vld [vmem:[#allocation7 + $0x578] sm:$0xff]
        %v3019 = vld [vmem:[#allocation7 + $0x580] sm:$0xff]
        %v3020 = vld [vmem:[#allocation7 + $0x588] sm:$0xff]
        %v3021 = vld [vmem:[#allocation7 + $0x590] sm:$0xff]
        %v3022 = vld [vmem:[#allocation7 + $0x598] sm:$0xff]
        %v3023 = vld [vmem:[#allocation7 + $0x5a0] sm:$0xff]
        %v3024 = vld [vmem:[#allocation7 + $0x5a8] sm:$0xff]
        %v3025 = vld [vmem:[#allocation7 + $0x5b0] sm:$0xff]
        %v3026 = vld [vmem:[#allocation7 + $0x5b8] sm:$0xff]
        %v3027 = vld [vmem:[#allocation7 + $0x5c0] sm:$0xff]
        %v3028 = vld [vmem:[#allocation7 + $0x5c8] sm:$0xff]
        %v3029 = vld [vmem:[#allocation7 + $0x5d0] sm:$0xff]
        %v3030 = vld [vmem:[#allocation7 + $0x5d8] sm:$0xff]
        %v3031 = vld [vmem:[#allocation7 + $0x5e0] sm:$0xff]
        %v3032 = vld [vmem:[#allocation7 + $0x5e8] sm:$0xff]
        %v3033 = vld [vmem:[#allocation7 + $0x5f0] sm:$0xff]
        %v3034 = vld [vmem:[#allocation7 + $0x5f8] sm:$0xff]
        %v3035 = vld [vmem:[#allocation7 + $0x600] sm:$0xff]
        %v3036 = vld [vmem:[#allocation7 + $0x608] sm:$0xff]
        %v3037 = vld [vmem:[#allocation7 + $0x610] sm:$0xff]
        %v3038 = vld [vmem:[#allocation7 + $0x618] sm:$0xff]
        %v3039 = vld [vmem:[#allocation7 + $0x620] sm:$0xff]
        %v3040 = vld [vmem:[#allocation7 + $0x628] sm:$0xff]
        %v3041 = vld [vmem:[#allocation7 + $0x630] sm:$0xff]
        %v3042 = vld [vmem:[#allocation7 + $0x638] sm:$0xff]
        %v3043 = vld [vmem:[#allocation7 + $0x640] sm:$0xff]
        %v3044 = vld [vmem:[#allocation7 + $0x648] sm:$0xff]
        %v3045 = vld [vmem:[#allocation7 + $0x650] sm:$0xff]
        %v3046 = vld [vmem:[#allocation7 + $0x658] sm:$0xff]
        %v3047 = vld [vmem:[#allocation7 + $0x660] sm:$0xff]
        %v3048 = vld [vmem:[#allocation7 + $0x668] sm:$0xff]
        %v3049 = vld [vmem:[#allocation7 + $0x670] sm:$0xff]
        %v3050 = vld [vmem:[#allocation7 + $0x678] sm:$0xff]
        %v3051 = vld [vmem:[#allocation7 + $0x680] sm:$0xff]
        %v3052 = vld [vmem:[#allocation7 + $0x688] sm:$0xff]
        %v3053 = vld [vmem:[#allocation7 + $0x690] sm:$0xff]
        %v3054 = vld [vmem:[#allocation7 + $0x698] sm:$0xff]
        %v3055 = vld [vmem:[#allocation7 + $0x6a0] sm:$0xff]
        %v3056 = vld [vmem:[#allocation7 + $0x6a8] sm:$0xff]
        %v3057 = vld [vmem:[#allocation7 + $0x6b0] sm:$0xff]
        %v3058 = vld [vmem:[#allocation7 + $0x6b8] sm:$0xff]
        %v3059 = vld [vmem:[#allocation7 + $0x6c0] sm:$0xff]
        %v3060 = vld [vmem:[#allocation7 + $0x6c8] sm:$0xff]
        %v3061 = vld [vmem:[#allocation7 + $0x6d0] sm:$0xff]
        %v3062 = vld [vmem:[#allocation7 + $0x6d8] sm:$0xff]
        %v3063 = vld [vmem:[#allocation7 + $0x6e0] sm:$0xff]
        %v3064 = vld [vmem:[#allocation7 + $0x6e8] sm:$0xff]
        %v3065 = vld [vmem:[#allocation7 + $0x6f0] sm:$0xff]
        %v3066 = vld [vmem:[#allocation7 + $0x6f8] sm:$0xff]
        %v3067 = vld [vmem:[#allocation7 + $0x700] sm:$0xff]
        %v3068 = vld [vmem:[#allocation7 + $0x708] sm:$0xff]
        %v3069 = vld [vmem:[#allocation7 + $0x710] sm:$0xff]
        %v3070 = vld [vmem:[#allocation7 + $0x718] sm:$0xff]
        %v3071 = vld [vmem:[#allocation7 + $0x720] sm:$0xff]
        %v3072 = vld [vmem:[#allocation7 + $0x728] sm:$0xff]
        %v3073 = vld [vmem:[#allocation7 + $0x730] sm:$0xff]
        %v3074 = vld [vmem:[#allocation7 + $0x738] sm:$0xff]
        %v3075 = vld [vmem:[#allocation7 + $0x740] sm:$0xff]
        %v3076 = vld [vmem:[#allocation7 + $0x748] sm:$0xff]
        %v3077 = vld [vmem:[#allocation7 + $0x750] sm:$0xff]
        %v3078 = vld [vmem:[#allocation7 + $0x758] sm:$0xff]
        %v3079 = vld [vmem:[#allocation7 + $0x760] sm:$0xff]
        %v3080 = vld [vmem:[#allocation7 + $0x768] sm:$0xff]
        %v3081 = vld [vmem:[#allocation7 + $0x770] sm:$0xff]
        %v3082 = vld [vmem:[#allocation7 + $0x778] sm:$0xff]
        %v3083 = vld [vmem:[#allocation7 + $0x780] sm:$0xff]
        %v3084 = vld [vmem:[#allocation7 + $0x788] sm:$0xff]
        %v3085 = vld [vmem:[#allocation7 + $0x790] sm:$0xff]
        %v3086 = vld [vmem:[#allocation7 + $0x798] sm:$0xff]
        %v3087 = vld [vmem:[#allocation7 + $0x7a0] sm:$0xff]
        %v3088 = vld [vmem:[#allocation7 + $0x7a8] sm:$0xff]
        %v3089 = vld [vmem:[#allocation7 + $0x7b0] sm:$0xff]
        %v3090 = vld [vmem:[#allocation7 + $0x7b8] sm:$0xff]
        %v3091 = vld [vmem:[#allocation7 + $0x7c0] sm:$0xff]
        %v3092 = vld [vmem:[#allocation7 + $0x7c8] sm:$0xff]
        %v3093 = vld [vmem:[#allocation7 + $0x7d0] sm:$0xff]
        %v3094 = vld [vmem:[#allocation7 + $0x7d8] sm:$0xff]
        %v3095 = vld [vmem:[#allocation7 + $0x7e0] sm:$0xff]
        %v3096 = vld [vmem:[#allocation7 + $0x7e8] sm:$0xff]
        %v3097 = vld [vmem:[#allocation7 + $0x7f0] sm:$0xff]
        %v3098 = vld [vmem:[#allocation7 + $0x7f8] sm:$0xff]
        %v3099 = vld [vmem:[#allocation8 + $0x13] sm:$0xff]
        %v3101 = vlaneseq
        %v3102 = vshrl.u32 %v3101, 7
        %v3103 = vsub.s32 0, %v3102
        %v3104 = vrot.slane %v3099, %v3103
        %v3105 = vlaneseq
        %v3106 = vshrl.u32 %v3105, 7
        %v3107 = vsub.s32 1, %v3106
        %v3108 = vrot.slane %v3099, %v3107
        %v3109 = vlaneseq
        %v3110 = vshrl.u32 %v3109, 7
        %v3111 = vsub.s32 2, %v3110
        %v3112 = vrot.slane %v3099, %v3111
        %v3113 = vlaneseq
        %v3114 = vshrl.u32 %v3113, 7
        %v3115 = vsub.s32 3, %v3114
        %v3116 = vrot.slane %v3099, %v3115
        %v3117 = vlaneseq
        %v3118 = vshrl.u32 %v3117, 7
        %v3119 = vsub.s32 4, %v3118
        %v3120 = vrot.slane %v3099, %v3119
        %v3121 = vlaneseq
        %v3122 = vshrl.u32 %v3121, 7
        %v3123 = vsub.s32 5, %v3122
        %v3124 = vrot.slane %v3099, %v3123
        %v3125 = vlaneseq
        %v3126 = vshrl.u32 %v3125, 7
        %v3127 = vsub.s32 6, %v3126
        %v3128 = vrot.slane %v3099, %v3127
        %v3129 = vlaneseq
        %v3130 = vshrl.u32 %v3129, 7
        %v3131 = vsub.s32 7, %v3130
        %v3132 = vrot.slane %v3099, %v3131
        %v3397 = vunpack.c.l.b16 %v2843
        %v3398 = vunpack.c.h.b16 %v2843
        %v3399 = vunpack.c.l.b16 %v2844
        %v3400 = vunpack.c.h.b16 %v2844
        %v3401 = vunpack.c.l.b16 %v2845
        %v3402 = vunpack.c.h.b16 %v2845
        %v3403 = vunpack.c.l.b16 %v2846
        %v3404 = vunpack.c.h.b16 %v2846
        %v3405 = vunpack.c.l.b16 %v2847
        %v3406 = vunpack.c.h.b16 %v2847
        %v3407 = vunpack.c.l.b16 %v2848
        %v3408 = vunpack.c.h.b16 %v2848
        %v3409 = vunpack.c.l.b16 %v2849
        %v3410 = vunpack.c.h.b16 %v2849
        %v3411 = vunpack.c.l.b16 %v2850
        %v3412 = vunpack.c.h.b16 %v2850
        %v3413 = vunpack.c.l.b16 %v2851
        %v3414 = vunpack.c.h.b16 %v2851
        %v3415 = vunpack.c.l.b16 %v2852
        %v3416 = vunpack.c.h.b16 %v2852
        %v3417 = vunpack.c.l.b16 %v2853
        %v3418 = vunpack.c.h.b16 %v2853
        %v3419 = vunpack.c.l.b16 %v2854
        %v3420 = vunpack.c.h.b16 %v2854
        %v3421 = vunpack.c.l.b16 %v2855
        %v3422 = vunpack.c.h.b16 %v2855
        %v3423 = vunpack.c.l.b16 %v2856
        %v3424 = vunpack.c.h.b16 %v2856
        %v3425 = vunpack.c.l.b16 %v2857
        %v3426 = vunpack.c.h.b16 %v2857
        %v3427 = vunpack.c.l.b16 %v2858
        %v3428 = vunpack.c.h.b16 %v2858
        %v3429 = vunpack.c.l.b16 %v2859
        %v3430 = vunpack.c.h.b16 %v2859
        %v3431 = vunpack.c.l.b16 %v2860
        %v3432 = vunpack.c.h.b16 %v2860
        %v3433 = vunpack.c.l.b16 %v2861
        %v3434 = vunpack.c.h.b16 %v2861
        %v3435 = vunpack.c.l.b16 %v2862
        %v3436 = vunpack.c.h.b16 %v2862
        %v3437 = vunpack.c.l.b16 %v2863
        %v3438 = vunpack.c.h.b16 %v2863
        %v3439 = vunpack.c.l.b16 %v2864
        %v3440 = vunpack.c.h.b16 %v2864
        %v3441 = vunpack.c.l.b16 %v2865
        %v3442 = vunpack.c.h.b16 %v2865
        %v3443 = vunpack.c.l.b16 %v2866
        %v3444 = vunpack.c.h.b16 %v2866
        %v3445 = vunpack.c.l.b16 %v2867
        %v3446 = vunpack.c.h.b16 %v2867
        %v3447 = vunpack.c.l.b16 %v2868
        %v3448 = vunpack.c.h.b16 %v2868
        %v3449 = vunpack.c.l.b16 %v2869
        %v3450 = vunpack.c.h.b16 %v2869
        %v3451 = vunpack.c.l.b16 %v2870
        %v3452 = vunpack.c.h.b16 %v2870
        %v3453 = vunpack.c.l.b16 %v2871
        %v3454 = vunpack.c.h.b16 %v2871
        %v3455 = vunpack.c.l.b16 %v2872
        %v3456 = vunpack.c.h.b16 %v2872
        %v3457 = vunpack.c.l.b16 %v2873
        %v3458 = vunpack.c.h.b16 %v2873
        %v3459 = vunpack.c.l.b16 %v2874
        %v3460 = vunpack.c.h.b16 %v2874
        %v3461 = vunpack.c.l.b16 %v2875
        %v3462 = vunpack.c.h.b16 %v2875
        %v3463 = vunpack.c.l.b16 %v2876
        %v3464 = vunpack.c.h.b16 %v2876
        %v3465 = vunpack.c.l.b16 %v2877
        %v3466 = vunpack.c.h.b16 %v2877
        %v3467 = vunpack.c.l.b16 %v2878
        %v3468 = vunpack.c.h.b16 %v2878
        %v3469 = vunpack.c.l.b16 %v2879
        %v3470 = vunpack.c.h.b16 %v2879
        %v3471 = vunpack.c.l.b16 %v2880
        %v3472 = vunpack.c.h.b16 %v2880
        %v3473 = vunpack.c.l.b16 %v2881
        %v3474 = vunpack.c.h.b16 %v2881
        %v3475 = vunpack.c.l.b16 %v2882
        %v3476 = vunpack.c.h.b16 %v2882
        %v3477 = vunpack.c.l.b16 %v2883
        %v3478 = vunpack.c.h.b16 %v2883
        %v3479 = vunpack.c.l.b16 %v2884
        %v3480 = vunpack.c.h.b16 %v2884
        %v3481 = vunpack.c.l.b16 %v2885
        %v3482 = vunpack.c.h.b16 %v2885
        %v3483 = vunpack.c.l.b16 %v2886
        %v3484 = vunpack.c.h.b16 %v2886
        %v3485 = vunpack.c.l.b16 %v2887
        %v3486 = vunpack.c.h.b16 %v2887
        %v3487 = vunpack.c.l.b16 %v2888
        %v3488 = vunpack.c.h.b16 %v2888
        %v3489 = vunpack.c.l.b16 %v2889
        %v3490 = vunpack.c.h.b16 %v2889
        %v3491 = vunpack.c.l.b16 %v2890
        %v3492 = vunpack.c.h.b16 %v2890
        %v3493 = vunpack.c.l.b16 %v2891
        %v3494 = vunpack.c.h.b16 %v2891
        %v3495 = vunpack.c.l.b16 %v2892
        %v3496 = vunpack.c.h.b16 %v2892
        %v3497 = vunpack.c.l.b16 %v2893
        %v3498 = vunpack.c.h.b16 %v2893
        %v3499 = vunpack.c.l.b16 %v2894
        %v3500 = vunpack.c.h.b16 %v2894
        %v3501 = vunpack.c.l.b16 %v2895
        %v3502 = vunpack.c.h.b16 %v2895
        %v3503 = vunpack.c.l.b16 %v2896
        %v3504 = vunpack.c.h.b16 %v2896
        %v3505 = vunpack.c.l.b16 %v2897
        %v3506 = vunpack.c.h.b16 %v2897
        %v3507 = vunpack.c.l.b16 %v2898
        %v3508 = vunpack.c.h.b16 %v2898
        %v3509 = vunpack.c.l.b16 %v2899
        %v3510 = vunpack.c.h.b16 %v2899
        %v3511 = vunpack.c.l.b16 %v2900
        %v3512 = vunpack.c.h.b16 %v2900
        %v3513 = vunpack.c.l.b16 %v2901
        %v3514 = vunpack.c.h.b16 %v2901
        %v3515 = vunpack.c.l.b16 %v2902
        %v3516 = vunpack.c.h.b16 %v2902
        %v3517 = vunpack.c.l.b16 %v2903
        %v3518 = vunpack.c.h.b16 %v2903
        %v3519 = vunpack.c.l.b16 %v2904
        %v3520 = vunpack.c.h.b16 %v2904
        %v3521 = vunpack.c.l.b16 %v2905
        %v3522 = vunpack.c.h.b16 %v2905
        %v3523 = vunpack.c.l.b16 %v2906
        %v3524 = vunpack.c.h.b16 %v2906
        %v3525 = vunpack.c.l.b16 %v2907
        %v3526 = vunpack.c.h.b16 %v2907
        %v3527 = vunpack.c.l.b16 %v2908
        %v3528 = vunpack.c.h.b16 %v2908
        %v3529 = vunpack.c.l.b16 %v2909
        %v3530 = vunpack.c.h.b16 %v2909
        %v3531 = vunpack.c.l.b16 %v2910
        %v3532 = vunpack.c.h.b16 %v2910
        %v3533 = vunpack.c.l.b16 %v2911
        %v3534 = vunpack.c.h.b16 %v2911
        %v3535 = vunpack.c.l.b16 %v2912
        %v3536 = vunpack.c.h.b16 %v2912
        %v3537 = vunpack.c.l.b16 %v2913
        %v3538 = vunpack.c.h.b16 %v2913
        %v3539 = vunpack.c.l.b16 %v2914
        %v3540 = vunpack.c.h.b16 %v2914
        %v3541 = vunpack.c.l.b16 %v2915
        %v3542 = vunpack.c.h.b16 %v2915
        %v3543 = vunpack.c.l.b16 %v2916
        %v3544 = vunpack.c.h.b16 %v2916
        %v3545 = vunpack.c.l.b16 %v2917
        %v3546 = vunpack.c.h.b16 %v2917
        %v3547 = vunpack.c.l.b16 %v2918
        %v3548 = vunpack.c.h.b16 %v2918
        %v3549 = vunpack.c.l.b16 %v2919
        %v3550 = vunpack.c.h.b16 %v2919
        %v3551 = vunpack.c.l.b16 %v2920
        %v3552 = vunpack.c.h.b16 %v2920
        %v3553 = vunpack.c.l.b16 %v2921
        %v3554 = vunpack.c.h.b16 %v2921
        %v3555 = vunpack.c.l.b16 %v2922
        %v3556 = vunpack.c.h.b16 %v2922
        %v3557 = vunpack.c.l.b16 %v2923
        %v3558 = vunpack.c.h.b16 %v2923
        %v3559 = vunpack.c.l.b16 %v2924
        %v3560 = vunpack.c.h.b16 %v2924
        %v3561 = vunpack.c.l.b16 %v2925
        %v3562 = vunpack.c.h.b16 %v2925
        %v3563 = vunpack.c.l.b16 %v2926
        %v3564 = vunpack.c.h.b16 %v2926
        %v3565 = vunpack.c.l.b16 %v2927
        %v3566 = vunpack.c.h.b16 %v2927
        %v3567 = vunpack.c.l.b16 %v2928
        %v3568 = vunpack.c.h.b16 %v2928
        %v3569 = vunpack.c.l.b16 %v2929
        %v3570 = vunpack.c.h.b16 %v2929
        %v3571 = vunpack.c.l.b16 %v2930
        %v3572 = vunpack.c.h.b16 %v2930
        %v3573 = vunpack.c.l.b16 %v2931
        %v3574 = vunpack.c.h.b16 %v2931
        %v3575 = vunpack.c.l.b16 %v2932
        %v3576 = vunpack.c.h.b16 %v2932
        %v3577 = vunpack.c.l.b16 %v2933
        %v3578 = vunpack.c.h.b16 %v2933
        %v3579 = vunpack.c.l.b16 %v2934
        %v3580 = vunpack.c.h.b16 %v2934
        %v3581 = vunpack.c.l.b16 %v2935
        %v3582 = vunpack.c.h.b16 %v2935
        %v3583 = vunpack.c.l.b16 %v2936
        %v3584 = vunpack.c.h.b16 %v2936
        %v3585 = vunpack.c.l.b16 %v2937
        %v3586 = vunpack.c.h.b16 %v2937
        %v3587 = vunpack.c.l.b16 %v2938
        %v3588 = vunpack.c.h.b16 %v2938
        %v3589 = vunpack.c.l.b16 %v2939
        %v3590 = vunpack.c.h.b16 %v2939
        %v3591 = vunpack.c.l.b16 %v2940
        %v3592 = vunpack.c.h.b16 %v2940
        %v3593 = vunpack.c.l.b16 %v2941
        %v3594 = vunpack.c.h.b16 %v2941
        %v3595 = vunpack.c.l.b16 %v2942
        %v3596 = vunpack.c.h.b16 %v2942
        %v3597 = vunpack.c.l.b16 %v2943
        %v3598 = vunpack.c.h.b16 %v2943
        %v3599 = vunpack.c.l.b16 %v2944
        %v3600 = vunpack.c.h.b16 %v2944
        %v3601 = vunpack.c.l.b16 %v2945
        %v3602 = vunpack.c.h.b16 %v2945
        %v3603 = vunpack.c.l.b16 %v2946
        %v3604 = vunpack.c.h.b16 %v2946
        %v3605 = vunpack.c.l.b16 %v2947
        %v3606 = vunpack.c.h.b16 %v2947
        %v3607 = vunpack.c.l.b16 %v2948
        %v3608 = vunpack.c.h.b16 %v2948
        %v3609 = vunpack.c.l.b16 %v2949
        %v3610 = vunpack.c.h.b16 %v2949
        %v3611 = vunpack.c.l.b16 %v2950
        %v3612 = vunpack.c.h.b16 %v2950
        %v3613 = vunpack.c.l.b16 %v2951
        %v3614 = vunpack.c.h.b16 %v2951
        %v3615 = vunpack.c.l.b16 %v2952
        %v3616 = vunpack.c.h.b16 %v2952
        %v3617 = vunpack.c.l.b16 %v2953
        %v3618 = vunpack.c.h.b16 %v2953
        %v3619 = vunpack.c.l.b16 %v2954
        %v3620 = vunpack.c.h.b16 %v2954
        %v3621 = vunpack.c.l.b16 %v2955
        %v3622 = vunpack.c.h.b16 %v2955
        %v3623 = vunpack.c.l.b16 %v2956
        %v3624 = vunpack.c.h.b16 %v2956
        %v3625 = vunpack.c.l.b16 %v2957
        %v3626 = vunpack.c.h.b16 %v2957
        %v3627 = vunpack.c.l.b16 %v2958
        %v3628 = vunpack.c.h.b16 %v2958
        %v3629 = vunpack.c.l.b16 %v2959
        %v3630 = vunpack.c.h.b16 %v2959
        %v3631 = vunpack.c.l.b16 %v2960
        %v3632 = vunpack.c.h.b16 %v2960
        %v3633 = vunpack.c.l.b16 %v2961
        %v3634 = vunpack.c.h.b16 %v2961
        %v3635 = vunpack.c.l.b16 %v2962
        %v3636 = vunpack.c.h.b16 %v2962
        %v3637 = vunpack.c.l.b16 %v2963
        %v3638 = vunpack.c.h.b16 %v2963
        %v3639 = vunpack.c.l.b16 %v2964
        %v3640 = vunpack.c.h.b16 %v2964
        %v3641 = vunpack.c.l.b16 %v2965
        %v3642 = vunpack.c.h.b16 %v2965
        %v3643 = vunpack.c.l.b16 %v2966
        %v3644 = vunpack.c.h.b16 %v2966
        %v3645 = vunpack.c.l.b16 %v2967
        %v3646 = vunpack.c.h.b16 %v2967
        %v3647 = vunpack.c.l.b16 %v2968
        %v3648 = vunpack.c.h.b16 %v2968
        %v3649 = vunpack.c.l.b16 %v2969
        %v3650 = vunpack.c.h.b16 %v2969
        %v3651 = vunpack.c.l.b16 %v2970
        %v3652 = vunpack.c.h.b16 %v2970
        %v3653 = vunpack.c.l.b16 %v2971
        %v3654 = vunpack.c.h.b16 %v2971
        %v3655 = vunpack.c.l.b16 %v2972
        %v3656 = vunpack.c.h.b16 %v2972
        %v3657 = vunpack.c.l.b16 %v2973
        %v3658 = vunpack.c.h.b16 %v2973
        %v3659 = vunpack.c.l.b16 %v2974
        %v3660 = vunpack.c.h.b16 %v2974
        %v3661 = vunpack.c.l.b16 %v2975
        %v3662 = vunpack.c.h.b16 %v2975
        %v3663 = vunpack.c.l.b16 %v2976
        %v3664 = vunpack.c.h.b16 %v2976
        %v3665 = vunpack.c.l.b16 %v2977
        %v3666 = vunpack.c.h.b16 %v2977
        %v3667 = vunpack.c.l.b16 %v2978
        %v3668 = vunpack.c.h.b16 %v2978
        %v3669 = vunpack.c.l.b16 %v2979
        %v3670 = vunpack.c.h.b16 %v2979
        %v3671 = vunpack.c.l.b16 %v2980
        %v3672 = vunpack.c.h.b16 %v2980
        %v3673 = vunpack.c.l.b16 %v2981
        %v3674 = vunpack.c.h.b16 %v2981
        %v3675 = vunpack.c.l.b16 %v2982
        %v3676 = vunpack.c.h.b16 %v2982
        %v3677 = vunpack.c.l.b16 %v2983
        %v3678 = vunpack.c.h.b16 %v2983
        %v3679 = vunpack.c.l.b16 %v2984
        %v3680 = vunpack.c.h.b16 %v2984
        %v3681 = vunpack.c.l.b16 %v2985
        %v3682 = vunpack.c.h.b16 %v2985
        %v3683 = vunpack.c.l.b16 %v2986
        %v3684 = vunpack.c.h.b16 %v2986
        %v3685 = vunpack.c.l.b16 %v2987
        %v3686 = vunpack.c.h.b16 %v2987
        %v3687 = vunpack.c.l.b16 %v2988
        %v3688 = vunpack.c.h.b16 %v2988
        %v3689 = vunpack.c.l.b16 %v2989
        %v3690 = vunpack.c.h.b16 %v2989
        %v3691 = vunpack.c.l.b16 %v2990
        %v3692 = vunpack.c.h.b16 %v2990
        %v3693 = vunpack.c.l.b16 %v2991
        %v3694 = vunpack.c.h.b16 %v2991
        %v3695 = vunpack.c.l.b16 %v2992
        %v3696 = vunpack.c.h.b16 %v2992
        %v3697 = vunpack.c.l.b16 %v2993
        %v3698 = vunpack.c.h.b16 %v2993
        %v3699 = vunpack.c.l.b16 %v2994
        %v3700 = vunpack.c.h.b16 %v2994
        %v3701 = vunpack.c.l.b16 %v2995
        %v3702 = vunpack.c.h.b16 %v2995
        %v3703 = vunpack.c.l.b16 %v2996
        %v3704 = vunpack.c.h.b16 %v2996
        %v3705 = vunpack.c.l.b16 %v2997
        %v3706 = vunpack.c.h.b16 %v2997
        %v3707 = vunpack.c.l.b16 %v2998
        %v3708 = vunpack.c.h.b16 %v2998
        %v3709 = vunpack.c.l.b16 %v2999
        %v3710 = vunpack.c.h.b16 %v2999
        %v3711 = vunpack.c.l.b16 %v3000
        %v3712 = vunpack.c.h.b16 %v3000
        %v3713 = vunpack.c.l.b16 %v3001
        %v3714 = vunpack.c.h.b16 %v3001
        %v3715 = vunpack.c.l.b16 %v3002
        %v3716 = vunpack.c.h.b16 %v3002
        %v3717 = vunpack.c.l.b16 %v3003
        %v3718 = vunpack.c.h.b16 %v3003
        %v3719 = vunpack.c.l.b16 %v3004
        %v3720 = vunpack.c.h.b16 %v3004
        %v3721 = vunpack.c.l.b16 %v3005
        %v3722 = vunpack.c.h.b16 %v3005
        %v3723 = vunpack.c.l.b16 %v3006
        %v3724 = vunpack.c.h.b16 %v3006
        %v3725 = vunpack.c.l.b16 %v3007
        %v3726 = vunpack.c.h.b16 %v3007
        %v3727 = vunpack.c.l.b16 %v3008
        %v3728 = vunpack.c.h.b16 %v3008
        %v3729 = vunpack.c.l.b16 %v3009
        %v3730 = vunpack.c.h.b16 %v3009
        %v3731 = vunpack.c.l.b16 %v3010
        %v3732 = vunpack.c.h.b16 %v3010
        %v3733 = vunpack.c.l.b16 %v3011
        %v3734 = vunpack.c.h.b16 %v3011
        %v3735 = vunpack.c.l.b16 %v3012
        %v3736 = vunpack.c.h.b16 %v3012
        %v3737 = vunpack.c.l.b16 %v3013
        %v3738 = vunpack.c.h.b16 %v3013
        %v3739 = vunpack.c.l.b16 %v3014
        %v3740 = vunpack.c.h.b16 %v3014
        %v3741 = vunpack.c.l.b16 %v3015
        %v3742 = vunpack.c.h.b16 %v3015
        %v3743 = vunpack.c.l.b16 %v3016
        %v3744 = vunpack.c.h.b16 %v3016
        %v3745 = vunpack.c.l.b16 %v3017
        %v3746 = vunpack.c.h.b16 %v3017
        %v3747 = vunpack.c.l.b16 %v3018
        %v3748 = vunpack.c.h.b16 %v3018
        %v3749 = vunpack.c.l.b16 %v3019
        %v3750 = vunpack.c.h.b16 %v3019
        %v3751 = vunpack.c.l.b16 %v3020
        %v3752 = vunpack.c.h.b16 %v3020
        %v3753 = vunpack.c.l.b16 %v3021
        %v3754 = vunpack.c.h.b16 %v3021
        %v3755 = vunpack.c.l.b16 %v3022
        %v3756 = vunpack.c.h.b16 %v3022
        %v3757 = vunpack.c.l.b16 %v3023
        %v3758 = vunpack.c.h.b16 %v3023
        %v3759 = vunpack.c.l.b16 %v3024
        %v3760 = vunpack.c.h.b16 %v3024
        %v3761 = vunpack.c.l.b16 %v3025
        %v3762 = vunpack.c.h.b16 %v3025
        %v3763 = vunpack.c.l.b16 %v3026
        %v3764 = vunpack.c.h.b16 %v3026
        %v3765 = vunpack.c.l.b16 %v3027
        %v3766 = vunpack.c.h.b16 %v3027
        %v3767 = vunpack.c.l.b16 %v3028
        %v3768 = vunpack.c.h.b16 %v3028
        %v3769 = vunpack.c.l.b16 %v3029
        %v3770 = vunpack.c.h.b16 %v3029
        %v3771 = vunpack.c.l.b16 %v3030
        %v3772 = vunpack.c.h.b16 %v3030
        %v3773 = vunpack.c.l.b16 %v3031
        %v3774 = vunpack.c.h.b16 %v3031
        %v3775 = vunpack.c.l.b16 %v3032
        %v3776 = vunpack.c.h.b16 %v3032
        %v3777 = vunpack.c.l.b16 %v3033
        %v3778 = vunpack.c.h.b16 %v3033
        %v3779 = vunpack.c.l.b16 %v3034
        %v3780 = vunpack.c.h.b16 %v3034
        %v3781 = vunpack.c.l.b16 %v3035
        %v3782 = vunpack.c.h.b16 %v3035
        %v3783 = vunpack.c.l.b16 %v3036
        %v3784 = vunpack.c.h.b16 %v3036
        %v3785 = vunpack.c.l.b16 %v3037
        %v3786 = vunpack.c.h.b16 %v3037
        %v3787 = vunpack.c.l.b16 %v3038
        %v3788 = vunpack.c.h.b16 %v3038
        %v3789 = vunpack.c.l.b16 %v3039
        %v3790 = vunpack.c.h.b16 %v3039
        %v3791 = vunpack.c.l.b16 %v3040
        %v3792 = vunpack.c.h.b16 %v3040
        %v3793 = vunpack.c.l.b16 %v3041
        %v3794 = vunpack.c.h.b16 %v3041
        %v3795 = vunpack.c.l.b16 %v3042
        %v3796 = vunpack.c.h.b16 %v3042
        %v3797 = vunpack.c.l.b16 %v3043
        %v3798 = vunpack.c.h.b16 %v3043
        %v3799 = vunpack.c.l.b16 %v3044
        %v3800 = vunpack.c.h.b16 %v3044
        %v3801 = vunpack.c.l.b16 %v3045
        %v3802 = vunpack.c.h.b16 %v3045
        %v3803 = vunpack.c.l.b16 %v3046
        %v3804 = vunpack.c.h.b16 %v3046
        %v3805 = vunpack.c.l.b16 %v3047
        %v3806 = vunpack.c.h.b16 %v3047
        %v3807 = vunpack.c.l.b16 %v3048
        %v3808 = vunpack.c.h.b16 %v3048
        %v3809 = vunpack.c.l.b16 %v3049
        %v3810 = vunpack.c.h.b16 %v3049
        %v3811 = vunpack.c.l.b16 %v3050
        %v3812 = vunpack.c.h.b16 %v3050
        %v3813 = vunpack.c.l.b16 %v3051
        %v3814 = vunpack.c.h.b16 %v3051
        %v3815 = vunpack.c.l.b16 %v3052
        %v3816 = vunpack.c.h.b16 %v3052
        %v3817 = vunpack.c.l.b16 %v3053
        %v3818 = vunpack.c.h.b16 %v3053
        %v3819 = vunpack.c.l.b16 %v3054
        %v3820 = vunpack.c.h.b16 %v3054
        %v3821 = vunpack.c.l.b16 %v3055
        %v3822 = vunpack.c.h.b16 %v3055
        %v3823 = vunpack.c.l.b16 %v3056
        %v3824 = vunpack.c.h.b16 %v3056
        %v3825 = vunpack.c.l.b16 %v3057
        %v3826 = vunpack.c.h.b16 %v3057
        %v3827 = vunpack.c.l.b16 %v3058
        %v3828 = vunpack.c.h.b16 %v3058
        %v3829 = vunpack.c.l.b16 %v3059
        %v3830 = vunpack.c.h.b16 %v3059
        %v3831 = vunpack.c.l.b16 %v3060
        %v3832 = vunpack.c.h.b16 %v3060
        %v3833 = vunpack.c.l.b16 %v3061
        %v3834 = vunpack.c.h.b16 %v3061
        %v3835 = vunpack.c.l.b16 %v3062
        %v3836 = vunpack.c.h.b16 %v3062
        %v3837 = vunpack.c.l.b16 %v3063
        %v3838 = vunpack.c.h.b16 %v3063
        %v3839 = vunpack.c.l.b16 %v3064
        %v3840 = vunpack.c.h.b16 %v3064
        %v3841 = vunpack.c.l.b16 %v3065
        %v3842 = vunpack.c.h.b16 %v3065
        %v3843 = vunpack.c.l.b16 %v3066
        %v3844 = vunpack.c.h.b16 %v3066
        %v3845 = vunpack.c.l.b16 %v3067
        %v3846 = vunpack.c.h.b16 %v3067
        %v3847 = vunpack.c.l.b16 %v3068
        %v3848 = vunpack.c.h.b16 %v3068
        %v3849 = vunpack.c.l.b16 %v3069
        %v3850 = vunpack.c.h.b16 %v3069
        %v3851 = vunpack.c.l.b16 %v3070
        %v3852 = vunpack.c.h.b16 %v3070
        %v3853 = vunpack.c.l.b16 %v3071
        %v3854 = vunpack.c.h.b16 %v3071
        %v3855 = vunpack.c.l.b16 %v3072
        %v3856 = vunpack.c.h.b16 %v3072
        %v3857 = vunpack.c.l.b16 %v3073
        %v3858 = vunpack.c.h.b16 %v3073
        %v3859 = vunpack.c.l.b16 %v3074
        %v3860 = vunpack.c.h.b16 %v3074
        %v3861 = vunpack.c.l.b16 %v3075
        %v3862 = vunpack.c.h.b16 %v3075
        %v3863 = vunpack.c.l.b16 %v3076
        %v3864 = vunpack.c.h.b16 %v3076
        %v3865 = vunpack.c.l.b16 %v3077
        %v3866 = vunpack.c.h.b16 %v3077
        %v3867 = vunpack.c.l.b16 %v3078
        %v3868 = vunpack.c.h.b16 %v3078
        %v3869 = vunpack.c.l.b16 %v3079
        %v3870 = vunpack.c.h.b16 %v3079
        %v3871 = vunpack.c.l.b16 %v3080
        %v3872 = vunpack.c.h.b16 %v3080
        %v3873 = vunpack.c.l.b16 %v3081
        %v3874 = vunpack.c.h.b16 %v3081
        %v3875 = vunpack.c.l.b16 %v3082
        %v3876 = vunpack.c.h.b16 %v3082
        %v3877 = vunpack.c.l.b16 %v3083
        %v3878 = vunpack.c.h.b16 %v3083
        %v3879 = vunpack.c.l.b16 %v3084
        %v3880 = vunpack.c.h.b16 %v3084
        %v3881 = vunpack.c.l.b16 %v3085
        %v3882 = vunpack.c.h.b16 %v3085
        %v3883 = vunpack.c.l.b16 %v3086
        %v3884 = vunpack.c.h.b16 %v3086
        %v3885 = vunpack.c.l.b16 %v3087
        %v3886 = vunpack.c.h.b16 %v3087
        %v3887 = vunpack.c.l.b16 %v3088
        %v3888 = vunpack.c.h.b16 %v3088
        %v3889 = vunpack.c.l.b16 %v3089
        %v3890 = vunpack.c.h.b16 %v3089
        %v3891 = vunpack.c.l.b16 %v3090
        %v3892 = vunpack.c.h.b16 %v3090
        %v3893 = vunpack.c.l.b16 %v3091
        %v3894 = vunpack.c.h.b16 %v3091
        %v3895 = vunpack.c.l.b16 %v3092
        %v3896 = vunpack.c.h.b16 %v3092
        %v3897 = vunpack.c.l.b16 %v3093
        %v3898 = vunpack.c.h.b16 %v3093
        %v3899 = vunpack.c.l.b16 %v3094
        %v3900 = vunpack.c.h.b16 %v3094
        %v3901 = vunpack.c.l.b16 %v3095
        %v3902 = vunpack.c.h.b16 %v3095
        %v3903 = vunpack.c.l.b16 %v3096
        %v3904 = vunpack.c.h.b16 %v3096
        %v3905 = vunpack.c.l.b16 %v3097
        %v3906 = vunpack.c.h.b16 %v3097
        %v3907 = vunpack.c.l.b16 %v3098
        %v3908 = vunpack.c.h.b16 %v3098
        %v3909 = vpack.c.b16 %v3405, %v3397
        %v3910 = vpack.c.b16 %v3406, %v3398
        %v3911 = vpack.c.b16 %v3407, %v3399
        %v3912 = vpack.c.b16 %v3408, %v3400
        %v3913 = vpack.c.b16 %v3409, %v3401
        %v3914 = vpack.c.b16 %v3410, %v3402
        %v3915 = vpack.c.b16 %v3411, %v3403
        %v3916 = vpack.c.b16 %v3412, %v3404
        %v3917 = vpack.c.b16 %v3421, %v3413
        %v3918 = vpack.c.b16 %v3422, %v3414
        %v3919 = vpack.c.b16 %v3423, %v3415
        %v3920 = vpack.c.b16 %v3424, %v3416
        %v3921 = vpack.c.b16 %v3425, %v3417
        %v3922 = vpack.c.b16 %v3426, %v3418
        %v3923 = vpack.c.b16 %v3427, %v3419
        %v3924 = vpack.c.b16 %v3428, %v3420
        %v3925 = vpack.c.b16 %v3437, %v3429
        %v3926 = vpack.c.b16 %v3438, %v3430
        %v3927 = vpack.c.b16 %v3439, %v3431
        %v3928 = vpack.c.b16 %v3440, %v3432
        %v3929 = vpack.c.b16 %v3441, %v3433
        %v3930 = vpack.c.b16 %v3442, %v3434
        %v3931 = vpack.c.b16 %v3443, %v3435
        %v3932 = vpack.c.b16 %v3444, %v3436
        %v3933 = vpack.c.b16 %v3453, %v3445
        %v3934 = vpack.c.b16 %v3454, %v3446
        %v3935 = vpack.c.b16 %v3455, %v3447
        %v3936 = vpack.c.b16 %v3456, %v3448
        %v3937 = vpack.c.b16 %v3457, %v3449
        %v3938 = vpack.c.b16 %v3458, %v3450
        %v3939 = vpack.c.b16 %v3459, %v3451
        %v3940 = vpack.c.b16 %v3460, %v3452
        %v3941 = vpack.c.b16 %v3469, %v3461
        %v3942 = vpack.c.b16 %v3470, %v3462
        %v3943 = vpack.c.b16 %v3471, %v3463
        %v3944 = vpack.c.b16 %v3472, %v3464
        %v3945 = vpack.c.b16 %v3473, %v3465
        %v3946 = vpack.c.b16 %v3474, %v3466
        %v3947 = vpack.c.b16 %v3475, %v3467
        %v3948 = vpack.c.b16 %v3476, %v3468
        %v3949 = vpack.c.b16 %v3485, %v3477
        %v3950 = vpack.c.b16 %v3486, %v3478
        %v3951 = vpack.c.b16 %v3487, %v3479
        %v3952 = vpack.c.b16 %v3488, %v3480
        %v3953 = vpack.c.b16 %v3489, %v3481
        %v3954 = vpack.c.b16 %v3490, %v3482
        %v3955 = vpack.c.b16 %v3491, %v3483
        %v3956 = vpack.c.b16 %v3492, %v3484
        %v3957 = vpack.c.b16 %v3501, %v3493
        %v3958 = vpack.c.b16 %v3502, %v3494
        %v3959 = vpack.c.b16 %v3503, %v3495
        %v3960 = vpack.c.b16 %v3504, %v3496
        %v3961 = vpack.c.b16 %v3505, %v3497
        %v3962 = vpack.c.b16 %v3506, %v3498
        %v3963 = vpack.c.b16 %v3507, %v3499
        %v3964 = vpack.c.b16 %v3508, %v3500
        %v3965 = vpack.c.b16 %v3517, %v3509
        %v3966 = vpack.c.b16 %v3518, %v3510
        %v3967 = vpack.c.b16 %v3519, %v3511
        %v3968 = vpack.c.b16 %v3520, %v3512
        %v3969 = vpack.c.b16 %v3521, %v3513
        %v3970 = vpack.c.b16 %v3522, %v3514
        %v3971 = vpack.c.b16 %v3523, %v3515
        %v3972 = vpack.c.b16 %v3524, %v3516
        %v3973 = vpack.c.b16 %v3533, %v3525
        %v3974 = vpack.c.b16 %v3534, %v3526
        %v3975 = vpack.c.b16 %v3535, %v3527
        %v3976 = vpack.c.b16 %v3536, %v3528
        %v3977 = vpack.c.b16 %v3537, %v3529
        %v3978 = vpack.c.b16 %v3538, %v3530
        %v3979 = vpack.c.b16 %v3539, %v3531
        %v3980 = vpack.c.b16 %v3540, %v3532
        %v3981 = vpack.c.b16 %v3549, %v3541
        %v3982 = vpack.c.b16 %v3550, %v3542
        %v3983 = vpack.c.b16 %v3551, %v3543
        %v3984 = vpack.c.b16 %v3552, %v3544
        %v3985 = vpack.c.b16 %v3553, %v3545
        %v3986 = vpack.c.b16 %v3554, %v3546
        %v3987 = vpack.c.b16 %v3555, %v3547
        %v3988 = vpack.c.b16 %v3556, %v3548
        %v3989 = vpack.c.b16 %v3565, %v3557
        %v3990 = vpack.c.b16 %v3566, %v3558
        %v3991 = vpack.c.b16 %v3567, %v3559
        %v3992 = vpack.c.b16 %v3568, %v3560
        %v3993 = vpack.c.b16 %v3569, %v3561
        %v3994 = vpack.c.b16 %v3570, %v3562
        %v3995 = vpack.c.b16 %v3571, %v3563
        %v3996 = vpack.c.b16 %v3572, %v3564
        %v3997 = vpack.c.b16 %v3581, %v3573
        %v3998 = vpack.c.b16 %v3582, %v3574
        %v3999 = vpack.c.b16 %v3583, %v3575
        %v4000 = vpack.c.b16 %v3584, %v3576
        %v4001 = vpack.c.b16 %v3585, %v3577
        %v4002 = vpack.c.b16 %v3586, %v3578
        %v4003 = vpack.c.b16 %v3587, %v3579
        %v4004 = vpack.c.b16 %v3588, %v3580
        %v4005 = vpack.c.b16 %v3597, %v3589
        %v4006 = vpack.c.b16 %v3598, %v3590
        %v4007 = vpack.c.b16 %v3599, %v3591
        %v4008 = vpack.c.b16 %v3600, %v3592
        %v4009 = vpack.c.b16 %v3601, %v3593
        %v4010 = vpack.c.b16 %v3602, %v3594
        %v4011 = vpack.c.b16 %v3603, %v3595
        %v4012 = vpack.c.b16 %v3604, %v3596
        %v4013 = vpack.c.b16 %v3613, %v3605
        %v4014 = vpack.c.b16 %v3614, %v3606
        %v4015 = vpack.c.b16 %v3615, %v3607
        %v4016 = vpack.c.b16 %v3616, %v3608
        %v4017 = vpack.c.b16 %v3617, %v3609
        %v4018 = vpack.c.b16 %v3618, %v3610
        %v4019 = vpack.c.b16 %v3619, %v3611
        %v4020 = vpack.c.b16 %v3620, %v3612
        %v4021 = vpack.c.b16 %v3629, %v3621
        %v4022 = vpack.c.b16 %v3630, %v3622
        %v4023 = vpack.c.b16 %v3631, %v3623
        %v4024 = vpack.c.b16 %v3632, %v3624
        %v4025 = vpack.c.b16 %v3633, %v3625
        %v4026 = vpack.c.b16 %v3634, %v3626
        %v4027 = vpack.c.b16 %v3635, %v3627
        %v4028 = vpack.c.b16 %v3636, %v3628
        %v4029 = vpack.c.b16 %v3645, %v3637
        %v4030 = vpack.c.b16 %v3646, %v3638
        %v4031 = vpack.c.b16 %v3647, %v3639
        %v4032 = vpack.c.b16 %v3648, %v3640
        %v4033 = vpack.c.b16 %v3649, %v3641
        %v4034 = vpack.c.b16 %v3650, %v3642
        %v4035 = vpack.c.b16 %v3651, %v3643
        %v4036 = vpack.c.b16 %v3652, %v3644
        %v4037 = vpack.c.b16 %v3661, %v3653
        %v4038 = vpack.c.b16 %v3662, %v3654
        %v4039 = vpack.c.b16 %v3663, %v3655
        %v4040 = vpack.c.b16 %v3664, %v3656
        %v4041 = vpack.c.b16 %v3665, %v3657
        %v4042 = vpack.c.b16 %v3666, %v3658
        %v4043 = vpack.c.b16 %v3667, %v3659
        %v4044 = vpack.c.b16 %v3668, %v3660
        %v4045 = vpack.c.b16 %v3677, %v3669
        %v4046 = vpack.c.b16 %v3678, %v3670
        %v4047 = vpack.c.b16 %v3679, %v3671
        %v4048 = vpack.c.b16 %v3680, %v3672
        %v4049 = vpack.c.b16 %v3681, %v3673
        %v4050 = vpack.c.b16 %v3682, %v3674
        %v4051 = vpack.c.b16 %v3683, %v3675
        %v4052 = vpack.c.b16 %v3684, %v3676
        %v4053 = vpack.c.b16 %v3693, %v3685
        %v4054 = vpack.c.b16 %v3694, %v3686
        %v4055 = vpack.c.b16 %v3695, %v3687
        %v4056 = vpack.c.b16 %v3696, %v3688
        %v4057 = vpack.c.b16 %v3697, %v3689
        %v4058 = vpack.c.b16 %v3698, %v3690
        %v4059 = vpack.c.b16 %v3699, %v3691
        %v4060 = vpack.c.b16 %v3700, %v3692
        %v4061 = vpack.c.b16 %v3709, %v3701
        %v4062 = vpack.c.b16 %v3710, %v3702
        %v4063 = vpack.c.b16 %v3711, %v3703
        %v4064 = vpack.c.b16 %v3712, %v3704
        %v4065 = vpack.c.b16 %v3713, %v3705
        %v4066 = vpack.c.b16 %v3714, %v3706
        %v4067 = vpack.c.b16 %v3715, %v3707
        %v4068 = vpack.c.b16 %v3716, %v3708
        %v4069 = vpack.c.b16 %v3725, %v3717
        %v4070 = vpack.c.b16 %v3726, %v3718
        %v4071 = vpack.c.b16 %v3727, %v3719
        %v4072 = vpack.c.b16 %v3728, %v3720
        %v4073 = vpack.c.b16 %v3729, %v3721
        %v4074 = vpack.c.b16 %v3730, %v3722
        %v4075 = vpack.c.b16 %v3731, %v3723
        %v4076 = vpack.c.b16 %v3732, %v3724
        %v4077 = vpack.c.b16 %v3741, %v3733
        %v4078 = vpack.c.b16 %v3742, %v3734
        %v4079 = vpack.c.b16 %v3743, %v3735
        %v4080 = vpack.c.b16 %v3744, %v3736
        %v4081 = vpack.c.b16 %v3745, %v3737
        %v4082 = vpack.c.b16 %v3746, %v3738
        %v4083 = vpack.c.b16 %v3747, %v3739
        %v4084 = vpack.c.b16 %v3748, %v3740
        %v4085 = vpack.c.b16 %v3757, %v3749
        %v4086 = vpack.c.b16 %v3758, %v3750
        %v4087 = vpack.c.b16 %v3759, %v3751
        %v4088 = vpack.c.b16 %v3760, %v3752
        %v4089 = vpack.c.b16 %v3761, %v3753
        %v4090 = vpack.c.b16 %v3762, %v3754
        %v4091 = vpack.c.b16 %v3763, %v3755
        %v4092 = vpack.c.b16 %v3764, %v3756
        %v4093 = vpack.c.b16 %v3773, %v3765
        %v4094 = vpack.c.b16 %v3774, %v3766
        %v4095 = vpack.c.b16 %v3775, %v3767
        %v4096 = vpack.c.b16 %v3776, %v3768
        %v4097 = vpack.c.b16 %v3777, %v3769
        %v4098 = vpack.c.b16 %v3778, %v3770
        %v4099 = vpack.c.b16 %v3779, %v3771
        %v4100 = vpack.c.b16 %v3780, %v3772
        %v4101 = vpack.c.b16 %v3789, %v3781
        %v4102 = vpack.c.b16 %v3790, %v3782
        %v4103 = vpack.c.b16 %v3791, %v3783
        %v4104 = vpack.c.b16 %v3792, %v3784
        %v4105 = vpack.c.b16 %v3793, %v3785
        %v4106 = vpack.c.b16 %v3794, %v3786
        %v4107 = vpack.c.b16 %v3795, %v3787
        %v4108 = vpack.c.b16 %v3796, %v3788
        %v4109 = vpack.c.b16 %v3805, %v3797
        %v4110 = vpack.c.b16 %v3806, %v3798
        %v4111 = vpack.c.b16 %v3807, %v3799
        %v4112 = vpack.c.b16 %v3808, %v3800
        %v4113 = vpack.c.b16 %v3809, %v3801
        %v4114 = vpack.c.b16 %v3810, %v3802
        %v4115 = vpack.c.b16 %v3811, %v3803
        %v4116 = vpack.c.b16 %v3812, %v3804
        %v4117 = vpack.c.b16 %v3821, %v3813
        %v4118 = vpack.c.b16 %v3822, %v3814
        %v4119 = vpack.c.b16 %v3823, %v3815
        %v4120 = vpack.c.b16 %v3824, %v3816
        %v4121 = vpack.c.b16 %v3825, %v3817
        %v4122 = vpack.c.b16 %v3826, %v3818
        %v4123 = vpack.c.b16 %v3827, %v3819
        %v4124 = vpack.c.b16 %v3828, %v3820
        %v4125 = vpack.c.b16 %v3837, %v3829
        %v4126 = vpack.c.b16 %v3838, %v3830
        %v4127 = vpack.c.b16 %v3839, %v3831
        %v4128 = vpack.c.b16 %v3840, %v3832
        %v4129 = vpack.c.b16 %v3841, %v3833
        %v4130 = vpack.c.b16 %v3842, %v3834
        %v4131 = vpack.c.b16 %v3843, %v3835
        %v4132 = vpack.c.b16 %v3844, %v3836
        %v4133 = vpack.c.b16 %v3853, %v3845
        %v4134 = vpack.c.b16 %v3854, %v3846
        %v4135 = vpack.c.b16 %v3855, %v3847
        %v4136 = vpack.c.b16 %v3856, %v3848
        %v4137 = vpack.c.b16 %v3857, %v3849
        %v4138 = vpack.c.b16 %v3858, %v3850
        %v4139 = vpack.c.b16 %v3859, %v3851
        %v4140 = vpack.c.b16 %v3860, %v3852
        %v4141 = vpack.c.b16 %v3869, %v3861
        %v4142 = vpack.c.b16 %v3870, %v3862
        %v4143 = vpack.c.b16 %v3871, %v3863
        %v4144 = vpack.c.b16 %v3872, %v3864
        %v4145 = vpack.c.b16 %v3873, %v3865
        %v4146 = vpack.c.b16 %v3874, %v3866
        %v4147 = vpack.c.b16 %v3875, %v3867
        %v4148 = vpack.c.b16 %v3876, %v3868
        %v4149 = vpack.c.b16 %v3885, %v3877
        %v4150 = vpack.c.b16 %v3886, %v3878
        %v4151 = vpack.c.b16 %v3887, %v3879
        %v4152 = vpack.c.b16 %v3888, %v3880
        %v4153 = vpack.c.b16 %v3889, %v3881
        %v4154 = vpack.c.b16 %v3890, %v3882
        %v4155 = vpack.c.b16 %v3891, %v3883
        %v4156 = vpack.c.b16 %v3892, %v3884
        %v4157 = vpack.c.b16 %v3901, %v3893
        %v4158 = vpack.c.b16 %v3902, %v3894
        %v4159 = vpack.c.b16 %v3903, %v3895
        %v4160 = vpack.c.b16 %v3904, %v3896
        %v4161 = vpack.c.b16 %v3905, %v3897
        %v4162 = vpack.c.b16 %v3906, %v3898
        %v4163 = vpack.c.b16 %v3907, %v3899
        %v4164 = vpack.c.b16 %v3908, %v3900
        %4421 = vmatprep.subr.bf16.mxu0 %v3910
        %4422 = vmatpush1.bf16.msra.mxu0 %v3909
        %4423 = vmatprep.subr.bf16.mxu0 %v3918
        %4424 = vmatpush1.bf16.msra.mxu0 %v3917
        %4425 = vmatprep.subr.bf16.mxu0 %v3926
        %4426 = vmatpush1.bf16.msra.mxu0 %v3925
        %4427 = vmatprep.subr.bf16.mxu0 %v3934
        %4428 = vmatpush1.bf16.msra.mxu0 %v3933
        %4429 = vmatprep.subr.bf16.mxu0 %v3942
        %4430 = vmatpush1.bf16.msra.mxu0 %v3941
        %4431 = vmatprep.subr.bf16.mxu0 %v3950
        %4432 = vmatpush1.bf16.msra.mxu0 %v3949
        %4433 = vmatprep.subr.bf16.mxu0 %v3958
        %4434 = vmatpush1.bf16.msra.mxu0 %v3957
        %4435 = vmatprep.subr.bf16.mxu0 %v3966
        %4436 = vmatpush1.bf16.msra.mxu0 %v3965
        %4437 = vmatprep.subr.bf16.mxu0 %v3974
        %4438 = vmatpush1.bf16.msra.mxu0 %v3973
        %4439 = vmatprep.subr.bf16.mxu0 %v3982
        %4440 = vmatpush1.bf16.msra.mxu0 %v3981
        %4441 = vmatprep.subr.bf16.mxu0 %v3990
        %4442 = vmatpush1.bf16.msra.mxu0 %v3989
        %4443 = vmatprep.subr.bf16.mxu0 %v3998
        %4444 = vmatpush1.bf16.msra.mxu0 %v3997
        %4445 = vmatprep.subr.bf16.mxu0 %v4006
        %4446 = vmatpush1.bf16.msra.mxu0 %v4005
        %4447 = vmatprep.subr.bf16.mxu0 %v4014
        %4448 = vmatpush1.bf16.msra.mxu0 %v4013
        %4449 = vmatprep.subr.bf16.mxu0 %v4022
        %4450 = vmatpush1.bf16.msra.mxu0 %v4021
        %4451 = vmatprep.subr.bf16.mxu0 %v4030
        %4452 = vmatpush1.bf16.msra.mxu0 %v4029
        %4453 = vmatprep.mubr.bf16.mxu0 %v2812
        %4454 = vmatmul.mubr.bf16.gmra.mrb[0].mxu0 %v2811
        %v4455 = vpop.f32.mrb[0].mxu0
        %v4456 = vadd.f32 %v3104, %v4455
        %v4457 = vpop.f32.mrb[0].mxu0
        %v4458 = vadd.f32 %v3108, %v4457
        %v4459 = vpop.f32.mrb[0].mxu0
        %v4460 = vadd.f32 %v3104, %v4459
        %v4461 = vpop.f32.mrb[0].mxu0
        %v4462 = vadd.f32 %v3108, %v4461
        %4463 = vmatprep.mubr.bf16.mxu0 %v2816
        %4464 = vmatmul.mubr.bf16.gmra.mrb[0].mxu0 %v2815
        %v4465 = vpop.f32.mrb[0].mxu0
        %v4466 = vadd.f32 %v3104, %v4465
        %v4467 = vpop.f32.mrb[0].mxu0
        %v4468 = vadd.f32 %v3108, %v4467
        %v4469 = vpop.f32.mrb[0].mxu0
        %v4470 = vadd.f32 %v3104, %v4469
        %v4471 = vpop.f32.mrb[0].mxu0
        %v4472 = vadd.f32 %v3108, %v4471
        %4473 = vmatprep.mubr.bf16.mxu0 %v2820
        %4474 = vmatmul.mubr.bf16.gmra.mrb[0].mxu0 %v2819
        %v4475 = vpop.f32.mrb[0].mxu0
        %v4476 = vadd.f32 %v3104, %v4475
        %v4477 = vpop.f32.mrb[0].mxu0
        %v4478 = vadd.f32 %v3108, %v4477
        %v4479 = vpop.f32.mrb[0].mxu0
        %v4480 = vadd.f32 %v3104, %v4479
        %v4481 = vpop.f32.mrb[0].mxu0
        %v4482 = vadd.f32 %v3108, %v4481
        %4483 = vmatprep.mubr.bf16.mxu0 %v2824
        %4484 = vmatmul.mubr.bf16.gmra.mrb[0].mxu0 %v2823
        %v4485 = vpop.f32.mrb[0].mxu0
        %v4486 = vadd.f32 %v3104, %v4485
        %v4487 = vpop.f32.mrb[0].mxu0
        %v4488 = vadd.f32 %v3108, %v4487
        %v4489 = vpop.f32.mrb[0].mxu0
        %v4490 = vadd.f32 %v3104, %v4489
        %v4491 = vpop.f32.mrb[0].mxu0
        %v4492 = vadd.f32 %v3108, %v4491
        %4493 = vmatprep.mubr.bf16.mxu0 %v2828
        %4494 = vmatmul.mubr.bf16.gmra.mrb[0].mxu0 %v2827
        %v4495 = vpop.f32.mrb[0].mxu0
        %v4496 = vadd.f32 %v3104, %v4495
        %v4497 = vpop.f32.mrb[0].mxu0
        %v4498 = vadd.f32 %v3108, %v4497
        %v4499 = vpop.f32.mrb[0].mxu0
        %v4500 = vadd.f32 %v3104, %v4499
        %v4501 = vpop.f32.mrb[0].mxu0
        %v4502 = vadd.f32 %v3108, %v4501
        %4503 = vmatprep.mubr.bf16.mxu0 %v2832
        %4504 = vmatmul.mubr.bf16.gmra.mrb[0].mxu0 %v2831
        %v4505 = vpop.f32.mrb[0].mxu0
        %v4506 = vadd.f32 %v3104, %v4505
        %v4507 = vpop.f32.mrb[0].mxu0
        %v4508 = vadd.f32 %v3108, %v4507
        %v4509 = vpop.f32.mrb[0].mxu0
        %v4510 = vadd.f32 %v3104, %v4509
        %v4511 = vpop.f32.mrb[0].mxu0
        %v4512 = vadd.f32 %v3108, %v4511
        %4513 = vmatprep.mubr.bf16.mxu0 %v2836
        %4514 = vmatmul.mubr.bf16.gmra.mrb[0].mxu0 %v2835
        %v4515 = vpop.f32.mrb[0].mxu0
        %v4516 = vadd.f32 %v3104, %v4515
        %v4517 = vpop.f32.mrb[0].mxu0
        %v4518 = vadd.f32 %v3108, %v4517
        %v4519 = vpop.f32.mrb[0].mxu0
        %v4520 = vadd.f32 %v3104, %v4519
        %v4521 = vpop.f32.mrb[0].mxu0
        %v4522 = vadd.f32 %v3108, %v4521
        %4523 = vmatprep.mubr.bf16.mxu0 %v2840
        %4524 = vmatmul.mubr.bf16.gmra.mrb[0].mxu0 %v2839
        %v4525 = vpop.f32.mrb[0].mxu0
        %v4526 = vadd.f32 %v3104, %v4525
        %v4527 = vpop.f32.mrb[0].mxu0
        %v4528 = vadd.f32 %v3108, %v4527
        %v4529 = vpop.f32.mrb[0].mxu0
        %v4530 = vadd.f32 %v3104, %v4529
        %v4531 = vpop.f32.mrb[0].mxu0
        %v4532 = vadd.f32 %v3108, %v4531
        %4533 = vdwg.mxu0
        %4534 = vmatprep.subr.bf16.mxu0 %v4038
        %4535 = vmatpush1.bf16.msra.mxu0 %v4037
        %4536 = vmatprep.subr.bf16.mxu0 %v4046
        %4537 = vmatpush1.bf16.msra.mxu0 %v4045
        %4538 = vmatprep.subr.bf16.mxu0 %v4054
        %4539 = vmatpush1.bf16.msra.mxu0 %v4053
        %4540 = vmatprep.subr.bf16.mxu0 %v4062
        %4541 = vmatpush1.bf16.msra.mxu0 %v4061
        %4542 = vmatprep.subr.bf16.mxu0 %v4070
        %4543 = vmatpush1.bf16.msra.mxu0 %v4069
        %4544 = vmatprep.subr.bf16.mxu0 %v4078
        %4545 = vmatpush1.bf16.msra.mxu0 %v4077
        %4546 = vmatprep.subr.bf16.mxu0 %v4086
        %4547 = vmatpush1.bf16.msra.mxu0 %v4085
        %4548 = vmatprep.subr.bf16.mxu0 %v4094
        %4549 = vmatpush1.bf16.msra.mxu0 %v4093
        %4550 = vmatprep.subr.bf16.mxu0 %v4102
        %4551 = vmatpush1.bf16.msra.mxu0 %v4101
        %4552 = vmatprep.subr.bf16.mxu0 %v4110
        %4553 = vmatpush1.bf16.msra.mxu0 %v4109
        %4554 = vmatprep.subr.bf16.mxu0 %v4118
        %4555 = vmatpush1.bf16.msra.mxu0 %v4117
        %4556 = vmatprep.subr.bf16.mxu0 %v4126
        %4557 = vmatpush1.bf16.msra.mxu0 %v4125
        %4558 = vmatprep.subr.bf16.mxu0 %v4134
        %4559 = vmatpush1.bf16.msra.mxu0 %v4133
        %4560 = vmatprep.subr.bf16.mxu0 %v4142
        %4561 = vmatpush1.bf16.msra.mxu0 %v4141
        %4562 = vmatprep.subr.bf16.mxu0 %v4150
        %4563 = vmatpush1.bf16.msra.mxu0 %v4149
        %4564 = vmatprep.subr.bf16.mxu0 %v4158
        %4565 = vmatpush1.bf16.msra.mxu0 %v4157
        %4566 = vmatprep.mubr.bf16.mxu0 %v2814
        %4567 = vmatmul.mubr.bf16.gmra.mrb[0].mxu0 %v2813
        %v4568 = vpop.f32.mrb[0].mxu0
        %v4569 = vadd.f32 %v4456, %v4568
        %v4570 = vpop.f32.mrb[0].mxu0
        %v4571 = vadd.f32 %v4458, %v4570
        %v4572 = vpop.f32.mrb[0].mxu0
        %v4573 = vadd.f32 %v4460, %v4572
        %v4574 = vpop.f32.mrb[0].mxu0
        %v4575 = vadd.f32 %v4462, %v4574
        %4576 = vmatprep.mubr.bf16.mxu0 %v2818
        %4577 = vmatmul.mubr.bf16.gmra.mrb[0].mxu0 %v2817
        %v4578 = vpop.f32.mrb[0].mxu0
        %v4579 = vadd.f32 %v4466, %v4578
        %v4580 = vpop.f32.mrb[0].mxu0
        %v4581 = vadd.f32 %v4468, %v4580
        %v4582 = vpop.f32.mrb[0].mxu0
        %v4583 = vadd.f32 %v4470, %v4582
        %v4584 = vpop.f32.mrb[0].mxu0
        %v4585 = vadd.f32 %v4472, %v4584
        %4586 = vmatprep.mubr.bf16.mxu0 %v2822
        %4587 = vmatmul.mubr.bf16.gmra.mrb[0].mxu0 %v2821
        %v4588 = vpop.f32.mrb[0].mxu0
        %v4589 = vadd.f32 %v4476, %v4588
        %v4590 = vpop.f32.mrb[0].mxu0
        %v4591 = vadd.f32 %v4478, %v4590
        %v4592 = vpop.f32.mrb[0].mxu0
        %v4593 = vadd.f32 %v4480, %v4592
        %v4594 = vpop.f32.mrb[0].mxu0
        %v4595 = vadd.f32 %v4482, %v4594
        %4596 = vmatprep.mubr.bf16.mxu0 %v2826
        %4597 = vmatmul.mubr.bf16.gmra.mrb[0].mxu0 %v2825
        %v4598 = vpop.f32.mrb[0].mxu0
        %v4599 = vadd.f32 %v4486, %v4598
        %v4600 = vpop.f32.mrb[0].mxu0
        %v4601 = vadd.f32 %v4488, %v4600
        %v4602 = vpop.f32.mrb[0].mxu0
        %v4603 = vadd.f32 %v4490, %v4602
        %v4604 = vpop.f32.mrb[0].mxu0
        %v4605 = vadd.f32 %v4492, %v4604
        %4606 = vmatprep.mubr.bf16.mxu0 %v2830
        %4607 = vmatmul.mubr.bf16.gmra.mrb[0].mxu0 %v2829
        %v4608 = vpop.f32.mrb[0].mxu0
        %v4609 = vadd.f32 %v4496, %v4608
        %v4610 = vpop.f32.mrb[0].mxu0
        %v4611 = vadd.f32 %v4498, %v4610
        %v4612 = vpop.f32.mrb[0].mxu0
        %v4613 = vadd.f32 %v4500, %v4612
        %v4614 = vpop.f32.mrb[0].mxu0
        %v4615 = vadd.f32 %v4502, %v4614
        %4616 = vmatprep.mubr.bf16.mxu0 %v2834
        %4617 = vmatmul.mubr.bf16.gmra.mrb[0].mxu0 %v2833
        %v4618 = vpop.f32.mrb[0].mxu0
        %v4619 = vadd.f32 %v4506, %v4618
        %v4620 = vpop.f32.mrb[0].mxu0
        %v4621 = vadd.f32 %v4508, %v4620
        %v4622 = vpop.f32.mrb[0].mxu0
        %v4623 = vadd.f32 %v4510, %v4622
        %v4624 = vpop.f32.mrb[0].mxu0
        %v4625 = vadd.f32 %v4512, %v4624
        %4626 = vmatprep.mubr.bf16.mxu0 %v2838
        %4627 = vmatmul.mubr.bf16.gmra.mrb[0].mxu0 %v2837
        %v4628 = vpop.f32.mrb[0].mxu0
        %v4629 = vadd.f32 %v4516, %v4628
        %v4630 = vpop.f32.mrb[0].mxu0
        %v4631 = vadd.f32 %v4518, %v4630
        %v4632 = vpop.f32.mrb[0].mxu0
        %v4633 = vadd.f32 %v4520, %v4632
        %v4634 = vpop.f32.mrb[0].mxu0
        %v4635 = vadd.f32 %v4522, %v4634
        %4636 = vmatprep.mubr.bf16.mxu0 %v2842
        %4637 = vmatmul.mubr.bf16.gmra.mrb[0].mxu0 %v2841
        %v4638 = vpop.f32.mrb[0].mxu0
        %v4639 = vadd.f32 %v4526, %v4638
        %v4640 = vpop.f32.mrb[0].mxu0
        %v4641 = vadd.f32 %v4528, %v4640
        %v4642 = vpop.f32.mrb[0].mxu0
        %v4643 = vadd.f32 %v4530, %v4642
        %v4644 = vpop.f32.mrb[0].mxu0
        %v4645 = vadd.f32 %v4532, %v4644
        %4646 = vdwg.mxu0
        %4647 = vmatprep.subr.bf16.mxu0 %v3912
        %4648 = vmatpush1.bf16.msra.mxu0 %v3911
        %4649 = vmatprep.subr.bf16.mxu0 %v3920
        %4650 = vmatpush1.bf16.msra.mxu0 %v3919
        %4651 = vmatprep.subr.bf16.mxu0 %v3928
        %4652 = vmatpush1.bf16.msra.mxu0 %v3927
        %4653 = vmatprep.subr.bf16.mxu0 %v3936
        %4654 = vmatpush1.bf16.msra.mxu0 %v3935
        %4655 = vmatprep.subr.bf16.mxu0 %v3944
        %4656 = vmatpush1.bf16.msra.mxu0 %v3943
        %4657 = vmatprep.subr.bf16.mxu0 %v3952
        %4658 = vmatpush1.bf16.msra.mxu0 %v3951
        %4659 = vmatprep.subr.bf16.mxu0 %v3960
        %4660 = vmatpush1.bf16.msra.mxu0 %v3959
        %4661 = vmatprep.subr.bf16.mxu0 %v3968
        %4662 = vmatpush1.bf16.msra.mxu0 %v3967
        %4663 = vmatprep.subr.bf16.mxu0 %v3976
        %4664 = vmatpush1.bf16.msra.mxu0 %v3975
        %4665 = vmatprep.subr.bf16.mxu0 %v3984
        %4666 = vmatpush1.bf16.msra.mxu0 %v3983
        %4667 = vmatprep.subr.bf16.mxu0 %v3992
        %4668 = vmatpush1.bf16.msra.mxu0 %v3991
        %4669 = vmatprep.subr.bf16.mxu0 %v4000
        %4670 = vmatpush1.bf16.msra.mxu0 %v3999
        %4671 = vmatprep.subr.bf16.mxu0 %v4008
        %4672 = vmatpush1.bf16.msra.mxu0 %v4007
        %4673 = vmatprep.subr.bf16.mxu0 %v4016
        %4674 = vmatpush1.bf16.msra.mxu0 %v4015
        %4675 = vmatprep.subr.bf16.mxu0 %v4024
        %4676 = vmatpush1.bf16.msra.mxu0 %v4023
        %4677 = vmatprep.subr.bf16.mxu0 %v4032
        %4678 = vmatpush1.bf16.msra.mxu0 %v4031
        %4679 = vmatprep.mubr.bf16.mxu0 %v2812
        %4680 = vmatmul.mubr.bf16.gmra.mrb[0].mxu0 %v2811
        %v4681 = vpop.f32.mrb[0].mxu0
        %v4682 = vadd.f32 %v3112, %v4681
        %v4683 = vpop.f32.mrb[0].mxu0
        %v4684 = vadd.f32 %v3116, %v4683
        %v4685 = vpop.f32.mrb[0].mxu0
        %v4686 = vadd.f32 %v3112, %v4685
        %v4687 = vpop.f32.mrb[0].mxu0
        %v4688 = vadd.f32 %v3116, %v4687
        %4689 = vmatprep.mubr.bf16.mxu0 %v2816
        %4690 = vmatmul.mubr.bf16.gmra.mrb[0].mxu0 %v2815
        %v4691 = vpop.f32.mrb[0].mxu0
        %v4692 = vadd.f32 %v3112, %v4691
        %v4693 = vpop.f32.mrb[0].mxu0
        %v4694 = vadd.f32 %v3116, %v4693
        %v4695 = vpop.f32.mrb[0].mxu0
        %v4696 = vadd.f32 %v3112, %v4695
        %v4697 = vpop.f32.mrb[0].mxu0
        %v4698 = vadd.f32 %v3116, %v4697
        %4699 = vmatprep.mubr.bf16.mxu0 %v2820
        %4700 = vmatmul.mubr.bf16.gmra.mrb[0].mxu0 %v2819
        %v4701 = vpop.f32.mrb[0].mxu0
        %v4702 = vadd.f32 %v3112, %v4701
        %v4703 = vpop.f32.mrb[0].mxu0
        %v4704 = vadd.f32 %v3116, %v4703
        %v4705 = vpop.f32.mrb[0].mxu0
        %v4706 = vadd.f32 %v3112, %v4705
        %v4707 = vpop.f32.mrb[0].mxu0
        %v4708 = vadd.f32 %v3116, %v4707
        %4709 = vmatprep.mubr.bf16.mxu0 %v2824
        %4710 = vmatmul.mubr.bf16.gmra.mrb[0].mxu0 %v2823
        %v4711 = vpop.f32.mrb[0].mxu0
        %v4712 = vadd.f32 %v3112, %v4711
        %v4713 = vpop.f32.mrb[0].mxu0
        %v4714 = vadd.f32 %v3116, %v4713
        %v4715 = vpop.f32.mrb[0].mxu0
        %v4716 = vadd.f32 %v3112, %v4715
        %v4717 = vpop.f32.mrb[0].mxu0
        %v4718 = vadd.f32 %v3116, %v4717
        %4719 = vmatprep.mubr.bf16.mxu0 %v2828
        %4720 = vmatmul.mubr.bf16.gmra.mrb[0].mxu0 %v2827
        %v4721 = vpop.f32.mrb[0].mxu0
        %v4722 = vadd.f32 %v3112, %v4721
        %v4723 = vpop.f32.mrb[0].mxu0
        %v4724 = vadd.f32 %v3116, %v4723
        %v4725 = vpop.f32.mrb[0].mxu0
        %v4726 = vadd.f32 %v3112, %v4725
        %v4727 = vpop.f32.mrb[0].mxu0
        %v4728 = vadd.f32 %v3116, %v4727
        %4729 = vmatprep.mubr.bf16.mxu0 %v2832
        %4730 = vmatmul.mubr.bf16.gmra.mrb[0].mxu0 %v2831
        %v4731 = vpop.f32.mrb[0].mxu0
        %v4732 = vadd.f32 %v3112, %v4731
        %v4733 = vpop.f32.mrb[0].mxu0
        %v4734 = vadd.f32 %v3116, %v4733
        %v4735 = vpop.f32.mrb[0].mxu0
        %v4736 = vadd.f32 %v3112, %v4735
        %v4737 = vpop.f32.mrb[0].mxu0
        %v4738 = vadd.f32 %v3116, %v4737
        %4739 = vmatprep.mubr.bf16.mxu0 %v2836
        %4740 = vmatmul.mubr.bf16.gmra.mrb[0].mxu0 %v2835
        %v4741 = vpop.f32.mrb[0].mxu0
        %v4742 = vadd.f32 %v3112, %v4741
        %v4743 = vpop.f32.mrb[0].mxu0
        %v4744 = vadd.f32 %v3116, %v4743
        %v4745 = vpop.f32.mrb[0].mxu0
        %v4746 = vadd.f32 %v3112, %v4745
        %v4747 = vpop.f32.mrb[0].mxu0
        %v4748 = vadd.f32 %v3116, %v4747
        %4749 = vmatprep.mubr.bf16.mxu0 %v2840
        %4750 = vmatmul.mubr.bf16.gmra.mrb[0].mxu0 %v2839
        %v4751 = vpop.f32.mrb[0].mxu0
        %v4752 = vadd.f32 %v3112, %v4751
        %v4753 = vpop.f32.mrb[0].mxu0
        %v4754 = vadd.f32 %v3116, %v4753
        %v4755 = vpop.f32.mrb[0].mxu0
        %v4756 = vadd.f32 %v3112, %v4755
        %v4757 = vpop.f32.mrb[0].mxu0
        %v4758 = vadd.f32 %v3116, %v4757
        %4759 = vdwg.mxu0
        %4760 = vmatprep.subr.bf16.mxu0 %v4040
        %4761 = vmatpush1.bf16.msra.mxu0 %v4039
        %4762 = vmatprep.subr.bf16.mxu0 %v4048
        %4763 = vmatpush1.bf16.msra.mxu0 %v4047
        %4764 = vmatprep.subr.bf16.mxu0 %v4056
        %4765 = vmatpush1.bf16.msra.mxu0 %v4055
        %4766 = vmatprep.subr.bf16.mxu0 %v4064
        %4767 = vmatpush1.bf16.msra.mxu0 %v4063
        %4768 = vmatprep.subr.bf16.mxu0 %v4072
        %4769 = vmatpush1.bf16.msra.mxu0 %v4071
        %4770 = vmatprep.subr.bf16.mxu0 %v4080
        %4771 = vmatpush1.bf16.msra.mxu0 %v4079
        %4772 = vmatprep.subr.bf16.mxu0 %v4088
        %4773 = vmatpush1.bf16.msra.mxu0 %v4087
        %4774 = vmatprep.subr.bf16.mxu0 %v4096
        %4775 = vmatpush1.bf16.msra.mxu0 %v4095
        %4776 = vmatprep.subr.bf16.mxu0 %v4104
        %4777 = vmatpush1.bf16.msra.mxu0 %v4103
        %4778 = vmatprep.subr.bf16.mxu0 %v4112
        %4779 = vmatpush1.bf16.msra.mxu0 %v4111
        %4780 = vmatprep.subr.bf16.mxu0 %v4120
        %4781 = vmatpush1.bf16.msra.mxu0 %v4119
        %4782 = vmatprep.subr.bf16.mxu0 %v4128
        %4783 = vmatpush1.bf16.msra.mxu0 %v4127
        %4784 = vmatprep.subr.bf16.mxu0 %v4136
        %4785 = vmatpush1.bf16.msra.mxu0 %v4135
        %4786 = vmatprep.subr.bf16.mxu0 %v4144
        %4787 = vmatpush1.bf16.msra.mxu0 %v4143
        %4788 = vmatprep.subr.bf16.mxu0 %v4152
        %4789 = vmatpush1.bf16.msra.mxu0 %v4151
        %4790 = vmatprep.subr.bf16.mxu0 %v4160
        %4791 = vmatpush1.bf16.msra.mxu0 %v4159
        %4792 = vmatprep.mubr.bf16.mxu0 %v2814
        %4793 = vmatmul.mubr.bf16.gmra.mrb[0].mxu0 %v2813
        %v4794 = vpop.f32.mrb[0].mxu0
        %v4795 = vadd.f32 %v4682, %v4794
        %v4796 = vpop.f32.mrb[0].mxu0
        %v4797 = vadd.f32 %v4684, %v4796
        %v4798 = vpop.f32.mrb[0].mxu0
        %v4799 = vadd.f32 %v4686, %v4798
        %v4800 = vpop.f32.mrb[0].mxu0
        %v4801 = vadd.f32 %v4688, %v4800
        %4802 = vmatprep.mubr.bf16.mxu0 %v2818
        %4803 = vmatmul.mubr.bf16.gmra.mrb[0].mxu0 %v2817
        %v4804 = vpop.f32.mrb[0].mxu0
        %v4805 = vadd.f32 %v4692, %v4804
        %v4806 = vpop.f32.mrb[0].mxu0
        %v4807 = vadd.f32 %v4694, %v4806
        %v4808 = vpop.f32.mrb[0].mxu0
        %v4809 = vadd.f32 %v4696, %v4808
        %v4810 = vpop.f32.mrb[0].mxu0
        %v4811 = vadd.f32 %v4698, %v4810
        %4812 = vmatprep.mubr.bf16.mxu0 %v2822
        %4813 = vmatmul.mubr.bf16.gmra.mrb[0].mxu0 %v2821
        %v4814 = vpop.f32.mrb[0].mxu0
        %v4815 = vadd.f32 %v4702, %v4814
        %v4816 = vpop.f32.mrb[0].mxu0
        %v4817 = vadd.f32 %v4704, %v4816
        %v4818 = vpop.f32.mrb[0].mxu0
        %v4819 = vadd.f32 %v4706, %v4818
        %v4820 = vpop.f32.mrb[0].mxu0
        %v4821 = vadd.f32 %v4708, %v4820
        %4822 = vmatprep.mubr.bf16.mxu0 %v2826
        %4823 = vmatmul.mubr.bf16.gmra.mrb[0].mxu0 %v2825
        %v4824 = vpop.f32.mrb[0].mxu0
        %v4825 = vadd.f32 %v4712, %v4824
        %v4826 = vpop.f32.mrb[0].mxu0
        %v4827 = vadd.f32 %v4714, %v4826
        %v4828 = vpop.f32.mrb[0].mxu0
        %v4829 = vadd.f32 %v4716, %v4828
        %v4830 = vpop.f32.mrb[0].mxu0
        %v4831 = vadd.f32 %v4718, %v4830
        %4832 = vmatprep.mubr.bf16.mxu0 %v2830
        %4833 = vmatmul.mubr.bf16.gmra.mrb[0].mxu0 %v2829
        %v4834 = vpop.f32.mrb[0].mxu0
        %v4835 = vadd.f32 %v4722, %v4834
        %v4836 = vpop.f32.mrb[0].mxu0
        %v4837 = vadd.f32 %v4724, %v4836
        %v4838 = vpop.f32.mrb[0].mxu0
        %v4839 = vadd.f32 %v4726, %v4838
        %v4840 = vpop.f32.mrb[0].mxu0
        %v4841 = vadd.f32 %v4728, %v4840
        %4842 = vmatprep.mubr.bf16.mxu0 %v2834
        %4843 = vmatmul.mubr.bf16.gmra.mrb[0].mxu0 %v2833
        %v4844 = vpop.f32.mrb[0].mxu0
        %v4845 = vadd.f32 %v4732, %v4844
        %v4846 = vpop.f32.mrb[0].mxu0
        %v4847 = vadd.f32 %v4734, %v4846
        %v4848 = vpop.f32.mrb[0].mxu0
        %v4849 = vadd.f32 %v4736, %v4848
        %v4850 = vpop.f32.mrb[0].mxu0
        %v4851 = vadd.f32 %v4738, %v4850
        %4852 = vmatprep.mubr.bf16.mxu0 %v2838
        %4853 = vmatmul.mubr.bf16.gmra.mrb[0].mxu0 %v2837
        %v4854 = vpop.f32.mrb[0].mxu0
        %v4855 = vadd.f32 %v4742, %v4854
        %v4856 = vpop.f32.mrb[0].mxu0
        %v4857 = vadd.f32 %v4744, %v4856
        %v4858 = vpop.f32.mrb[0].mxu0
        %v4859 = vadd.f32 %v4746, %v4858
        %v4860 = vpop.f32.mrb[0].mxu0
        %v4861 = vadd.f32 %v4748, %v4860
        %4862 = vmatprep.mubr.bf16.mxu0 %v2842
        %4863 = vmatmul.mubr.bf16.gmra.mrb[0].mxu0 %v2841
        %v4864 = vpop.f32.mrb[0].mxu0
        %v4865 = vadd.f32 %v4752, %v4864
        %v4866 = vpop.f32.mrb[0].mxu0
        %v4867 = vadd.f32 %v4754, %v4866
        %v4868 = vpop.f32.mrb[0].mxu0
        %v4869 = vadd.f32 %v4756, %v4868
        %v4870 = vpop.f32.mrb[0].mxu0
        %v4871 = vadd.f32 %v4758, %v4870
        %4872 = vdwg.mxu0
        %4873 = vmatprep.subr.bf16.mxu0 %v3914
        %4874 = vmatpush1.bf16.msra.mxu0 %v3913
        %4875 = vmatprep.subr.bf16.mxu0 %v3922
        %4876 = vmatpush1.bf16.msra.mxu0 %v3921
        %4877 = vmatprep.subr.bf16.mxu0 %v3930
        %4878 = vmatpush1.bf16.msra.mxu0 %v3929
        %4879 = vmatprep.subr.bf16.mxu0 %v3938
        %4880 = vmatpush1.bf16.msra.mxu0 %v3937
        %4881 = vmatprep.subr.bf16.mxu0 %v3946
        %4882 = vmatpush1.bf16.msra.mxu0 %v3945
        %4883 = vmatprep.subr.bf16.mxu0 %v3954
        %4884 = vmatpush1.bf16.msra.mxu0 %v3953
        %4885 = vmatprep.subr.bf16.mxu0 %v3962
        %4886 = vmatpush1.bf16.msra.mxu0 %v3961
        %4887 = vmatprep.subr.bf16.mxu0 %v3970
        %4888 = vmatpush1.bf16.msra.mxu0 %v3969
        %4889 = vmatprep.subr.bf16.mxu0 %v3978
        %4890 = vmatpush1.bf16.msra.mxu0 %v3977
        %4891 = vmatprep.subr.bf16.mxu0 %v3986
        %4892 = vmatpush1.bf16.msra.mxu0 %v3985
        %4893 = vmatprep.subr.bf16.mxu0 %v3994
        %4894 = vmatpush1.bf16.msra.mxu0 %v3993
        %4895 = vmatprep.subr.bf16.mxu0 %v4002
        %4896 = vmatpush1.bf16.msra.mxu0 %v4001
        %4897 = vmatprep.subr.bf16.mxu0 %v4010
        %4898 = vmatpush1.bf16.msra.mxu0 %v4009
        %4899 = vmatprep.subr.bf16.mxu0 %v4018
        %4900 = vmatpush1.bf16.msra.mxu0 %v4017
        %4901 = vmatprep.subr.bf16.mxu0 %v4026
        %4902 = vmatpush1.bf16.msra.mxu0 %v4025
        %4903 = vmatprep.subr.bf16.mxu0 %v4034
        %4904 = vmatpush1.bf16.msra.mxu0 %v4033
        %4905 = vmatprep.mubr.bf16.mxu0 %v2812
        %4906 = vmatmul.mubr.bf16.gmra.mrb[0].mxu0 %v2811
        %v4907 = vpop.f32.mrb[0].mxu0
        %v4908 = vadd.f32 %v3120, %v4907
        %v4909 = vpop.f32.mrb[0].mxu0
        %v4910 = vadd.f32 %v3124, %v4909
        %v4911 = vpop.f32.mrb[0].mxu0
        %v4912 = vadd.f32 %v3120, %v4911
        %v4913 = vpop.f32.mrb[0].mxu0
        %v4914 = vadd.f32 %v3124, %v4913
        %4915 = vmatprep.mubr.bf16.mxu0 %v2816
        %4916 = vmatmul.mubr.bf16.gmra.mrb[0].mxu0 %v2815
        %v4917 = vpop.f32.mrb[0].mxu0
        %v4918 = vadd.f32 %v3120, %v4917
        %v4919 = vpop.f32.mrb[0].mxu0
        %v4920 = vadd.f32 %v3124, %v4919
        %v4921 = vpop.f32.mrb[0].mxu0
        %v4922 = vadd.f32 %v3120, %v4921
        %v4923 = vpop.f32.mrb[0].mxu0
        %v4924 = vadd.f32 %v3124, %v4923
        %4925 = vmatprep.mubr.bf16.mxu0 %v2820
        %4926 = vmatmul.mubr.bf16.gmra.mrb[0].mxu0 %v2819
        %v4927 = vpop.f32.mrb[0].mxu0
        %v4928 = vadd.f32 %v3120, %v4927
        %v4929 = vpop.f32.mrb[0].mxu0
        %v4930 = vadd.f32 %v3124, %v4929
        %v4931 = vpop.f32.mrb[0].mxu0
        %v4932 = vadd.f32 %v3120, %v4931
        %v4933 = vpop.f32.mrb[0].mxu0
        %v4934 = vadd.f32 %v3124, %v4933
        %4935 = vmatprep.mubr.bf16.mxu0 %v2824
        %4936 = vmatmul.mubr.bf16.gmra.mrb[0].mxu0 %v2823
        %v4937 = vpop.f32.mrb[0].mxu0
        %v4938 = vadd.f32 %v3120, %v4937
        %v4939 = vpop.f32.mrb[0].mxu0
        %v4940 = vadd.f32 %v3124, %v4939
        %v4941 = vpop.f32.mrb[0].mxu0
        %v4942 = vadd.f32 %v3120, %v4941
        %v4943 = vpop.f32.mrb[0].mxu0
        %v4944 = vadd.f32 %v3124, %v4943
        %4945 = vmatprep.mubr.bf16.mxu0 %v2828
        %4946 = vmatmul.mubr.bf16.gmra.mrb[0].mxu0 %v2827
        %v4947 = vpop.f32.mrb[0].mxu0
        %v4948 = vadd.f32 %v3120, %v4947
        %v4949 = vpop.f32.mrb[0].mxu0
        %v4950 = vadd.f32 %v3124, %v4949
        %v4951 = vpop.f32.mrb[0].mxu0
        %v4952 = vadd.f32 %v3120, %v4951
        %v4953 = vpop.f32.mrb[0].mxu0
        %v4954 = vadd.f32 %v3124, %v4953
        %4955 = vmatprep.mubr.bf16.mxu0 %v2832
        %4956 = vmatmul.mubr.bf16.gmra.mrb[0].mxu0 %v2831
        %v4957 = vpop.f32.mrb[0].mxu0
        %v4958 = vadd.f32 %v3120, %v4957
        %v4959 = vpop.f32.mrb[0].mxu0
        %v4960 = vadd.f32 %v3124, %v4959
        %v4961 = vpop.f32.mrb[0].mxu0
        %v4962 = vadd.f32 %v3120, %v4961
        %v4963 = vpop.f32.mrb[0].mxu0
        %v4964 = vadd.f32 %v3124, %v4963
        %4965 = vmatprep.mubr.bf16.mxu0 %v2836
        %4966 = vmatmul.mubr.bf16.gmra.mrb[0].mxu0 %v2835
        %v4967 = vpop.f32.mrb[0].mxu0
        %v4968 = vadd.f32 %v3120, %v4967
        %v4969 = vpop.f32.mrb[0].mxu0
        %v4970 = vadd.f32 %v3124, %v4969
        %v4971 = vpop.f32.mrb[0].mxu0
        %v4972 = vadd.f32 %v3120, %v4971
        %v4973 = vpop.f32.mrb[0].mxu0
        %v4974 = vadd.f32 %v3124, %v4973
        %4975 = vmatprep.mubr.bf16.mxu0 %v2840
        %4976 = vmatmul.mubr.bf16.gmra.mrb[0].mxu0 %v2839
        %v4977 = vpop.f32.mrb[0].mxu0
        %v4978 = vadd.f32 %v3120, %v4977
        %v4979 = vpop.f32.mrb[0].mxu0
        %v4980 = vadd.f32 %v3124, %v4979
        %v4981 = vpop.f32.mrb[0].mxu0
        %v4982 = vadd.f32 %v3120, %v4981
        %v4983 = vpop.f32.mrb[0].mxu0
        %v4984 = vadd.f32 %v3124, %v4983
        %4985 = vdwg.mxu0
        %4986 = vmatprep.subr.bf16.mxu0 %v4042
        %4987 = vmatpush1.bf16.msra.mxu0 %v4041
        %4988 = vmatprep.subr.bf16.mxu0 %v4050
        %4989 = vmatpush1.bf16.msra.mxu0 %v4049
        %4990 = vmatprep.subr.bf16.mxu0 %v4058
        %4991 = vmatpush1.bf16.msra.mxu0 %v4057
        %4992 = vmatprep.subr.bf16.mxu0 %v4066
        %4993 = vmatpush1.bf16.msra.mxu0 %v4065
        %4994 = vmatprep.subr.bf16.mxu0 %v4074
        %4995 = vmatpush1.bf16.msra.mxu0 %v4073
        %4996 = vmatprep.subr.bf16.mxu0 %v4082
        %4997 = vmatpush1.bf16.msra.mxu0 %v4081
        %4998 = vmatprep.subr.bf16.mxu0 %v4090
        %4999 = vmatpush1.bf16.msra.mxu0 %v4089
        %5000 = vmatprep.subr.bf16.mxu0 %v4098
        %5001 = vmatpush1.bf16.msra.mxu0 %v4097
        %5002 = vmatprep.subr.bf16.mxu0 %v4106
        %5003 = vmatpush1.bf16.msra.mxu0 %v4105
        %5004 = vmatprep.subr.bf16.mxu0 %v4114
        %5005 = vmatpush1.bf16.msra.mxu0 %v4113
        %5006 = vmatprep.subr.bf16.mxu0 %v4122
        %5007 = vmatpush1.bf16.msra.mxu0 %v4121
        %5008 = vmatprep.subr.bf16.mxu0 %v4130
        %5009 = vmatpush1.bf16.msra.mxu0 %v4129
        %5010 = vmatprep.subr.bf16.mxu0 %v4138
        %5011 = vmatpush1.bf16.msra.mxu0 %v4137
        %5012 = vmatprep.subr.bf16.mxu0 %v4146
        %5013 = vmatpush1.bf16.msra.mxu0 %v4145
        %5014 = vmatprep.subr.bf16.mxu0 %v4154
        %5015 = vmatpush1.bf16.msra.mxu0 %v4153
        %5016 = vmatprep.subr.bf16.mxu0 %v4162
        %5017 = vmatpush1.bf16.msra.mxu0 %v4161
        %5018 = vmatprep.mubr.bf16.mxu0 %v2814
        %5019 = vmatmul.mubr.bf16.gmra.mrb[0].mxu0 %v2813
        %v5020 = vpop.f32.mrb[0].mxu0
        %v5021 = vadd.f32 %v4908, %v5020
        %v5022 = vpop.f32.mrb[0].mxu0
        %v5023 = vadd.f32 %v4910, %v5022
        %v5024 = vpop.f32.mrb[0].mxu0
        %v5025 = vadd.f32 %v4912, %v5024
        %v5026 = vpop.f32.mrb[0].mxu0
        %v5027 = vadd.f32 %v4914, %v5026
        %5028 = vmatprep.mubr.bf16.mxu0 %v2818
        %5029 = vmatmul.mubr.bf16.gmra.mrb[0].mxu0 %v2817
        %v5030 = vpop.f32.mrb[0].mxu0
        %v5031 = vadd.f32 %v4918, %v5030
        %v5032 = vpop.f32.mrb[0].mxu0
        %v5033 = vadd.f32 %v4920, %v5032
        %v5034 = vpop.f32.mrb[0].mxu0
        %v5035 = vadd.f32 %v4922, %v5034
        %v5036 = vpop.f32.mrb[0].mxu0
        %v5037 = vadd.f32 %v4924, %v5036
        %5038 = vmatprep.mubr.bf16.mxu0 %v2822
        %5039 = vmatmul.mubr.bf16.gmra.mrb[0].mxu0 %v2821
        %v5040 = vpop.f32.mrb[0].mxu0
        %v5041 = vadd.f32 %v4928, %v5040
        %v5042 = vpop.f32.mrb[0].mxu0
        %v5043 = vadd.f32 %v4930, %v5042
        %v5044 = vpop.f32.mrb[0].mxu0
        %v5045 = vadd.f32 %v4932, %v5044
        %v5046 = vpop.f32.mrb[0].mxu0
        %v5047 = vadd.f32 %v4934, %v5046
        %5048 = vmatprep.mubr.bf16.mxu0 %v2826
        %5049 = vmatmul.mubr.bf16.gmra.mrb[0].mxu0 %v2825
        %v5050 = vpop.f32.mrb[0].mxu0
        %v5051 = vadd.f32 %v4938, %v5050
        %v5052 = vpop.f32.mrb[0].mxu0
        %v5053 = vadd.f32 %v4940, %v5052
        %v5054 = vpop.f32.mrb[0].mxu0
        %v5055 = vadd.f32 %v4942, %v5054
        %v5056 = vpop.f32.mrb[0].mxu0
        %v5057 = vadd.f32 %v4944, %v5056
        %5058 = vmatprep.mubr.bf16.mxu0 %v2830
        %5059 = vmatmul.mubr.bf16.gmra.mrb[0].mxu0 %v2829
        %v5060 = vpop.f32.mrb[0].mxu0
        %v5061 = vadd.f32 %v4948, %v5060
        %v5062 = vpop.f32.mrb[0].mxu0
        %v5063 = vadd.f32 %v4950, %v5062
        %v5064 = vpop.f32.mrb[0].mxu0
        %v5065 = vadd.f32 %v4952, %v5064
        %v5066 = vpop.f32.mrb[0].mxu0
        %v5067 = vadd.f32 %v4954, %v5066
        %5068 = vmatprep.mubr.bf16.mxu0 %v2834
        %5069 = vmatmul.mubr.bf16.gmra.mrb[0].mxu0 %v2833
        %v5070 = vpop.f32.mrb[0].mxu0
        %v5071 = vadd.f32 %v4958, %v5070
        %v5072 = vpop.f32.mrb[0].mxu0
        %v5073 = vadd.f32 %v4960, %v5072
        %v5074 = vpop.f32.mrb[0].mxu0
        %v5075 = vadd.f32 %v4962, %v5074
        %v5076 = vpop.f32.mrb[0].mxu0
        %v5077 = vadd.f32 %v4964, %v5076
        %5078 = vmatprep.mubr.bf16.mxu0 %v2838
        %5079 = vmatmul.mubr.bf16.gmra.mrb[0].mxu0 %v2837
        %v5080 = vpop.f32.mrb[0].mxu0
        %v5081 = vadd.f32 %v4968, %v5080
        %v5082 = vpop.f32.mrb[0].mxu0
        %v5083 = vadd.f32 %v4970, %v5082
        %v5084 = vpop.f32.mrb[0].mxu0
        %v5085 = vadd.f32 %v4972, %v5084
        %v5086 = vpop.f32.mrb[0].mxu0
        %v5087 = vadd.f32 %v4974, %v5086
        %5088 = vmatprep.mubr.bf16.mxu0 %v2842
        %5089 = vmatmul.mubr.bf16.gmra.mrb[0].mxu0 %v2841
        %v5090 = vpop.f32.mrb[0].mxu0
        %v5091 = vadd.f32 %v4978, %v5090
        %v5092 = vpop.f32.mrb[0].mxu0
        %v5093 = vadd.f32 %v4980, %v5092
        %v5094 = vpop.f32.mrb[0].mxu0
        %v5095 = vadd.f32 %v4982, %v5094
        %v5096 = vpop.f32.mrb[0].mxu0
        %v5097 = vadd.f32 %v4984, %v5096
        %5098 = vdwg.mxu0
        %5099 = vmatprep.subr.bf16.mxu0 %v3916
        %5100 = vmatpush1.bf16.msra.mxu0 %v3915
        %5101 = vmatprep.subr.bf16.mxu0 %v3924
        %5102 = vmatpush1.bf16.msra.mxu0 %v3923
        %5103 = vmatprep.subr.bf16.mxu0 %v3932
        %5104 = vmatpush1.bf16.msra.mxu0 %v3931
        %5105 = vmatprep.subr.bf16.mxu0 %v3940
        %5106 = vmatpush1.bf16.msra.mxu0 %v3939
        %5107 = vmatprep.subr.bf16.mxu0 %v3948
        %5108 = vmatpush1.bf16.msra.mxu0 %v3947
        %5109 = vmatprep.subr.bf16.mxu0 %v3956
        %5110 = vmatpush1.bf16.msra.mxu0 %v3955
        %5111 = vmatprep.subr.bf16.mxu0 %v3964
        %5112 = vmatpush1.bf16.msra.mxu0 %v3963
        %5113 = vmatprep.subr.bf16.mxu0 %v3972
        %5114 = vmatpush1.bf16.msra.mxu0 %v3971
        %5115 = vmatprep.subr.bf16.mxu0 %v3980
        %5116 = vmatpush1.bf16.msra.mxu0 %v3979
        %5117 = vmatprep.subr.bf16.mxu0 %v3988
        %5118 = vmatpush1.bf16.msra.mxu0 %v3987
        %5119 = vmatprep.subr.bf16.mxu0 %v3996
        %5120 = vmatpush1.bf16.msra.mxu0 %v3995
        %5121 = vmatprep.subr.bf16.mxu0 %v4004
        %5122 = vmatpush1.bf16.msra.mxu0 %v4003
        %5123 = vmatprep.subr.bf16.mxu0 %v4012
        %5124 = vmatpush1.bf16.msra.mxu0 %v4011
        %5125 = vmatprep.subr.bf16.mxu0 %v4020
        %5126 = vmatpush1.bf16.msra.mxu0 %v4019
        %5127 = vmatprep.subr.bf16.mxu0 %v4028
        %5128 = vmatpush1.bf16.msra.mxu0 %v4027
        %5129 = vmatprep.subr.bf16.mxu0 %v4036
        %5130 = vmatpush1.bf16.msra.mxu0 %v4035
        %5131 = vmatprep.mubr.bf16.mxu0 %v2812
        %5132 = vmatmul.mubr.bf16.gmra.mrb[0].mxu0 %v2811
        %v5133 = vpop.f32.mrb[0].mxu0
        %v5134 = vadd.f32 %v3128, %v5133
        %v5135 = vpop.f32.mrb[0].mxu0
        %v5136 = vadd.f32 %v3132, %v5135
        %v5137 = vpop.f32.mrb[0].mxu0
        %v5138 = vadd.f32 %v3128, %v5137
        %v5139 = vpop.f32.mrb[0].mxu0
        %v5140 = vadd.f32 %v3132, %v5139
        %5141 = vmatprep.mubr.bf16.mxu0 %v2816
        %5142 = vmatmul.mubr.bf16.gmra.mrb[0].mxu0 %v2815
        %v5143 = vpop.f32.mrb[0].mxu0
        %v5144 = vadd.f32 %v3128, %v5143
        %v5145 = vpop.f32.mrb[0].mxu0
        %v5146 = vadd.f32 %v3132, %v5145
        %v5147 = vpop.f32.mrb[0].mxu0
        %v5148 = vadd.f32 %v3128, %v5147
        %v5149 = vpop.f32.mrb[0].mxu0
        %v5150 = vadd.f32 %v3132, %v5149
        %5151 = vmatprep.mubr.bf16.mxu0 %v2820
        %5152 = vmatmul.mubr.bf16.gmra.mrb[0].mxu0 %v2819
        %v5153 = vpop.f32.mrb[0].mxu0
        %v5154 = vadd.f32 %v3128, %v5153
        %v5155 = vpop.f32.mrb[0].mxu0
        %v5156 = vadd.f32 %v3132, %v5155
        %v5157 = vpop.f32.mrb[0].mxu0
        %v5158 = vadd.f32 %v3128, %v5157
        %v5159 = vpop.f32.mrb[0].mxu0
        %v5160 = vadd.f32 %v3132, %v5159
        %5161 = vmatprep.mubr.bf16.mxu0 %v2824
        %5162 = vmatmul.mubr.bf16.gmra.mrb[0].mxu0 %v2823
        %v5163 = vpop.f32.mrb[0].mxu0
        %v5164 = vadd.f32 %v3128, %v5163
        %v5165 = vpop.f32.mrb[0].mxu0
        %v5166 = vadd.f32 %v3132, %v5165
        %v5167 = vpop.f32.mrb[0].mxu0
        %v5168 = vadd.f32 %v3128, %v5167
        %v5169 = vpop.f32.mrb[0].mxu0
        %v5170 = vadd.f32 %v3132, %v5169
        %5171 = vmatprep.mubr.bf16.mxu0 %v2828
        %5172 = vmatmul.mubr.bf16.gmra.mrb[0].mxu0 %v2827
        %v5173 = vpop.f32.mrb[0].mxu0
        %v5174 = vadd.f32 %v3128, %v5173
        %v5175 = vpop.f32.mrb[0].mxu0
        %v5176 = vadd.f32 %v3132, %v5175
        %v5177 = vpop.f32.mrb[0].mxu0
        %v5178 = vadd.f32 %v3128, %v5177
        %v5179 = vpop.f32.mrb[0].mxu0
        %v5180 = vadd.f32 %v3132, %v5179
        %5181 = vmatprep.mubr.bf16.mxu0 %v2832
        %5182 = vmatmul.mubr.bf16.gmra.mrb[0].mxu0 %v2831
        %v5183 = vpop.f32.mrb[0].mxu0
        %v5184 = vadd.f32 %v3128, %v5183
        %v5185 = vpop.f32.mrb[0].mxu0
        %v5186 = vadd.f32 %v3132, %v5185
        %v5187 = vpop.f32.mrb[0].mxu0
        %v5188 = vadd.f32 %v3128, %v5187
        %v5189 = vpop.f32.mrb[0].mxu0
        %v5190 = vadd.f32 %v3132, %v5189
        %5191 = vmatprep.mubr.bf16.mxu0 %v2836
        %5192 = vmatmul.mubr.bf16.gmra.mrb[0].mxu0 %v2835
        %v5193 = vpop.f32.mrb[0].mxu0
        %v5194 = vadd.f32 %v3128, %v5193
        %v5195 = vpop.f32.mrb[0].mxu0
        %v5196 = vadd.f32 %v3132, %v5195
        %v5197 = vpop.f32.mrb[0].mxu0
        %v5198 = vadd.f32 %v3128, %v5197
        %v5199 = vpop.f32.mrb[0].mxu0
        %v5200 = vadd.f32 %v3132, %v5199
        %5201 = vmatprep.mubr.bf16.mxu0 %v2840
        %5202 = vmatmul.mubr.bf16.gmra.mrb[0].mxu0 %v2839
        %v5203 = vpop.f32.mrb[0].mxu0
        %v5204 = vadd.f32 %v3128, %v5203
        %v5205 = vpop.f32.mrb[0].mxu0
        %v5206 = vadd.f32 %v3132, %v5205
        %v5207 = vpop.f32.mrb[0].mxu0
        %v5208 = vadd.f32 %v3128, %v5207
        %v5209 = vpop.f32.mrb[0].mxu0
        %v5210 = vadd.f32 %v3132, %v5209
        %5211 = vdwg.mxu0
        %5212 = vmatprep.subr.bf16.mxu0 %v4044
        %5213 = vmatpush1.bf16.msra.mxu0 %v4043
        %5214 = vmatprep.subr.bf16.mxu0 %v4052
        %5215 = vmatpush1.bf16.msra.mxu0 %v4051
        %5216 = vmatprep.subr.bf16.mxu0 %v4060
        %5217 = vmatpush1.bf16.msra.mxu0 %v4059
        %5218 = vmatprep.subr.bf16.mxu0 %v4068
        %5219 = vmatpush1.bf16.msra.mxu0 %v4067
        %5220 = vmatprep.subr.bf16.mxu0 %v4076
        %5221 = vmatpush1.bf16.msra.mxu0 %v4075
        %5222 = vmatprep.subr.bf16.mxu0 %v4084
        %5223 = vmatpush1.bf16.msra.mxu0 %v4083
        %5224 = vmatprep.subr.bf16.mxu0 %v4092
        %5225 = vmatpush1.bf16.msra.mxu0 %v4091
        %5226 = vmatprep.subr.bf16.mxu0 %v4100
        %5227 = vmatpush1.bf16.msra.mxu0 %v4099
        %5228 = vmatprep.subr.bf16.mxu0 %v4108
        %5229 = vmatpush1.bf16.msra.mxu0 %v4107
        %5230 = vmatprep.subr.bf16.mxu0 %v4116
        %5231 = vmatpush1.bf16.msra.mxu0 %v4115
        %5232 = vmatprep.subr.bf16.mxu0 %v4124
        %5233 = vmatpush1.bf16.msra.mxu0 %v4123
        %5234 = vmatprep.subr.bf16.mxu0 %v4132
        %5235 = vmatpush1.bf16.msra.mxu0 %v4131
        %5236 = vmatprep.subr.bf16.mxu0 %v4140
        %5237 = vmatpush1.bf16.msra.mxu0 %v4139
        %5238 = vmatprep.subr.bf16.mxu0 %v4148
        %5239 = vmatpush1.bf16.msra.mxu0 %v4147
        %5240 = vmatprep.subr.bf16.mxu0 %v4156
        %5241 = vmatpush1.bf16.msra.mxu0 %v4155
        %5242 = vmatprep.subr.bf16.mxu0 %v4164
        %5243 = vmatpush1.bf16.msra.mxu0 %v4163
        %5244 = vmatprep.mubr.bf16.mxu0 %v2814
        %5245 = vmatmul.mubr.bf16.gmra.mrb[0].mxu0 %v2813
        %v5246 = vpop.f32.mrb[0].mxu0
        %v5247 = vadd.f32 %v5134, %v5246
        %v5248 = vpop.f32.mrb[0].mxu0
        %v5249 = vadd.f32 %v5136, %v5248
        %v5250 = vpop.f32.mrb[0].mxu0
        %v5251 = vadd.f32 %v5138, %v5250
        %v5252 = vpop.f32.mrb[0].mxu0
        %v5253 = vadd.f32 %v5140, %v5252
        %5254 = vmatprep.mubr.bf16.mxu0 %v2818
        %5255 = vmatmul.mubr.bf16.gmra.mrb[0].mxu0 %v2817
        %v5256 = vpop.f32.mrb[0].mxu0
        %v5257 = vadd.f32 %v5144, %v5256
        %v5258 = vpop.f32.mrb[0].mxu0
        %v5259 = vadd.f32 %v5146, %v5258
        %v5260 = vpop.f32.mrb[0].mxu0
        %v5261 = vadd.f32 %v5148, %v5260
        %v5262 = vpop.f32.mrb[0].mxu0
        %v5263 = vadd.f32 %v5150, %v5262
        %5264 = vmatprep.mubr.bf16.mxu0 %v2822
        %5265 = vmatmul.mubr.bf16.gmra.mrb[0].mxu0 %v2821
        %v5266 = vpop.f32.mrb[0].mxu0
        %v5267 = vadd.f32 %v5154, %v5266
        %v5268 = vpop.f32.mrb[0].mxu0
        %v5269 = vadd.f32 %v5156, %v5268
        %v5270 = vpop.f32.mrb[0].mxu0
        %v5271 = vadd.f32 %v5158, %v5270
        %v5272 = vpop.f32.mrb[0].mxu0
        %v5273 = vadd.f32 %v5160, %v5272
        %5274 = vmatprep.mubr.bf16.mxu0 %v2826
        %5275 = vmatmul.mubr.bf16.gmra.mrb[0].mxu0 %v2825
        %v5276 = vpop.f32.mrb[0].mxu0
        %v5277 = vadd.f32 %v5164, %v5276
        %v5278 = vpop.f32.mrb[0].mxu0
        %v5279 = vadd.f32 %v5166, %v5278
        %v5280 = vpop.f32.mrb[0].mxu0
        %v5281 = vadd.f32 %v5168, %v5280
        %v5282 = vpop.f32.mrb[0].mxu0
        %v5283 = vadd.f32 %v5170, %v5282
        %5284 = vmatprep.mubr.bf16.mxu0 %v2830
        %5285 = vmatmul.mubr.bf16.gmra.mrb[0].mxu0 %v2829
        %v5286 = vpop.f32.mrb[0].mxu0
        %v5287 = vadd.f32 %v5174, %v5286
        %v5288 = vpop.f32.mrb[0].mxu0
        %v5289 = vadd.f32 %v5176, %v5288
        %v5290 = vpop.f32.mrb[0].mxu0
        %v5291 = vadd.f32 %v5178, %v5290
        %v5292 = vpop.f32.mrb[0].mxu0
        %v5293 = vadd.f32 %v5180, %v5292
        %5294 = vmatprep.mubr.bf16.mxu0 %v2834
        %5295 = vmatmul.mubr.bf16.gmra.mrb[0].mxu0 %v2833
        %v5296 = vpop.f32.mrb[0].mxu0
        %v5297 = vadd.f32 %v5184, %v5296
        %v5298 = vpop.f32.mrb[0].mxu0
        %v5299 = vadd.f32 %v5186, %v5298
        %v5300 = vpop.f32.mrb[0].mxu0
        %v5301 = vadd.f32 %v5188, %v5300
        %v5302 = vpop.f32.mrb[0].mxu0
        %v5303 = vadd.f32 %v5190, %v5302
        %5304 = vmatprep.mubr.bf16.mxu0 %v2838
        %5305 = vmatmul.mubr.bf16.gmra.mrb[0].mxu0 %v2837
        %v5306 = vpop.f32.mrb[0].mxu0
        %v5307 = vadd.f32 %v5194, %v5306
        %v5308 = vpop.f32.mrb[0].mxu0
        %v5309 = vadd.f32 %v5196, %v5308
        %v5310 = vpop.f32.mrb[0].mxu0
        %v5311 = vadd.f32 %v5198, %v5310
        %v5312 = vpop.f32.mrb[0].mxu0
        %v5313 = vadd.f32 %v5200, %v5312
        %5314 = vmatprep.mubr.bf16.mxu0 %v2842
        %5315 = vmatmul.mubr.bf16.gmra.mrb[0].mxu0 %v2841
        %v5316 = vpop.f32.mrb[0].mxu0
        %v5317 = vadd.f32 %v5204, %v5316
        %v5318 = vpop.f32.mrb[0].mxu0
        %v5319 = vadd.f32 %v5206, %v5318
        %v5320 = vpop.f32.mrb[0].mxu0
        %v5321 = vadd.f32 %v5208, %v5320
        %v5322 = vpop.f32.mrb[0].mxu0
        %v5323 = vadd.f32 %v5210, %v5322
        %5324 = vdwg.mxu0
        %v5325 = vadd.f32 %v4569, %v4573
        %v5326 = vadd.f32 %v5325, %v4579
        %v5327 = vadd.f32 %v5326, %v4583
        %v5328 = vadd.f32 %v5327, %v4589
        %v5329 = vadd.f32 %v5328, %v4593
        %v5330 = vadd.f32 %v5329, %v4599
        %v5331 = vadd.f32 %v5330, %v4603
        %v5332 = vadd.f32 %v5331, %v4609
        %v5333 = vadd.f32 %v5332, %v4613
        %v5334 = vadd.f32 %v5333, %v4619
        %v5335 = vadd.f32 %v5334, %v4623
        %v5336 = vadd.f32 %v5335, %v4629
        %v5337 = vadd.f32 %v5336, %v4633
        %v5338 = vadd.f32 %v5337, %v4639
        %v5339 = vadd.f32 %v5338, %v4643
        %v5340 = vrot.slane %v5339, 4
        %v5341 = vadd.f32 %v5339, %v5340
        %v5342 = vrot.slane %v5341, 2
        %v5343 = vadd.f32 %v5341, %v5342
        %v5344 = vrot.slane %v5343, 1
        %v5345 = vadd.f32 %v5343, %v5344
        %v5346 = vadd.f32 %v4571, %v4575
        %v5347 = vadd.f32 %v5346, %v4581
        %v5348 = vadd.f32 %v5347, %v4585
        %v5349 = vadd.f32 %v5348, %v4591
        %v5350 = vadd.f32 %v5349, %v4595
        %v5351 = vadd.f32 %v5350, %v4601
        %v5352 = vadd.f32 %v5351, %v4605
        %v5353 = vadd.f32 %v5352, %v4611
        %v5354 = vadd.f32 %v5353, %v4615
        %v5355 = vadd.f32 %v5354, %v4621
        %v5356 = vadd.f32 %v5355, %v4625
        %v5357 = vadd.f32 %v5356, %v4631
        %v5358 = vadd.f32 %v5357, %v4635
        %v5359 = vadd.f32 %v5358, %v4641
        %v5360 = vadd.f32 %v5359, %v4645
        %v5361 = vrot.slane %v5360, 4
        %v5362 = vadd.f32 %v5360, %v5361
        %v5363 = vrot.slane %v5362, 2
        %v5364 = vadd.f32 %v5362, %v5363
        %v5365 = vrot.slane %v5364, 1
        %v5366 = vadd.f32 %v5364, %v5365
        %v5367 = vadd.f32 %v4795, %v4799
        %v5368 = vadd.f32 %v5367, %v4805
        %v5369 = vadd.f32 %v5368, %v4809
        %v5370 = vadd.f32 %v5369, %v4815
        %v5371 = vadd.f32 %v5370, %v4819
        %v5372 = vadd.f32 %v5371, %v4825
        %v5373 = vadd.f32 %v5372, %v4829
        %v5374 = vadd.f32 %v5373, %v4835
        %v5375 = vadd.f32 %v5374, %v4839
        %v5376 = vadd.f32 %v5375, %v4845
        %v5377 = vadd.f32 %v5376, %v4849
        %v5378 = vadd.f32 %v5377, %v4855
        %v5379 = vadd.f32 %v5378, %v4859
        %v5380 = vadd.f32 %v5379, %v4865
        %v5381 = vadd.f32 %v5380, %v4869
        %v5382 = vrot.slane %v5381, 4
        %v5383 = vadd.f32 %v5381, %v5382
        %v5384 = vrot.slane %v5383, 2
        %v5385 = vadd.f32 %v5383, %v5384
        %v5386 = vrot.slane %v5385, 1
        %v5387 = vadd.f32 %v5385, %v5386
        %v5388 = vadd.f32 %v4797, %v4801
        %v5389 = vadd.f32 %v5388, %v4807
        %v5390 = vadd.f32 %v5389, %v4811
        %v5391 = vadd.f32 %v5390, %v4817
        %v5392 = vadd.f32 %v5391, %v4821
        %v5393 = vadd.f32 %v5392, %v4827
        %v5394 = vadd.f32 %v5393, %v4831
        %v5395 = vadd.f32 %v5394, %v4837
        %v5396 = vadd.f32 %v5395, %v4841
        %v5397 = vadd.f32 %v5396, %v4847
        %v5398 = vadd.f32 %v5397, %v4851
        %v5399 = vadd.f32 %v5398, %v4857
        %v5400 = vadd.f32 %v5399, %v4861
        %v5401 = vadd.f32 %v5400, %v4867
        %v5402 = vadd.f32 %v5401, %v4871
        %v5403 = vrot.slane %v5402, 4
        %v5404 = vadd.f32 %v5402, %v5403
        %v5405 = vrot.slane %v5404, 2
        %v5406 = vadd.f32 %v5404, %v5405
        %v5407 = vrot.slane %v5406, 1
        %v5408 = vadd.f32 %v5406, %v5407
        %v5409 = vadd.f32 %v5021, %v5025
        %v5410 = vadd.f32 %v5409, %v5031
        %v5411 = vadd.f32 %v5410, %v5035
        %v5412 = vadd.f32 %v5411, %v5041
        %v5413 = vadd.f32 %v5412, %v5045
        %v5414 = vadd.f32 %v5413, %v5051
        %v5415 = vadd.f32 %v5414, %v5055
        %v5416 = vadd.f32 %v5415, %v5061
        %v5417 = vadd.f32 %v5416, %v5065
        %v5418 = vadd.f32 %v5417, %v5071
        %v5419 = vadd.f32 %v5418, %v5075
        %v5420 = vadd.f32 %v5419, %v5081
        %v5421 = vadd.f32 %v5420, %v5085
        %v5422 = vadd.f32 %v5421, %v5091
        %v5423 = vadd.f32 %v5422, %v5095
        %v5424 = vrot.slane %v5423, 4
        %v5425 = vadd.f32 %v5423, %v5424
        %v5426 = vrot.slane %v5425, 2
        %v5427 = vadd.f32 %v5425, %v5426
        %v5428 = vrot.slane %v5427, 1
        %v5429 = vadd.f32 %v5427, %v5428
        %v5430 = vadd.f32 %v5023, %v5027
        %v5431 = vadd.f32 %v5430, %v5033
        %v5432 = vadd.f32 %v5431, %v5037
        %v5433 = vadd.f32 %v5432, %v5043
        %v5434 = vadd.f32 %v5433, %v5047
        %v5435 = vadd.f32 %v5434, %v5053
        %v5436 = vadd.f32 %v5435, %v5057
        %v5437 = vadd.f32 %v5436, %v5063
        %v5438 = vadd.f32 %v5437, %v5067
        %v5439 = vadd.f32 %v5438, %v5073
        %v5440 = vadd.f32 %v5439, %v5077
        %v5441 = vadd.f32 %v5440, %v5083
        %v5442 = vadd.f32 %v5441, %v5087
        %v5443 = vadd.f32 %v5442, %v5093
        %v5444 = vadd.f32 %v5443, %v5097
        %v5445 = vrot.slane %v5444, 4
        %v5446 = vadd.f32 %v5444, %v5445
        %v5447 = vrot.slane %v5446, 2
        %v5448 = vadd.f32 %v5446, %v5447
        %v5449 = vrot.slane %v5448, 1
        %v5450 = vadd.f32 %v5448, %v5449
        %v5451 = vadd.f32 %v5247, %v5251
        %v5452 = vadd.f32 %v5451, %v5257
        %v5453 = vadd.f32 %v5452, %v5261
        %v5454 = vadd.f32 %v5453, %v5267
        %v5455 = vadd.f32 %v5454, %v5271
        %v5456 = vadd.f32 %v5455, %v5277
        %v5457 = vadd.f32 %v5456, %v5281
        %v5458 = vadd.f32 %v5457, %v5287
        %v5459 = vadd.f32 %v5458, %v5291
        %v5460 = vadd.f32 %v5459, %v5297
        %v5461 = vadd.f32 %v5460, %v5301
        %v5462 = vadd.f32 %v5461, %v5307
        %v5463 = vadd.f32 %v5462, %v5311
        %v5464 = vadd.f32 %v5463, %v5317
        %v5465 = vadd.f32 %v5464, %v5321
        %v5466 = vrot.slane %v5465, 4
        %v5467 = vadd.f32 %v5465, %v5466
        %v5468 = vrot.slane %v5467, 2
        %v5469 = vadd.f32 %v5467, %v5468
        %v5470 = vrot.slane %v5469, 1
        %v5471 = vadd.f32 %v5469, %v5470
        %v5472 = vadd.f32 %v5249, %v5253
        %v5473 = vadd.f32 %v5472, %v5259
        %v5474 = vadd.f32 %v5473, %v5263
        %v5475 = vadd.f32 %v5474, %v5269
        %v5476 = vadd.f32 %v5475, %v5273
        %v5477 = vadd.f32 %v5476, %v5279
        %v5478 = vadd.f32 %v5477, %v5283
        %v5479 = vadd.f32 %v5478, %v5289
        %v5480 = vadd.f32 %v5479, %v5293
        %v5481 = vadd.f32 %v5480, %v5299
        %v5482 = vadd.f32 %v5481, %v5303
        %v5483 = vadd.f32 %v5482, %v5309
        %v5484 = vadd.f32 %v5483, %v5313
        %v5485 = vadd.f32 %v5484, %v5319
        %v5486 = vadd.f32 %v5485, %v5323
        %v5487 = vrot.slane %v5486, 4
        %v5488 = vadd.f32 %v5486, %v5487
        %v5489 = vrot.slane %v5488, 2
        %v5490 = vadd.f32 %v5488, %v5489
        %v5491 = vrot.slane %v5490, 1
        %v5492 = vadd.f32 %v5490, %v5491
        %v5493 = vmul.f32 %v5345, %v1168
        %v5494 = vmul.f32 %v5366, %v1168
        %v5495 = vmul.f32 %v5387, %v1168
        %v5496 = vmul.f32 %v5408, %v1168
        %v5497 = vmul.f32 %v5429, %v1168
        %v5498 = vmul.f32 %v5450, %v1168
        %v5499 = vmul.f32 %v5471, %v1168
        %v5500 = vmul.f32 %v5492, %v1168
        %v5501 = vmul.f32 %v4569, %v4569
        %v5502 = vmul.f32 %v4571, %v4571
        %v5503 = vmul.f32 %v4795, %v4795
        %v5504 = vmul.f32 %v4797, %v4797
        %v5505 = vmul.f32 %v5021, %v5021
        %v5506 = vmul.f32 %v5023, %v5023
        %v5507 = vmul.f32 %v5247, %v5247
        %v5508 = vmul.f32 %v5249, %v5249
        %v5509 = vmul.f32 %v4573, %v4573
        %v5510 = vmul.f32 %v4575, %v4575
        %v5511 = vmul.f32 %v4799, %v4799
        %v5512 = vmul.f32 %v4801, %v4801
        %v5513 = vmul.f32 %v5025, %v5025
        %v5514 = vmul.f32 %v5027, %v5027
        %v5515 = vmul.f32 %v5251, %v5251
        %v5516 = vmul.f32 %v5253, %v5253
        %v5517 = vmul.f32 %v4579, %v4579
        %v5518 = vmul.f32 %v4581, %v4581
        %v5519 = vmul.f32 %v4805, %v4805
        %v5520 = vmul.f32 %v4807, %v4807
        %v5521 = vmul.f32 %v5031, %v5031
        %v5522 = vmul.f32 %v5033, %v5033
        %v5523 = vmul.f32 %v5257, %v5257
        %v5524 = vmul.f32 %v5259, %v5259
        %v5525 = vmul.f32 %v4583, %v4583
        %v5526 = vmul.f32 %v4585, %v4585
        %v5527 = vmul.f32 %v4809, %v4809
        %v5528 = vmul.f32 %v4811, %v4811
        %v5529 = vmul.f32 %v5035, %v5035
        %v5530 = vmul.f32 %v5037, %v5037
        %v5531 = vmul.f32 %v5261, %v5261
        %v5532 = vmul.f32 %v5263, %v5263
        %v5533 = vmul.f32 %v4589, %v4589
        %v5534 = vmul.f32 %v4591, %v4591
        %v5535 = vmul.f32 %v4815, %v4815
        %v5536 = vmul.f32 %v4817, %v4817
        %v5537 = vmul.f32 %v5041, %v5041
        %v5538 = vmul.f32 %v5043, %v5043
        %v5539 = vmul.f32 %v5267, %v5267
        %v5540 = vmul.f32 %v5269, %v5269
        %v5541 = vmul.f32 %v4593, %v4593
        %v5542 = vmul.f32 %v4595, %v4595
        %v5543 = vmul.f32 %v4819, %v4819
        %v5544 = vmul.f32 %v4821, %v4821
        %v5545 = vmul.f32 %v5045, %v5045
        %v5546 = vmul.f32 %v5047, %v5047
        %v5547 = vmul.f32 %v5271, %v5271
        %v5548 = vmul.f32 %v5273, %v5273
        %v5549 = vmul.f32 %v4599, %v4599
        %v5550 = vmul.f32 %v4601, %v4601
        %v5551 = vmul.f32 %v4825, %v4825
        %v5552 = vmul.f32 %v4827, %v4827
        %v5553 = vmul.f32 %v5051, %v5051
        %v5554 = vmul.f32 %v5053, %v5053
        %v5555 = vmul.f32 %v5277, %v5277
        %v5556 = vmul.f32 %v5279, %v5279
        %v5557 = vmul.f32 %v4603, %v4603
        %v5558 = vmul.f32 %v4605, %v4605
        %v5559 = vmul.f32 %v4829, %v4829
        %v5560 = vmul.f32 %v4831, %v4831
        %v5561 = vmul.f32 %v5055, %v5055
        %v5562 = vmul.f32 %v5057, %v5057
        %v5563 = vmul.f32 %v5281, %v5281
        %v5564 = vmul.f32 %v5283, %v5283
        %v5565 = vmul.f32 %v4609, %v4609
        %v5566 = vmul.f32 %v4611, %v4611
        %v5567 = vmul.f32 %v4835, %v4835
        %v5568 = vmul.f32 %v4837, %v4837
        %v5569 = vmul.f32 %v5061, %v5061
        %v5570 = vmul.f32 %v5063, %v5063
        %v5571 = vmul.f32 %v5287, %v5287
        %v5572 = vmul.f32 %v5289, %v5289
        %v5573 = vmul.f32 %v4613, %v4613
        %v5574 = vmul.f32 %v4615, %v4615
        %v5575 = vmul.f32 %v4839, %v4839
        %v5576 = vmul.f32 %v4841, %v4841
        %v5577 = vmul.f32 %v5065, %v5065
        %v5578 = vmul.f32 %v5067, %v5067
        %v5579 = vmul.f32 %v5291, %v5291
        %v5580 = vmul.f32 %v5293, %v5293
        %v5581 = vmul.f32 %v4619, %v4619
        %v5582 = vmul.f32 %v4621, %v4621
        %v5583 = vmul.f32 %v4845, %v4845
        %v5584 = vmul.f32 %v4847, %v4847
        %v5585 = vmul.f32 %v5071, %v5071
        %v5586 = vmul.f32 %v5073, %v5073
        %v5587 = vmul.f32 %v5297, %v5297
        %v5588 = vmul.f32 %v5299, %v5299
        %v5589 = vmul.f32 %v4623, %v4623
        %v5590 = vmul.f32 %v4625, %v4625
        %v5591 = vmul.f32 %v4849, %v4849
        %v5592 = vmul.f32 %v4851, %v4851
        %v5593 = vmul.f32 %v5075, %v5075
        %v5594 = vmul.f32 %v5077, %v5077
        %v5595 = vmul.f32 %v5301, %v5301
        %v5596 = vmul.f32 %v5303, %v5303
        %v5597 = vmul.f32 %v4629, %v4629
        %v5598 = vmul.f32 %v4631, %v4631
        %v5599 = vmul.f32 %v4855, %v4855
        %v5600 = vmul.f32 %v4857, %v4857
        %v5601 = vmul.f32 %v5081, %v5081
        %v5602 = vmul.f32 %v5083, %v5083
        %v5603 = vmul.f32 %v5307, %v5307
        %v5604 = vmul.f32 %v5309, %v5309
        %v5605 = vmul.f32 %v4633, %v4633
        %v5606 = vmul.f32 %v4635, %v4635
        %v5607 = vmul.f32 %v4859, %v4859
        %v5608 = vmul.f32 %v4861, %v4861
        %v5609 = vmul.f32 %v5085, %v5085
        %v5610 = vmul.f32 %v5087, %v5087
        %v5611 = vmul.f32 %v5311, %v5311
        %v5612 = vmul.f32 %v5313, %v5313
        %v5613 = vmul.f32 %v4639, %v4639
        %v5614 = vmul.f32 %v4641, %v4641
        %v5615 = vmul.f32 %v4865, %v4865
        %v5616 = vmul.f32 %v4867, %v4867
        %v5617 = vmul.f32 %v5091, %v5091
        %v5618 = vmul.f32 %v5093, %v5093
        %v5619 = vmul.f32 %v5317, %v5317
        %v5620 = vmul.f32 %v5319, %v5319
        %v5621 = vmul.f32 %v4643, %v4643
        %v5622 = vmul.f32 %v4645, %v4645
        %v5623 = vmul.f32 %v4869, %v4869
        %v5624 = vmul.f32 %v4871, %v4871
        %v5625 = vmul.f32 %v5095, %v5095
        %v5626 = vmul.f32 %v5097, %v5097
        %v5627 = vmul.f32 %v5321, %v5321
        %v5628 = vmul.f32 %v5323, %v5323
        %v5629 = vadd.f32 %v5501, %v5509
        %v5630 = vadd.f32 %v5629, %v5517
        %v5631 = vadd.f32 %v5630, %v5525
        %v5632 = vadd.f32 %v5631, %v5533
        %v5633 = vadd.f32 %v5632, %v5541
        %v5634 = vadd.f32 %v5633, %v5549
        %v5635 = vadd.f32 %v5634, %v5557
        %v5636 = vadd.f32 %v5635, %v5565
        %v5637 = vadd.f32 %v5636, %v5573
        %v5638 = vadd.f32 %v5637, %v5581
        %v5639 = vadd.f32 %v5638, %v5589
        %v5640 = vadd.f32 %v5639, %v5597
        %v5641 = vadd.f32 %v5640, %v5605
        %v5642 = vadd.f32 %v5641, %v5613
        %v5643 = vadd.f32 %v5642, %v5621
        %v5644 = vrot.slane %v5643, 4
        %v5645 = vadd.f32 %v5643, %v5644
        %v5646 = vrot.slane %v5645, 2
        %v5647 = vadd.f32 %v5645, %v5646
        %v5648 = vrot.slane %v5647, 1
        %v5649 = vadd.f32 %v5647, %v5648
        %v5650 = vadd.f32 %v5502, %v5510
        %v5651 = vadd.f32 %v5650, %v5518
        %v5652 = vadd.f32 %v5651, %v5526
        %v5653 = vadd.f32 %v5652, %v5534
        %v5654 = vadd.f32 %v5653, %v5542
        %v5655 = vadd.f32 %v5654, %v5550
        %v5656 = vadd.f32 %v5655, %v5558
        %v5657 = vadd.f32 %v5656, %v5566
        %v5658 = vadd.f32 %v5657, %v5574
        %v5659 = vadd.f32 %v5658, %v5582
        %v5660 = vadd.f32 %v5659, %v5590
        %v5661 = vadd.f32 %v5660, %v5598
        %v5662 = vadd.f32 %v5661, %v5606
        %v5663 = vadd.f32 %v5662, %v5614
        %v5664 = vadd.f32 %v5663, %v5622
        %v5665 = vrot.slane %v5664, 4
        %v5666 = vadd.f32 %v5664, %v5665
        %v5667 = vrot.slane %v5666, 2
        %v5668 = vadd.f32 %v5666, %v5667
        %v5669 = vrot.slane %v5668, 1
        %v5670 = vadd.f32 %v5668, %v5669
        %v5671 = vadd.f32 %v5503, %v5511
        %v5672 = vadd.f32 %v5671, %v5519
        %v5673 = vadd.f32 %v5672, %v5527
        %v5674 = vadd.f32 %v5673, %v5535
        %v5675 = vadd.f32 %v5674, %v5543
        %v5676 = vadd.f32 %v5675, %v5551
        %v5677 = vadd.f32 %v5676, %v5559
        %v5678 = vadd.f32 %v5677, %v5567
        %v5679 = vadd.f32 %v5678, %v5575
        %v5680 = vadd.f32 %v5679, %v5583
        %v5681 = vadd.f32 %v5680, %v5591
        %v5682 = vadd.f32 %v5681, %v5599
        %v5683 = vadd.f32 %v5682, %v5607
        %v5684 = vadd.f32 %v5683, %v5615
        %v5685 = vadd.f32 %v5684, %v5623
        %v5686 = vrot.slane %v5685, 4
        %v5687 = vadd.f32 %v5685, %v5686
        %v5688 = vrot.slane %v5687, 2
        %v5689 = vadd.f32 %v5687, %v5688
        %v5690 = vrot.slane %v5689, 1
        %v5691 = vadd.f32 %v5689, %v5690
        %v5692 = vadd.f32 %v5504, %v5512
        %v5693 = vadd.f32 %v5692, %v5520
        %v5694 = vadd.f32 %v5693, %v5528
        %v5695 = vadd.f32 %v5694, %v5536
        %v5696 = vadd.f32 %v5695, %v5544
        %v5697 = vadd.f32 %v5696, %v5552
        %v5698 = vadd.f32 %v5697, %v5560
        %v5699 = vadd.f32 %v5698, %v5568
        %v5700 = vadd.f32 %v5699, %v5576
        %v5701 = vadd.f32 %v5700, %v5584
        %v5702 = vadd.f32 %v5701, %v5592
        %v5703 = vadd.f32 %v5702, %v5600
        %v5704 = vadd.f32 %v5703, %v5608
        %v5705 = vadd.f32 %v5704, %v5616
        %v5706 = vadd.f32 %v5705, %v5624
        %v5707 = vrot.slane %v5706, 4
        %v5708 = vadd.f32 %v5706, %v5707
        %v5709 = vrot.slane %v5708, 2
        %v5710 = vadd.f32 %v5708, %v5709
        %v5711 = vrot.slane %v5710, 1
        %v5712 = vadd.f32 %v5710, %v5711
        %v5713 = vadd.f32 %v5505, %v5513
        %v5714 = vadd.f32 %v5713, %v5521
        %v5715 = vadd.f32 %v5714, %v5529
        %v5716 = vadd.f32 %v5715, %v5537
        %v5717 = vadd.f32 %v5716, %v5545
        %v5718 = vadd.f32 %v5717, %v5553
        %v5719 = vadd.f32 %v5718, %v5561
        %v5720 = vadd.f32 %v5719, %v5569
        %v5721 = vadd.f32 %v5720, %v5577
        %v5722 = vadd.f32 %v5721, %v5585
        %v5723 = vadd.f32 %v5722, %v5593
        %v5724 = vadd.f32 %v5723, %v5601
        %v5725 = vadd.f32 %v5724, %v5609
        %v5726 = vadd.f32 %v5725, %v5617
        %v5727 = vadd.f32 %v5726, %v5625
        %v5728 = vrot.slane %v5727, 4
        %v5729 = vadd.f32 %v5727, %v5728
        %v5730 = vrot.slane %v5729, 2
        %v5731 = vadd.f32 %v5729, %v5730
        %v5732 = vrot.slane %v5731, 1
        %v5733 = vadd.f32 %v5731, %v5732
        %v5734 = vadd.f32 %v5506, %v5514
        %v5735 = vadd.f32 %v5734, %v5522
        %v5736 = vadd.f32 %v5735, %v5530
        %v5737 = vadd.f32 %v5736, %v5538
        %v5738 = vadd.f32 %v5737, %v5546
        %v5739 = vadd.f32 %v5738, %v5554
        %v5740 = vadd.f32 %v5739, %v5562
        %v5741 = vadd.f32 %v5740, %v5570
        %v5742 = vadd.f32 %v5741, %v5578
        %v5743 = vadd.f32 %v5742, %v5586
        %v5744 = vadd.f32 %v5743, %v5594
        %v5745 = vadd.f32 %v5744, %v5602
        %v5746 = vadd.f32 %v5745, %v5610
        %v5747 = vadd.f32 %v5746, %v5618
        %v5748 = vadd.f32 %v5747, %v5626
        %v5749 = vrot.slane %v5748, 4
        %v5750 = vadd.f32 %v5748, %v5749
        %v5751 = vrot.slane %v5750, 2
        %v5752 = vadd.f32 %v5750, %v5751
        %v5753 = vrot.slane %v5752, 1
        %v5754 = vadd.f32 %v5752, %v5753
        %v5755 = vadd.f32 %v5507, %v5515
        %v5756 = vadd.f32 %v5755, %v5523
        %v5757 = vadd.f32 %v5756, %v5531
        %v5758 = vadd.f32 %v5757, %v5539
        %v5759 = vadd.f32 %v5758, %v5547
        %v5760 = vadd.f32 %v5759, %v5555
        %v5761 = vadd.f32 %v5760, %v5563
        %v5762 = vadd.f32 %v5761, %v5571
        %v5763 = vadd.f32 %v5762, %v5579
        %v5764 = vadd.f32 %v5763, %v5587
        %v5765 = vadd.f32 %v5764, %v5595
        %v5766 = vadd.f32 %v5765, %v5603
        %v5767 = vadd.f32 %v5766, %v5611
        %v5768 = vadd.f32 %v5767, %v5619
        %v5769 = vadd.f32 %v5768, %v5627
        %v5770 = vrot.slane %v5769, 4
        %v5771 = vadd.f32 %v5769, %v5770
        %v5772 = vrot.slane %v5771, 2
        %v5773 = vadd.f32 %v5771, %v5772
        %v5774 = vrot.slane %v5773, 1
        %v5775 = vadd.f32 %v5773, %v5774
        %v5776 = vadd.f32 %v5508, %v5516
        %v5777 = vadd.f32 %v5776, %v5524
        %v5778 = vadd.f32 %v5777, %v5532
        %v5779 = vadd.f32 %v5778, %v5540
        %v5780 = vadd.f32 %v5779, %v5548
        %v5781 = vadd.f32 %v5780, %v5556
        %v5782 = vadd.f32 %v5781, %v5564
        %v5783 = vadd.f32 %v5782, %v5572
        %v5784 = vadd.f32 %v5783, %v5580
        %v5785 = vadd.f32 %v5784, %v5588
        %v5786 = vadd.f32 %v5785, %v5596
        %v5787 = vadd.f32 %v5786, %v5604
        %v5788 = vadd.f32 %v5787, %v5612
        %v5789 = vadd.f32 %v5788, %v5620
        %v5790 = vadd.f32 %v5789, %v5628
        %v5791 = vrot.slane %v5790, 4
        %v5792 = vadd.f32 %v5790, %v5791
        %v5793 = vrot.slane %v5792, 2
        %v5794 = vadd.f32 %v5792, %v5793
        %v5795 = vrot.slane %v5794, 1
        %v5796 = vadd.f32 %v5794, %v5795
        %v5797 = vmul.f32 %v5649, %v1168
        %v5798 = vmul.f32 %v5670, %v1168
        %v5799 = vmul.f32 %v5691, %v1168
        %v5800 = vmul.f32 %v5712, %v1168
        %v5801 = vmul.f32 %v5733, %v1168
        %v5802 = vmul.f32 %v5754, %v1168
        %v5803 = vmul.f32 %v5775, %v1168
        %v5804 = vmul.f32 %v5796, %v1168
        %v5805 = vmul.f32 %v5493, %v5493
        %v5806 = vmul.f32 %v5494, %v5494
        %v5807 = vmul.f32 %v5495, %v5495
        %v5808 = vmul.f32 %v5496, %v5496
        %v5809 = vmul.f32 %v5497, %v5497
        %v5810 = vmul.f32 %v5498, %v5498
        %v5811 = vmul.f32 %v5499, %v5499
        %v5812 = vmul.f32 %v5500, %v5500
        %v5813 = vsub.f32 %v5797, %v5805
        %v5814 = vsub.f32 %v5798, %v5806
        %v5815 = vsub.f32 %v5799, %v5807
        %v5816 = vsub.f32 %v5800, %v5808
        %v5817 = vsub.f32 %v5801, %v5809
        %v5818 = vsub.f32 %v5802, %v5810
        %v5819 = vsub.f32 %v5803, %v5811
        %v5820 = vsub.f32 %v5804, %v5812
        %v5821 = vld [vmem:[#allocation8 + $0x1b] sm:$0xff]
        %v5822 = vadd.f32 %v5813, 0.8
        %v5823 = vadd.f32 %v5814, 0.8
        %v5824 = vadd.f32 %v5815, 0.8
        %v5825 = vadd.f32 %v5816, 0.8
        %v5826 = vadd.f32 %v5817, 0.8
        %v5827 = vadd.f32 %v5818, 0.8
        %v5828 = vadd.f32 %v5819, 0.8
        %v5829 = vadd.f32 %v5820, 0.8
        %v5830 = vrsqrt.pop %v5822
        %v5831 = vrsqrt.pop %v5823
        %v5832 = vrsqrt.pop %v5824
        %v5833 = vrsqrt.pop %v5825
        %v5834 = vrsqrt.pop %v5826
        %v5835 = vrsqrt.pop %v5827
        %v5836 = vrsqrt.pop %v5828
        %v5837 = vrsqrt.pop %v5829
        %v5846 = vcombine.low %v5830, %v5831
        %v5847 = vcombine.low %v5832, %v5833
        %v5848 = vcombine.low %v5834, %v5835
        %v5849 = vcombine.low %v5836, %v5837
        %v5851 = vunpack.c.l.s4 1966171168
        %v5852 = vunpack.c.0.s8 %v5851
        %v5853 = vlaneseq
        %v5854 = vshrl.u32 %v5853, 7
        %v5855 = vsub.s32 %v5852, %v5854
        %v5856 = vrot.slane %v5846, %v5855
        %v5858 = vunpack.c.l.s4 1966171168
        %v5859 = vunpack.c.0.s8 %v5858
        %v5860 = vlaneseq
        %v5861 = vshrl.u32 %v5860, 7
        %v5862 = vsub.s32 %v5859, %v5861
        %v5863 = vrot.slane %v5847, %v5862
        %v5865 = vunpack.c.l.s4 1966171168
        %v5866 = vunpack.c.0.s8 %v5865
        %v5867 = vlaneseq
        %v5868 = vshrl.u32 %v5867, 7
        %v5869 = vsub.s32 %v5866, %v5868
        %v5870 = vrot.slane %v5848, %v5869
        %v5872 = vunpack.c.l.s4 1966171168
        %v5873 = vunpack.c.0.s8 %v5872
        %v5874 = vlaneseq
        %v5875 = vshrl.u32 %v5874, 7
        %v5876 = vsub.s32 %v5873, %v5875
        %v5877 = vrot.slane %v5849, %v5876
        %v5878 = vcombine.low %v5856, %v5863
        %v5879 = vcombine.low %v5870, %v5877
        %v5881 = vunpack.c.l.s4 1966171168
        %v5882 = vunpack.c.0.s8 %v5881
        %v5883 = vlaneseq
        %v5884 = vshrl.u32 %v5883, 7
        %v5885 = vsub.s32 %v5882, %v5884
        %v5886 = vrot.slane %v5878, %v5885
        %v5888 = vunpack.c.l.s4 1966171168
        %v5889 = vunpack.c.0.s8 %v5888
        %v5890 = vlaneseq
        %v5891 = vshrl.u32 %v5890, 7
        %v5892 = vsub.s32 %v5889, %v5891
        %v5893 = vrot.slane %v5879, %v5892
        %v5894 = vcombine.low %v5886, %v5893
        %v5896 = vmul.f32 %v5821, %v5894
        %v5897 = vld [vmem:[#allocation8 + $0x23] sm:$0xff]
        %v5899 = vlaneseq
        %v5900 = vshrl.u32 %v5899, 7
        %v5901 = vsub.s32 0, %v5900
        %v5902 = vrot.slane %v5896, %v5901
        %v5903 = vlaneseq
        %v5904 = vshrl.u32 %v5903, 7
        %v5905 = vsub.s32 1, %v5904
        %v5906 = vrot.slane %v5896, %v5905
        %v5907 = vlaneseq
        %v5908 = vshrl.u32 %v5907, 7
        %v5909 = vsub.s32 2, %v5908
        %v5910 = vrot.slane %v5896, %v5909
        %v5911 = vlaneseq
        %v5912 = vshrl.u32 %v5911, 7
        %v5913 = vsub.s32 3, %v5912
        %v5914 = vrot.slane %v5896, %v5913
        %v5915 = vlaneseq
        %v5916 = vshrl.u32 %v5915, 7
        %v5917 = vsub.s32 4, %v5916
        %v5918 = vrot.slane %v5896, %v5917
        %v5919 = vlaneseq
        %v5920 = vshrl.u32 %v5919, 7
        %v5921 = vsub.s32 5, %v5920
        %v5922 = vrot.slane %v5896, %v5921
        %v5923 = vlaneseq
        %v5924 = vshrl.u32 %v5923, 7
        %v5925 = vsub.s32 6, %v5924
        %v5926 = vrot.slane %v5896, %v5925
        %v5927 = vlaneseq
        %v5928 = vshrl.u32 %v5927, 7
        %v5929 = vsub.s32 7, %v5928
        %v5930 = vrot.slane %v5896, %v5929
        %v5939 = vmul.f32 %v5493, %v5902
        %v5940 = vmul.f32 %v5494, %v5906
        %v5941 = vmul.f32 %v5495, %v5910
        %v5942 = vmul.f32 %v5496, %v5914
        %v5943 = vmul.f32 %v5497, %v5918
        %v5944 = vmul.f32 %v5498, %v5922
        %v5945 = vmul.f32 %v5499, %v5926
        %v5946 = vmul.f32 %v5500, %v5930
        %v5955 = vcombine.low %v5939, %v5940
        %v5956 = vcombine.low %v5941, %v5942
        %v5957 = vcombine.low %v5943, %v5944
        %v5958 = vcombine.low %v5945, %v5946
        %v5960 = vunpack.c.l.s4 1966171168
        %v5961 = vunpack.c.0.s8 %v5960
        %v5962 = vlaneseq
        %v5963 = vshrl.u32 %v5962, 7
        %v5964 = vsub.s32 %v5961, %v5963
        %v5965 = vrot.slane %v5955, %v5964
        %v5967 = vunpack.c.l.s4 1966171168
        %v5968 = vunpack.c.0.s8 %v5967
        %v5969 = vlaneseq
        %v5970 = vshrl.u32 %v5969, 7
        %v5971 = vsub.s32 %v5968, %v5970
        %v5972 = vrot.slane %v5956, %v5971
        %v5974 = vunpack.c.l.s4 1966171168
        %v5975 = vunpack.c.0.s8 %v5974
        %v5976 = vlaneseq
        %v5977 = vshrl.u32 %v5976, 7
        %v5978 = vsub.s32 %v5975, %v5977
        %v5979 = vrot.slane %v5957, %v5978
        %v5981 = vunpack.c.l.s4 1966171168
        %v5982 = vunpack.c.0.s8 %v5981
        %v5983 = vlaneseq
        %v5984 = vshrl.u32 %v5983, 7
        %v5985 = vsub.s32 %v5982, %v5984
        %v5986 = vrot.slane %v5958, %v5985
        %v5987 = vcombine.low %v5965, %v5972
        %v5988 = vcombine.low %v5979, %v5986
        %v5990 = vunpack.c.l.s4 1966171168
        %v5991 = vunpack.c.0.s8 %v5990
        %v5992 = vlaneseq
        %v5993 = vshrl.u32 %v5992, 7
        %v5994 = vsub.s32 %v5991, %v5993
        %v5995 = vrot.slane %v5987, %v5994
        %v5997 = vunpack.c.l.s4 1966171168
        %v5998 = vunpack.c.0.s8 %v5997
        %v5999 = vlaneseq
        %v6000 = vshrl.u32 %v5999, 7
        %v6001 = vsub.s32 %v5998, %v6000
        %v6002 = vrot.slane %v5988, %v6001
        %v6003 = vcombine.low %v5995, %v6002
        %v6005 = vsub.f32 %v5897, %v6003
        %v6006 = vmul.f32 %v4569, %v5902
        %v6007 = vmul.f32 %v4571, %v5906
        %v6008 = vmul.f32 %v4795, %v5910
        %v6009 = vmul.f32 %v4797, %v5914
        %v6010 = vmul.f32 %v5021, %v5918
        %v6011 = vmul.f32 %v5023, %v5922
        %v6012 = vmul.f32 %v5247, %v5926
        %v6013 = vmul.f32 %v5249, %v5930
        %v6014 = vmul.f32 %v4573, %v5902
        %v6015 = vmul.f32 %v4575, %v5906
        %v6016 = vmul.f32 %v4799, %v5910
        %v6017 = vmul.f32 %v4801, %v5914
        %v6018 = vmul.f32 %v5025, %v5918
        %v6019 = vmul.f32 %v5027, %v5922
        %v6020 = vmul.f32 %v5251, %v5926
        %v6021 = vmul.f32 %v5253, %v5930
        %v6022 = vmul.f32 %v4579, %v5902
        %v6023 = vmul.f32 %v4581, %v5906
        %v6024 = vmul.f32 %v4805, %v5910
        %v6025 = vmul.f32 %v4807, %v5914
        %v6026 = vmul.f32 %v5031, %v5918
        %v6027 = vmul.f32 %v5033, %v5922
        %v6028 = vmul.f32 %v5257, %v5926
        %v6029 = vmul.f32 %v5259, %v5930
        %v6030 = vmul.f32 %v4583, %v5902
        %v6031 = vmul.f32 %v4585, %v5906
        %v6032 = vmul.f32 %v4809, %v5910
        %v6033 = vmul.f32 %v4811, %v5914
        %v6034 = vmul.f32 %v5035, %v5918
        %v6035 = vmul.f32 %v5037, %v5922
        %v6036 = vmul.f32 %v5261, %v5926
        %v6037 = vmul.f32 %v5263, %v5930
        %v6038 = vmul.f32 %v4589, %v5902
        %v6039 = vmul.f32 %v4591, %v5906
        %v6040 = vmul.f32 %v4815, %v5910
        %v6041 = vmul.f32 %v4817, %v5914
        %v6042 = vmul.f32 %v5041, %v5918
        %v6043 = vmul.f32 %v5043, %v5922
        %v6044 = vmul.f32 %v5267, %v5926
        %v6045 = vmul.f32 %v5269, %v5930
        %v6046 = vmul.f32 %v4593, %v5902
        %v6047 = vmul.f32 %v4595, %v5906
        %v6048 = vmul.f32 %v4819, %v5910
        %v6049 = vmul.f32 %v4821, %v5914
        %v6050 = vmul.f32 %v5045, %v5918
        %v6051 = vmul.f32 %v5047, %v5922
        %v6052 = vmul.f32 %v5271, %v5926
        %v6053 = vmul.f32 %v5273, %v5930
        %v6054 = vmul.f32 %v4599, %v5902
        %v6055 = vmul.f32 %v4601, %v5906
        %v6056 = vmul.f32 %v4825, %v5910
        %v6057 = vmul.f32 %v4827, %v5914
        %v6058 = vmul.f32 %v5051, %v5918
        %v6059 = vmul.f32 %v5053, %v5922
        %v6060 = vmul.f32 %v5277, %v5926
        %v6061 = vmul.f32 %v5279, %v5930
        %v6062 = vmul.f32 %v4603, %v5902
        %v6063 = vmul.f32 %v4605, %v5906
        %v6064 = vmul.f32 %v4829, %v5910
        %v6065 = vmul.f32 %v4831, %v5914
        %v6066 = vmul.f32 %v5055, %v5918
        %v6067 = vmul.f32 %v5057, %v5922
        %v6068 = vmul.f32 %v5281, %v5926
        %v6069 = vmul.f32 %v5283, %v5930
        %v6070 = vmul.f32 %v4609, %v5902
        %v6071 = vmul.f32 %v4611, %v5906
        %v6072 = vmul.f32 %v4835, %v5910
        %v6073 = vmul.f32 %v4837, %v5914
        %v6074 = vmul.f32 %v5061, %v5918
        %v6075 = vmul.f32 %v5063, %v5922
        %v6076 = vmul.f32 %v5287, %v5926
        %v6077 = vmul.f32 %v5289, %v5930
        %v6078 = vmul.f32 %v4613, %v5902
        %v6079 = vmul.f32 %v4615, %v5906
        %v6080 = vmul.f32 %v4839, %v5910
        %v6081 = vmul.f32 %v4841, %v5914
        %v6082 = vmul.f32 %v5065, %v5918
        %v6083 = vmul.f32 %v5067, %v5922
        %v6084 = vmul.f32 %v5291, %v5926
        %v6085 = vmul.f32 %v5293, %v5930
        %v6086 = vmul.f32 %v4619, %v5902
        %v6087 = vmul.f32 %v4621, %v5906
        %v6088 = vmul.f32 %v4845, %v5910
        %v6089 = vmul.f32 %v4847, %v5914
        %v6090 = vmul.f32 %v5071, %v5918
        %v6091 = vmul.f32 %v5073, %v5922
        %v6092 = vmul.f32 %v5297, %v5926
        %v6093 = vmul.f32 %v5299, %v5930
        %v6094 = vmul.f32 %v4623, %v5902
        %v6095 = vmul.f32 %v4625, %v5906
        %v6096 = vmul.f32 %v4849, %v5910
        %v6097 = vmul.f32 %v4851, %v5914
        %v6098 = vmul.f32 %v5075, %v5918
        %v6099 = vmul.f32 %v5077, %v5922
        %v6100 = vmul.f32 %v5301, %v5926
        %v6101 = vmul.f32 %v5303, %v5930
        %v6102 = vmul.f32 %v4629, %v5902
        %v6103 = vmul.f32 %v4631, %v5906
        %v6104 = vmul.f32 %v4855, %v5910
        %v6105 = vmul.f32 %v4857, %v5914
        %v6106 = vmul.f32 %v5081, %v5918
        %v6107 = vmul.f32 %v5083, %v5922
        %v6108 = vmul.f32 %v5307, %v5926
        %v6109 = vmul.f32 %v5309, %v5930
        %v6110 = vmul.f32 %v4633, %v5902
        %v6111 = vmul.f32 %v4635, %v5906
        %v6112 = vmul.f32 %v4859, %v5910
        %v6113 = vmul.f32 %v4861, %v5914
        %v6114 = vmul.f32 %v5085, %v5918
        %v6115 = vmul.f32 %v5087, %v5922
        %v6116 = vmul.f32 %v5311, %v5926
        %v6117 = vmul.f32 %v5313, %v5930
        %v6118 = vmul.f32 %v4639, %v5902
        %v6119 = vmul.f32 %v4641, %v5906
        %v6120 = vmul.f32 %v4865, %v5910
        %v6121 = vmul.f32 %v4867, %v5914
        %v6122 = vmul.f32 %v5091, %v5918
        %v6123 = vmul.f32 %v5093, %v5922
        %v6124 = vmul.f32 %v5317, %v5926
        %v6125 = vmul.f32 %v5319, %v5930
        %v6126 = vmul.f32 %v4643, %v5902
        %v6127 = vmul.f32 %v4645, %v5906
        %v6128 = vmul.f32 %v4869, %v5910
        %v6129 = vmul.f32 %v4871, %v5914
        %v6130 = vmul.f32 %v5095, %v5918
        %v6131 = vmul.f32 %v5097, %v5922
        %v6132 = vmul.f32 %v5321, %v5926
        %v6133 = vmul.f32 %v5323, %v5930
        %v6135 = vlaneseq
        %v6136 = vshrl.u32 %v6135, 7
        %v6137 = vsub.s32 0, %v6136
        %v6138 = vrot.slane %v6005, %v6137
        %v6139 = vlaneseq
        %v6140 = vshrl.u32 %v6139, 7
        %v6141 = vsub.s32 1, %v6140
        %v6142 = vrot.slane %v6005, %v6141
        %v6143 = vlaneseq
        %v6144 = vshrl.u32 %v6143, 7
        %v6145 = vsub.s32 2, %v6144
        %v6146 = vrot.slane %v6005, %v6145
        %v6147 = vlaneseq
        %v6148 = vshrl.u32 %v6147, 7
        %v6149 = vsub.s32 3, %v6148
        %v6150 = vrot.slane %v6005, %v6149
        %v6151 = vlaneseq
        %v6152 = vshrl.u32 %v6151, 7
        %v6153 = vsub.s32 4, %v6152
        %v6154 = vrot.slane %v6005, %v6153
        %v6155 = vlaneseq
        %v6156 = vshrl.u32 %v6155, 7
        %v6157 = vsub.s32 5, %v6156
        %v6158 = vrot.slane %v6005, %v6157
        %v6159 = vlaneseq
        %v6160 = vshrl.u32 %v6159, 7
        %v6161 = vsub.s32 6, %v6160
        %v6162 = vrot.slane %v6005, %v6161
        %v6163 = vlaneseq
        %v6164 = vshrl.u32 %v6163, 7
        %v6165 = vsub.s32 7, %v6164
        %v6166 = vrot.slane %v6005, %v6165
        %v6175 = vadd.f32 %v6006, %v6138
        %v6176 = vadd.f32 %v6007, %v6142
        %v6177 = vadd.f32 %v6008, %v6146
        %v6178 = vadd.f32 %v6009, %v6150
        %v6179 = vadd.f32 %v6010, %v6154
        %v6180 = vadd.f32 %v6011, %v6158
        %v6181 = vadd.f32 %v6012, %v6162
        %v6182 = vadd.f32 %v6013, %v6166
        %v6183 = vadd.f32 %v6014, %v6138
        %v6184 = vadd.f32 %v6015, %v6142
        %v6185 = vadd.f32 %v6016, %v6146
        %v6186 = vadd.f32 %v6017, %v6150
        %v6187 = vadd.f32 %v6018, %v6154
        %v6188 = vadd.f32 %v6019, %v6158
        %v6189 = vadd.f32 %v6020, %v6162
        %v6190 = vadd.f32 %v6021, %v6166
        %v6191 = vadd.f32 %v6022, %v6138
        %v6192 = vadd.f32 %v6023, %v6142
        %v6193 = vadd.f32 %v6024, %v6146
        %v6194 = vadd.f32 %v6025, %v6150
        %v6195 = vadd.f32 %v6026, %v6154
        %v6196 = vadd.f32 %v6027, %v6158
        %v6197 = vadd.f32 %v6028, %v6162
        %v6198 = vadd.f32 %v6029, %v6166
        %v6199 = vadd.f32 %v6030, %v6138
        %v6200 = vadd.f32 %v6031, %v6142
        %v6201 = vadd.f32 %v6032, %v6146
        %v6202 = vadd.f32 %v6033, %v6150
        %v6203 = vadd.f32 %v6034, %v6154
        %v6204 = vadd.f32 %v6035, %v6158
        %v6205 = vadd.f32 %v6036, %v6162
        %v6206 = vadd.f32 %v6037, %v6166
        %v6207 = vadd.f32 %v6038, %v6138
        %v6208 = vadd.f32 %v6039, %v6142
        %v6209 = vadd.f32 %v6040, %v6146
        %v6210 = vadd.f32 %v6041, %v6150
        %v6211 = vadd.f32 %v6042, %v6154
        %v6212 = vadd.f32 %v6043, %v6158
        %v6213 = vadd.f32 %v6044, %v6162
        %v6214 = vadd.f32 %v6045, %v6166
        %v6215 = vadd.f32 %v6046, %v6138
        %v6216 = vadd.f32 %v6047, %v6142
        %v6217 = vadd.f32 %v6048, %v6146
        %v6218 = vadd.f32 %v6049, %v6150
        %v6219 = vadd.f32 %v6050, %v6154
        %v6220 = vadd.f32 %v6051, %v6158
        %v6221 = vadd.f32 %v6052, %v6162
        %v6222 = vadd.f32 %v6053, %v6166
        %v6223 = vadd.f32 %v6054, %v6138
        %v6224 = vadd.f32 %v6055, %v6142
        %v6225 = vadd.f32 %v6056, %v6146
        %v6226 = vadd.f32 %v6057, %v6150
        %v6227 = vadd.f32 %v6058, %v6154
        %v6228 = vadd.f32 %v6059, %v6158
        %v6229 = vadd.f32 %v6060, %v6162
        %v6230 = vadd.f32 %v6061, %v6166
        %v6231 = vadd.f32 %v6062, %v6138
        %v6232 = vadd.f32 %v6063, %v6142
        %v6233 = vadd.f32 %v6064, %v6146
        %v6234 = vadd.f32 %v6065, %v6150
        %v6235 = vadd.f32 %v6066, %v6154
        %v6236 = vadd.f32 %v6067, %v6158
        %v6237 = vadd.f32 %v6068, %v6162
        %v6238 = vadd.f32 %v6069, %v6166
        %v6239 = vadd.f32 %v6070, %v6138
        %v6240 = vadd.f32 %v6071, %v6142
        %v6241 = vadd.f32 %v6072, %v6146
        %v6242 = vadd.f32 %v6073, %v6150
        %v6243 = vadd.f32 %v6074, %v6154
        %v6244 = vadd.f32 %v6075, %v6158
        %v6245 = vadd.f32 %v6076, %v6162
        %v6246 = vadd.f32 %v6077, %v6166
        %v6247 = vadd.f32 %v6078, %v6138
        %v6248 = vadd.f32 %v6079, %v6142
        %v6249 = vadd.f32 %v6080, %v6146
        %v6250 = vadd.f32 %v6081, %v6150
        %v6251 = vadd.f32 %v6082, %v6154
        %v6252 = vadd.f32 %v6083, %v6158
        %v6253 = vadd.f32 %v6084, %v6162
        %v6254 = vadd.f32 %v6085, %v6166
        %v6255 = vadd.f32 %v6086, %v6138
        %v6256 = vadd.f32 %v6087, %v6142
        %v6257 = vadd.f32 %v6088, %v6146
        %v6258 = vadd.f32 %v6089, %v6150
        %v6259 = vadd.f32 %v6090, %v6154
        %v6260 = vadd.f32 %v6091, %v6158
        %v6261 = vadd.f32 %v6092, %v6162
        %v6262 = vadd.f32 %v6093, %v6166
        %v6263 = vadd.f32 %v6094, %v6138
        %v6264 = vadd.f32 %v6095, %v6142
        %v6265 = vadd.f32 %v6096, %v6146
        %v6266 = vadd.f32 %v6097, %v6150
        %v6267 = vadd.f32 %v6098, %v6154
        %v6268 = vadd.f32 %v6099, %v6158
        %v6269 = vadd.f32 %v6100, %v6162
        %v6270 = vadd.f32 %v6101, %v6166
        %v6271 = vadd.f32 %v6102, %v6138
        %v6272 = vadd.f32 %v6103, %v6142
        %v6273 = vadd.f32 %v6104, %v6146
        %v6274 = vadd.f32 %v6105, %v6150
        %v6275 = vadd.f32 %v6106, %v6154
        %v6276 = vadd.f32 %v6107, %v6158
        %v6277 = vadd.f32 %v6108, %v6162
        %v6278 = vadd.f32 %v6109, %v6166
        %v6279 = vadd.f32 %v6110, %v6138
        %v6280 = vadd.f32 %v6111, %v6142
        %v6281 = vadd.f32 %v6112, %v6146
        %v6282 = vadd.f32 %v6113, %v6150
        %v6283 = vadd.f32 %v6114, %v6154
        %v6284 = vadd.f32 %v6115, %v6158
        %v6285 = vadd.f32 %v6116, %v6162
        %v6286 = vadd.f32 %v6117, %v6166
        %v6287 = vadd.f32 %v6118, %v6138
        %v6288 = vadd.f32 %v6119, %v6142
        %v6289 = vadd.f32 %v6120, %v6146
        %v6290 = vadd.f32 %v6121, %v6150
        %v6291 = vadd.f32 %v6122, %v6154
        %v6292 = vadd.f32 %v6123, %v6158
        %v6293 = vadd.f32 %v6124, %v6162
        %v6294 = vadd.f32 %v6125, %v6166
        %v6295 = vadd.f32 %v6126, %v6138
        %v6296 = vadd.f32 %v6127, %v6142
        %v6297 = vadd.f32 %v6128, %v6146
        %v6298 = vadd.f32 %v6129, %v6150
        %v6299 = vadd.f32 %v6130, %v6154
        %v6300 = vadd.f32 %v6131, %v6158
        %v6301 = vadd.f32 %v6132, %v6162
        %v6302 = vadd.f32 %v6133, %v6166
        %vm6303 = vcmp.gt.f32.partialorder %v6175, 0.0
        %vm6304 = vcmp.gt.f32.partialorder %v6176, 0.0
        %vm6305 = vcmp.gt.f32.partialorder %v6177, 0.0
        %vm6306 = vcmp.gt.f32.partialorder %v6178, 0.0
        %vm6307 = vcmp.gt.f32.partialorder %v6179, 0.0
        %vm6308 = vcmp.gt.f32.partialorder %v6180, 0.0
        %vm6309 = vcmp.gt.f32.partialorder %v6181, 0.0
        %vm6310 = vcmp.gt.f32.partialorder %v6182, 0.0
        %vm6311 = vcmp.gt.f32.partialorder %v6183, 0.0
        %vm6312 = vcmp.gt.f32.partialorder %v6184, 0.0
        %vm6313 = vcmp.gt.f32.partialorder %v6185, 0.0
        %vm6314 = vcmp.gt.f32.partialorder %v6186, 0.0
        %vm6315 = vcmp.gt.f32.partialorder %v6187, 0.0
        %vm6316 = vcmp.gt.f32.partialorder %v6188, 0.0
        %vm6317 = vcmp.gt.f32.partialorder %v6189, 0.0
        %vm6318 = vcmp.gt.f32.partialorder %v6190, 0.0
        %vm6319 = vcmp.gt.f32.partialorder %v6191, 0.0
        %vm6320 = vcmp.gt.f32.partialorder %v6192, 0.0
        %vm6321 = vcmp.gt.f32.partialorder %v6193, 0.0
        %vm6322 = vcmp.gt.f32.partialorder %v6194, 0.0
        %vm6323 = vcmp.gt.f32.partialorder %v6195, 0.0
        %vm6324 = vcmp.gt.f32.partialorder %v6196, 0.0
        %vm6325 = vcmp.gt.f32.partialorder %v6197, 0.0
        %vm6326 = vcmp.gt.f32.partialorder %v6198, 0.0
        %vm6327 = vcmp.gt.f32.partialorder %v6199, 0.0
        %vm6328 = vcmp.gt.f32.partialorder %v6200, 0.0
        %vm6329 = vcmp.gt.f32.partialorder %v6201, 0.0
        %vm6330 = vcmp.gt.f32.partialorder %v6202, 0.0
        %vm6331 = vcmp.gt.f32.partialorder %v6203, 0.0
        %vm6332 = vcmp.gt.f32.partialorder %v6204, 0.0
        %vm6333 = vcmp.gt.f32.partialorder %v6205, 0.0
        %vm6334 = vcmp.gt.f32.partialorder %v6206, 0.0
        %vm6335 = vcmp.gt.f32.partialorder %v6207, 0.0
        %vm6336 = vcmp.gt.f32.partialorder %v6208, 0.0
        %vm6337 = vcmp.gt.f32.partialorder %v6209, 0.0
        %vm6338 = vcmp.gt.f32.partialorder %v6210, 0.0
        %vm6339 = vcmp.gt.f32.partialorder %v6211, 0.0
        %vm6340 = vcmp.gt.f32.partialorder %v6212, 0.0
        %vm6341 = vcmp.gt.f32.partialorder %v6213, 0.0
        %vm6342 = vcmp.gt.f32.partialorder %v6214, 0.0
        %vm6343 = vcmp.gt.f32.partialorder %v6215, 0.0
        %vm6344 = vcmp.gt.f32.partialorder %v6216, 0.0
        %vm6345 = vcmp.gt.f32.partialorder %v6217, 0.0
        %vm6346 = vcmp.gt.f32.partialorder %v6218, 0.0
        %vm6347 = vcmp.gt.f32.partialorder %v6219, 0.0
        %vm6348 = vcmp.gt.f32.partialorder %v6220, 0.0
        %vm6349 = vcmp.gt.f32.partialorder %v6221, 0.0
        %vm6350 = vcmp.gt.f32.partialorder %v6222, 0.0
        %vm6351 = vcmp.gt.f32.partialorder %v6223, 0.0
        %vm6352 = vcmp.gt.f32.partialorder %v6224, 0.0
        %vm6353 = vcmp.gt.f32.partialorder %v6225, 0.0
        %vm6354 = vcmp.gt.f32.partialorder %v6226, 0.0
        %vm6355 = vcmp.gt.f32.partialorder %v6227, 0.0
        %vm6356 = vcmp.gt.f32.partialorder %v6228, 0.0
        %vm6357 = vcmp.gt.f32.partialorder %v6229, 0.0
        %vm6358 = vcmp.gt.f32.partialorder %v6230, 0.0
        %vm6359 = vcmp.gt.f32.partialorder %v6231, 0.0
        %vm6360 = vcmp.gt.f32.partialorder %v6232, 0.0
        %vm6361 = vcmp.gt.f32.partialorder %v6233, 0.0
        %vm6362 = vcmp.gt.f32.partialorder %v6234, 0.0
        %vm6363 = vcmp.gt.f32.partialorder %v6235, 0.0
        %vm6364 = vcmp.gt.f32.partialorder %v6236, 0.0
        %vm6365 = vcmp.gt.f32.partialorder %v6237, 0.0
        %vm6366 = vcmp.gt.f32.partialorder %v6238, 0.0
        %vm6367 = vcmp.gt.f32.partialorder %v6239, 0.0
        %vm6368 = vcmp.gt.f32.partialorder %v6240, 0.0
        %vm6369 = vcmp.gt.f32.partialorder %v6241, 0.0
        %vm6370 = vcmp.gt.f32.partialorder %v6242, 0.0
        %vm6371 = vcmp.gt.f32.partialorder %v6243, 0.0
        %vm6372 = vcmp.gt.f32.partialorder %v6244, 0.0
        %vm6373 = vcmp.gt.f32.partialorder %v6245, 0.0
        %vm6374 = vcmp.gt.f32.partialorder %v6246, 0.0
        %vm6375 = vcmp.gt.f32.partialorder %v6247, 0.0
        %vm6376 = vcmp.gt.f32.partialorder %v6248, 0.0
        %vm6377 = vcmp.gt.f32.partialorder %v6249, 0.0
        %vm6378 = vcmp.gt.f32.partialorder %v6250, 0.0
        %vm6379 = vcmp.gt.f32.partialorder %v6251, 0.0
        %vm6380 = vcmp.gt.f32.partialorder %v6252, 0.0
        %vm6381 = vcmp.gt.f32.partialorder %v6253, 0.0
        %vm6382 = vcmp.gt.f32.partialorder %v6254, 0.0
        %vm6383 = vcmp.gt.f32.partialorder %v6255, 0.0
        %vm6384 = vcmp.gt.f32.partialorder %v6256, 0.0
        %vm6385 = vcmp.gt.f32.partialorder %v6257, 0.0
        %vm6386 = vcmp.gt.f32.partialorder %v6258, 0.0
        %vm6387 = vcmp.gt.f32.partialorder %v6259, 0.0
        %vm6388 = vcmp.gt.f32.partialorder %v6260, 0.0
        %vm6389 = vcmp.gt.f32.partialorder %v6261, 0.0
        %vm6390 = vcmp.gt.f32.partialorder %v6262, 0.0
        %vm6391 = vcmp.gt.f32.partialorder %v6263, 0.0
        %vm6392 = vcmp.gt.f32.partialorder %v6264, 0.0
        %vm6393 = vcmp.gt.f32.partialorder %v6265, 0.0
        %vm6394 = vcmp.gt.f32.partialorder %v6266, 0.0
        %vm6395 = vcmp.gt.f32.partialorder %v6267, 0.0
        %vm6396 = vcmp.gt.f32.partialorder %v6268, 0.0
        %vm6397 = vcmp.gt.f32.partialorder %v6269, 0.0
        %vm6398 = vcmp.gt.f32.partialorder %v6270, 0.0
        %vm6399 = vcmp.gt.f32.partialorder %v6271, 0.0
        %vm6400 = vcmp.gt.f32.partialorder %v6272, 0.0
        %vm6401 = vcmp.gt.f32.partialorder %v6273, 0.0
        %vm6402 = vcmp.gt.f32.partialorder %v6274, 0.0
        %vm6403 = vcmp.gt.f32.partialorder %v6275, 0.0
        %vm6404 = vcmp.gt.f32.partialorder %v6276, 0.0
        %vm6405 = vcmp.gt.f32.partialorder %v6277, 0.0
        %vm6406 = vcmp.gt.f32.partialorder %v6278, 0.0
        %vm6407 = vcmp.gt.f32.partialorder %v6279, 0.0
        %vm6408 = vcmp.gt.f32.partialorder %v6280, 0.0
        %vm6409 = vcmp.gt.f32.partialorder %v6281, 0.0
        %vm6410 = vcmp.gt.f32.partialorder %v6282, 0.0
        %vm6411 = vcmp.gt.f32.partialorder %v6283, 0.0
        %vm6412 = vcmp.gt.f32.partialorder %v6284, 0.0
        %vm6413 = vcmp.gt.f32.partialorder %v6285, 0.0
        %vm6414 = vcmp.gt.f32.partialorder %v6286, 0.0
        %vm6415 = vcmp.gt.f32.partialorder %v6287, 0.0
        %vm6416 = vcmp.gt.f32.partialorder %v6288, 0.0
        %vm6417 = vcmp.gt.f32.partialorder %v6289, 0.0
        %vm6418 = vcmp.gt.f32.partialorder %v6290, 0.0
        %vm6419 = vcmp.gt.f32.partialorder %v6291, 0.0
        %vm6420 = vcmp.gt.f32.partialorder %v6292, 0.0
        %vm6421 = vcmp.gt.f32.partialorder %v6293, 0.0
        %vm6422 = vcmp.gt.f32.partialorder %v6294, 0.0
        %vm6423 = vcmp.gt.f32.partialorder %v6295, 0.0
        %vm6424 = vcmp.gt.f32.partialorder %v6296, 0.0
        %vm6425 = vcmp.gt.f32.partialorder %v6297, 0.0
        %vm6426 = vcmp.gt.f32.partialorder %v6298, 0.0
        %vm6427 = vcmp.gt.f32.partialorder %v6299, 0.0
        %vm6428 = vcmp.gt.f32.partialorder %v6300, 0.0
        %vm6429 = vcmp.gt.f32.partialorder %v6301, 0.0
        %vm6430 = vcmp.gt.f32.partialorder %v6302, 0.0
        %v6431 = vmul.f32 %v6175, 0.2
        %v6432 = vmul.f32 %v6176, 0.2
        %v6433 = vmul.f32 %v6177, 0.2
        %v6434 = vmul.f32 %v6178, 0.2
        %v6435 = vmul.f32 %v6179, 0.2
        %v6436 = vmul.f32 %v6180, 0.2
        %v6437 = vmul.f32 %v6181, 0.2
        %v6438 = vmul.f32 %v6182, 0.2
        %v6439 = vmul.f32 %v6183, 0.2
        %v6440 = vmul.f32 %v6184, 0.2
        %v6441 = vmul.f32 %v6185, 0.2
        %v6442 = vmul.f32 %v6186, 0.2
        %v6443 = vmul.f32 %v6187, 0.2
        %v6444 = vmul.f32 %v6188, 0.2
        %v6445 = vmul.f32 %v6189, 0.2
        %v6446 = vmul.f32 %v6190, 0.2
        %v6447 = vmul.f32 %v6191, 0.2
        %v6448 = vmul.f32 %v6192, 0.2
        %v6449 = vmul.f32 %v6193, 0.2
        %v6450 = vmul.f32 %v6194, 0.2
        %v6451 = vmul.f32 %v6195, 0.2
        %v6452 = vmul.f32 %v6196, 0.2
        %v6453 = vmul.f32 %v6197, 0.2
        %v6454 = vmul.f32 %v6198, 0.2
        %v6455 = vmul.f32 %v6199, 0.2
        %v6456 = vmul.f32 %v6200, 0.2
        %v6457 = vmul.f32 %v6201, 0.2
        %v6458 = vmul.f32 %v6202, 0.2
        %v6459 = vmul.f32 %v6203, 0.2
        %v6460 = vmul.f32 %v6204, 0.2
        %v6461 = vmul.f32 %v6205, 0.2
        %v6462 = vmul.f32 %v6206, 0.2
        %v6463 = vmul.f32 %v6207, 0.2
        %v6464 = vmul.f32 %v6208, 0.2
        %v6465 = vmul.f32 %v6209, 0.2
        %v6466 = vmul.f32 %v6210, 0.2
        %v6467 = vmul.f32 %v6211, 0.2
        %v6468 = vmul.f32 %v6212, 0.2
        %v6469 = vmul.f32 %v6213, 0.2
        %v6470 = vmul.f32 %v6214, 0.2
        %v6471 = vmul.f32 %v6215, 0.2
        %v6472 = vmul.f32 %v6216, 0.2
        %v6473 = vmul.f32 %v6217, 0.2
        %v6474 = vmul.f32 %v6218, 0.2
        %v6475 = vmul.f32 %v6219, 0.2
        %v6476 = vmul.f32 %v6220, 0.2
        %v6477 = vmul.f32 %v6221, 0.2
        %v6478 = vmul.f32 %v6222, 0.2
        %v6479 = vmul.f32 %v6223, 0.2
        %v6480 = vmul.f32 %v6224, 0.2
        %v6481 = vmul.f32 %v6225, 0.2
        %v6482 = vmul.f32 %v6226, 0.2
        %v6483 = vmul.f32 %v6227, 0.2
        %v6484 = vmul.f32 %v6228, 0.2
        %v6485 = vmul.f32 %v6229, 0.2
        %v6486 = vmul.f32 %v6230, 0.2
        %v6487 = vmul.f32 %v6231, 0.2
        %v6488 = vmul.f32 %v6232, 0.2
        %v6489 = vmul.f32 %v6233, 0.2
        %v6490 = vmul.f32 %v6234, 0.2
        %v6491 = vmul.f32 %v6235, 0.2
        %v6492 = vmul.f32 %v6236, 0.2
        %v6493 = vmul.f32 %v6237, 0.2
        %v6494 = vmul.f32 %v6238, 0.2
        %v6495 = vmul.f32 %v6239, 0.2
        %v6496 = vmul.f32 %v6240, 0.2
        %v6497 = vmul.f32 %v6241, 0.2
        %v6498 = vmul.f32 %v6242, 0.2
        %v6499 = vmul.f32 %v6243, 0.2
        %v6500 = vmul.f32 %v6244, 0.2
        %v6501 = vmul.f32 %v6245, 0.2
        %v6502 = vmul.f32 %v6246, 0.2
        %v6503 = vmul.f32 %v6247, 0.2
        %v6504 = vmul.f32 %v6248, 0.2
        %v6505 = vmul.f32 %v6249, 0.2
        %v6506 = vmul.f32 %v6250, 0.2
        %v6507 = vmul.f32 %v6251, 0.2
        %v6508 = vmul.f32 %v6252, 0.2
        %v6509 = vmul.f32 %v6253, 0.2
        %v6510 = vmul.f32 %v6254, 0.2
        %v6511 = vmul.f32 %v6255, 0.2
        %v6512 = vmul.f32 %v6256, 0.2
        %v6513 = vmul.f32 %v6257, 0.2
        %v6514 = vmul.f32 %v6258, 0.2
        %v6515 = vmul.f32 %v6259, 0.2
        %v6516 = vmul.f32 %v6260, 0.2
        %v6517 = vmul.f32 %v6261, 0.2
        %v6518 = vmul.f32 %v6262, 0.2
        %v6519 = vmul.f32 %v6263, 0.2
        %v6520 = vmul.f32 %v6264, 0.2
        %v6521 = vmul.f32 %v6265, 0.2
        %v6522 = vmul.f32 %v6266, 0.2
        %v6523 = vmul.f32 %v6267, 0.2
        %v6524 = vmul.f32 %v6268, 0.2
        %v6525 = vmul.f32 %v6269, 0.2
        %v6526 = vmul.f32 %v6270, 0.2
        %v6527 = vmul.f32 %v6271, 0.2
        %v6528 = vmul.f32 %v6272, 0.2
        %v6529 = vmul.f32 %v6273, 0.2
        %v6530 = vmul.f32 %v6274, 0.2
        %v6531 = vmul.f32 %v6275, 0.2
        %v6532 = vmul.f32 %v6276, 0.2
        %v6533 = vmul.f32 %v6277, 0.2
        %v6534 = vmul.f32 %v6278, 0.2
        %v6535 = vmul.f32 %v6279, 0.2
        %v6536 = vmul.f32 %v6280, 0.2
        %v6537 = vmul.f32 %v6281, 0.2
        %v6538 = vmul.f32 %v6282, 0.2
        %v6539 = vmul.f32 %v6283, 0.2
        %v6540 = vmul.f32 %v6284, 0.2
        %v6541 = vmul.f32 %v6285, 0.2
        %v6542 = vmul.f32 %v6286, 0.2
        %v6543 = vmul.f32 %v6287, 0.2
        %v6544 = vmul.f32 %v6288, 0.2
        %v6545 = vmul.f32 %v6289, 0.2
        %v6546 = vmul.f32 %v6290, 0.2
        %v6547 = vmul.f32 %v6291, 0.2
        %v6548 = vmul.f32 %v6292, 0.2
        %v6549 = vmul.f32 %v6293, 0.2
        %v6550 = vmul.f32 %v6294, 0.2
        %v6551 = vmul.f32 %v6295, 0.2
        %v6552 = vmul.f32 %v6296, 0.2
        %v6553 = vmul.f32 %v6297, 0.2
        %v6554 = vmul.f32 %v6298, 0.2
        %v6555 = vmul.f32 %v6299, 0.2
        %v6556 = vmul.f32 %v6300, 0.2
        %v6557 = vmul.f32 %v6301, 0.2
        %v6558 = vmul.f32 %v6302, 0.2
        %v6559 = vsel %vm6303, %v6175, %v6431
        %v6560 = vsel %vm6304, %v6176, %v6432
        %v6561 = vsel %vm6305, %v6177, %v6433
        %v6562 = vsel %vm6306, %v6178, %v6434
        %v6563 = vsel %vm6307, %v6179, %v6435
        %v6564 = vsel %vm6308, %v6180, %v6436
        %v6565 = vsel %vm6309, %v6181, %v6437
        %v6566 = vsel %vm6310, %v6182, %v6438
        %v6567 = vsel %vm6311, %v6183, %v6439
        %v6568 = vsel %vm6312, %v6184, %v6440
        %v6569 = vsel %vm6313, %v6185, %v6441
        %v6570 = vsel %vm6314, %v6186, %v6442
        %v6571 = vsel %vm6315, %v6187, %v6443
        %v6572 = vsel %vm6316, %v6188, %v6444
        %v6573 = vsel %vm6317, %v6189, %v6445
        %v6574 = vsel %vm6318, %v6190, %v6446
        %v6575 = vsel %vm6319, %v6191, %v6447
        %v6576 = vsel %vm6320, %v6192, %v6448
        %v6577 = vsel %vm6321, %v6193, %v6449
        %v6578 = vsel %vm6322, %v6194, %v6450
        %v6579 = vsel %vm6323, %v6195, %v6451
        %v6580 = vsel %vm6324, %v6196, %v6452
        %v6581 = vsel %vm6325, %v6197, %v6453
        %v6582 = vsel %vm6326, %v6198, %v6454
        %v6583 = vsel %vm6327, %v6199, %v6455
        %v6584 = vsel %vm6328, %v6200, %v6456
        %v6585 = vsel %vm6329, %v6201, %v6457
        %v6586 = vsel %vm6330, %v6202, %v6458
        %v6587 = vsel %vm6331, %v6203, %v6459
        %v6588 = vsel %vm6332, %v6204, %v6460
        %v6589 = vsel %vm6333, %v6205, %v6461
        %v6590 = vsel %vm6334, %v6206, %v6462
        %v6591 = vsel %vm6335, %v6207, %v6463
        %v6592 = vsel %vm6336, %v6208, %v6464
        %v6593 = vsel %vm6337, %v6209, %v6465
        %v6594 = vsel %vm6338, %v6210, %v6466
        %v6595 = vsel %vm6339, %v6211, %v6467
        %v6596 = vsel %vm6340, %v6212, %v6468
        %v6597 = vsel %vm6341, %v6213, %v6469
        %v6598 = vsel %vm6342, %v6214, %v6470
        %v6599 = vsel %vm6343, %v6215, %v6471
        %v6600 = vsel %vm6344, %v6216, %v6472
        %v6601 = vsel %vm6345, %v6217, %v6473
        %v6602 = vsel %vm6346, %v6218, %v6474
        %v6603 = vsel %vm6347, %v6219, %v6475
        %v6604 = vsel %vm6348, %v6220, %v6476
        %v6605 = vsel %vm6349, %v6221, %v6477
        %v6606 = vsel %vm6350, %v6222, %v6478
        %v6607 = vsel %vm6351, %v6223, %v6479
        %v6608 = vsel %vm6352, %v6224, %v6480
        %v6609 = vsel %vm6353, %v6225, %v6481
        %v6610 = vsel %vm6354, %v6226, %v6482
        %v6611 = vsel %vm6355, %v6227, %v6483
        %v6612 = vsel %vm6356, %v6228, %v6484
        %v6613 = vsel %vm6357, %v6229, %v6485
        %v6614 = vsel %vm6358, %v6230, %v6486
        %v6615 = vsel %vm6359, %v6231, %v6487
        %v6616 = vsel %vm6360, %v6232, %v6488
        %v6617 = vsel %vm6361, %v6233, %v6489
        %v6618 = vsel %vm6362, %v6234, %v6490
        %v6619 = vsel %vm6363, %v6235, %v6491
        %v6620 = vsel %vm6364, %v6236, %v6492
        %v6621 = vsel %vm6365, %v6237, %v6493
        %v6622 = vsel %vm6366, %v6238, %v6494
        %v6623 = vsel %vm6367, %v6239, %v6495
        %v6624 = vsel %vm6368, %v6240, %v6496
        %v6625 = vsel %vm6369, %v6241, %v6497
        %v6626 = vsel %vm6370, %v6242, %v6498
        %v6627 = vsel %vm6371, %v6243, %v6499
        %v6628 = vsel %vm6372, %v6244, %v6500
        %v6629 = vsel %vm6373, %v6245, %v6501
        %v6630 = vsel %vm6374, %v6246, %v6502
        %v6631 = vsel %vm6375, %v6247, %v6503
        %v6632 = vsel %vm6376, %v6248, %v6504
        %v6633 = vsel %vm6377, %v6249, %v6505
        %v6634 = vsel %vm6378, %v6250, %v6506
        %v6635 = vsel %vm6379, %v6251, %v6507
        %v6636 = vsel %vm6380, %v6252, %v6508
        %v6637 = vsel %vm6381, %v6253, %v6509
        %v6638 = vsel %vm6382, %v6254, %v6510
        %v6639 = vsel %vm6383, %v6255, %v6511
        %v6640 = vsel %vm6384, %v6256, %v6512
        %v6641 = vsel %vm6385, %v6257, %v6513
        %v6642 = vsel %vm6386, %v6258, %v6514
        %v6643 = vsel %vm6387, %v6259, %v6515
        %v6644 = vsel %vm6388, %v6260, %v6516
        %v6645 = vsel %vm6389, %v6261, %v6517
        %v6646 = vsel %vm6390, %v6262, %v6518
        %v6647 = vsel %vm6391, %v6263, %v6519
        %v6648 = vsel %vm6392, %v6264, %v6520
        %v6649 = vsel %vm6393, %v6265, %v6521
        %v6650 = vsel %vm6394, %v6266, %v6522
        %v6651 = vsel %vm6395, %v6267, %v6523
        %v6652 = vsel %vm6396, %v6268, %v6524
        %v6653 = vsel %vm6397, %v6269, %v6525
        %v6654 = vsel %vm6398, %v6270, %v6526
        %v6655 = vsel %vm6399, %v6271, %v6527
        %v6656 = vsel %vm6400, %v6272, %v6528
        %v6657 = vsel %vm6401, %v6273, %v6529
        %v6658 = vsel %vm6402, %v6274, %v6530
        %v6659 = vsel %vm6403, %v6275, %v6531
        %v6660 = vsel %vm6404, %v6276, %v6532
        %v6661 = vsel %vm6405, %v6277, %v6533
        %v6662 = vsel %vm6406, %v6278, %v6534
        %v6663 = vsel %vm6407, %v6279, %v6535
        %v6664 = vsel %vm6408, %v6280, %v6536
        %v6665 = vsel %vm6409, %v6281, %v6537
        %v6666 = vsel %vm6410, %v6282, %v6538
        %v6667 = vsel %vm6411, %v6283, %v6539
        %v6668 = vsel %vm6412, %v6284, %v6540
        %v6669 = vsel %vm6413, %v6285, %v6541
        %v6670 = vsel %vm6414, %v6286, %v6542
        %v6671 = vsel %vm6415, %v6287, %v6543
        %v6672 = vsel %vm6416, %v6288, %v6544
        %v6673 = vsel %vm6417, %v6289, %v6545
        %v6674 = vsel %vm6418, %v6290, %v6546
        %v6675 = vsel %vm6419, %v6291, %v6547
        %v6676 = vsel %vm6420, %v6292, %v6548
        %v6677 = vsel %vm6421, %v6293, %v6549
        %v6678 = vsel %vm6422, %v6294, %v6550
        %v6679 = vsel %vm6423, %v6295, %v6551
        %v6680 = vsel %vm6424, %v6296, %v6552
        %v6681 = vsel %vm6425, %v6297, %v6553
        %v6682 = vsel %vm6426, %v6298, %v6554
        %v6683 = vsel %vm6427, %v6299, %v6555
        %v6684 = vsel %vm6428, %v6300, %v6556
        %v6685 = vsel %vm6429, %v6301, %v6557
        %v6686 = vsel %vm6430, %v6302, %v6558
        %v6687 = vpack.c.bf16 %v6567, %v6559
        %v6688 = vpack.c.bf16 %v6568, %v6560
        %v6689 = vpack.c.bf16 %v6569, %v6561
        %v6690 = vpack.c.bf16 %v6570, %v6562
        %v6691 = vpack.c.bf16 %v6571, %v6563
        %v6692 = vpack.c.bf16 %v6572, %v6564
        %v6693 = vpack.c.bf16 %v6573, %v6565
        %v6694 = vpack.c.bf16 %v6574, %v6566
        %v6695 = vpack.c.bf16 %v6583, %v6575
        %v6696 = vpack.c.bf16 %v6584, %v6576
        %v6697 = vpack.c.bf16 %v6585, %v6577
        %v6698 = vpack.c.bf16 %v6586, %v6578
        %v6699 = vpack.c.bf16 %v6587, %v6579
        %v6700 = vpack.c.bf16 %v6588, %v6580
        %v6701 = vpack.c.bf16 %v6589, %v6581
        %v6702 = vpack.c.bf16 %v6590, %v6582
        %v6703 = vpack.c.bf16 %v6599, %v6591
        %v6704 = vpack.c.bf16 %v6600, %v6592
        %v6705 = vpack.c.bf16 %v6601, %v6593
        %v6706 = vpack.c.bf16 %v6602, %v6594
        %v6707 = vpack.c.bf16 %v6603, %v6595
        %v6708 = vpack.c.bf16 %v6604, %v6596
        %v6709 = vpack.c.bf16 %v6605, %v6597
        %v6710 = vpack.c.bf16 %v6606, %v6598
        %v6711 = vpack.c.bf16 %v6615, %v6607
        %v6712 = vpack.c.bf16 %v6616, %v6608
        %v6713 = vpack.c.bf16 %v6617, %v6609
        %v6714 = vpack.c.bf16 %v6618, %v6610
        %v6715 = vpack.c.bf16 %v6619, %v6611
        %v6716 = vpack.c.bf16 %v6620, %v6612
        %v6717 = vpack.c.bf16 %v6621, %v6613
        %v6718 = vpack.c.bf16 %v6622, %v6614
        %v6719 = vpack.c.bf16 %v6631, %v6623
        %v6720 = vpack.c.bf16 %v6632, %v6624
        %v6721 = vpack.c.bf16 %v6633, %v6625
        %v6722 = vpack.c.bf16 %v6634, %v6626
        %v6723 = vpack.c.bf16 %v6635, %v6627
        %v6724 = vpack.c.bf16 %v6636, %v6628
        %v6725 = vpack.c.bf16 %v6637, %v6629
        %v6726 = vpack.c.bf16 %v6638, %v6630
        %v6727 = vpack.c.bf16 %v6647, %v6639
        %v6728 = vpack.c.bf16 %v6648, %v6640
        %v6729 = vpack.c.bf16 %v6649, %v6641
        %v6730 = vpack.c.bf16 %v6650, %v6642
        %v6731 = vpack.c.bf16 %v6651, %v6643
        %v6732 = vpack.c.bf16 %v6652, %v6644
        %v6733 = vpack.c.bf16 %v6653, %v6645
        %v6734 = vpack.c.bf16 %v6654, %v6646
        %v6735 = vpack.c.bf16 %v6663, %v6655
        %v6736 = vpack.c.bf16 %v6664, %v6656
        %v6737 = vpack.c.bf16 %v6665, %v6657
        %v6738 = vpack.c.bf16 %v6666, %v6658
        %v6739 = vpack.c.bf16 %v6667, %v6659
        %v6740 = vpack.c.bf16 %v6668, %v6660
        %v6741 = vpack.c.bf16 %v6669, %v6661
        %v6742 = vpack.c.bf16 %v6670, %v6662
        %v6743 = vpack.c.bf16 %v6679, %v6671
        %v6744 = vpack.c.bf16 %v6680, %v6672
        %v6745 = vpack.c.bf16 %v6681, %v6673
        %v6746 = vpack.c.bf16 %v6682, %v6674
        %v6747 = vpack.c.bf16 %v6683, %v6675
        %v6748 = vpack.c.bf16 %v6684, %v6676
        %v6749 = vpack.c.bf16 %v6685, %v6677
        %v6750 = vpack.c.bf16 %v6686, %v6678
        %v6751 = vld [vmem:[%s7] sm:$0xf]
        %v6752 = vld [vmem:[%s7 + $0x4] sm:$0xf]
        %v6753 = vld [vmem:[%s7 + $0x8] sm:$0xf]
        %v6754 = vld [vmem:[%s7 + $0xc] sm:$0xf]
        %v6755 = vld [vmem:[%s7 + $0x10] sm:$0xf]
        %v6756 = vld [vmem:[%s7 + $0x14] sm:$0xf]
        %v6757 = vld [vmem:[%s7 + $0x18] sm:$0xf]
        %v6758 = vld [vmem:[%s7 + $0x1c] sm:$0xf]
        %v6759 = vld [vmem:[%s7 + $0x20] sm:$0xf]
        %v6760 = vld [vmem:[%s7 + $0x24] sm:$0xf]
        %v6761 = vld [vmem:[%s7 + $0x28] sm:$0xf]
        %v6762 = vld [vmem:[%s7 + $0x2c] sm:$0xf]
        %v6763 = vld [vmem:[%s7 + $0x30] sm:$0xf]
        %v6764 = vld [vmem:[%s7 + $0x34] sm:$0xf]
        %v6765 = vld [vmem:[%s7 + $0x38] sm:$0xf]
        %v6766 = vld [vmem:[%s7 + $0x3c] sm:$0xf]
        %v6767 = vld [vmem:[%s7 + $0x40] sm:$0xf]
        %v6768 = vld [vmem:[%s7 + $0x44] sm:$0xf]
        %v6769 = vld [vmem:[%s7 + $0x48] sm:$0xf]
        %v6770 = vld [vmem:[%s7 + $0x4c] sm:$0xf]
        %v6771 = vld [vmem:[%s7 + $0x50] sm:$0xf]
        %v6772 = vld [vmem:[%s7 + $0x54] sm:$0xf]
        %v6773 = vld [vmem:[%s7 + $0x58] sm:$0xf]
        %v6774 = vld [vmem:[%s7 + $0x5c] sm:$0xf]
        %v6775 = vld [vmem:[%s7 + $0x60] sm:$0xf]
        %v6776 = vld [vmem:[%s7 + $0x64] sm:$0xf]
        %v6777 = vld [vmem:[%s7 + $0x68] sm:$0xf]
        %v6778 = vld [vmem:[%s7 + $0x6c] sm:$0xf]
        %v6779 = vld [vmem:[%s7 + $0x70] sm:$0xf]
        %v6780 = vld [vmem:[%s7 + $0x74] sm:$0xf]
        %v6781 = vld [vmem:[%s7 + $0x78] sm:$0xf]
        %v6782 = vld [vmem:[%s7 + $0x7c] sm:$0xf]
        %v6783 = vld [vmem:[%s7 + $0x80] sm:$0xf]
        %v6784 = vld [vmem:[%s7 + $0x84] sm:$0xf]
        %v6785 = vld [vmem:[%s7 + $0x88] sm:$0xf]
        %v6786 = vld [vmem:[%s7 + $0x8c] sm:$0xf]
        %v6787 = vld [vmem:[%s7 + $0x90] sm:$0xf]
        %v6788 = vld [vmem:[%s7 + $0x94] sm:$0xf]
        %v6789 = vld [vmem:[%s7 + $0x98] sm:$0xf]
        %v6790 = vld [vmem:[%s7 + $0x9c] sm:$0xf]
        %v6791 = vld [vmem:[%s7 + $0xa0] sm:$0xf]
        %v6792 = vld [vmem:[%s7 + $0xa4] sm:$0xf]
        %v6793 = vld [vmem:[%s7 + $0xa8] sm:$0xf]
        %v6794 = vld [vmem:[%s7 + $0xac] sm:$0xf]
        %v6795 = vld [vmem:[%s7 + $0xb0] sm:$0xf]
        %v6796 = vld [vmem:[%s7 + $0xb4] sm:$0xf]
        %v6797 = vld [vmem:[%s7 + $0xb8] sm:$0xf]
        %v6798 = vld [vmem:[%s7 + $0xbc] sm:$0xf]
        %v6799 = vld [vmem:[%s7 + $0xc0] sm:$0xf]
        %v6800 = vld [vmem:[%s7 + $0xc4] sm:$0xf]
        %v6801 = vld [vmem:[%s7 + $0xc8] sm:$0xf]
        %v6802 = vld [vmem:[%s7 + $0xcc] sm:$0xf]
        %v6803 = vld [vmem:[%s7 + $0xd0] sm:$0xf]
        %v6804 = vld [vmem:[%s7 + $0xd4] sm:$0xf]
        %v6805 = vld [vmem:[%s7 + $0xd8] sm:$0xf]
        %v6806 = vld [vmem:[%s7 + $0xdc] sm:$0xf]
        %v6807 = vld [vmem:[%s7 + $0xe0] sm:$0xf]
        %v6808 = vld [vmem:[%s7 + $0xe4] sm:$0xf]
        %v6809 = vld [vmem:[%s7 + $0xe8] sm:$0xf]
        %v6810 = vld [vmem:[%s7 + $0xec] sm:$0xf]
        %v6811 = vld [vmem:[%s7 + $0xf0] sm:$0xf]
        %v6812 = vld [vmem:[%s7 + $0xf4] sm:$0xf]
        %v6813 = vld [vmem:[%s7 + $0xf8] sm:$0xf]
        %v6814 = vld [vmem:[%s7 + $0xfc] sm:$0xf]
        %v6815 = vld [vmem:[%s7 + $0x100] sm:$0xf]
        %v6816 = vld [vmem:[%s7 + $0x104] sm:$0xf]
        %v6817 = vld [vmem:[%s7 + $0x108] sm:$0xf]
        %v6818 = vld [vmem:[%s7 + $0x10c] sm:$0xf]
        %v6819 = vld [vmem:[%s7 + $0x110] sm:$0xf]
        %v6820 = vld [vmem:[%s7 + $0x114] sm:$0xf]
        %v6821 = vld [vmem:[%s7 + $0x118] sm:$0xf]
        %v6822 = vld [vmem:[%s7 + $0x11c] sm:$0xf]
        %v6823 = vld [vmem:[%s7 + $0x120] sm:$0xf]
        %v6824 = vld [vmem:[%s7 + $0x124] sm:$0xf]
        %v6825 = vld [vmem:[%s7 + $0x128] sm:$0xf]
        %v6826 = vld [vmem:[%s7 + $0x12c] sm:$0xf]
        %v6827 = vld [vmem:[%s7 + $0x130] sm:$0xf]
        %v6828 = vld [vmem:[%s7 + $0x134] sm:$0xf]
        %v6829 = vld [vmem:[%s7 + $0x138] sm:$0xf]
        %v6830 = vld [vmem:[%s7 + $0x13c] sm:$0xf]
        %v6831 = vld [vmem:[%s7 + $0x140] sm:$0xf]
        %v6832 = vld [vmem:[%s7 + $0x144] sm:$0xf]
        %v6833 = vld [vmem:[%s7 + $0x148] sm:$0xf]
        %v6834 = vld [vmem:[%s7 + $0x14c] sm:$0xf]
        %v6835 = vld [vmem:[%s7 + $0x150] sm:$0xf]
        %v6836 = vld [vmem:[%s7 + $0x154] sm:$0xf]
        %v6837 = vld [vmem:[%s7 + $0x158] sm:$0xf]
        %v6838 = vld [vmem:[%s7 + $0x15c] sm:$0xf]
        %v6839 = vld [vmem:[%s7 + $0x160] sm:$0xf]
        %v6840 = vld [vmem:[%s7 + $0x164] sm:$0xf]
        %v6841 = vld [vmem:[%s7 + $0x168] sm:$0xf]
        %v6842 = vld [vmem:[%s7 + $0x16c] sm:$0xf]
        %v6843 = vld [vmem:[%s7 + $0x170] sm:$0xf]
        %v6844 = vld [vmem:[%s7 + $0x174] sm:$0xf]
        %v6845 = vld [vmem:[%s7 + $0x178] sm:$0xf]
        %v6846 = vld [vmem:[%s7 + $0x17c] sm:$0xf]
        %v6847 = vld [vmem:[%s7 + $0x180] sm:$0xf]
        %v6848 = vld [vmem:[%s7 + $0x184] sm:$0xf]
        %v6849 = vld [vmem:[%s7 + $0x188] sm:$0xf]
        %v6850 = vld [vmem:[%s7 + $0x18c] sm:$0xf]
        %v6851 = vld [vmem:[%s7 + $0x190] sm:$0xf]
        %v6852 = vld [vmem:[%s7 + $0x194] sm:$0xf]
        %v6853 = vld [vmem:[%s7 + $0x198] sm:$0xf]
        %v6854 = vld [vmem:[%s7 + $0x19c] sm:$0xf]
        %v6855 = vld [vmem:[%s7 + $0x1a0] sm:$0xf]
        %v6856 = vld [vmem:[%s7 + $0x1a4] sm:$0xf]
        %v6857 = vld [vmem:[%s7 + $0x1a8] sm:$0xf]
        %v6858 = vld [vmem:[%s7 + $0x1ac] sm:$0xf]
        %v6859 = vld [vmem:[%s7 + $0x1b0] sm:$0xf]
        %v6860 = vld [vmem:[%s7 + $0x1b4] sm:$0xf]
        %v6861 = vld [vmem:[%s7 + $0x1b8] sm:$0xf]
        %v6862 = vld [vmem:[%s7 + $0x1bc] sm:$0xf]
        %v6863 = vld [vmem:[%s7 + $0x1c0] sm:$0xf]
        %v6864 = vld [vmem:[%s7 + $0x1c4] sm:$0xf]
        %v6865 = vld [vmem:[%s7 + $0x1c8] sm:$0xf]
        %v6866 = vld [vmem:[%s7 + $0x1cc] sm:$0xf]
        %v6867 = vld [vmem:[%s7 + $0x1d0] sm:$0xf]
        %v6868 = vld [vmem:[%s7 + $0x1d4] sm:$0xf]
        %v6869 = vld [vmem:[%s7 + $0x1d8] sm:$0xf]
        %v6870 = vld [vmem:[%s7 + $0x1dc] sm:$0xf]
        %v6871 = vld [vmem:[%s7 + $0x1e0] sm:$0xf]
        %v6872 = vld [vmem:[%s7 + $0x1e4] sm:$0xf]
        %v6873 = vld [vmem:[%s7 + $0x1e8] sm:$0xf]
        %v6874 = vld [vmem:[%s7 + $0x1ec] sm:$0xf]
        %v6875 = vld [vmem:[%s7 + $0x1f0] sm:$0xf]
        %v6876 = vld [vmem:[%s7 + $0x1f4] sm:$0xf]
        %v6877 = vld [vmem:[%s7 + $0x1f8] sm:$0xf]
        %v6878 = vld [vmem:[%s7 + $0x1fc] sm:$0xf]
        %v6879 = vld [vmem:[#allocation8 + $0x2b] sm:$0x1]
        %v6881 = vlaneseq
        %v6882 = vshrl.u32 %v6881, 7
        %v6883 = vsub.s32 0, %v6882
        %v6884 = vrot.slane %v6879, %v6883
        %v7014 = vunpack.c.l.b16 %v6751
        %v7015 = vunpack.c.l.b16 %v6752
        %v7016 = vunpack.c.l.b16 %v6753
        %v7017 = vunpack.c.l.b16 %v6754
        %v7018 = vunpack.c.l.b16 %v6755
        %v7019 = vunpack.c.l.b16 %v6756
        %v7020 = vunpack.c.l.b16 %v6757
        %v7021 = vunpack.c.l.b16 %v6758
        %v7022 = vunpack.c.l.b16 %v6759
        %v7023 = vunpack.c.l.b16 %v6760
        %v7024 = vunpack.c.l.b16 %v6761
        %v7025 = vunpack.c.l.b16 %v6762
        %v7026 = vunpack.c.l.b16 %v6763
        %v7027 = vunpack.c.l.b16 %v6764
        %v7028 = vunpack.c.l.b16 %v6765
        %v7029 = vunpack.c.l.b16 %v6766
        %v7030 = vunpack.c.l.b16 %v6767
        %v7031 = vunpack.c.l.b16 %v6768
        %v7032 = vunpack.c.l.b16 %v6769
        %v7033 = vunpack.c.l.b16 %v6770
        %v7034 = vunpack.c.l.b16 %v6771
        %v7035 = vunpack.c.l.b16 %v6772
        %v7036 = vunpack.c.l.b16 %v6773
        %v7037 = vunpack.c.l.b16 %v6774
        %v7038 = vunpack.c.l.b16 %v6775
        %v7039 = vunpack.c.l.b16 %v6776
        %v7040 = vunpack.c.l.b16 %v6777
        %v7041 = vunpack.c.l.b16 %v6778
        %v7042 = vunpack.c.l.b16 %v6779
        %v7043 = vunpack.c.l.b16 %v6780
        %v7044 = vunpack.c.l.b16 %v6781
        %v7045 = vunpack.c.l.b16 %v6782
        %v7046 = vunpack.c.l.b16 %v6783
        %v7047 = vunpack.c.l.b16 %v6784
        %v7048 = vunpack.c.l.b16 %v6785
        %v7049 = vunpack.c.l.b16 %v6786
        %v7050 = vunpack.c.l.b16 %v6787
        %v7051 = vunpack.c.l.b16 %v6788
        %v7052 = vunpack.c.l.b16 %v6789
        %v7053 = vunpack.c.l.b16 %v6790
        %v7054 = vunpack.c.l.b16 %v6791
        %v7055 = vunpack.c.l.b16 %v6792
        %v7056 = vunpack.c.l.b16 %v6793
        %v7057 = vunpack.c.l.b16 %v6794
        %v7058 = vunpack.c.l.b16 %v6795
        %v7059 = vunpack.c.l.b16 %v6796
        %v7060 = vunpack.c.l.b16 %v6797
        %v7061 = vunpack.c.l.b16 %v6798
        %v7062 = vunpack.c.l.b16 %v6799
        %v7063 = vunpack.c.l.b16 %v6800
        %v7064 = vunpack.c.l.b16 %v6801
        %v7065 = vunpack.c.l.b16 %v6802
        %v7066 = vunpack.c.l.b16 %v6803
        %v7067 = vunpack.c.l.b16 %v6804
        %v7068 = vunpack.c.l.b16 %v6805
        %v7069 = vunpack.c.l.b16 %v6806
        %v7070 = vunpack.c.l.b16 %v6807
        %v7071 = vunpack.c.l.b16 %v6808
        %v7072 = vunpack.c.l.b16 %v6809
        %v7073 = vunpack.c.l.b16 %v6810
        %v7074 = vunpack.c.l.b16 %v6811
        %v7075 = vunpack.c.l.b16 %v6812
        %v7076 = vunpack.c.l.b16 %v6813
        %v7077 = vunpack.c.l.b16 %v6814
        %v7078 = vunpack.c.l.b16 %v6815
        %v7079 = vunpack.c.l.b16 %v6816
        %v7080 = vunpack.c.l.b16 %v6817
        %v7081 = vunpack.c.l.b16 %v6818
        %v7082 = vunpack.c.l.b16 %v6819
        %v7083 = vunpack.c.l.b16 %v6820
        %v7084 = vunpack.c.l.b16 %v6821
        %v7085 = vunpack.c.l.b16 %v6822
        %v7086 = vunpack.c.l.b16 %v6823
        %v7087 = vunpack.c.l.b16 %v6824
        %v7088 = vunpack.c.l.b16 %v6825
        %v7089 = vunpack.c.l.b16 %v6826
        %v7090 = vunpack.c.l.b16 %v6827
        %v7091 = vunpack.c.l.b16 %v6828
        %v7092 = vunpack.c.l.b16 %v6829
        %v7093 = vunpack.c.l.b16 %v6830
        %v7094 = vunpack.c.l.b16 %v6831
        %v7095 = vunpack.c.l.b16 %v6832
        %v7096 = vunpack.c.l.b16 %v6833
        %v7097 = vunpack.c.l.b16 %v6834
        %v7098 = vunpack.c.l.b16 %v6835
        %v7099 = vunpack.c.l.b16 %v6836
        %v7100 = vunpack.c.l.b16 %v6837
        %v7101 = vunpack.c.l.b16 %v6838
        %v7102 = vunpack.c.l.b16 %v6839
        %v7103 = vunpack.c.l.b16 %v6840
        %v7104 = vunpack.c.l.b16 %v6841
        %v7105 = vunpack.c.l.b16 %v6842
        %v7106 = vunpack.c.l.b16 %v6843
        %v7107 = vunpack.c.l.b16 %v6844
        %v7108 = vunpack.c.l.b16 %v6845
        %v7109 = vunpack.c.l.b16 %v6846
        %v7110 = vunpack.c.l.b16 %v6847
        %v7111 = vunpack.c.l.b16 %v6848
        %v7112 = vunpack.c.l.b16 %v6849
        %v7113 = vunpack.c.l.b16 %v6850
        %v7114 = vunpack.c.l.b16 %v6851
        %v7115 = vunpack.c.l.b16 %v6852
        %v7116 = vunpack.c.l.b16 %v6853
        %v7117 = vunpack.c.l.b16 %v6854
        %v7118 = vunpack.c.l.b16 %v6855
        %v7119 = vunpack.c.l.b16 %v6856
        %v7120 = vunpack.c.l.b16 %v6857
        %v7121 = vunpack.c.l.b16 %v6858
        %v7122 = vunpack.c.l.b16 %v6859
        %v7123 = vunpack.c.l.b16 %v6860
        %v7124 = vunpack.c.l.b16 %v6861
        %v7125 = vunpack.c.l.b16 %v6862
        %v7126 = vunpack.c.l.b16 %v6863
        %v7127 = vunpack.c.l.b16 %v6864
        %v7128 = vunpack.c.l.b16 %v6865
        %v7129 = vunpack.c.l.b16 %v6866
        %v7130 = vunpack.c.l.b16 %v6867
        %v7131 = vunpack.c.l.b16 %v6868
        %v7132 = vunpack.c.l.b16 %v6869
        %v7133 = vunpack.c.l.b16 %v6870
        %v7134 = vunpack.c.l.b16 %v6871
        %v7135 = vunpack.c.l.b16 %v6872
        %v7136 = vunpack.c.l.b16 %v6873
        %v7137 = vunpack.c.l.b16 %v6874
        %v7138 = vunpack.c.l.b16 %v6875
        %v7139 = vunpack.c.l.b16 %v6876
        %v7140 = vunpack.c.l.b16 %v6877
        %v7141 = vunpack.c.l.b16 %v6878
        %v7142 = vpack.c.b16 %v7015, %v7014
        %v7143 = vpack.c.b16 %v7017, %v7016
        %v7144 = vpack.c.b16 %v7019, %v7018
        %v7145 = vpack.c.b16 %v7021, %v7020
        %v7146 = vpack.c.b16 %v7023, %v7022
        %v7147 = vpack.c.b16 %v7025, %v7024
        %v7148 = vpack.c.b16 %v7027, %v7026
        %v7149 = vpack.c.b16 %v7029, %v7028
        %v7150 = vpack.c.b16 %v7031, %v7030
        %v7151 = vpack.c.b16 %v7033, %v7032
        %v7152 = vpack.c.b16 %v7035, %v7034
        %v7153 = vpack.c.b16 %v7037, %v7036
        %v7154 = vpack.c.b16 %v7039, %v7038
        %v7155 = vpack.c.b16 %v7041, %v7040
        %v7156 = vpack.c.b16 %v7043, %v7042
        %v7157 = vpack.c.b16 %v7045, %v7044
        %v7158 = vpack.c.b16 %v7047, %v7046
        %v7159 = vpack.c.b16 %v7049, %v7048
        %v7160 = vpack.c.b16 %v7051, %v7050
        %v7161 = vpack.c.b16 %v7053, %v7052
        %v7162 = vpack.c.b16 %v7055, %v7054
        %v7163 = vpack.c.b16 %v7057, %v7056
        %v7164 = vpack.c.b16 %v7059, %v7058
        %v7165 = vpack.c.b16 %v7061, %v7060
        %v7166 = vpack.c.b16 %v7063, %v7062
        %v7167 = vpack.c.b16 %v7065, %v7064
        %v7168 = vpack.c.b16 %v7067, %v7066
        %v7169 = vpack.c.b16 %v7069, %v7068
        %v7170 = vpack.c.b16 %v7071, %v7070
        %v7171 = vpack.c.b16 %v7073, %v7072
        %v7172 = vpack.c.b16 %v7075, %v7074
        %v7173 = vpack.c.b16 %v7077, %v7076
        %v7174 = vpack.c.b16 %v7079, %v7078
        %v7175 = vpack.c.b16 %v7081, %v7080
        %v7176 = vpack.c.b16 %v7083, %v7082
        %v7177 = vpack.c.b16 %v7085, %v7084
        %v7178 = vpack.c.b16 %v7087, %v7086
        %v7179 = vpack.c.b16 %v7089, %v7088
        %v7180 = vpack.c.b16 %v7091, %v7090
        %v7181 = vpack.c.b16 %v7093, %v7092
        %v7182 = vpack.c.b16 %v7095, %v7094
        %v7183 = vpack.c.b16 %v7097, %v7096
        %v7184 = vpack.c.b16 %v7099, %v7098
        %v7185 = vpack.c.b16 %v7101, %v7100
        %v7186 = vpack.c.b16 %v7103, %v7102
        %v7187 = vpack.c.b16 %v7105, %v7104
        %v7188 = vpack.c.b16 %v7107, %v7106
        %v7189 = vpack.c.b16 %v7109, %v7108
        %v7190 = vpack.c.b16 %v7111, %v7110
        %v7191 = vpack.c.b16 %v7113, %v7112
        %v7192 = vpack.c.b16 %v7115, %v7114
        %v7193 = vpack.c.b16 %v7117, %v7116
        %v7194 = vpack.c.b16 %v7119, %v7118
        %v7195 = vpack.c.b16 %v7121, %v7120
        %v7196 = vpack.c.b16 %v7123, %v7122
        %v7197 = vpack.c.b16 %v7125, %v7124
        %v7198 = vpack.c.b16 %v7127, %v7126
        %v7199 = vpack.c.b16 %v7129, %v7128
        %v7200 = vpack.c.b16 %v7131, %v7130
        %v7201 = vpack.c.b16 %v7133, %v7132
        %v7202 = vpack.c.b16 %v7135, %v7134
        %v7203 = vpack.c.b16 %v7137, %v7136
        %v7204 = vpack.c.b16 %v7139, %v7138
        %v7205 = vpack.c.b16 %v7141, %v7140
        %7270 = vmatprep.subr.bf16.mxu0 0
        %7271 = vmatpush1.bf16.msra.mxu0 %v7142
        %7272 = vmatprep.subr.bf16.mxu0 0
        %7273 = vmatpush1.bf16.msra.mxu0 %v7143
        %7274 = vmatprep.subr.bf16.mxu0 0
        %7275 = vmatpush1.bf16.msra.mxu0 %v7144
        %7276 = vmatprep.subr.bf16.mxu0 0
        %7277 = vmatpush1.bf16.msra.mxu0 %v7145
        %7278 = vmatprep.subr.bf16.mxu0 0
        %7279 = vmatpush1.bf16.msra.mxu0 %v7146
        %7280 = vmatprep.subr.bf16.mxu0 0
        %7281 = vmatpush1.bf16.msra.mxu0 %v7147
        %7282 = vmatprep.subr.bf16.mxu0 0
        %7283 = vmatpush1.bf16.msra.mxu0 %v7148
        %7284 = vmatprep.subr.bf16.mxu0 0
        %7285 = vmatpush1.bf16.msra.mxu0 %v7149
        %7286 = vmatprep.subr.bf16.mxu0 0
        %7287 = vmatpush1.bf16.msra.mxu0 %v7150
        %7288 = vmatprep.subr.bf16.mxu0 0
        %7289 = vmatpush1.bf16.msra.mxu0 %v7151
        %7290 = vmatprep.subr.bf16.mxu0 0
        %7291 = vmatpush1.bf16.msra.mxu0 %v7152
        %7292 = vmatprep.subr.bf16.mxu0 0
        %7293 = vmatpush1.bf16.msra.mxu0 %v7153
        %7294 = vmatprep.subr.bf16.mxu0 0
        %7295 = vmatpush1.bf16.msra.mxu0 %v7154
        %7296 = vmatprep.subr.bf16.mxu0 0
        %7297 = vmatpush1.bf16.msra.mxu0 %v7155
        %7298 = vmatprep.subr.bf16.mxu0 0
        %7299 = vmatpush1.bf16.msra.mxu0 %v7156
        %7300 = vmatprep.subr.bf16.mxu0 0
        %7301 = vmatpush1.bf16.msra.mxu0 %v7157
        %7302 = vmatprep.mubr.bf16.mxu0 %v6688
        %7303 = vmatmul.mubr.bf16.gmra.mrb[0].mxu0 %v6687
        %v7304 = vpop.f32.mrb[0].mxu0
        %v7305 = vadd.f32 %v6884, %v7304
        %v7306 = vpop.f32.mrb[0].mxu0
        %v7307 = vpop.f32.mrb[0].mxu0
        %v7308 = vadd.f32 %v6884, %v7307
        %v7309 = vpop.f32.mrb[0].mxu0
        %7310 = vmatprep.mubr.bf16.mxu0 %v6696
        %7311 = vmatmul.mubr.bf16.gmra.mrb[0].mxu0 %v6695
        %v7312 = vpop.f32.mrb[0].mxu0
        %v7313 = vadd.f32 %v6884, %v7312
        %v7314 = vpop.f32.mrb[0].mxu0
        %v7315 = vpop.f32.mrb[0].mxu0
        %v7316 = vadd.f32 %v6884, %v7315
        %v7317 = vpop.f32.mrb[0].mxu0
        %7318 = vmatprep.mubr.bf16.mxu0 %v6704
        %7319 = vmatmul.mubr.bf16.gmra.mrb[0].mxu0 %v6703
        %v7320 = vpop.f32.mrb[0].mxu0
        %v7321 = vadd.f32 %v6884, %v7320
        %v7322 = vpop.f32.mrb[0].mxu0
        %v7323 = vpop.f32.mrb[0].mxu0
        %v7324 = vadd.f32 %v6884, %v7323
        %v7325 = vpop.f32.mrb[0].mxu0
        %7326 = vmatprep.mubr.bf16.mxu0 %v6712
        %7327 = vmatmul.mubr.bf16.gmra.mrb[0].mxu0 %v6711
        %v7328 = vpop.f32.mrb[0].mxu0
        %v7329 = vadd.f32 %v6884, %v7328
        %v7330 = vpop.f32.mrb[0].mxu0
        %v7331 = vpop.f32.mrb[0].mxu0
        %v7332 = vadd.f32 %v6884, %v7331
        %v7333 = vpop.f32.mrb[0].mxu0
        %7334 = vmatprep.mubr.bf16.mxu0 %v6720
        %7335 = vmatmul.mubr.bf16.gmra.mrb[0].mxu0 %v6719
        %v7336 = vpop.f32.mrb[0].mxu0
        %v7337 = vadd.f32 %v6884, %v7336
        %v7338 = vpop.f32.mrb[0].mxu0
        %v7339 = vpop.f32.mrb[0].mxu0
        %v7340 = vadd.f32 %v6884, %v7339
        %v7341 = vpop.f32.mrb[0].mxu0
        %7342 = vmatprep.mubr.bf16.mxu0 %v6728
        %7343 = vmatmul.mubr.bf16.gmra.mrb[0].mxu0 %v6727
        %v7344 = vpop.f32.mrb[0].mxu0
        %v7345 = vadd.f32 %v6884, %v7344
        %v7346 = vpop.f32.mrb[0].mxu0
        %v7347 = vpop.f32.mrb[0].mxu0
        %v7348 = vadd.f32 %v6884, %v7347
        %v7349 = vpop.f32.mrb[0].mxu0
        %7350 = vmatprep.mubr.bf16.mxu0 %v6736
        %7351 = vmatmul.mubr.bf16.gmra.mrb[0].mxu0 %v6735
        %v7352 = vpop.f32.mrb[0].mxu0
        %v7353 = vadd.f32 %v6884, %v7352
        %v7354 = vpop.f32.mrb[0].mxu0
        %v7355 = vpop.f32.mrb[0].mxu0
        %v7356 = vadd.f32 %v6884, %v7355
        %v7357 = vpop.f32.mrb[0].mxu0
        %7358 = vmatprep.mubr.bf16.mxu0 %v6744
        %7359 = vmatmul.mubr.bf16.gmra.mrb[0].mxu0 %v6743
        %v7360 = vpop.f32.mrb[0].mxu0
        %v7361 = vadd.f32 %v6884, %v7360
        %v7362 = vpop.f32.mrb[0].mxu0
        %v7363 = vpop.f32.mrb[0].mxu0
        %v7364 = vadd.f32 %v6884, %v7363
        %v7365 = vpop.f32.mrb[0].mxu0
        %7366 = vdwg.mxu0
        %7367 = vmatprep.subr.bf16.mxu0 0
        %7368 = vmatpush1.bf16.msra.mxu0 %v7158
        %7369 = vmatprep.subr.bf16.mxu0 0
        %7370 = vmatpush1.bf16.msra.mxu0 %v7159
        %7371 = vmatprep.subr.bf16.mxu0 0
        %7372 = vmatpush1.bf16.msra.mxu0 %v7160
        %7373 = vmatprep.subr.bf16.mxu0 0
        %7374 = vmatpush1.bf16.msra.mxu0 %v7161
        %7375 = vmatprep.subr.bf16.mxu0 0
        %7376 = vmatpush1.bf16.msra.mxu0 %v7162
        %7377 = vmatprep.subr.bf16.mxu0 0
        %7378 = vmatpush1.bf16.msra.mxu0 %v7163
        %7379 = vmatprep.subr.bf16.mxu0 0
        %7380 = vmatpush1.bf16.msra.mxu0 %v7164
        %7381 = vmatprep.subr.bf16.mxu0 0
        %7382 = vmatpush1.bf16.msra.mxu0 %v7165
        %7383 = vmatprep.subr.bf16.mxu0 0
        %7384 = vmatpush1.bf16.msra.mxu0 %v7166
        %7385 = vmatprep.subr.bf16.mxu0 0
        %7386 = vmatpush1.bf16.msra.mxu0 %v7167
        %7387 = vmatprep.subr.bf16.mxu0 0
        %7388 = vmatpush1.bf16.msra.mxu0 %v7168
        %7389 = vmatprep.subr.bf16.mxu0 0
        %7390 = vmatpush1.bf16.msra.mxu0 %v7169
        %7391 = vmatprep.subr.bf16.mxu0 0
        %7392 = vmatpush1.bf16.msra.mxu0 %v7170
        %7393 = vmatprep.subr.bf16.mxu0 0
        %7394 = vmatpush1.bf16.msra.mxu0 %v7171
        %7395 = vmatprep.subr.bf16.mxu0 0
        %7396 = vmatpush1.bf16.msra.mxu0 %v7172
        %7397 = vmatprep.subr.bf16.mxu0 0
        %7398 = vmatpush1.bf16.msra.mxu0 %v7173
        %7399 = vmatprep.mubr.bf16.mxu0 %v6690
        %7400 = vmatmul.mubr.bf16.gmra.mrb[0].mxu0 %v6689
        %v7401 = vpop.f32.mrb[0].mxu0
        %v7402 = vadd.f32 %v7305, %v7401
        %v7403 = vpop.f32.mrb[0].mxu0
        %v7404 = vpop.f32.mrb[0].mxu0
        %v7405 = vadd.f32 %v7308, %v7404
        %v7406 = vpop.f32.mrb[0].mxu0
        %7407 = vmatprep.mubr.bf16.mxu0 %v6698
        %7408 = vmatmul.mubr.bf16.gmra.mrb[0].mxu0 %v6697
        %v7409 = vpop.f32.mrb[0].mxu0
        %v7410 = vadd.f32 %v7313, %v7409
        %v7411 = vpop.f32.mrb[0].mxu0
        %v7412 = vpop.f32.mrb[0].mxu0
        %v7413 = vadd.f32 %v7316, %v7412
        %v7414 = vpop.f32.mrb[0].mxu0
        %7415 = vmatprep.mubr.bf16.mxu0 %v6706
        %7416 = vmatmul.mubr.bf16.gmra.mrb[0].mxu0 %v6705
        %v7417 = vpop.f32.mrb[0].mxu0
        %v7418 = vadd.f32 %v7321, %v7417
        %v7419 = vpop.f32.mrb[0].mxu0
        %v7420 = vpop.f32.mrb[0].mxu0
        %v7421 = vadd.f32 %v7324, %v7420
        %v7422 = vpop.f32.mrb[0].mxu0
        %7423 = vmatprep.mubr.bf16.mxu0 %v6714
        %7424 = vmatmul.mubr.bf16.gmra.mrb[0].mxu0 %v6713
        %v7425 = vpop.f32.mrb[0].mxu0
        %v7426 = vadd.f32 %v7329, %v7425
        %v7427 = vpop.f32.mrb[0].mxu0
        %v7428 = vpop.f32.mrb[0].mxu0
        %v7429 = vadd.f32 %v7332, %v7428
        %v7430 = vpop.f32.mrb[0].mxu0
        %7431 = vmatprep.mubr.bf16.mxu0 %v6722
        %7432 = vmatmul.mubr.bf16.gmra.mrb[0].mxu0 %v6721
        %v7433 = vpop.f32.mrb[0].mxu0
        %v7434 = vadd.f32 %v7337, %v7433
        %v7435 = vpop.f32.mrb[0].mxu0
        %v7436 = vpop.f32.mrb[0].mxu0
        %v7437 = vadd.f32 %v7340, %v7436
        %v7438 = vpop.f32.mrb[0].mxu0
        %7439 = vmatprep.mubr.bf16.mxu0 %v6730
        %7440 = vmatmul.mubr.bf16.gmra.mrb[0].mxu0 %v6729
        %v7441 = vpop.f32.mrb[0].mxu0
        %v7442 = vadd.f32 %v7345, %v7441
        %v7443 = vpop.f32.mrb[0].mxu0
        %v7444 = vpop.f32.mrb[0].mxu0
        %v7445 = vadd.f32 %v7348, %v7444
        %v7446 = vpop.f32.mrb[0].mxu0
        %7447 = vmatprep.mubr.bf16.mxu0 %v6738
        %7448 = vmatmul.mubr.bf16.gmra.mrb[0].mxu0 %v6737
        %v7449 = vpop.f32.mrb[0].mxu0
        %v7450 = vadd.f32 %v7353, %v7449
        %v7451 = vpop.f32.mrb[0].mxu0
        %v7452 = vpop.f32.mrb[0].mxu0
        %v7453 = vadd.f32 %v7356, %v7452
        %v7454 = vpop.f32.mrb[0].mxu0
        %7455 = vmatprep.mubr.bf16.mxu0 %v6746
        %7456 = vmatmul.mubr.bf16.gmra.mrb[0].mxu0 %v6745
        %v7457 = vpop.f32.mrb[0].mxu0
        %v7458 = vadd.f32 %v7361, %v7457
        %v7459 = vpop.f32.mrb[0].mxu0
        %v7460 = vpop.f32.mrb[0].mxu0
        %v7461 = vadd.f32 %v7364, %v7460
        %v7462 = vpop.f32.mrb[0].mxu0
        %7463 = vdwg.mxu0
        %7464 = vmatprep.subr.bf16.mxu0 0
        %7465 = vmatpush1.bf16.msra.mxu0 %v7174
        %7466 = vmatprep.subr.bf16.mxu0 0
        %7467 = vmatpush1.bf16.msra.mxu0 %v7175
        %7468 = vmatprep.subr.bf16.mxu0 0
        %7469 = vmatpush1.bf16.msra.mxu0 %v7176
        %7470 = vmatprep.subr.bf16.mxu0 0
        %7471 = vmatpush1.bf16.msra.mxu0 %v7177
        %7472 = vmatprep.subr.bf16.mxu0 0
        %7473 = vmatpush1.bf16.msra.mxu0 %v7178
        %7474 = vmatprep.subr.bf16.mxu0 0
        %7475 = vmatpush1.bf16.msra.mxu0 %v7179
        %7476 = vmatprep.subr.bf16.mxu0 0
        %7477 = vmatpush1.bf16.msra.mxu0 %v7180
        %7478 = vmatprep.subr.bf16.mxu0 0
        %7479 = vmatpush1.bf16.msra.mxu0 %v7181
        %7480 = vmatprep.subr.bf16.mxu0 0
        %7481 = vmatpush1.bf16.msra.mxu0 %v7182
        %7482 = vmatprep.subr.bf16.mxu0 0
        %7483 = vmatpush1.bf16.msra.mxu0 %v7183
        %7484 = vmatprep.subr.bf16.mxu0 0
        %7485 = vmatpush1.bf16.msra.mxu0 %v7184
        %7486 = vmatprep.subr.bf16.mxu0 0
        %7487 = vmatpush1.bf16.msra.mxu0 %v7185
        %7488 = vmatprep.subr.bf16.mxu0 0
        %7489 = vmatpush1.bf16.msra.mxu0 %v7186
        %7490 = vmatprep.subr.bf16.mxu0 0
        %7491 = vmatpush1.bf16.msra.mxu0 %v7187
        %7492 = vmatprep.subr.bf16.mxu0 0
        %7493 = vmatpush1.bf16.msra.mxu0 %v7188
        %7494 = vmatprep.subr.bf16.mxu0 0
        %7495 = vmatpush1.bf16.msra.mxu0 %v7189
        %7496 = vmatprep.mubr.bf16.mxu0 %v6692
        %7497 = vmatmul.mubr.bf16.gmra.mrb[0].mxu0 %v6691
        %v7498 = vpop.f32.mrb[0].mxu0
        %v7499 = vadd.f32 %v7402, %v7498
        %v7500 = vpop.f32.mrb[0].mxu0
        %v7501 = vpop.f32.mrb[0].mxu0
        %v7502 = vadd.f32 %v7405, %v7501
        %v7503 = vpop.f32.mrb[0].mxu0
        %7504 = vmatprep.mubr.bf16.mxu0 %v6700
        %7505 = vmatmul.mubr.bf16.gmra.mrb[0].mxu0 %v6699
        %v7506 = vpop.f32.mrb[0].mxu0
        %v7507 = vadd.f32 %v7410, %v7506
        %v7508 = vpop.f32.mrb[0].mxu0
        %v7509 = vpop.f32.mrb[0].mxu0
        %v7510 = vadd.f32 %v7413, %v7509
        %v7511 = vpop.f32.mrb[0].mxu0
        %7512 = vmatprep.mubr.bf16.mxu0 %v6708
        %7513 = vmatmul.mubr.bf16.gmra.mrb[0].mxu0 %v6707
        %v7514 = vpop.f32.mrb[0].mxu0
        %v7515 = vadd.f32 %v7418, %v7514
        %v7516 = vpop.f32.mrb[0].mxu0
        %v7517 = vpop.f32.mrb[0].mxu0
        %v7518 = vadd.f32 %v7421, %v7517
        %v7519 = vpop.f32.mrb[0].mxu0
        %7520 = vmatprep.mubr.bf16.mxu0 %v6716
        %7521 = vmatmul.mubr.bf16.gmra.mrb[0].mxu0 %v6715
        %v7522 = vpop.f32.mrb[0].mxu0
        %v7523 = vadd.f32 %v7426, %v7522
        %v7524 = vpop.f32.mrb[0].mxu0
        %v7525 = vpop.f32.mrb[0].mxu0
        %v7526 = vadd.f32 %v7429, %v7525
        %v7527 = vpop.f32.mrb[0].mxu0
        %7528 = vmatprep.mubr.bf16.mxu0 %v6724
        %7529 = vmatmul.mubr.bf16.gmra.mrb[0].mxu0 %v6723
        %v7530 = vpop.f32.mrb[0].mxu0
        %v7531 = vadd.f32 %v7434, %v7530
        %v7532 = vpop.f32.mrb[0].mxu0
        %v7533 = vpop.f32.mrb[0].mxu0
        %v7534 = vadd.f32 %v7437, %v7533
        %v7535 = vpop.f32.mrb[0].mxu0
        %7536 = vmatprep.mubr.bf16.mxu0 %v6732
        %7537 = vmatmul.mubr.bf16.gmra.mrb[0].mxu0 %v6731
        %v7538 = vpop.f32.mrb[0].mxu0
        %v7539 = vadd.f32 %v7442, %v7538
        %v7540 = vpop.f32.mrb[0].mxu0
        %v7541 = vpop.f32.mrb[0].mxu0
        %v7542 = vadd.f32 %v7445, %v7541
        %v7543 = vpop.f32.mrb[0].mxu0
        %7544 = vmatprep.mubr.bf16.mxu0 %v6740
        %7545 = vmatmul.mubr.bf16.gmra.mrb[0].mxu0 %v6739
        %v7546 = vpop.f32.mrb[0].mxu0
        %v7547 = vadd.f32 %v7450, %v7546
        %v7548 = vpop.f32.mrb[0].mxu0
        %v7549 = vpop.f32.mrb[0].mxu0
        %v7550 = vadd.f32 %v7453, %v7549
        %v7551 = vpop.f32.mrb[0].mxu0
        %7552 = vmatprep.mubr.bf16.mxu0 %v6748
        %7553 = vmatmul.mubr.bf16.gmra.mrb[0].mxu0 %v6747
        %v7554 = vpop.f32.mrb[0].mxu0
        %v7555 = vadd.f32 %v7458, %v7554
        %v7556 = vpop.f32.mrb[0].mxu0
        %v7557 = vpop.f32.mrb[0].mxu0
        %v7558 = vadd.f32 %v7461, %v7557
        %v7559 = vpop.f32.mrb[0].mxu0
        %7560 = vdwg.mxu0
        %7561 = vmatprep.subr.bf16.mxu0 0
        %7562 = vmatpush1.bf16.msra.mxu0 %v7190
        %7563 = vmatprep.subr.bf16.mxu0 0
        %7564 = vmatpush1.bf16.msra.mxu0 %v7191
        %7565 = vmatprep.subr.bf16.mxu0 0
        %7566 = vmatpush1.bf16.msra.mxu0 %v7192
        %7567 = vmatprep.subr.bf16.mxu0 0
        %7568 = vmatpush1.bf16.msra.mxu0 %v7193
        %7569 = vmatprep.subr.bf16.mxu0 0
        %7570 = vmatpush1.bf16.msra.mxu0 %v7194
        %7571 = vmatprep.subr.bf16.mxu0 0
        %7572 = vmatpush1.bf16.msra.mxu0 %v7195
        %7573 = vmatprep.subr.bf16.mxu0 0
        %7574 = vmatpush1.bf16.msra.mxu0 %v7196
        %7575 = vmatprep.subr.bf16.mxu0 0
        %7576 = vmatpush1.bf16.msra.mxu0 %v7197
        %7577 = vmatprep.subr.bf16.mxu0 0
        %7578 = vmatpush1.bf16.msra.mxu0 %v7198
        %7579 = vmatprep.subr.bf16.mxu0 0
        %7580 = vmatpush1.bf16.msra.mxu0 %v7199
        %7581 = vmatprep.subr.bf16.mxu0 0
        %7582 = vmatpush1.bf16.msra.mxu0 %v7200
        %7583 = vmatprep.subr.bf16.mxu0 0
        %7584 = vmatpush1.bf16.msra.mxu0 %v7201
        %7585 = vmatprep.subr.bf16.mxu0 0
        %7586 = vmatpush1.bf16.msra.mxu0 %v7202
        %7587 = vmatprep.subr.bf16.mxu0 0
        %7588 = vmatpush1.bf16.msra.mxu0 %v7203
        %7589 = vmatprep.subr.bf16.mxu0 0
        %7590 = vmatpush1.bf16.msra.mxu0 %v7204
        %7591 = vmatprep.subr.bf16.mxu0 0
        %7592 = vmatpush1.bf16.msra.mxu0 %v7205
        %7593 = vmatprep.mubr.bf16.mxu0 %v6694
        %7594 = vmatmul.mubr.bf16.gmra.mrb[0].mxu0 %v6693
        %v7595 = vpop.f32.mrb[0].mxu0
        %v7596 = vadd.f32 %v7499, %v7595
        %v7597 = vpop.f32.mrb[0].mxu0
        %v7598 = vpop.f32.mrb[0].mxu0
        %v7599 = vadd.f32 %v7502, %v7598
        %v7600 = vpop.f32.mrb[0].mxu0
        %7601 = vmatprep.mubr.bf16.mxu0 %v6702
        %7602 = vmatmul.mubr.bf16.gmra.mrb[0].mxu0 %v6701
        %v7603 = vpop.f32.mrb[0].mxu0
        %v7604 = vadd.f32 %v7507, %v7603
        %v7605 = vpop.f32.mrb[0].mxu0
        %v7606 = vpop.f32.mrb[0].mxu0
        %v7607 = vadd.f32 %v7510, %v7606
        %v7608 = vpop.f32.mrb[0].mxu0
        %7609 = vmatprep.mubr.bf16.mxu0 %v6710
        %7610 = vmatmul.mubr.bf16.gmra.mrb[0].mxu0 %v6709
        %v7611 = vpop.f32.mrb[0].mxu0
        %v7612 = vadd.f32 %v7515, %v7611
        %v7613 = vpop.f32.mrb[0].mxu0
        %v7614 = vpop.f32.mrb[0].mxu0
        %v7615 = vadd.f32 %v7518, %v7614
        %v7616 = vpop.f32.mrb[0].mxu0
        %7617 = vmatprep.mubr.bf16.mxu0 %v6718
        %7618 = vmatmul.mubr.bf16.gmra.mrb[0].mxu0 %v6717
        %v7619 = vpop.f32.mrb[0].mxu0
        %v7620 = vadd.f32 %v7523, %v7619
        %v7621 = vpop.f32.mrb[0].mxu0
        %v7622 = vpop.f32.mrb[0].mxu0
        %v7623 = vadd.f32 %v7526, %v7622
        %v7624 = vpop.f32.mrb[0].mxu0
        %7625 = vmatprep.mubr.bf16.mxu0 %v6726
        %7626 = vmatmul.mubr.bf16.gmra.mrb[0].mxu0 %v6725
        %v7627 = vpop.f32.mrb[0].mxu0
        %v7628 = vadd.f32 %v7531, %v7627
        %v7629 = vpop.f32.mrb[0].mxu0
        %v7630 = vpop.f32.mrb[0].mxu0
        %v7631 = vadd.f32 %v7534, %v7630
        %v7632 = vpop.f32.mrb[0].mxu0
        %7633 = vmatprep.mubr.bf16.mxu0 %v6734
        %7634 = vmatmul.mubr.bf16.gmra.mrb[0].mxu0 %v6733
        %v7635 = vpop.f32.mrb[0].mxu0
        %v7636 = vadd.f32 %v7539, %v7635
        %v7637 = vpop.f32.mrb[0].mxu0
        %v7638 = vpop.f32.mrb[0].mxu0
        %v7639 = vadd.f32 %v7542, %v7638
        %v7640 = vpop.f32.mrb[0].mxu0
        %7641 = vmatprep.mubr.bf16.mxu0 %v6742
        %7642 = vmatmul.mubr.bf16.gmra.mrb[0].mxu0 %v6741
        %v7643 = vpop.f32.mrb[0].mxu0
        %v7644 = vadd.f32 %v7547, %v7643
        %v7645 = vpop.f32.mrb[0].mxu0
        %v7646 = vpop.f32.mrb[0].mxu0
        %v7647 = vadd.f32 %v7550, %v7646
        %v7648 = vpop.f32.mrb[0].mxu0
        %7649 = vmatprep.mubr.bf16.mxu0 %v6750
        %7650 = vmatmul.mubr.bf16.gmra.mrb[0].mxu0 %v6749
        %v7651 = vpop.f32.mrb[0].mxu0
        %v7652 = vadd.f32 %v7555, %v7651
        %v7653 = vpop.f32.mrb[0].mxu0
        %v7654 = vpop.f32.mrb[0].mxu0
        %v7655 = vadd.f32 %v7558, %v7654
        %v7656 = vpop.f32.mrb[0].mxu0
        %7657 = vdwg.mxu0
        %v7658 = vtanh.pop %v7596
        %v7659 = vtanh.pop %v7599
        %v7660 = vtanh.pop %v7604
        %v7661 = vtanh.pop %v7607
        %v7662 = vtanh.pop %v7612
        %v7663 = vtanh.pop %v7615
        %v7664 = vtanh.pop %v7620
        %v7665 = vtanh.pop %v7623
        %v7666 = vtanh.pop %v7628
        %v7667 = vtanh.pop %v7631
        %v7668 = vtanh.pop %v7636
        %v7669 = vtanh.pop %v7639
        %v7670 = vtanh.pop %v7644
        %v7671 = vtanh.pop %v7647
        %v7672 = vtanh.pop %v7652
        %v7673 = vtanh.pop %v7655
        %7674 = vst [vmem:[%s397] sm:$0xff] %v7658
        %7675 = vst [vmem:[%s397 + $0x8] sm:$0xff] %v7659
        %7676 = vst [vmem:[%s397 + $0x10] sm:$0xff] %v7660
        %7677 = vst [vmem:[%s397 + $0x18] sm:$0xff] %v7661
        %7678 = vst [vmem:[%s397 + $0x20] sm:$0xff] %v7662
        %7679 = vst [vmem:[%s397 + $0x28] sm:$0xff] %v7663
        %7680 = vst [vmem:[%s397 + $0x30] sm:$0xff] %v7664
        %7681 = vst [vmem:[%s397 + $0x38] sm:$0xff] %v7665
        %7682 = vst [vmem:[%s397 + $0x40] sm:$0xff] %v7666
        %7683 = vst [vmem:[%s397 + $0x48] sm:$0xff] %v7667
        %7684 = vst [vmem:[%s397 + $0x50] sm:$0xff] %v7668
        %7685 = vst [vmem:[%s397 + $0x58] sm:$0xff] %v7669
        %7686 = vst [vmem:[%s397 + $0x60] sm:$0xff] %v7670
        %7687 = vst [vmem:[%s397 + $0x68] sm:$0xff] %v7671
        %7688 = vst [vmem:[%s397 + $0x70] sm:$0xff] %v7672
        %7689 = vst [vmem:[%s397 + $0x78] sm:$0xff] %v7673
        %s7690 = sand.u32 %s233, 1
        %s7691 = scalar_lea.sflag [#allocation4], %s7690
        %s7692 = sand.u32 %s233, 1
        %s7693 = smul.addr %s7692, 128
        %s7694 = scalar_lea.vmem [#allocation10], %s7693
        // Predicated region
        $region73: #{tpu_custom_call.1} parent=55 // pred_check
          %p7695 = pneg %p243
        $region74: #{tpu_custom_call.1} parent=55 // pred_check_branch
          %7697 = sbr.rel (%p7695) target = $region76
        $region75: #{tpu_custom_call.1} parent=55 // pred_region
          %s7699 = ssub.s32 2048, 2048
          %7700 = vsyncadd %s7691, %s7699
          %s7701 = smul.addr %s26, 16
          %s7702 = smul.addr %s7701, 128
          %s7703 = scalar_lea.hbm %s9, %s7702
          %s7704 = sshll.u32 %s7694, 4
          %s7705 = int_to_ptr.vmem [resolvable:$true] %s7704
          %7710 = dma.vmem_to_hbm [thread:$0]  %s7705, 2048, %s7703, %s7691, 128, 128, 8
        $region76: #{tpu_custom_call.1} parent=55 // pred_fallthru
          _
      $region56: #{tpu_custom_call.1} parent=5 // pred_fallthru
        _
      %p7711 = scmp.le.s32.totalorder 2, %s21
      // Predicated region
      $region77: #{tpu_custom_call.1} parent=5 // pred_check
        %p7712 = pneg %p7711
      $region78: #{tpu_custom_call.1} parent=5 // pred_check_branch
        %7714 = sbr.rel (%p7712) target = $region80
      $region79: #{tpu_custom_call.1} parent=5 // pred_region
        %s7715 = ssub.s32 %s21, 2
        // Predicated region
        $region81: #{tpu_custom_call.1} parent=79 // pred_check
          %p7716 = pneg %p249
        $region82: #{tpu_custom_call.1} parent=79 // pred_check_branch
          %7718 = sbr.rel (%p7716) target = $region84
        $region83: #{tpu_custom_call.1} parent=79 // pred_region
          %s7719 = sand.u32 %s234, 1
          %s7720 = scalar_lea.sflag [#allocation4], %s7719
          %s7721 = sand.u32 %s234, 1
          %s7722 = smul.addr %s7721, 128
          %s7723 = scalar_lea.vmem [#allocation10], %s7722
          %7724 = dma.done %s7720, 2048
        $region84: #{tpu_custom_call.1} parent=79 // pred_fallthru
          _
      $region80: #{tpu_custom_call.1} parent=5 // pred_fallthru
        _
    $region6: #{tpu_custom_call.1} parent=1 // loop_footer
      %s25 = sadd.s32 1, %s21
    $region7: #{tpu_custom_call.1} parent=1 // loop_footer_branch
      %20 = sbr.rel target = $region3
    $region8: #{tpu_custom_call.1} parent=1 // loop_exit
      _
    %7725 = vsyncpa [#allocation3], 1
    %s7726 = scalar_lea.sflag [#allocation3], 1
    %7727 = vsyncpa %s7726, 1
    %7728 = vsyncpa [#allocation6], 1
    %7729 = vsyncpa [#allocation9], 1
    %7730 = vsyncpa [#allocation4], 1
    %s7731 = scalar_lea.sflag [#allocation4], 1
    %7732 = vsyncpa %s7731, 1

</llo_original>
